<compile_context>
chip_gen: v7x
topology: tpu7x:2x2x1
jax: 0.10.0
libtpu: 0.0.40
codegen_flags: <defaults>
</compile_context>

<pallas_src>
import jax
import jax.numpy as jnp
from jax.experimental import pallas as pl
from jax.experimental.pallas import tpu as pltpu

_LANE = 128


def _conv_bn_relu_x2_kernel(x_ref, w1_ref, b1_ref, w2_ref, b2_ref, o_ref, mid_ref):
    """One batch element per grid step.

    x_ref  : (1, H+2, W+2, Cin)  bf16 spatially pre-padded NHWC input
    w1_ref : (9, Cin, Cp)        bf16 BN1-scale-folded taps (dy-major, dx-minor)
    b1_ref : (1, Cp)             f32 folded BN1 bias
    w2_ref : (9, Cp,  Cp)        bf16 BN2-scale-folded taps
    b2_ref : (1, Cp)             f32 folded BN2 bias
    o_ref  : (1, H, W, Cp)       f32 output (padded channels are zero)
    mid_ref: (H+2, W+2, Cp)      bf16 VMEM scratch: padded ReLU(conv1) result
    """
    Hp, Wp = x_ref.shape[1], x_ref.shape[2]
    H, W = Hp - 2, Wp - 2
    Cp = o_ref.shape[3]

    x = x_ref[0]                                     # (H+2, W+2, Cin) bf16
    dims = (((2,), (0,)), ((), ()))                  # contract the channel dim

    # ---- conv1 (BN1 scale pre-folded): 9 shifted taps, f32 accumulation ----
    acc1 = jnp.zeros((H, W, Cp), jnp.float32)
    for t in range(9):
        dy, dx = t // 3, t % 3
        acc1 = acc1 + jax.lax.dot_general(
            x[dy:dy + H, dx:dx + W, :], w1_ref[t], dims,
            preferred_element_type=jnp.float32)
    y1 = jnp.maximum(acc1 + b1_ref[...], 0.0)        # (H, W, Cp) f32

    # ---- padded bf16 intermediate: clear only the 1-px halo ring, write interior.
    # Ring is cleared every step (not just step 0) so the kernel stays correct
    # when the batch grid axis is sharded across cores (per-core scratch).
    mid_ref[0:1, :, :] = jnp.zeros((1, Wp, Cp), jnp.bfloat16)
    mid_ref[H + 1:H + 2, :, :] = jnp.zeros((1, Wp, Cp), jnp.bfloat16)
    mid_ref[:, 0:1, :] = jnp.zeros((Hp, 1, Cp), jnp.bfloat16)
    mid_ref[:, W + 1:W + 2, :] = jnp.zeros((Hp, 1, Cp), jnp.bfloat16)
    mid_ref[1:H + 1, 1:W + 1, :] = y1.astype(jnp.bfloat16)

    # ---- conv2 (BN2 scale pre-folded): operands already bf16, f32 accumulation ----
    acc2 = jnp.zeros((H, W, Cp), jnp.float32)
    for t in range(9):
        dy, dx = t // 3, t % 3
        acc2 = acc2 + jax.lax.dot_general(
            mid_ref[dy:dy + H, dx:dx + W, :], w2_ref[t], dims,
            preferred_element_type=jnp.float32)
    o_ref[0] = jnp.maximum(acc2 + b2_ref[...], 0.0).astype(o_ref.dtype)


@jax.jit
def conv_block(x_nchw, w1, g1, be1, m1, v1, w2, g2, be2, m2, v2, eps=1e-5):
    """Pallas forward of the PyTorch `conv` module (inference-mode BN).

    x_nchw : (N, Cin, H, W) float32
    w1     : (Cout, Cin, 3, 3)   (PyTorch OIHW layout)
    w2     : (Cout, Cout, 3, 3)
    g*, be*, m*, v* : (Cout,) BN gamma / beta / running_mean / running_var
    returns: (N, Cout, H, W) float32
    """
    N, Cin, H, W = x_nchw.shape
    Cout = w1.shape[0]
    Cp = ((Cout + _LANE - 1) // _LANE) * _LANE       # channels padded to lane width

    # glue (plain JAX): NHWC relayout + 1-px spatial pad + bf16 cast (all fused
    # by XLA into the mandatory relayout), BN scale/bias fold.
    x = jnp.transpose(x_nchw, (0, 2, 3, 1)).astype(jnp.float32)
    x_pad = jnp.pad(x, ((0, 0), (1, 1), (1, 1), (0, 0))).astype(jnp.bfloat16)

    s1 = (g1 / jnp.sqrt(v1 + eps)).astype(jnp.float32)
    b1 = (be1 - m1 * s1).astype(jnp.float32)
    s2 = (g2 / jnp.sqrt(v2 + eps)).astype(jnp.float32)
    b2 = (be2 - m2 * s2).astype(jnp.float32)

    # weights -> (kh, kw, Cin, Cout), fold BN scale, pad channels, cast bf16
    w1_t = jnp.transpose(w1, (2, 3, 1, 0)).astype(jnp.float32) * s1
    w2_t = jnp.transpose(w2, (2, 3, 1, 0)).astype(jnp.float32) * s2
    w1_k = jnp.pad(w1_t, ((0, 0), (0, 0), (0, 0), (0, Cp - Cout))
                   ).reshape(9, Cin, Cp).astype(jnp.bfloat16)
    w2_k = jnp.pad(w2_t, ((0, 0), (0, 0), (0, Cp - Cout), (0, Cp - Cout))
                   ).reshape(9, Cp, Cp).astype(jnp.bfloat16)
    b1_p = jnp.pad(b1, (0, Cp - Cout)).reshape(1, Cp)
    b2_p = jnp.pad(b2, (0, Cp - Cout)).reshape(1, Cp)

    out_nhwc = pl.pallas_call(
        _conv_bn_relu_x2_kernel,
        out_shape=jax.ShapeDtypeStruct((N, H, W, Cp), jnp.float32),
        grid_spec=pltpu.PrefetchScalarGridSpec(
            num_scalar_prefetch=0,
            grid=(N,),
            in_specs=[
                pl.BlockSpec((1, H + 2, W + 2, Cin), lambda n: (n, 0, 0, 0)),
                pl.BlockSpec((9, Cin, Cp), lambda n: (0, 0, 0)),
                pl.BlockSpec((1, Cp), lambda n: (0, 0)),
                pl.BlockSpec((9, Cp, Cp), lambda n: (0, 0, 0)),
                pl.BlockSpec((1, Cp), lambda n: (0, 0)),
            ],
            out_specs=pl.BlockSpec((1, H, W, Cp), lambda n: (n, 0, 0, 0)),
            scratch_shapes=[pltpu.VMEM((H + 2, W + 2, Cp), jnp.bfloat16)],
        ),
        compiler_params=pltpu.CompilerParams(
            dimension_semantics=("parallel",),
            vmem_limit_bytes=32 * 1024 * 1024,
        ),
    )(x_pad, w1_k, b1_p, w2_k, b2_p)

    return jnp.transpose(out_nhwc[..., :Cout], (0, 3, 1, 2))      # back to NCHW


def _reference_matched(x_nchw, w1, g1, be1, m1, v1, w2, g2, be2, m2, v2, eps=1e-5):
    """Reference mirroring the kernel's numerics (folded BN, bf16 operands, f32 accum)."""
    x = jnp.transpose(x_nchw, (0, 2, 3, 1)).astype(jnp.float32)
    s1 = g1 / jnp.sqrt(v1 + eps)
    b1 = be1 - m1 * s1
    s2 = g2 / jnp.sqrt(v2 + eps)
    b2 = be2 - m2 * s2
    w1_h = (jnp.transpose(w1, (2, 3, 1, 0)).astype(jnp.float32) * s1).astype(jnp.bfloat16)
    w2_h = (jnp.transpose(w2, (2, 3, 1, 0)).astype(jnp.float32) * s2).astype(jnp.bfloat16)
    dn = ("NHWC", "HWIO", "NHWC")
    y = jax.lax.conv_general_dilated(
        x.astype(jnp.bfloat16), w1_h, (1, 1), ((1, 1), (1, 1)),
        dimension_numbers=dn, preferred_element_type=jnp.float32)
    y = jnp.maximum(y + b1, 0.0)
    y = jax.lax.conv_general_dilated(
        y.astype(jnp.bfloat16), w2_h, (1, 1), ((1, 1), (1, 1)),
        dimension_numbers=dn, preferred_element_type=jnp.float32)
    y = jnp.maximum(y + b2, 0.0)
    return jnp.transpose(y, (0, 3, 1, 2))


def _reference_f32(x_nchw, w1, g1, be1, m1, v1, w2, g2, be2, m2, v2, eps=1e-5):
    """Plain-f32 reference with the original module semantics (inference-mode BN)."""
    dn = jax.lax.conv_dimension_numbers(x_nchw.shape, w1.shape,
                                        ("NCHW", "OIHW", "NCHW"))

    def bn_relu(y, g, be, m, v):
        g = g.reshape(1, -1, 1, 1)
        be = be.reshape(1, -1, 1, 1)
        m = m.reshape(1, -1, 1, 1)
        v = v.reshape(1, -1, 1, 1)
        return jnp.maximum((y - m) / jnp.sqrt(v + eps) * g + be, 0.0)

    y = jax.lax.conv_general_dilated(x_nchw, w1, (1, 1), ((1, 1), (1, 1)),
                                     dimension_numbers=dn)
    y = bn_relu(y, g1, be1, m1, v1)
    y = jax.lax.conv_general_dilated(y, w2, (1, 1), ((1, 1), (1, 1)),
                                     dimension_numbers=dn)
    return bn_relu(y, g2, be2, m2, v2)


if __name__ == "__main__":
    # TODO(synk): BatchNorm is implemented in inference (eval) mode with fixed
    # running stats; PyTorch default train-mode batch statistics are not modeled.
    N, Cin, Cout, H, W = 2, 4, 8, 16, 16

    key = jax.random.PRNGKey(0)
    ks = jax.random.split(key, 11)
    x = jax.random.normal(ks[0], (N, Cin, H, W), jnp.float32)
    w1 = jax.random.normal(ks[1], (Cout, Cin, 3, 3), jnp.float32) * 0.1
    w2 = jax.random.normal(ks[2], (Cout, Cout, 3, 3), jnp.float32) * 0.1
    g1 = 1.0 + 0.1 * jax.random.normal(ks[3], (Cout,), jnp.float32)
    be1 = 0.1 * jax.random.normal(ks[4], (Cout,), jnp.float32)
    m1 = 0.1 * jax.random.normal(ks[5], (Cout,), jnp.float32)
    v1 = 1.0 + 0.1 * jax.random.uniform(ks[6], (Cout,), jnp.float32)
    g2 = 1.0 + 0.1 * jax.random.normal(ks[7], (Cout,), jnp.float32)
    be2 = 0.1 * jax.random.normal(ks[8], (Cout,), jnp.float32)
    m2 = 0.1 * jax.random.normal(ks[9], (Cout,), jnp.float32)
    v2 = 1.0 + 0.1 * jax.random.uniform(ks[10], (Cout,), jnp.float32)

    out = conv_block(x, w1, g1, be1, m1, v1, w2, g2, be2, m2, v2)
    out = jax.block_until_ready(out)
    assert out.shape == (N, Cout, H, W)

    # (1) tight check vs. a reference that mirrors the kernel's numerics exactly
    ref_m = _reference_matched(x, w1, g1, be1, m1, v1, w2, g2, be2, m2, v2)
    err_m = float(jnp.max(jnp.abs(out - ref_m)))
    assert jnp.allclose(out, ref_m, atol=2e-3, rtol=2e-3), err_m

    # (2) sanity check vs. the pure-f32 module semantics (bf16 MXU operands
    #     introduce ~1e-2-scale deviations, hence the looser tolerance)
    ref_f = _reference_f32(x, w1, g1, be1, m1, v1, w2, g2, be2, m2, v2)
    err_f = float(jnp.max(jnp.abs(out - ref_f)))
    assert jnp.allclose(out, ref_f, atol=3e-2, rtol=3e-2), err_f

    print("KERNEL_OK")
</pallas_src>

<mosaic_0001>
module attributes {stable_mosaic.version = 11 : i64} {
  func.func @_conv_bn_relu_x2_kernel(%arg0: i32, %arg1: memref<1x18x18x4xbf16, #tpu.memory_space<vmem>>, %arg2: memref<9x4x128xbf16, #tpu.memory_space<vmem>>, %arg3: memref<1x128xf32, #tpu.memory_space<vmem>>, %arg4: memref<9x128x128xbf16, #tpu.memory_space<vmem>>, %arg5: memref<1x128xf32, #tpu.memory_space<vmem>>, %arg6: memref<1x16x16x128xf32, #tpu.memory_space<vmem>>, %arg7: memref<18x18x128xbf16, #tpu.memory_space<vmem>>) attributes {dimension_semantics = [#tpu.dimension_semantics<parallel>], iteration_bounds = array<i64: 2>, scalar_prefetch = 0 : i64, scratch_operands = 1 : i64, tpu.core_type = #tpu.core_type<tc>, window_params = [{transform_indices = @transform_0, window_bounds = array<i64: 1, 18, 18, 4>}, {pipeline_mode = #tpu.pipeline_mode<synchronous>, transform_indices = @transform_1, window_bounds = array<i64: 9, 4, 128>}, {pipeline_mode = #tpu.pipeline_mode<synchronous>, transform_indices = @transform_2, window_bounds = array<i64: 1, 128>}, {pipeline_mode = #tpu.pipeline_mode<synchronous>, transform_indices = @transform_3, window_bounds = array<i64: 9, 128, 128>}, {pipeline_mode = #tpu.pipeline_mode<synchronous>, transform_indices = @transform_4, window_bounds = array<i64: 1, 128>}, {transform_indices = @transform_5, window_bounds = array<i64: 1, 16, 16, 128>}]} {
    %c0 = arith.constant 0 : index
    %c0_0 = arith.constant 0 : index
    %c0_1 = arith.constant 0 : index
    %c0_2 = arith.constant 0 : index
    %0 = vector.load %arg1[%c0, %c0_0, %c0_1, %c0_2] : memref<1x18x18x4xbf16, #tpu.memory_space<vmem>>, vector<1x18x18x4xbf16>
    %1 = vector.shape_cast %0 : vector<1x18x18x4xbf16> to vector<18x18x4xbf16>
    %cst = arith.constant 0.000000e+00 : f32
    %2 = vector.broadcast %cst : f32 to vector<16x16x128xf32>
    %3 = vector.extract_strided_slice %1 {offsets = [0, 0, 0], sizes = [16, 16, 4], strides = [1, 1, 1]} : vector<18x18x4xbf16> to vector<16x16x4xbf16>
    %c0_3 = arith.constant 0 : index
    %c0_4 = arith.constant 0 : index
    %c0_5 = arith.constant 0 : index
    %4 = vector.load %arg2[%c0_3, %c0_4, %c0_5] : memref<9x4x128xbf16, #tpu.memory_space<vmem>>, vector<1x4x128xbf16>
    %5 = vector.shape_cast %4 : vector<1x4x128xbf16> to vector<4x128xbf16>
    %cst_6 = arith.constant dense<0.000000e+00> : vector<16x16x128xf32>
    %6 = tpu.matmul %3, %5, %cst_6 {dimension_numbers = #tpu.dot_dimension_numbers<[2], [0], [0, 1], [1], [0, 0, 0, 1, 1, 1], [], []>} : vector<16x16x4xbf16>, vector<4x128xbf16>, vector<16x16x128xf32> -> vector<16x16x128xf32>
    %7 = arith.addf %2, %6 : vector<16x16x128xf32>
    %8 = vector.extract_strided_slice %1 {offsets = [0, 1, 0], sizes = [16, 16, 4], strides = [1, 1, 1]} : vector<18x18x4xbf16> to vector<16x16x4xbf16>
    %c1 = arith.constant 1 : index
    %c0_7 = arith.constant 0 : index
    %c0_8 = arith.constant 0 : index
    %9 = vector.load %arg2[%c1, %c0_7, %c0_8] : memref<9x4x128xbf16, #tpu.memory_space<vmem>>, vector<1x4x128xbf16>
    %10 = vector.shape_cast %9 : vector<1x4x128xbf16> to vector<4x128xbf16>
    %cst_9 = arith.constant dense<0.000000e+00> : vector<16x16x128xf32>
    %11 = tpu.matmul %8, %10, %cst_9 {dimension_numbers = #tpu.dot_dimension_numbers<[2], [0], [0, 1], [1], [0, 0, 0, 1, 1, 1], [], []>} : vector<16x16x4xbf16>, vector<4x128xbf16>, vector<16x16x128xf32> -> vector<16x16x128xf32>
    %12 = arith.addf %7, %11 : vector<16x16x128xf32>
    %13 = vector.extract_strided_slice %1 {offsets = [0, 2, 0], sizes = [16, 16, 4], strides = [1, 1, 1]} : vector<18x18x4xbf16> to vector<16x16x4xbf16>
    %c2 = arith.constant 2 : index
    %c0_10 = arith.constant 0 : index
    %c0_11 = arith.constant 0 : index
    %14 = vector.load %arg2[%c2, %c0_10, %c0_11] : memref<9x4x128xbf16, #tpu.memory_space<vmem>>, vector<1x4x128xbf16>
    %15 = vector.shape_cast %14 : vector<1x4x128xbf16> to vector<4x128xbf16>
    %cst_12 = arith.constant dense<0.000000e+00> : vector<16x16x128xf32>
    %16 = tpu.matmul %13, %15, %cst_12 {dimension_numbers = #tpu.dot_dimension_numbers<[2], [0], [0, 1], [1], [0, 0, 0, 1, 1, 1], [], []>} : vector<16x16x4xbf16>, vector<4x128xbf16>, vector<16x16x128xf32> -> vector<16x16x128xf32>
    %17 = arith.addf %12, %16 : vector<16x16x128xf32>
    %18 = vector.extract_strided_slice %1 {offsets = [1, 0, 0], sizes = [16, 16, 4], strides = [1, 1, 1]} : vector<18x18x4xbf16> to vector<16x16x4xbf16>
    %c3 = arith.constant 3 : index
    %c0_13 = arith.constant 0 : index
    %c0_14 = arith.constant 0 : index
    %19 = vector.load %arg2[%c3, %c0_13, %c0_14] : memref<9x4x128xbf16, #tpu.memory_space<vmem>>, vector<1x4x128xbf16>
    %20 = vector.shape_cast %19 : vector<1x4x128xbf16> to vector<4x128xbf16>
    %cst_15 = arith.constant dense<0.000000e+00> : vector<16x16x128xf32>
    %21 = tpu.matmul %18, %20, %cst_15 {dimension_numbers = #tpu.dot_dimension_numbers<[2], [0], [0, 1], [1], [0, 0, 0, 1, 1, 1], [], []>} : vector<16x16x4xbf16>, vector<4x128xbf16>, vector<16x16x128xf32> -> vector<16x16x128xf32>
    %22 = arith.addf %17, %21 : vector<16x16x128xf32>
    %23 = vector.extract_strided_slice %1 {offsets = [1, 1, 0], sizes = [16, 16, 4], strides = [1, 1, 1]} : vector<18x18x4xbf16> to vector<16x16x4xbf16>
    %c4 = arith.constant 4 : index
    %c0_16 = arith.constant 0 : index
    %c0_17 = arith.constant 0 : index
    %24 = vector.load %arg2[%c4, %c0_16, %c0_17] : memref<9x4x128xbf16, #tpu.memory_space<vmem>>, vector<1x4x128xbf16>
    %25 = vector.shape_cast %24 : vector<1x4x128xbf16> to vector<4x128xbf16>
    %cst_18 = arith.constant dense<0.000000e+00> : vector<16x16x128xf32>
    %26 = tpu.matmul %23, %25, %cst_18 {dimension_numbers = #tpu.dot_dimension_numbers<[2], [0], [0, 1], [1], [0, 0, 0, 1, 1, 1], [], []>} : vector<16x16x4xbf16>, vector<4x128xbf16>, vector<16x16x128xf32> -> vector<16x16x128xf32>
    %27 = arith.addf %22, %26 : vector<16x16x128xf32>
    %28 = vector.extract_strided_slice %1 {offsets = [1, 2, 0], sizes = [16, 16, 4], strides = [1, 1, 1]} : vector<18x18x4xbf16> to vector<16x16x4xbf16>
    %c5 = arith.constant 5 : index
    %c0_19 = arith.constant 0 : index
    %c0_20 = arith.constant 0 : index
    %29 = vector.load %arg2[%c5, %c0_19, %c0_20] : memref<9x4x128xbf16, #tpu.memory_space<vmem>>, vector<1x4x128xbf16>
    %30 = vector.shape_cast %29 : vector<1x4x128xbf16> to vector<4x128xbf16>
    %cst_21 = arith.constant dense<0.000000e+00> : vector<16x16x128xf32>
    %31 = tpu.matmul %28, %30, %cst_21 {dimension_numbers = #tpu.dot_dimension_numbers<[2], [0], [0, 1], [1], [0, 0, 0, 1, 1, 1], [], []>} : vector<16x16x4xbf16>, vector<4x128xbf16>, vector<16x16x128xf32> -> vector<16x16x128xf32>
    %32 = arith.addf %27, %31 : vector<16x16x128xf32>
    %33 = vector.extract_strided_slice %1 {offsets = [2, 0, 0], sizes = [16, 16, 4], strides = [1, 1, 1]} : vector<18x18x4xbf16> to vector<16x16x4xbf16>
    %c6 = arith.constant 6 : index
    %c0_22 = arith.constant 0 : index
    %c0_23 = arith.constant 0 : index
    %34 = vector.load %arg2[%c6, %c0_22, %c0_23] : memref<9x4x128xbf16, #tpu.memory_space<vmem>>, vector<1x4x128xbf16>
    %35 = vector.shape_cast %34 : vector<1x4x128xbf16> to vector<4x128xbf16>
    %cst_24 = arith.constant dense<0.000000e+00> : vector<16x16x128xf32>
    %36 = tpu.matmul %33, %35, %cst_24 {dimension_numbers = #tpu.dot_dimension_numbers<[2], [0], [0, 1], [1], [0, 0, 0, 1, 1, 1], [], []>} : vector<16x16x4xbf16>, vector<4x128xbf16>, vector<16x16x128xf32> -> vector<16x16x128xf32>
    %37 = arith.addf %32, %36 : vector<16x16x128xf32>
    %38 = vector.extract_strided_slice %1 {offsets = [2, 1, 0], sizes = [16, 16, 4], strides = [1, 1, 1]} : vector<18x18x4xbf16> to vector<16x16x4xbf16>
    %c7 = arith.constant 7 : index
    %c0_25 = arith.constant 0 : index
    %c0_26 = arith.constant 0 : index
    %39 = vector.load %arg2[%c7, %c0_25, %c0_26] : memref<9x4x128xbf16, #tpu.memory_space<vmem>>, vector<1x4x128xbf16>
    %40 = vector.shape_cast %39 : vector<1x4x128xbf16> to vector<4x128xbf16>
    %cst_27 = arith.constant dense<0.000000e+00> : vector<16x16x128xf32>
    %41 = tpu.matmul %38, %40, %cst_27 {dimension_numbers = #tpu.dot_dimension_numbers<[2], [0], [0, 1], [1], [0, 0, 0, 1, 1, 1], [], []>} : vector<16x16x4xbf16>, vector<4x128xbf16>, vector<16x16x128xf32> -> vector<16x16x128xf32>
    %42 = arith.addf %37, %41 : vector<16x16x128xf32>
    %43 = vector.extract_strided_slice %1 {offsets = [2, 2, 0], sizes = [16, 16, 4], strides = [1, 1, 1]} : vector<18x18x4xbf16> to vector<16x16x4xbf16>
    %c8 = arith.constant 8 : index
    %c0_28 = arith.constant 0 : index
    %c0_29 = arith.constant 0 : index
    %44 = vector.load %arg2[%c8, %c0_28, %c0_29] : memref<9x4x128xbf16, #tpu.memory_space<vmem>>, vector<1x4x128xbf16>
    %45 = vector.shape_cast %44 : vector<1x4x128xbf16> to vector<4x128xbf16>
    %cst_30 = arith.constant dense<0.000000e+00> : vector<16x16x128xf32>
    %46 = tpu.matmul %43, %45, %cst_30 {dimension_numbers = #tpu.dot_dimension_numbers<[2], [0], [0, 1], [1], [0, 0, 0, 1, 1, 1], [], []>} : vector<16x16x4xbf16>, vector<4x128xbf16>, vector<16x16x128xf32> -> vector<16x16x128xf32>
    %47 = arith.addf %42, %46 : vector<16x16x128xf32>
    %c0_31 = arith.constant 0 : index
    %c0_32 = arith.constant 0 : index
    %48 = vector.load %arg3[%c0_31, %c0_32] : memref<1x128xf32, #tpu.memory_space<vmem>>, vector<1x128xf32>
    %49 = vector.shape_cast %48 : vector<1x128xf32> to vector<1x1x128xf32>
    %50 = vector.broadcast %49 : vector<1x1x128xf32> to vector<16x16x128xf32>
    %51 = arith.addf %47, %50 : vector<16x16x128xf32>
    %cst_33 = arith.constant 0.000000e+00 : f32
    %52 = vector.broadcast %cst_33 : f32 to vector<16x16x128xf32>
    %53 = arith.maximumf %51, %52 : vector<16x16x128xf32>
    %cst_34 = arith.constant 0.000000e+00 : bf16
    %54 = vector.broadcast %cst_34 : bf16 to vector<1x18x128xbf16>
    %c0_35 = arith.constant 0 : index
    %c0_36 = arith.constant 0 : index
    %c0_37 = arith.constant 0 : index
    %55 = vector.load %arg7[%c0_35, %c0_36, %c0_37] : memref<18x18x128xbf16, #tpu.memory_space<vmem>>, vector<1x18x128xbf16>
    tpu.vector_store %arg7[%c0_35, %c0_36, %c0_37], %54 {strides = array<i32>} : memref<18x18x128xbf16, #tpu.memory_space<vmem>>, vector<1x18x128xbf16>,
    %cst_38 = arith.constant 0.000000e+00 : bf16
    %56 = vector.broadcast %cst_38 : bf16 to vector<1x18x128xbf16>
    %c17 = arith.constant 17 : index
    %c0_39 = arith.constant 0 : index
    %c0_40 = arith.constant 0 : index
    %57 = vector.load %arg7[%c17, %c0_39, %c0_40] : memref<18x18x128xbf16, #tpu.memory_space<vmem>>, vector<1x18x128xbf16>
    tpu.vector_store %arg7[%c17, %c0_39, %c0_40], %56 {strides = array<i32>} : memref<18x18x128xbf16, #tpu.memory_space<vmem>>, vector<1x18x128xbf16>,
    %cst_41 = arith.constant 0.000000e+00 : bf16
    %58 = vector.broadcast %cst_41 : bf16 to vector<18x1x128xbf16>
    %c0_42 = arith.constant 0 : index
    %c0_43 = arith.constant 0 : index
    %c0_44 = arith.constant 0 : index
    %59 = vector.load %arg7[%c0_42, %c0_43, %c0_44] : memref<18x18x128xbf16, #tpu.memory_space<vmem>>, vector<18x1x128xbf16>
    tpu.vector_store %arg7[%c0_42, %c0_43, %c0_44], %58 {strides = array<i32>} : memref<18x18x128xbf16, #tpu.memory_space<vmem>>, vector<18x1x128xbf16>,
    %cst_45 = arith.constant 0.000000e+00 : bf16
    %60 = vector.broadcast %cst_45 : bf16 to vector<18x1x128xbf16>
    %c0_46 = arith.constant 0 : index
    %c17_47 = arith.constant 17 : index
    %c0_48 = arith.constant 0 : index
    %61 = vector.load %arg7[%c0_46, %c17_47, %c0_48] : memref<18x18x128xbf16, #tpu.memory_space<vmem>>, vector<18x1x128xbf16>
    tpu.vector_store %arg7[%c0_46, %c17_47, %c0_48], %60 {strides = array<i32>} : memref<18x18x128xbf16, #tpu.memory_space<vmem>>, vector<18x1x128xbf16>,
    %62 = arith.truncf %53 : vector<16x16x128xf32> to vector<16x16x128xbf16>
    %c1_49 = arith.constant 1 : index
    %c1_50 = arith.constant 1 : index
    %c0_51 = arith.constant 0 : index
    %63 = vector.load %arg7[%c1_49, %c1_50, %c0_51] : memref<18x18x128xbf16, #tpu.memory_space<vmem>>, vector<16x16x128xbf16>
    tpu.vector_store %arg7[%c1_49, %c1_50, %c0_51], %62 {strides = array<i32>} : memref<18x18x128xbf16, #tpu.memory_space<vmem>>, vector<16x16x128xbf16>,
    %cst_52 = arith.constant 0.000000e+00 : f32
    %64 = vector.broadcast %cst_52 : f32 to vector<16x16x128xf32>
    %c0_53 = arith.constant 0 : index
    %c0_54 = arith.constant 0 : index
    %c0_55 = arith.constant 0 : index
    %65 = vector.load %arg7[%c0_53, %c0_54, %c0_55] : memref<18x18x128xbf16, #tpu.memory_space<vmem>>, vector<16x16x128xbf16>
    %c0_56 = arith.constant 0 : index
    %c0_57 = arith.constant 0 : index
    %c0_58 = arith.constant 0 : index
    %66 = vector.load %arg4[%c0_56, %c0_57, %c0_58] : memref<9x128x128xbf16, #tpu.memory_space<vmem>>, vector<1x128x128xbf16>
    %67 = vector.shape_cast %66 : vector<1x128x128xbf16> to vector<128x128xbf16>
    %cst_59 = arith.constant dense<0.000000e+00> : vector<16x16x128xf32>
    %68 = tpu.matmul %65, %67, %cst_59 {dimension_numbers = #tpu.dot_dimension_numbers<[2], [0], [0, 1], [1], [0, 0, 0, 1, 1, 1], [], []>} : vector<16x16x128xbf16>, vector<128x128xbf16>, vector<16x16x128xf32> -> vector<16x16x128xf32>
    %69 = arith.addf %64, %68 : vector<16x16x128xf32>
    %c0_60 = arith.constant 0 : index
    %c1_61 = arith.constant 1 : index
    %c0_62 = arith.constant 0 : index
    %70 = vector.load %arg7[%c0_60, %c1_61, %c0_62] : memref<18x18x128xbf16, #tpu.memory_space<vmem>>, vector<16x16x128xbf16>
    %c1_63 = arith.constant 1 : index
    %c0_64 = arith.constant 0 : index
    %c0_65 = arith.constant 0 : index
    %71 = vector.load %arg4[%c1_63, %c0_64, %c0_65] : memref<9x128x128xbf16, #tpu.memory_space<vmem>>, vector<1x128x128xbf16>
    %72 = vector.shape_cast %71 : vector<1x128x128xbf16> to vector<128x128xbf16>
    %cst_66 = arith.constant dense<0.000000e+00> : vector<16x16x128xf32>
    %73 = tpu.matmul %70, %72, %cst_66 {dimension_numbers = #tpu.dot_dimension_numbers<[2], [0], [0, 1], [1], [0, 0, 0, 1, 1, 1], [], []>} : vector<16x16x128xbf16>, vector<128x128xbf16>, vector<16x16x128xf32> -> vector<16x16x128xf32>
    %74 = arith.addf %69, %73 : vector<16x16x128xf32>
    %c0_67 = arith.constant 0 : index
    %c2_68 = arith.constant 2 : index
    %c0_69 = arith.constant 0 : index
    %75 = vector.load %arg7[%c0_67, %c2_68, %c0_69] : memref<18x18x128xbf16, #tpu.memory_space<vmem>>, vector<16x16x128xbf16>
    %c2_70 = arith.constant 2 : index
    %c0_71 = arith.constant 0 : index
    %c0_72 = arith.constant 0 : index
    %76 = vector.load %arg4[%c2_70, %c0_71, %c0_72] : memref<9x128x128xbf16, #tpu.memory_space<vmem>>, vector<1x128x128xbf16>
    %77 = vector.shape_cast %76 : vector<1x128x128xbf16> to vector<128x128xbf16>
    %cst_73 = arith.constant dense<0.000000e+00> : vector<16x16x128xf32>
    %78 = tpu.matmul %75, %77, %cst_73 {dimension_numbers = #tpu.dot_dimension_numbers<[2], [0], [0, 1], [1], [0, 0, 0, 1, 1, 1], [], []>} : vector<16x16x128xbf16>, vector<128x128xbf16>, vector<16x16x128xf32> -> vector<16x16x128xf32>
    %79 = arith.addf %74, %78 : vector<16x16x128xf32>
    %c1_74 = arith.constant 1 : index
    %c0_75 = arith.constant 0 : index
    %c0_76 = arith.constant 0 : index
    %80 = vector.load %arg7[%c1_74, %c0_75, %c0_76] : memref<18x18x128xbf16, #tpu.memory_space<vmem>>, vector<16x16x128xbf16>
    %c3_77 = arith.constant 3 : index
    %c0_78 = arith.constant 0 : index
    %c0_79 = arith.constant 0 : index
    %81 = vector.load %arg4[%c3_77, %c0_78, %c0_79] : memref<9x128x128xbf16, #tpu.memory_space<vmem>>, vector<1x128x128xbf16>
    %82 = vector.shape_cast %81 : vector<1x128x128xbf16> to vector<128x128xbf16>
    %cst_80 = arith.constant dense<0.000000e+00> : vector<16x16x128xf32>
    %83 = tpu.matmul %80, %82, %cst_80 {dimension_numbers = #tpu.dot_dimension_numbers<[2], [0], [0, 1], [1], [0, 0, 0, 1, 1, 1], [], []>} : vector<16x16x128xbf16>, vector<128x128xbf16>, vector<16x16x128xf32> -> vector<16x16x128xf32>
    %84 = arith.addf %79, %83 : vector<16x16x128xf32>
    %c1_81 = arith.constant 1 : index
    %c1_82 = arith.constant 1 : index
    %c0_83 = arith.constant 0 : index
    %85 = vector.load %arg7[%c1_81, %c1_82, %c0_83] : memref<18x18x128xbf16, #tpu.memory_space<vmem>>, vector<16x16x128xbf16>
    %c4_84 = arith.constant 4 : index
    %c0_85 = arith.constant 0 : index
    %c0_86 = arith.constant 0 : index
    %86 = vector.load %arg4[%c4_84, %c0_85, %c0_86] : memref<9x128x128xbf16, #tpu.memory_space<vmem>>, vector<1x128x128xbf16>
    %87 = vector.shape_cast %86 : vector<1x128x128xbf16> to vector<128x128xbf16>
    %cst_87 = arith.constant dense<0.000000e+00> : vector<16x16x128xf32>
    %88 = tpu.matmul %85, %87, %cst_87 {dimension_numbers = #tpu.dot_dimension_numbers<[2], [0], [0, 1], [1], [0, 0, 0, 1, 1, 1], [], []>} : vector<16x16x128xbf16>, vector<128x128xbf16>, vector<16x16x128xf32> -> vector<16x16x128xf32>
    %89 = arith.addf %84, %88 : vector<16x16x128xf32>
    %c1_88 = arith.constant 1 : index
    %c2_89 = arith.constant 2 : index
    %c0_90 = arith.constant 0 : index
    %90 = vector.load %arg7[%c1_88, %c2_89, %c0_90] : memref<18x18x128xbf16, #tpu.memory_space<vmem>>, vector<16x16x128xbf16>
    %c5_91 = arith.constant 5 : index
    %c0_92 = arith.constant 0 : index
    %c0_93 = arith.constant 0 : index
    %91 = vector.load %arg4[%c5_91, %c0_92, %c0_93] : memref<9x128x128xbf16, #tpu.memory_space<vmem>>, vector<1x128x128xbf16>
    %92 = vector.shape_cast %91 : vector<1x128x128xbf16> to vector<128x128xbf16>
    %cst_94 = arith.constant dense<0.000000e+00> : vector<16x16x128xf32>
    %93 = tpu.matmul %90, %92, %cst_94 {dimension_numbers = #tpu.dot_dimension_numbers<[2], [0], [0, 1], [1], [0, 0, 0, 1, 1, 1], [], []>} : vector<16x16x128xbf16>, vector<128x128xbf16>, vector<16x16x128xf32> -> vector<16x16x128xf32>
    %94 = arith.addf %89, %93 : vector<16x16x128xf32>
    %c2_95 = arith.constant 2 : index
    %c0_96 = arith.constant 0 : index
    %c0_97 = arith.constant 0 : index
    %95 = vector.load %arg7[%c2_95, %c0_96, %c0_97] : memref<18x18x128xbf16, #tpu.memory_space<vmem>>, vector<16x16x128xbf16>
    %c6_98 = arith.constant 6 : index
    %c0_99 = arith.constant 0 : index
    %c0_100 = arith.constant 0 : index
    %96 = vector.load %arg4[%c6_98, %c0_99, %c0_100] : memref<9x128x128xbf16, #tpu.memory_space<vmem>>, vector<1x128x128xbf16>
    %97 = vector.shape_cast %96 : vector<1x128x128xbf16> to vector<128x128xbf16>
    %cst_101 = arith.constant dense<0.000000e+00> : vector<16x16x128xf32>
    %98 = tpu.matmul %95, %97, %cst_101 {dimension_numbers = #tpu.dot_dimension_numbers<[2], [0], [0, 1], [1], [0, 0, 0, 1, 1, 1], [], []>} : vector<16x16x128xbf16>, vector<128x128xbf16>, vector<16x16x128xf32> -> vector<16x16x128xf32>
    %99 = arith.addf %94, %98 : vector<16x16x128xf32>
    %c2_102 = arith.constant 2 : index
    %c1_103 = arith.constant 1 : index
    %c0_104 = arith.constant 0 : index
    %100 = vector.load %arg7[%c2_102, %c1_103, %c0_104] : memref<18x18x128xbf16, #tpu.memory_space<vmem>>, vector<16x16x128xbf16>
    %c7_105 = arith.constant 7 : index
    %c0_106 = arith.constant 0 : index
    %c0_107 = arith.constant 0 : index
    %101 = vector.load %arg4[%c7_105, %c0_106, %c0_107] : memref<9x128x128xbf16, #tpu.memory_space<vmem>>, vector<1x128x128xbf16>
    %102 = vector.shape_cast %101 : vector<1x128x128xbf16> to vector<128x128xbf16>
    %cst_108 = arith.constant dense<0.000000e+00> : vector<16x16x128xf32>
    %103 = tpu.matmul %100, %102, %cst_108 {dimension_numbers = #tpu.dot_dimension_numbers<[2], [0], [0, 1], [1], [0, 0, 0, 1, 1, 1], [], []>} : vector<16x16x128xbf16>, vector<128x128xbf16>, vector<16x16x128xf32> -> vector<16x16x128xf32>
    %104 = arith.addf %99, %103 : vector<16x16x128xf32>
    %c2_109 = arith.constant 2 : index
    %c2_110 = arith.constant 2 : index
    %c0_111 = arith.constant 0 : index
    %105 = vector.load %arg7[%c2_109, %c2_110, %c0_111] : memref<18x18x128xbf16, #tpu.memory_space<vmem>>, vector<16x16x128xbf16>
    %c8_112 = arith.constant 8 : index
    %c0_113 = arith.constant 0 : index
    %c0_114 = arith.constant 0 : index
    %106 = vector.load %arg4[%c8_112, %c0_113, %c0_114] : memref<9x128x128xbf16, #tpu.memory_space<vmem>>, vector<1x128x128xbf16>
    %107 = vector.shape_cast %106 : vector<1x128x128xbf16> to vector<128x128xbf16>
    %cst_115 = arith.constant dense<0.000000e+00> : vector<16x16x128xf32>
    %108 = tpu.matmul %105, %107, %cst_115 {dimension_numbers = #tpu.dot_dimension_numbers<[2], [0], [0, 1], [1], [0, 0, 0, 1, 1, 1], [], []>} : vector<16x16x128xbf16>, vector<128x128xbf16>, vector<16x16x128xf32> -> vector<16x16x128xf32>
    %109 = arith.addf %104, %108 : vector<16x16x128xf32>
    %c0_116 = arith.constant 0 : index
    %c0_117 = arith.constant 0 : index
    %110 = vector.load %arg5[%c0_116, %c0_117] : memref<1x128xf32, #tpu.memory_space<vmem>>, vector<1x128xf32>
    %111 = vector.shape_cast %110 : vector<1x128xf32> to vector<1x1x128xf32>
    %112 = vector.broadcast %111 : vector<1x1x128xf32> to vector<16x16x128xf32>
    %113 = arith.addf %109, %112 : vector<16x16x128xf32>
    %cst_118 = arith.constant 0.000000e+00 : f32
    %114 = vector.broadcast %cst_118 : f32 to vector<16x16x128xf32>
    %115 = arith.maximumf %113, %114 : vector<16x16x128xf32>
    %c0_119 = arith.constant 0 : index
    %c0_120 = arith.constant 0 : index
    %c0_121 = arith.constant 0 : index
    %c0_122 = arith.constant 0 : index
    %116 = vector.load %arg6[%c0_119, %c0_120, %c0_121, %c0_122] : memref<1x16x16x128xf32, #tpu.memory_space<vmem>>, vector<1x16x16x128xf32>
    %117 = vector.shape_cast %116 : vector<1x16x16x128xf32> to vector<16x16x128xf32>
    %118 = vector.shape_cast %115 : vector<16x16x128xf32> to vector<1x16x16x128xf32>
    tpu.vector_store %arg6[%c0_119, %c0_120, %c0_121, %c0_122], %118 {strides = array<i32>} : memref<1x16x16x128xf32, #tpu.memory_space<vmem>>, vector<1x16x16x128xf32>,
    return
  }
  func.func @transform_0(%arg0: i32) -> (i32, i32, i32, i32) {
    %c0_i32 = arith.constant 0 : i32
    %c0_i32_0 = arith.constant 0 : i32
    %c0_i32_1 = arith.constant 0 : i32
    %c0_i32_2 = arith.constant 0 : i32
    return %arg0, %c0_i32, %c0_i32_0, %c0_i32_1 : i32, i32, i32, i32
  }
  func.func @transform_1(%arg0: i32) -> (i32, i32, i32) {
    %c0_i32 = arith.constant 0 : i32
    %c0_i32_0 = arith.constant 0 : i32
    %c0_i32_1 = arith.constant 0 : i32
    %c0_i32_2 = arith.constant 0 : i32
    return %c0_i32, %c0_i32_0, %c0_i32_1 : i32, i32, i32
  }
  func.func @transform_2(%arg0: i32) -> (i32, i32) {
    %c0_i32 = arith.constant 0 : i32
    %c0_i32_0 = arith.constant 0 : i32
    %c0_i32_1 = arith.constant 0 : i32
    return %c0_i32, %c0_i32_0 : i32, i32
  }
  func.func @transform_3(%arg0: i32) -> (i32, i32, i32) {
    %c0_i32 = arith.constant 0 : i32
    %c0_i32_0 = arith.constant 0 : i32
    %c0_i32_1 = arith.constant 0 : i32
    %c0_i32_2 = arith.constant 0 : i32
    return %c0_i32, %c0_i32_0, %c0_i32_1 : i32, i32, i32
  }
  func.func @transform_4(%arg0: i32) -> (i32, i32) {
    %c0_i32 = arith.constant 0 : i32
    %c0_i32_0 = arith.constant 0 : i32
    %c0_i32_1 = arith.constant 0 : i32
    return %c0_i32, %c0_i32_0 : i32, i32
  }
  func.func @transform_5(%arg0: i32) -> (i32, i32, i32, i32) {
    %c0_i32 = arith.constant 0 : i32
    %c0_i32_0 = arith.constant 0 : i32
    %c0_i32_1 = arith.constant 0 : i32
    %c0_i32_2 = arith.constant 0 : i32
    return %arg0, %c0_i32, %c0_i32_0, %c0_i32_1 : i32, i32, i32, i32
  }
}

</mosaic_0001>

<llo_original>
// kernel: conv_block.1
$region0: #{conv_block.1}
  #allocation0 [shape = 'u32[]', space=smem, size = 0x4, offset = 0x4, fixed_abs, tag = 'smem constant byte address 0x4 - core index']
  #allocation1 [shape = 'u32[144,128]{1,0:T(1,128)}', space=vmem, size = 0x12000, scoped, tag = 'internal scratch']
  #allocation2 [shape = 'bf16[18,18,128]{2,1,0:T(8,128)(2,1)}', space=vmem, size = 0x1b000, scoped, tag = 'scratch operand']
  %s0 = inlined_call_operand.vmem [shape: bf16[2,18,18,4], index: 0, kind: input, shape index: {}]
  %s1 = inlined_call_operand.vmem [shape: bf16[9,4,128], index: 1, kind: input, shape index: {}]
  %s2 = inlined_call_operand.vmem [shape: f32[1,128], index: 2, kind: input, shape index: {}]
  %s3 = inlined_call_operand.vmem [shape: bf16[9,128,128], index: 3, kind: input, shape index: {}]
  %s4 = inlined_call_operand.vmem [shape: f32[1,128], index: 4, kind: input, shape index: {}]
  %s5 = inlined_call_operand.vmem [shape: f32[2,16,16,128], index: 5, kind: output, shape index: {}]
  %s6 = sld [smem:[#allocation0]]
  $region53: #{conv_block.1} parent=0
    _
  %s8 = ssub.s32 1, %s6
  %s9 = scalar_select 0, %s8, %s6
  loop: start=0, step=1, limit=4
  $region2: #{conv_block.1} parent=0 // loop_pre_header
    _
  $region3: #{conv_block.1} parent=0 // loop_header
    %s11 = sphi 0, %s15
    %p12 = scmp.ge.s32.totalorder %s11, 4
    %s21 = sphi 0, %s23
    %s24 = sphi 0, %s21
    %s25 = sphi 0, %s24
    %s41 = sphi 0, %s25
    %s45 = sphi 0, %s45
    %s47 = sphi 0, %s45
    %s48 = sphi 0, %s47
    %s62 = sphi 0, %s48
    %s66 = sphi 0, %s66
    %s68 = sphi 0, %s66
    %s69 = sphi 0, %s68
    %s83 = sphi 0, %s69
    %s87 = sphi 0, %s87
    %s89 = sphi 0, %s87
    %s90 = sphi 0, %s89
    %s104 = sphi 0, %s90
    %s108 = sphi 0, %s108
    %s110 = sphi 0, %s108
    %s111 = sphi 0, %s110
    %s125 = sphi 0, %s111
    %s131 = sphi 0, %s133
    %s134 = sphi 0, %s131
    %s135 = sphi 0, %s134
    %s151 = sphi 0, %s135
  $region4: #{conv_block.1} parent=0 // loop_header_branch
    %14 = sbr.rel (%p12) target = $region8
  $region5: #{conv_block.1} parent=0 // loop_body
    %s16 = ssub.s32 %s11, 1
    %s17 = ssub.s32 %s11, 2
    %s18 = sadd.s32 %s11, 1
    %s19 = ssub.s32 %s11, %s18
    %p20 = scmp.eq.s32.totalorder %s19, 0
    %s22 = sadd.s32 %s21, 1
    %s23 = scalar_select %p20, %s21, %s22
    %p26 = pneg %p20
    %p27 = scmp.eq.s32.totalorder %s11, 1
    %p28 = por %p26, %p27
    %p29 = scmp.ne.s32.totalorder %s21, %s24
    %p30 = scmp.eq.s32.totalorder %s11, 0
    %p31 = por %p29, %p30
    %p32 = scmp.ne.s32.totalorder %s21, %s24
    %p33 = scmp.eq.s32.totalorder %s16, 1
    %p34 = por %p32, %p33
    %p35 = scmp.ne.s32.totalorder %s24, %s25
    %p36 = scmp.eq.s32.totalorder %s16, 0
    %p37 = por %p35, %p36
    %p38 = scmp.ne.s32.totalorder %s24, %s25
    %p39 = scmp.eq.s32.totalorder %s17, 1
    %p40 = por %p38, %p39
    %p42 = scmp.ne.s32.totalorder %s25, %s41
    %p43 = scmp.eq.s32.totalorder %s17, 0
    %p44 = por %p42, %p43
    %s46 = sadd.s32 %s45, 1
    %p49 = scmp.eq.s32.totalorder %s11, 1
    %p50 = scmp.ne.s32.totalorder %s45, %s47
    %p51 = scmp.eq.s32.totalorder %s11, 0
    %p52 = por %p50, %p51
    %p53 = scmp.ne.s32.totalorder %s45, %s47
    %p54 = scmp.eq.s32.totalorder %s16, 1
    %p55 = por %p53, %p54
    %p56 = scmp.ne.s32.totalorder %s47, %s48
    %p57 = scmp.eq.s32.totalorder %s16, 0
    %p58 = por %p56, %p57
    %p59 = scmp.ne.s32.totalorder %s47, %s48
    %p60 = scmp.eq.s32.totalorder %s17, 1
    %p61 = por %p59, %p60
    %p63 = scmp.ne.s32.totalorder %s48, %s62
    %p64 = scmp.eq.s32.totalorder %s17, 0
    %p65 = por %p63, %p64
    %s67 = sadd.s32 %s66, 1
    %p70 = scmp.eq.s32.totalorder %s11, 1
    %p71 = scmp.ne.s32.totalorder %s66, %s68
    %p72 = scmp.eq.s32.totalorder %s11, 0
    %p73 = por %p71, %p72
    %p74 = scmp.ne.s32.totalorder %s66, %s68
    %p75 = scmp.eq.s32.totalorder %s16, 1
    %p76 = por %p74, %p75
    %p77 = scmp.ne.s32.totalorder %s68, %s69
    %p78 = scmp.eq.s32.totalorder %s16, 0
    %p79 = por %p77, %p78
    %p80 = scmp.ne.s32.totalorder %s68, %s69
    %p81 = scmp.eq.s32.totalorder %s17, 1
    %p82 = por %p80, %p81
    %p84 = scmp.ne.s32.totalorder %s69, %s83
    %p85 = scmp.eq.s32.totalorder %s17, 0
    %p86 = por %p84, %p85
    %s88 = sadd.s32 %s87, 1
    %p91 = scmp.eq.s32.totalorder %s11, 1
    %p92 = scmp.ne.s32.totalorder %s87, %s89
    %p93 = scmp.eq.s32.totalorder %s11, 0
    %p94 = por %p92, %p93
    %p95 = scmp.ne.s32.totalorder %s87, %s89
    %p96 = scmp.eq.s32.totalorder %s16, 1
    %p97 = por %p95, %p96
    %p98 = scmp.ne.s32.totalorder %s89, %s90
    %p99 = scmp.eq.s32.totalorder %s16, 0
    %p100 = por %p98, %p99
    %p101 = scmp.ne.s32.totalorder %s89, %s90
    %p102 = scmp.eq.s32.totalorder %s17, 1
    %p103 = por %p101, %p102
    %p105 = scmp.ne.s32.totalorder %s90, %s104
    %p106 = scmp.eq.s32.totalorder %s17, 0
    %p107 = por %p105, %p106
    %s109 = sadd.s32 %s108, 1
    %p112 = scmp.eq.s32.totalorder %s11, 1
    %p113 = scmp.ne.s32.totalorder %s108, %s110
    %p114 = scmp.eq.s32.totalorder %s11, 0
    %p115 = por %p113, %p114
    %p116 = scmp.ne.s32.totalorder %s108, %s110
    %p117 = scmp.eq.s32.totalorder %s16, 1
    %p118 = por %p116, %p117
    %p119 = scmp.ne.s32.totalorder %s110, %s111
    %p120 = scmp.eq.s32.totalorder %s16, 0
    %p121 = por %p119, %p120
    %p122 = scmp.ne.s32.totalorder %s110, %s111
    %p123 = scmp.eq.s32.totalorder %s17, 1
    %p124 = por %p122, %p123
    %p126 = scmp.ne.s32.totalorder %s111, %s125
    %p127 = scmp.eq.s32.totalorder %s17, 0
    %p128 = por %p126, %p127
    %s129 = ssub.s32 %s11, %s18
    %p130 = scmp.eq.s32.totalorder %s129, 0
    %s132 = sadd.s32 %s131, 1
    %s133 = scalar_select %p130, %s131, %s132
    %p136 = pneg %p130
    %p137 = scmp.eq.s32.totalorder %s11, 1
    %p138 = por %p136, %p137
    %p139 = scmp.ne.s32.totalorder %s131, %s134
    %p140 = scmp.eq.s32.totalorder %s11, 0
    %p141 = por %p139, %p140
    %p142 = scmp.ne.s32.totalorder %s131, %s134
    %p143 = scmp.eq.s32.totalorder %s16, 1
    %p144 = por %p142, %p143
    %p145 = scmp.ne.s32.totalorder %s134, %s135
    %p146 = scmp.eq.s32.totalorder %s16, 0
    %p147 = por %p145, %p146
    %p148 = scmp.ne.s32.totalorder %s134, %s135
    %p149 = scmp.eq.s32.totalorder %s17, 1
    %p150 = por %p148, %p149
    %p152 = scmp.ne.s32.totalorder %s135, %s151
    %p153 = scmp.eq.s32.totalorder %s17, 0
    %p154 = por %p152, %p153
    %p155 = scmp.le.s32.totalorder 1, %s11
    %p156 = scmp.lt.s32.totalorder %s11, 3
    %p157 = pnand %p155, %p156
    %p158 = pneg %p157
    // Predicated region
    $region9: #{conv_block.1} parent=5 // pred_check
      _
    $region10: #{conv_block.1} parent=5 // pred_check_branch
      %160 = sbr.rel (%p157) target = $region12
    $region11: #{conv_block.1} parent=5 // pred_region
      %s161 = ssub.s32 %s11, 1
      // Predicated region
      $region13: #{conv_block.1} parent=11 // pred_check
        %p162 = pneg %p58
      $region14: #{conv_block.1} parent=11 // pred_check_branch
        %164 = sbr.rel (%p162) target = $region16
      $region15: #{conv_block.1} parent=11 // pred_region
        _
      $region16: #{conv_block.1} parent=11 // pred_fallthru
        _
      // Predicated region
      $region17: #{conv_block.1} parent=11 // pred_check
        %p165 = pneg %p79
      $region18: #{conv_block.1} parent=11 // pred_check_branch
        %167 = sbr.rel (%p165) target = $region20
      $region19: #{conv_block.1} parent=11 // pred_region
        _
      $region20: #{conv_block.1} parent=11 // pred_fallthru
        _
      // Predicated region
      $region21: #{conv_block.1} parent=11 // pred_check
        %p168 = pneg %p100
      $region22: #{conv_block.1} parent=11 // pred_check_branch
        %170 = sbr.rel (%p168) target = $region24
      $region23: #{conv_block.1} parent=11 // pred_region
        _
      $region24: #{conv_block.1} parent=11 // pred_fallthru
        _
      // Predicated region
      $region25: #{conv_block.1} parent=11 // pred_check
        %p171 = pneg %p121
      $region26: #{conv_block.1} parent=11 // pred_check_branch
        %173 = sbr.rel (%p171) target = $region28
      $region27: #{conv_block.1} parent=11 // pred_region
        _
      $region28: #{conv_block.1} parent=11 // pred_fallthru
        _
    $region12: #{conv_block.1} parent=5 // pred_fallthru
      _
    %p174 = scmp.lt.s32.totalorder %s11, 2
    // Predicated region
    $region29: #{conv_block.1} parent=5 // pred_check
      %p175 = pneg %p174
    $region30: #{conv_block.1} parent=5 // pred_check_branch
      %177 = sbr.rel (%p175) target = $region32
    $region31: #{conv_block.1} parent=5 // pred_region
      // Predicated region
      $region33: #{conv_block.1} parent=31 // pred_check
        %p178 = pneg %p31
      $region34: #{conv_block.1} parent=31 // pred_check_branch
        %180 = sbr.rel (%p178) target = $region36
      $region35: #{conv_block.1} parent=31 // pred_region
        %p181 = scmp.lt.s32.totalorder %s11, 1
        %s182 = scalar_select %p181, %s11, 1
        %s183 = smul.addr %s182, 54
        %s184 = smul.addr %s183, 4
        %s185 = scalar_lea.vmem %s0, %s184
      $region36: #{conv_block.1} parent=31 // pred_fallthru
        _
    $region32: #{conv_block.1} parent=5 // pred_fallthru
      _
    %p186 = scmp.le.s32.totalorder 1, %s11
    %p187 = scmp.lt.s32.totalorder %s11, 3
    %p188 = pnand %p186, %p187
    %p189 = pneg %p188
    // Predicated region
    $region37: #{conv_block.1} parent=5 // pred_check
      _
    $region38: #{conv_block.1} parent=5 // pred_check_branch
      %191 = sbr.rel (%p188) target = $region40
    $region39: #{conv_block.1} parent=5 // pred_region
      %s192 = ssub.s32 %s11, 1
      %p193 = scmp.lt.s32.totalorder %s16, 1
      %s194 = scalar_select %p193, %s16, 1
      %s195 = smul.addr %s194, 54
      %s196 = smul.addr %s195, 4
      %s197 = scalar_lea.vmem %s0, %s196
      %p198 = pneg %p37
      %p199 = pneg %p34
      %p200 = pneg %p58
      %p201 = pneg %p55
      %p202 = pneg %p79
      %p203 = pneg %p76
      %p204 = pneg %p100
      %p205 = pneg %p97
      %p206 = pneg %p121
      %p207 = pneg %p118
      %p208 = pneg %p147
      %p209 = pneg %p144
      %p210 = scmp.lt.s32.totalorder %s16, 1
      %s211 = scalar_select %p210, %s16, 1
      %s212 = smul.addr %s211, 32
      %s213 = smul.addr %s212, 8
      %s214 = scalar_lea.vmem %s5, %s213
      %p215 = scmp.lt.s32.totalorder %s16, 1
      %s216 = scalar_select %p215, %s16, 1
      %s217 = smul.addr %s216, 54
      %s218 = smul.addr %s217, 4
      %s219 = scalar_lea.vmem %s0, %s218
      %p220 = scmp.lt.s32.totalorder %s16, 1
      %s221 = scalar_select %p220, %s16, 1
      %s222 = smul.addr %s221, 32
      %s223 = smul.addr %s222, 8
      %s224 = scalar_lea.vmem %s5, %s223
      %v226 = vld [vmem:[%s219] sm:$0xf]
      %v227 = vld [vmem:[%s219 + $0x4] sm:$0xf]
      %v228 = vld [vmem:[%s219 + $0x8] sm:$0x1]
      %v229 = vld [vmem:[%s219 + $0xc] sm:$0xf]
      %v230 = vld [vmem:[%s219 + $0x10] sm:$0xf]
      %v231 = vld [vmem:[%s219 + $0x14] sm:$0x1]
      %v232 = vld [vmem:[%s219 + $0x18] sm:$0xf]
      %v233 = vld [vmem:[%s219 + $0x1c] sm:$0xf]
      %v234 = vld [vmem:[%s219 + $0x20] sm:$0x1]
      %v235 = vld [vmem:[%s219 + $0x24] sm:$0xf]
      %v236 = vld [vmem:[%s219 + $0x28] sm:$0xf]
      %v237 = vld [vmem:[%s219 + $0x2c] sm:$0x1]
      %v238 = vld [vmem:[%s219 + $0x30] sm:$0xf]
      %v239 = vld [vmem:[%s219 + $0x34] sm:$0xf]
      %v240 = vld [vmem:[%s219 + $0x38] sm:$0x1]
      %v241 = vld [vmem:[%s219 + $0x3c] sm:$0xf]
      %v242 = vld [vmem:[%s219 + $0x40] sm:$0xf]
      %v243 = vld [vmem:[%s219 + $0x44] sm:$0x1]
      %v244 = vld [vmem:[%s219 + $0x48] sm:$0xf]
      %v245 = vld [vmem:[%s219 + $0x4c] sm:$0xf]
      %v246 = vld [vmem:[%s219 + $0x50] sm:$0x1]
      %v247 = vld [vmem:[%s219 + $0x54] sm:$0xf]
      %v248 = vld [vmem:[%s219 + $0x58] sm:$0xf]
      %v249 = vld [vmem:[%s219 + $0x5c] sm:$0x1]
      %v250 = vld [vmem:[%s219 + $0x60] sm:$0xf]
      %v251 = vld [vmem:[%s219 + $0x64] sm:$0xf]
      %v252 = vld [vmem:[%s219 + $0x68] sm:$0x1]
      %v253 = vld [vmem:[%s219 + $0x6c] sm:$0xf]
      %v254 = vld [vmem:[%s219 + $0x70] sm:$0xf]
      %v255 = vld [vmem:[%s219 + $0x74] sm:$0x1]
      %v256 = vld [vmem:[%s219 + $0x78] sm:$0xf]
      %v257 = vld [vmem:[%s219 + $0x7c] sm:$0xf]
      %v258 = vld [vmem:[%s219 + $0x80] sm:$0x1]
      %v259 = vld [vmem:[%s219 + $0x84] sm:$0xf]
      %v260 = vld [vmem:[%s219 + $0x88] sm:$0xf]
      %v261 = vld [vmem:[%s219 + $0x8c] sm:$0x1]
      %v262 = vld [vmem:[%s219 + $0x90] sm:$0xf]
      %v263 = vld [vmem:[%s219 + $0x94] sm:$0xf]
      %v264 = vld [vmem:[%s219 + $0x98] sm:$0x1]
      %v265 = vld [vmem:[%s219 + $0x9c] sm:$0xf]
      %v266 = vld [vmem:[%s219 + $0xa0] sm:$0xf]
      %v267 = vld [vmem:[%s219 + $0xa4] sm:$0x1]
      %v268 = vld [vmem:[%s219 + $0xa8] sm:$0xf]
      %v269 = vld [vmem:[%s219 + $0xac] sm:$0xf]
      %v270 = vld [vmem:[%s219 + $0xb0] sm:$0x1]
      %v271 = vld [vmem:[%s219 + $0xb4] sm:$0xf]
      %v272 = vld [vmem:[%s219 + $0xb8] sm:$0xf]
      %v273 = vld [vmem:[%s219 + $0xbc] sm:$0x1]
      %v274 = vld [vmem:[%s219 + $0xc0] sm:$0xf]
      %v275 = vld [vmem:[%s219 + $0xc4] sm:$0xf]
      %v276 = vld [vmem:[%s219 + $0xc8] sm:$0x1]
      %v277 = vld [vmem:[%s219 + $0xcc] sm:$0xf]
      %v278 = vld [vmem:[%s219 + $0xd0] sm:$0xf]
      %v279 = vld [vmem:[%s219 + $0xd4] sm:$0x1]
      %v280 = vld [vmem:[%s1] sm:$0x3]
      %s281 = scalar_lea.vmem %s1, 2
      %v282 = vld [vmem:[%s281] sm:$0x3]
      %vm283 = vsmask.f32 3328
      %vm284 = vsmask.f32 7440
      %vm285 = vmor %vm283, %vm284
      %v287 = vshrl.u32 %v226, 16
      %v289 = vrot.slane %v287, 4
      %v290 = vshll.u32 %v226, 16
      %v292 = vrot.slane %v290, 5
      %v293 = vor.u32 %v289, %v292
      %v294 = vrot.slane %v293, 4
      %v296 = vshll.u32 %v227, 16
      %v298 = vrot.slane %v296, 5
      %v299 = vsel %vm285, %v294, %v298
      %v300 = vshrl.u32 %v227, 16
      %v302 = vrot.slane %v300, 4
      %v303 = vor.u32 %v302, %v298
      %v304 = vrot.slane %v303, 4
      %v306 = vshll.u32 %v228, 16
      %v308 = vrot.slane %v306, 5
      %v309 = vsel %vm285, %v304, %v308
      %v311 = vshrl.u32 %v229, 16
      %v313 = vrot.slane %v311, 4
      %v314 = vshll.u32 %v229, 16
      %v316 = vrot.slane %v314, 5
      %v317 = vor.u32 %v313, %v316
      %v318 = vrot.slane %v317, 4
      %v320 = vshll.u32 %v230, 16
      %v322 = vrot.slane %v320, 5
      %v323 = vsel %vm285, %v318, %v322
      %v324 = vshrl.u32 %v230, 16
      %v326 = vrot.slane %v324, 4
      %v327 = vor.u32 %v326, %v322
      %v328 = vrot.slane %v327, 4
      %v330 = vshll.u32 %v231, 16
      %v332 = vrot.slane %v330, 5
      %v333 = vsel %vm285, %v328, %v332
      %v335 = vshrl.u32 %v232, 16
      %v337 = vrot.slane %v335, 4
      %v338 = vshll.u32 %v232, 16
      %v340 = vrot.slane %v338, 5
      %v341 = vor.u32 %v337, %v340
      %v342 = vrot.slane %v341, 4
      %v344 = vshll.u32 %v233, 16
      %v346 = vrot.slane %v344, 5
      %v347 = vsel %vm285, %v342, %v346
      %v348 = vshrl.u32 %v233, 16
      %v350 = vrot.slane %v348, 4
      %v351 = vor.u32 %v350, %v346
      %v352 = vrot.slane %v351, 4
      %v354 = vshll.u32 %v234, 16
      %v356 = vrot.slane %v354, 5
      %v357 = vsel %vm285, %v352, %v356
      %v359 = vshrl.u32 %v235, 16
      %v361 = vrot.slane %v359, 4
      %v362 = vshll.u32 %v235, 16
      %v364 = vrot.slane %v362, 5
      %v365 = vor.u32 %v361, %v364
      %v366 = vrot.slane %v365, 4
      %v368 = vshll.u32 %v236, 16
      %v370 = vrot.slane %v368, 5
      %v371 = vsel %vm285, %v366, %v370
      %v372 = vshrl.u32 %v236, 16
      %v374 = vrot.slane %v372, 4
      %v375 = vor.u32 %v374, %v370
      %v376 = vrot.slane %v375, 4
      %v378 = vshll.u32 %v237, 16
      %v380 = vrot.slane %v378, 5
      %v381 = vsel %vm285, %v376, %v380
      %v383 = vshrl.u32 %v238, 16
      %v385 = vrot.slane %v383, 4
      %v386 = vshll.u32 %v238, 16
      %v388 = vrot.slane %v386, 5
      %v389 = vor.u32 %v385, %v388
      %v390 = vrot.slane %v389, 4
      %v392 = vshll.u32 %v239, 16
      %v394 = vrot.slane %v392, 5
      %v395 = vsel %vm285, %v390, %v394
      %v396 = vshrl.u32 %v239, 16
      %v398 = vrot.slane %v396, 4
      %v399 = vor.u32 %v398, %v394
      %v400 = vrot.slane %v399, 4
      %v402 = vshll.u32 %v240, 16
      %v404 = vrot.slane %v402, 5
      %v405 = vsel %vm285, %v400, %v404
      %v407 = vshrl.u32 %v241, 16
      %v409 = vrot.slane %v407, 4
      %v410 = vshll.u32 %v241, 16
      %v412 = vrot.slane %v410, 5
      %v413 = vor.u32 %v409, %v412
      %v414 = vrot.slane %v413, 4
      %v416 = vshll.u32 %v242, 16
      %v418 = vrot.slane %v416, 5
      %v419 = vsel %vm285, %v414, %v418
      %v420 = vshrl.u32 %v242, 16
      %v422 = vrot.slane %v420, 4
      %v423 = vor.u32 %v422, %v418
      %v424 = vrot.slane %v423, 4
      %v426 = vshll.u32 %v243, 16
      %v428 = vrot.slane %v426, 5
      %v429 = vsel %vm285, %v424, %v428
      %v431 = vshrl.u32 %v244, 16
      %v433 = vrot.slane %v431, 4
      %v434 = vshll.u32 %v244, 16
      %v436 = vrot.slane %v434, 5
      %v437 = vor.u32 %v433, %v436
      %v438 = vrot.slane %v437, 4
      %v440 = vshll.u32 %v245, 16
      %v442 = vrot.slane %v440, 5
      %v443 = vsel %vm285, %v438, %v442
      %v444 = vshrl.u32 %v245, 16
      %v446 = vrot.slane %v444, 4
      %v447 = vor.u32 %v446, %v442
      %v448 = vrot.slane %v447, 4
      %v450 = vshll.u32 %v246, 16
      %v452 = vrot.slane %v450, 5
      %v453 = vsel %vm285, %v448, %v452
      %v455 = vshrl.u32 %v247, 16
      %v457 = vrot.slane %v455, 4
      %v458 = vshll.u32 %v247, 16
      %v460 = vrot.slane %v458, 5
      %v461 = vor.u32 %v457, %v460
      %v462 = vrot.slane %v461, 4
      %v464 = vshll.u32 %v248, 16
      %v466 = vrot.slane %v464, 5
      %v467 = vsel %vm285, %v462, %v466
      %v468 = vshrl.u32 %v248, 16
      %v470 = vrot.slane %v468, 4
      %v471 = vor.u32 %v470, %v466
      %v472 = vrot.slane %v471, 4
      %v474 = vshll.u32 %v249, 16
      %v476 = vrot.slane %v474, 5
      %v477 = vsel %vm285, %v472, %v476
      %v479 = vshrl.u32 %v250, 16
      %v481 = vrot.slane %v479, 4
      %v482 = vshll.u32 %v250, 16
      %v484 = vrot.slane %v482, 5
      %v485 = vor.u32 %v481, %v484
      %v486 = vrot.slane %v485, 4
      %v488 = vshll.u32 %v251, 16
      %v490 = vrot.slane %v488, 5
      %v491 = vsel %vm285, %v486, %v490
      %v492 = vshrl.u32 %v251, 16
      %v494 = vrot.slane %v492, 4
      %v495 = vor.u32 %v494, %v490
      %v496 = vrot.slane %v495, 4
      %v498 = vshll.u32 %v252, 16
      %v500 = vrot.slane %v498, 5
      %v501 = vsel %vm285, %v496, %v500
      %v503 = vshrl.u32 %v253, 16
      %v505 = vrot.slane %v503, 4
      %v506 = vshll.u32 %v253, 16
      %v508 = vrot.slane %v506, 5
      %v509 = vor.u32 %v505, %v508
      %v510 = vrot.slane %v509, 4
      %v512 = vshll.u32 %v254, 16
      %v514 = vrot.slane %v512, 5
      %v515 = vsel %vm285, %v510, %v514
      %v516 = vshrl.u32 %v254, 16
      %v518 = vrot.slane %v516, 4
      %v519 = vor.u32 %v518, %v514
      %v520 = vrot.slane %v519, 4
      %v522 = vshll.u32 %v255, 16
      %v524 = vrot.slane %v522, 5
      %v525 = vsel %vm285, %v520, %v524
      %v527 = vshrl.u32 %v256, 16
      %v529 = vrot.slane %v527, 4
      %v530 = vshll.u32 %v256, 16
      %v532 = vrot.slane %v530, 5
      %v533 = vor.u32 %v529, %v532
      %v534 = vrot.slane %v533, 4
      %v536 = vshll.u32 %v257, 16
      %v538 = vrot.slane %v536, 5
      %v539 = vsel %vm285, %v534, %v538
      %v540 = vshrl.u32 %v257, 16
      %v542 = vrot.slane %v540, 4
      %v543 = vor.u32 %v542, %v538
      %v544 = vrot.slane %v543, 4
      %v546 = vshll.u32 %v258, 16
      %v548 = vrot.slane %v546, 5
      %v549 = vsel %vm285, %v544, %v548
      %v551 = vshrl.u32 %v259, 16
      %v553 = vrot.slane %v551, 4
      %v554 = vshll.u32 %v259, 16
      %v556 = vrot.slane %v554, 5
      %v557 = vor.u32 %v553, %v556
      %v558 = vrot.slane %v557, 4
      %v560 = vshll.u32 %v260, 16
      %v562 = vrot.slane %v560, 5
      %v563 = vsel %vm285, %v558, %v562
      %v564 = vshrl.u32 %v260, 16
      %v566 = vrot.slane %v564, 4
      %v567 = vor.u32 %v566, %v562
      %v568 = vrot.slane %v567, 4
      %v570 = vshll.u32 %v261, 16
      %v572 = vrot.slane %v570, 5
      %v573 = vsel %vm285, %v568, %v572
      %v575 = vshrl.u32 %v262, 16
      %v577 = vrot.slane %v575, 4
      %v578 = vshll.u32 %v262, 16
      %v580 = vrot.slane %v578, 5
      %v581 = vor.u32 %v577, %v580
      %v582 = vrot.slane %v581, 4
      %v584 = vshll.u32 %v263, 16
      %v586 = vrot.slane %v584, 5
      %v587 = vsel %vm285, %v582, %v586
      %v588 = vshrl.u32 %v263, 16
      %v590 = vrot.slane %v588, 4
      %v591 = vor.u32 %v590, %v586
      %v592 = vrot.slane %v591, 4
      %v594 = vshll.u32 %v264, 16
      %v596 = vrot.slane %v594, 5
      %v597 = vsel %vm285, %v592, %v596
      %v599 = vshrl.u32 %v265, 16
      %v601 = vrot.slane %v599, 4
      %v602 = vshll.u32 %v265, 16
      %v604 = vrot.slane %v602, 5
      %v605 = vor.u32 %v601, %v604
      %v606 = vrot.slane %v605, 4
      %v608 = vshll.u32 %v266, 16
      %v610 = vrot.slane %v608, 5
      %v611 = vsel %vm285, %v606, %v610
      %v612 = vshrl.u32 %v266, 16
      %v614 = vrot.slane %v612, 4
      %v615 = vor.u32 %v614, %v610
      %v616 = vrot.slane %v615, 4
      %v618 = vshll.u32 %v267, 16
      %v620 = vrot.slane %v618, 5
      %v621 = vsel %vm285, %v616, %v620
      %v623 = vshrl.u32 %v268, 16
      %v625 = vrot.slane %v623, 4
      %v626 = vshll.u32 %v268, 16
      %v628 = vrot.slane %v626, 5
      %v629 = vor.u32 %v625, %v628
      %v630 = vrot.slane %v629, 4
      %v632 = vshll.u32 %v269, 16
      %v634 = vrot.slane %v632, 5
      %v635 = vsel %vm285, %v630, %v634
      %v636 = vshrl.u32 %v269, 16
      %v638 = vrot.slane %v636, 4
      %v639 = vor.u32 %v638, %v634
      %v640 = vrot.slane %v639, 4
      %v642 = vshll.u32 %v270, 16
      %v644 = vrot.slane %v642, 5
      %v645 = vsel %vm285, %v640, %v644
      %v647 = vshrl.u32 %v271, 16
      %v649 = vrot.slane %v647, 4
      %v650 = vshll.u32 %v271, 16
      %v652 = vrot.slane %v650, 5
      %v653 = vor.u32 %v649, %v652
      %v654 = vrot.slane %v653, 4
      %v656 = vshll.u32 %v272, 16
      %v658 = vrot.slane %v656, 5
      %v659 = vsel %vm285, %v654, %v658
      %v660 = vshrl.u32 %v272, 16
      %v662 = vrot.slane %v660, 4
      %v663 = vor.u32 %v662, %v658
      %v664 = vrot.slane %v663, 4
      %v666 = vshll.u32 %v273, 16
      %v668 = vrot.slane %v666, 5
      %v669 = vsel %vm285, %v664, %v668
      %v670 = vunpack.c.l.b16 %v299
      %v671 = vunpack.c.l.b16 %v309
      %v672 = vunpack.c.l.b16 %v323
      %v673 = vunpack.c.l.b16 %v333
      %v674 = vunpack.c.l.b16 %v347
      %v675 = vunpack.c.l.b16 %v357
      %v676 = vunpack.c.l.b16 %v371
      %v677 = vunpack.c.l.b16 %v381
      %v678 = vunpack.c.l.b16 %v395
      %v679 = vunpack.c.l.b16 %v405
      %v680 = vunpack.c.l.b16 %v419
      %v681 = vunpack.c.l.b16 %v429
      %v682 = vunpack.c.l.b16 %v443
      %v683 = vunpack.c.l.b16 %v453
      %v684 = vunpack.c.l.b16 %v467
      %v685 = vunpack.c.l.b16 %v477
      %v686 = vunpack.c.l.b16 %v491
      %v687 = vunpack.c.l.b16 %v501
      %v688 = vunpack.c.l.b16 %v515
      %v689 = vunpack.c.l.b16 %v525
      %v690 = vunpack.c.l.b16 %v539
      %v691 = vunpack.c.l.b16 %v549
      %v692 = vunpack.c.l.b16 %v563
      %v693 = vunpack.c.l.b16 %v573
      %v694 = vunpack.c.l.b16 %v587
      %v695 = vunpack.c.l.b16 %v597
      %v696 = vunpack.c.l.b16 %v611
      %v697 = vunpack.c.l.b16 %v621
      %v698 = vunpack.c.l.b16 %v635
      %v699 = vunpack.c.l.b16 %v645
      %v700 = vunpack.c.l.b16 %v659
      %v701 = vunpack.c.l.b16 %v669
      %v702 = vpack.c.b16 %v671, %v670
      %v703 = vpack.c.b16 %v673, %v672
      %v704 = vpack.c.b16 %v675, %v674
      %v705 = vpack.c.b16 %v677, %v676
      %v706 = vpack.c.b16 %v679, %v678
      %v707 = vpack.c.b16 %v681, %v680
      %v708 = vpack.c.b16 %v683, %v682
      %v709 = vpack.c.b16 %v685, %v684
      %v710 = vpack.c.b16 %v687, %v686
      %v711 = vpack.c.b16 %v689, %v688
      %v712 = vpack.c.b16 %v691, %v690
      %v713 = vpack.c.b16 %v693, %v692
      %v714 = vpack.c.b16 %v695, %v694
      %v715 = vpack.c.b16 %v697, %v696
      %v716 = vpack.c.b16 %v699, %v698
      %v717 = vpack.c.b16 %v701, %v700
      %vm718 = vcmask 31744
      %v720 = vsel %vm718, %v702, 0
      %v723 = vsel %vm718, %v703, 0
      %v726 = vsel %vm718, %v704, 0
      %v729 = vsel %vm718, %v705, 0
      %v732 = vsel %vm718, %v706, 0
      %v735 = vsel %vm718, %v707, 0
      %v738 = vsel %vm718, %v708, 0
      %v741 = vsel %vm718, %v709, 0
      %v744 = vsel %vm718, %v710, 0
      %v747 = vsel %vm718, %v711, 0
      %v750 = vsel %vm718, %v712, 0
      %v753 = vsel %vm718, %v713, 0
      %v756 = vsel %vm718, %v714, 0
      %v759 = vsel %vm718, %v715, 0
      %v762 = vsel %vm718, %v716, 0
      %v765 = vsel %vm718, %v717, 0
      %vm767 = vcmask 1041408
      %v769 = vsel %vm767, %v282, 0
      %771 = vmatprep.subr.bf16.mxu0 0
      %772 = vmatpush1.bf16.msra.mxu0 %v769
      %773 = vmatprep.subr.bf16.mxu0 0
      %774 = vmatpush1.bf16.msra.mxu0 0
      %775 = vmatprep.subr.bf16.mxu0 0
      %776 = vmatpush1.bf16.msra.mxu0 0
      %777 = vmatprep.subr.bf16.mxu0 0
      %778 = vmatpush1.bf16.msra.mxu0 0
      %779 = vmatprep.subr.bf16.mxu0 0
      %780 = vmatpush1.bf16.msra.mxu0 0
      %781 = vmatprep.subr.bf16.mxu0 0
      %782 = vmatpush1.bf16.msra.mxu0 0
      %783 = vmatprep.subr.bf16.mxu0 0
      %784 = vmatpush1.bf16.msra.mxu0 0
      %785 = vmatprep.subr.bf16.mxu0 0
      %786 = vmatpush1.bf16.msra.mxu0 0
      %787 = vmatprep.subr.bf16.mxu0 0
      %788 = vmatpush1.bf16.msra.mxu0 0
      %789 = vmatprep.subr.bf16.mxu0 0
      %790 = vmatpush1.bf16.msra.mxu0 0
      %791 = vmatprep.subr.bf16.mxu0 0
      %792 = vmatpush1.bf16.msra.mxu0 0
      %793 = vmatprep.subr.bf16.mxu0 0
      %794 = vmatpush1.bf16.msra.mxu0 0
      %795 = vmatprep.subr.bf16.mxu0 0
      %796 = vmatpush1.bf16.msra.mxu0 0
      %797 = vmatprep.subr.bf16.mxu0 0
      %798 = vmatpush1.bf16.msra.mxu0 0
      %799 = vmatprep.subr.bf16.mxu0 0
      %800 = vmatpush1.bf16.msra.mxu0 0
      %801 = vmatprep.subr.bf16.mxu0 0
      %802 = vmatpush1.bf16.msra.mxu0 0
      %803 = vmatprep.mubr.bf16.mxu0 0
      %804 = vmatmul.mubr.bf16.gmra.mrb[0].mxu0 %v720
      %v805 = vpop.f32.mrb[0].mxu0
      %v806 = vadd.f32 0.0, %v805
      %v807 = vpop.f32.mrb[0].mxu0
      %v808 = vpop.f32.mrb[0].mxu0
      %v809 = vadd.f32 0.0, %v808
      %v810 = vpop.f32.mrb[0].mxu0
      %811 = vmatprep.mubr.bf16.mxu0 0
      %812 = vmatmul.mubr.bf16.gmra.mrb[0].mxu0 %v723
      %v813 = vpop.f32.mrb[0].mxu0
      %v814 = vadd.f32 0.0, %v813
      %v815 = vpop.f32.mrb[0].mxu0
      %v816 = vpop.f32.mrb[0].mxu0
      %v817 = vadd.f32 0.0, %v816
      %v818 = vpop.f32.mrb[0].mxu0
      %819 = vmatprep.mubr.bf16.mxu0 0
      %820 = vmatmul.mubr.bf16.gmra.mrb[0].mxu0 %v726
      %v821 = vpop.f32.mrb[0].mxu0
      %v822 = vadd.f32 0.0, %v821
      %v823 = vpop.f32.mrb[0].mxu0
      %v824 = vpop.f32.mrb[0].mxu0
      %v825 = vadd.f32 0.0, %v824
      %v826 = vpop.f32.mrb[0].mxu0
      %827 = vmatprep.mubr.bf16.mxu0 0
      %828 = vmatmul.mubr.bf16.gmra.mrb[0].mxu0 %v729
      %v829 = vpop.f32.mrb[0].mxu0
      %v830 = vadd.f32 0.0, %v829
      %v831 = vpop.f32.mrb[0].mxu0
      %v832 = vpop.f32.mrb[0].mxu0
      %v833 = vadd.f32 0.0, %v832
      %v834 = vpop.f32.mrb[0].mxu0
      %835 = vmatprep.mubr.bf16.mxu0 0
      %836 = vmatmul.mubr.bf16.gmra.mrb[0].mxu0 %v732
      %v837 = vpop.f32.mrb[0].mxu0
      %v838 = vadd.f32 0.0, %v837
      %v839 = vpop.f32.mrb[0].mxu0
      %v840 = vpop.f32.mrb[0].mxu0
      %v841 = vadd.f32 0.0, %v840
      %v842 = vpop.f32.mrb[0].mxu0
      %843 = vmatprep.mubr.bf16.mxu0 0
      %844 = vmatmul.mubr.bf16.gmra.mrb[0].mxu0 %v735
      %v845 = vpop.f32.mrb[0].mxu0
      %v846 = vadd.f32 0.0, %v845
      %v847 = vpop.f32.mrb[0].mxu0
      %v848 = vpop.f32.mrb[0].mxu0
      %v849 = vadd.f32 0.0, %v848
      %v850 = vpop.f32.mrb[0].mxu0
      %851 = vmatprep.mubr.bf16.mxu0 0
      %852 = vmatmul.mubr.bf16.gmra.mrb[0].mxu0 %v738
      %v853 = vpop.f32.mrb[0].mxu0
      %v854 = vadd.f32 0.0, %v853
      %v855 = vpop.f32.mrb[0].mxu0
      %v856 = vpop.f32.mrb[0].mxu0
      %v857 = vadd.f32 0.0, %v856
      %v858 = vpop.f32.mrb[0].mxu0
      %859 = vmatprep.mubr.bf16.mxu0 0
      %860 = vmatmul.mubr.bf16.gmra.mrb[0].mxu0 %v741
      %v861 = vpop.f32.mrb[0].mxu0
      %v862 = vadd.f32 0.0, %v861
      %v863 = vpop.f32.mrb[0].mxu0
      %v864 = vpop.f32.mrb[0].mxu0
      %v865 = vadd.f32 0.0, %v864
      %v866 = vpop.f32.mrb[0].mxu0
      %867 = vmatprep.mubr.bf16.mxu0 0
      %868 = vmatmul.mubr.bf16.gmra.mrb[0].mxu0 %v744
      %v869 = vpop.f32.mrb[0].mxu0
      %v870 = vadd.f32 0.0, %v869
      %v871 = vpop.f32.mrb[0].mxu0
      %v872 = vpop.f32.mrb[0].mxu0
      %v873 = vadd.f32 0.0, %v872
      %v874 = vpop.f32.mrb[0].mxu0
      %875 = vmatprep.mubr.bf16.mxu0 0
      %876 = vmatmul.mubr.bf16.gmra.mrb[0].mxu0 %v747
      %v877 = vpop.f32.mrb[0].mxu0
      %v878 = vadd.f32 0.0, %v877
      %v879 = vpop.f32.mrb[0].mxu0
      %v880 = vpop.f32.mrb[0].mxu0
      %v881 = vadd.f32 0.0, %v880
      %v882 = vpop.f32.mrb[0].mxu0
      %883 = vmatprep.mubr.bf16.mxu0 0
      %884 = vmatmul.mubr.bf16.gmra.mrb[0].mxu0 %v750
      %v885 = vpop.f32.mrb[0].mxu0
      %v886 = vadd.f32 0.0, %v885
      %v887 = vpop.f32.mrb[0].mxu0
      %v888 = vpop.f32.mrb[0].mxu0
      %v889 = vadd.f32 0.0, %v888
      %v890 = vpop.f32.mrb[0].mxu0
      %891 = vmatprep.mubr.bf16.mxu0 0
      %892 = vmatmul.mubr.bf16.gmra.mrb[0].mxu0 %v753
      %v893 = vpop.f32.mrb[0].mxu0
      %v894 = vadd.f32 0.0, %v893
      %v895 = vpop.f32.mrb[0].mxu0
      %v896 = vpop.f32.mrb[0].mxu0
      %v897 = vadd.f32 0.0, %v896
      %v898 = vpop.f32.mrb[0].mxu0
      %899 = vmatprep.mubr.bf16.mxu0 0
      %900 = vmatmul.mubr.bf16.gmra.mrb[0].mxu0 %v756
      %v901 = vpop.f32.mrb[0].mxu0
      %v902 = vadd.f32 0.0, %v901
      %v903 = vpop.f32.mrb[0].mxu0
      %v904 = vpop.f32.mrb[0].mxu0
      %v905 = vadd.f32 0.0, %v904
      %v906 = vpop.f32.mrb[0].mxu0
      %907 = vmatprep.mubr.bf16.mxu0 0
      %908 = vmatmul.mubr.bf16.gmra.mrb[0].mxu0 %v759
      %v909 = vpop.f32.mrb[0].mxu0
      %v910 = vadd.f32 0.0, %v909
      %v911 = vpop.f32.mrb[0].mxu0
      %v912 = vpop.f32.mrb[0].mxu0
      %v913 = vadd.f32 0.0, %v912
      %v914 = vpop.f32.mrb[0].mxu0
      %915 = vmatprep.mubr.bf16.mxu0 0
      %916 = vmatmul.mubr.bf16.gmra.mrb[0].mxu0 %v762
      %v917 = vpop.f32.mrb[0].mxu0
      %v918 = vadd.f32 0.0, %v917
      %v919 = vpop.f32.mrb[0].mxu0
      %v920 = vpop.f32.mrb[0].mxu0
      %v921 = vadd.f32 0.0, %v920
      %v922 = vpop.f32.mrb[0].mxu0
      %923 = vmatprep.mubr.bf16.mxu0 0
      %924 = vmatmul.mubr.bf16.gmra.mrb[0].mxu0 %v765
      %v925 = vpop.f32.mrb[0].mxu0
      %v926 = vadd.f32 0.0, %v925
      %v927 = vpop.f32.mrb[0].mxu0
      %v928 = vpop.f32.mrb[0].mxu0
      %v929 = vadd.f32 0.0, %v928
      %v930 = vpop.f32.mrb[0].mxu0
      %931 = vdwg.mxu0
      %v964 = vunpack.c.l.b16 %v226
      %v965 = vunpack.c.l.b16 %v227
      %v966 = vunpack.c.l.b16 %v229
      %v967 = vunpack.c.l.b16 %v230
      %v968 = vunpack.c.l.b16 %v232
      %v969 = vunpack.c.l.b16 %v233
      %v970 = vunpack.c.l.b16 %v235
      %v971 = vunpack.c.l.b16 %v236
      %v972 = vunpack.c.l.b16 %v238
      %v973 = vunpack.c.l.b16 %v239
      %v974 = vunpack.c.l.b16 %v241
      %v975 = vunpack.c.l.b16 %v242
      %v976 = vunpack.c.l.b16 %v244
      %v977 = vunpack.c.l.b16 %v245
      %v978 = vunpack.c.l.b16 %v247
      %v979 = vunpack.c.l.b16 %v248
      %v980 = vunpack.c.l.b16 %v250
      %v981 = vunpack.c.l.b16 %v251
      %v982 = vunpack.c.l.b16 %v253
      %v983 = vunpack.c.l.b16 %v254
      %v984 = vunpack.c.l.b16 %v256
      %v985 = vunpack.c.l.b16 %v257
      %v986 = vunpack.c.l.b16 %v259
      %v987 = vunpack.c.l.b16 %v260
      %v988 = vunpack.c.l.b16 %v262
      %v989 = vunpack.c.l.b16 %v263
      %v990 = vunpack.c.l.b16 %v265
      %v991 = vunpack.c.l.b16 %v266
      %v992 = vunpack.c.l.b16 %v268
      %v993 = vunpack.c.l.b16 %v269
      %v994 = vunpack.c.l.b16 %v271
      %v995 = vunpack.c.l.b16 %v272
      %v996 = vpack.c.b16 %v965, %v964
      %v997 = vpack.c.b16 %v967, %v966
      %v998 = vpack.c.b16 %v969, %v968
      %v999 = vpack.c.b16 %v971, %v970
      %v1000 = vpack.c.b16 %v973, %v972
      %v1001 = vpack.c.b16 %v975, %v974
      %v1002 = vpack.c.b16 %v977, %v976
      %v1003 = vpack.c.b16 %v979, %v978
      %v1004 = vpack.c.b16 %v981, %v980
      %v1005 = vpack.c.b16 %v983, %v982
      %v1006 = vpack.c.b16 %v985, %v984
      %v1007 = vpack.c.b16 %v987, %v986
      %v1008 = vpack.c.b16 %v989, %v988
      %v1009 = vpack.c.b16 %v991, %v990
      %v1010 = vpack.c.b16 %v993, %v992
      %v1011 = vpack.c.b16 %v995, %v994
      %v1013 = vsel %vm718, %v996, 0
      %v1016 = vsel %vm718, %v997, 0
      %v1019 = vsel %vm718, %v998, 0
      %v1022 = vsel %vm718, %v999, 0
      %v1025 = vsel %vm718, %v1000, 0
      %v1028 = vsel %vm718, %v1001, 0
      %v1031 = vsel %vm718, %v1002, 0
      %v1034 = vsel %vm718, %v1003, 0
      %v1037 = vsel %vm718, %v1004, 0
      %v1040 = vsel %vm718, %v1005, 0
      %v1043 = vsel %vm718, %v1006, 0
      %v1046 = vsel %vm718, %v1007, 0
      %v1049 = vsel %vm718, %v1008, 0
      %v1052 = vsel %vm718, %v1009, 0
      %v1055 = vsel %vm718, %v1010, 0
      %v1058 = vsel %vm718, %v1011, 0
      %v1061 = vsel %vm767, %v280, 0
      %1063 = vmatprep.subr.bf16.mxu0 0
      %1064 = vmatpush1.bf16.msra.mxu0 %v1061
      %1065 = vmatprep.subr.bf16.mxu0 0
      %1066 = vmatpush1.bf16.msra.mxu0 0
      %1067 = vmatprep.subr.bf16.mxu0 0
      %1068 = vmatpush1.bf16.msra.mxu0 0
      %1069 = vmatprep.subr.bf16.mxu0 0
      %1070 = vmatpush1.bf16.msra.mxu0 0
      %1071 = vmatprep.subr.bf16.mxu0 0
      %1072 = vmatpush1.bf16.msra.mxu0 0
      %1073 = vmatprep.subr.bf16.mxu0 0
      %1074 = vmatpush1.bf16.msra.mxu0 0
      %1075 = vmatprep.subr.bf16.mxu0 0
      %1076 = vmatpush1.bf16.msra.mxu0 0
      %1077 = vmatprep.subr.bf16.mxu0 0
      %1078 = vmatpush1.bf16.msra.mxu0 0
      %1079 = vmatprep.subr.bf16.mxu0 0
      %1080 = vmatpush1.bf16.msra.mxu0 0
      %1081 = vmatprep.subr.bf16.mxu0 0
      %1082 = vmatpush1.bf16.msra.mxu0 0
      %1083 = vmatprep.subr.bf16.mxu0 0
      %1084 = vmatpush1.bf16.msra.mxu0 0
      %1085 = vmatprep.subr.bf16.mxu0 0
      %1086 = vmatpush1.bf16.msra.mxu0 0
      %1087 = vmatprep.subr.bf16.mxu0 0
      %1088 = vmatpush1.bf16.msra.mxu0 0
      %1089 = vmatprep.subr.bf16.mxu0 0
      %1090 = vmatpush1.bf16.msra.mxu0 0
      %1091 = vmatprep.subr.bf16.mxu0 0
      %1092 = vmatpush1.bf16.msra.mxu0 0
      %1093 = vmatprep.subr.bf16.mxu0 0
      %1094 = vmatpush1.bf16.msra.mxu0 0
      %1095 = vmatprep.mubr.bf16.mxu0 0
      %1096 = vmatmul.mubr.bf16.gmra.mrb[0].mxu0 %v1013
      %v1097 = vpop.f32.mrb[0].mxu0
      %v1098 = vadd.f32 %v806, %v1097
      %v1099 = vpop.f32.mrb[0].mxu0
      %v1100 = vpop.f32.mrb[0].mxu0
      %v1101 = vadd.f32 %v809, %v1100
      %v1102 = vpop.f32.mrb[0].mxu0
      %1103 = vmatprep.mubr.bf16.mxu0 0
      %1104 = vmatmul.mubr.bf16.gmra.mrb[0].mxu0 %v1016
      %v1105 = vpop.f32.mrb[0].mxu0
      %v1106 = vadd.f32 %v814, %v1105
      %v1107 = vpop.f32.mrb[0].mxu0
      %v1108 = vpop.f32.mrb[0].mxu0
      %v1109 = vadd.f32 %v817, %v1108
      %v1110 = vpop.f32.mrb[0].mxu0
      %1111 = vmatprep.mubr.bf16.mxu0 0
      %1112 = vmatmul.mubr.bf16.gmra.mrb[0].mxu0 %v1019
      %v1113 = vpop.f32.mrb[0].mxu0
      %v1114 = vadd.f32 %v822, %v1113
      %v1115 = vpop.f32.mrb[0].mxu0
      %v1116 = vpop.f32.mrb[0].mxu0
      %v1117 = vadd.f32 %v825, %v1116
      %v1118 = vpop.f32.mrb[0].mxu0
      %1119 = vmatprep.mubr.bf16.mxu0 0
      %1120 = vmatmul.mubr.bf16.gmra.mrb[0].mxu0 %v1022
      %v1121 = vpop.f32.mrb[0].mxu0
      %v1122 = vadd.f32 %v830, %v1121
      %v1123 = vpop.f32.mrb[0].mxu0
      %v1124 = vpop.f32.mrb[0].mxu0
      %v1125 = vadd.f32 %v833, %v1124
      %v1126 = vpop.f32.mrb[0].mxu0
      %1127 = vmatprep.mubr.bf16.mxu0 0
      %1128 = vmatmul.mubr.bf16.gmra.mrb[0].mxu0 %v1025
      %v1129 = vpop.f32.mrb[0].mxu0
      %v1130 = vadd.f32 %v838, %v1129
      %v1131 = vpop.f32.mrb[0].mxu0
      %v1132 = vpop.f32.mrb[0].mxu0
      %v1133 = vadd.f32 %v841, %v1132
      %v1134 = vpop.f32.mrb[0].mxu0
      %1135 = vmatprep.mubr.bf16.mxu0 0
      %1136 = vmatmul.mubr.bf16.gmra.mrb[0].mxu0 %v1028
      %v1137 = vpop.f32.mrb[0].mxu0
      %v1138 = vadd.f32 %v846, %v1137
      %v1139 = vpop.f32.mrb[0].mxu0
      %v1140 = vpop.f32.mrb[0].mxu0
      %v1141 = vadd.f32 %v849, %v1140
      %v1142 = vpop.f32.mrb[0].mxu0
      %1143 = vmatprep.mubr.bf16.mxu0 0
      %1144 = vmatmul.mubr.bf16.gmra.mrb[0].mxu0 %v1031
      %v1145 = vpop.f32.mrb[0].mxu0
      %v1146 = vadd.f32 %v854, %v1145
      %v1147 = vpop.f32.mrb[0].mxu0
      %v1148 = vpop.f32.mrb[0].mxu0
      %v1149 = vadd.f32 %v857, %v1148
      %v1150 = vpop.f32.mrb[0].mxu0
      %1151 = vmatprep.mubr.bf16.mxu0 0
      %1152 = vmatmul.mubr.bf16.gmra.mrb[0].mxu0 %v1034
      %v1153 = vpop.f32.mrb[0].mxu0
      %v1154 = vadd.f32 %v862, %v1153
      %v1155 = vpop.f32.mrb[0].mxu0
      %v1156 = vpop.f32.mrb[0].mxu0
      %v1157 = vadd.f32 %v865, %v1156
      %v1158 = vpop.f32.mrb[0].mxu0
      %1159 = vmatprep.mubr.bf16.mxu0 0
      %1160 = vmatmul.mubr.bf16.gmra.mrb[0].mxu0 %v1037
      %v1161 = vpop.f32.mrb[0].mxu0
      %v1162 = vadd.f32 %v870, %v1161
      %v1163 = vpop.f32.mrb[0].mxu0
      %v1164 = vpop.f32.mrb[0].mxu0
      %v1165 = vadd.f32 %v873, %v1164
      %v1166 = vpop.f32.mrb[0].mxu0
      %1167 = vmatprep.mubr.bf16.mxu0 0
      %1168 = vmatmul.mubr.bf16.gmra.mrb[0].mxu0 %v1040
      %v1169 = vpop.f32.mrb[0].mxu0
      %v1170 = vadd.f32 %v878, %v1169
      %v1171 = vpop.f32.mrb[0].mxu0
      %v1172 = vpop.f32.mrb[0].mxu0
      %v1173 = vadd.f32 %v881, %v1172
      %v1174 = vpop.f32.mrb[0].mxu0
      %1175 = vmatprep.mubr.bf16.mxu0 0
      %1176 = vmatmul.mubr.bf16.gmra.mrb[0].mxu0 %v1043
      %v1177 = vpop.f32.mrb[0].mxu0
      %v1178 = vadd.f32 %v886, %v1177
      %v1179 = vpop.f32.mrb[0].mxu0
      %v1180 = vpop.f32.mrb[0].mxu0
      %v1181 = vadd.f32 %v889, %v1180
      %v1182 = vpop.f32.mrb[0].mxu0
      %1183 = vmatprep.mubr.bf16.mxu0 0
      %1184 = vmatmul.mubr.bf16.gmra.mrb[0].mxu0 %v1046
      %v1185 = vpop.f32.mrb[0].mxu0
      %v1186 = vadd.f32 %v894, %v1185
      %v1187 = vpop.f32.mrb[0].mxu0
      %v1188 = vpop.f32.mrb[0].mxu0
      %v1189 = vadd.f32 %v897, %v1188
      %v1190 = vpop.f32.mrb[0].mxu0
      %1191 = vmatprep.mubr.bf16.mxu0 0
      %1192 = vmatmul.mubr.bf16.gmra.mrb[0].mxu0 %v1049
      %v1193 = vpop.f32.mrb[0].mxu0
      %v1194 = vadd.f32 %v902, %v1193
      %v1195 = vpop.f32.mrb[0].mxu0
      %v1196 = vpop.f32.mrb[0].mxu0
      %v1197 = vadd.f32 %v905, %v1196
      %v1198 = vpop.f32.mrb[0].mxu0
      %1199 = vmatprep.mubr.bf16.mxu0 0
      %1200 = vmatmul.mubr.bf16.gmra.mrb[0].mxu0 %v1052
      %v1201 = vpop.f32.mrb[0].mxu0
      %v1202 = vadd.f32 %v910, %v1201
      %v1203 = vpop.f32.mrb[0].mxu0
      %v1204 = vpop.f32.mrb[0].mxu0
      %v1205 = vadd.f32 %v913, %v1204
      %v1206 = vpop.f32.mrb[0].mxu0
      %1207 = vmatprep.mubr.bf16.mxu0 0
      %1208 = vmatmul.mubr.bf16.gmra.mrb[0].mxu0 %v1055
      %v1209 = vpop.f32.mrb[0].mxu0
      %v1210 = vadd.f32 %v918, %v1209
      %v1211 = vpop.f32.mrb[0].mxu0
      %v1212 = vpop.f32.mrb[0].mxu0
      %v1213 = vadd.f32 %v921, %v1212
      %v1214 = vpop.f32.mrb[0].mxu0
      %1215 = vmatprep.mubr.bf16.mxu0 0
      %1216 = vmatmul.mubr.bf16.gmra.mrb[0].mxu0 %v1058
      %v1217 = vpop.f32.mrb[0].mxu0
      %v1218 = vadd.f32 %v926, %v1217
      %v1219 = vpop.f32.mrb[0].mxu0
      %v1220 = vpop.f32.mrb[0].mxu0
      %v1221 = vadd.f32 %v929, %v1220
      %v1222 = vpop.f32.mrb[0].mxu0
      %1223 = vdwg.mxu0
      %s1224 = scalar_lea.vmem %s1, 4
      %v1225 = vld [vmem:[%s1224] sm:$0x3]
      %vm1242 = vcmask 1042432
      %vm1243 = vcmask 1046532
      %vm1244 = vmor %vm1242, %vm1243
      %v1245 = vrot.slane %v226, 5
      %v1246 = vrot.slane %v1245, 4
      %v1247 = vrot.slane %v227, 5
      %v1248 = vsel %vm1244, %v1246, %v1247
      %v1249 = vrot.slane %v1247, 4
      %v1250 = vrot.slane %v228, 5
      %v1251 = vsel %vm1244, %v1249, %v1250
      %v1252 = vrot.slane %v229, 5
      %v1253 = vrot.slane %v1252, 4
      %v1254 = vrot.slane %v230, 5
      %v1255 = vsel %vm1244, %v1253, %v1254
      %v1256 = vrot.slane %v1254, 4
      %v1257 = vrot.slane %v231, 5
      %v1258 = vsel %vm1244, %v1256, %v1257
      %v1259 = vrot.slane %v232, 5
      %v1260 = vrot.slane %v1259, 4
      %v1261 = vrot.slane %v233, 5
      %v1262 = vsel %vm1244, %v1260, %v1261
      %v1263 = vrot.slane %v1261, 4
      %v1264 = vrot.slane %v234, 5
      %v1265 = vsel %vm1244, %v1263, %v1264
      %v1266 = vrot.slane %v235, 5
      %v1267 = vrot.slane %v1266, 4
      %v1268 = vrot.slane %v236, 5
      %v1269 = vsel %vm1244, %v1267, %v1268
      %v1270 = vrot.slane %v1268, 4
      %v1271 = vrot.slane %v237, 5
      %v1272 = vsel %vm1244, %v1270, %v1271
      %v1273 = vrot.slane %v238, 5
      %v1274 = vrot.slane %v1273, 4
      %v1275 = vrot.slane %v239, 5
      %v1276 = vsel %vm1244, %v1274, %v1275
      %v1277 = vrot.slane %v1275, 4
      %v1278 = vrot.slane %v240, 5
      %v1279 = vsel %vm1244, %v1277, %v1278
      %v1280 = vrot.slane %v241, 5
      %v1281 = vrot.slane %v1280, 4
      %v1282 = vrot.slane %v242, 5
      %v1283 = vsel %vm1244, %v1281, %v1282
      %v1284 = vrot.slane %v1282, 4
      %v1285 = vrot.slane %v243, 5
      %v1286 = vsel %vm1244, %v1284, %v1285
      %v1287 = vrot.slane %v244, 5
      %v1288 = vrot.slane %v1287, 4
      %v1289 = vrot.slane %v245, 5
      %v1290 = vsel %vm1244, %v1288, %v1289
      %v1291 = vrot.slane %v1289, 4
      %v1292 = vrot.slane %v246, 5
      %v1293 = vsel %vm1244, %v1291, %v1292
      %v1294 = vrot.slane %v247, 5
      %v1295 = vrot.slane %v1294, 4
      %v1296 = vrot.slane %v248, 5
      %v1297 = vsel %vm1244, %v1295, %v1296
      %v1298 = vrot.slane %v1296, 4
      %v1299 = vrot.slane %v249, 5
      %v1300 = vsel %vm1244, %v1298, %v1299
      %v1301 = vrot.slane %v250, 5
      %v1302 = vrot.slane %v1301, 4
      %v1303 = vrot.slane %v251, 5
      %v1304 = vsel %vm1244, %v1302, %v1303
      %v1305 = vrot.slane %v1303, 4
      %v1306 = vrot.slane %v252, 5
      %v1307 = vsel %vm1244, %v1305, %v1306
      %v1308 = vrot.slane %v253, 5
      %v1309 = vrot.slane %v1308, 4
      %v1310 = vrot.slane %v254, 5
      %v1311 = vsel %vm1244, %v1309, %v1310
      %v1312 = vrot.slane %v1310, 4
      %v1313 = vrot.slane %v255, 5
      %v1314 = vsel %vm1244, %v1312, %v1313
      %v1315 = vrot.slane %v256, 5
      %v1316 = vrot.slane %v1315, 4
      %v1317 = vrot.slane %v257, 5
      %v1318 = vsel %vm1244, %v1316, %v1317
      %v1319 = vrot.slane %v1317, 4
      %v1320 = vrot.slane %v258, 5
      %v1321 = vsel %vm1244, %v1319, %v1320
      %v1322 = vrot.slane %v259, 5
      %v1323 = vrot.slane %v1322, 4
      %v1324 = vrot.slane %v260, 5
      %v1325 = vsel %vm1244, %v1323, %v1324
      %v1326 = vrot.slane %v1324, 4
      %v1327 = vrot.slane %v261, 5
      %v1328 = vsel %vm1244, %v1326, %v1327
      %v1329 = vrot.slane %v262, 5
      %v1330 = vrot.slane %v1329, 4
      %v1331 = vrot.slane %v263, 5
      %v1332 = vsel %vm1244, %v1330, %v1331
      %v1333 = vrot.slane %v1331, 4
      %v1334 = vrot.slane %v264, 5
      %v1335 = vsel %vm1244, %v1333, %v1334
      %v1336 = vrot.slane %v265, 5
      %v1337 = vrot.slane %v1336, 4
      %v1338 = vrot.slane %v266, 5
      %v1339 = vsel %vm1244, %v1337, %v1338
      %v1340 = vrot.slane %v1338, 4
      %v1341 = vrot.slane %v267, 5
      %v1342 = vsel %vm1244, %v1340, %v1341
      %v1343 = vrot.slane %v268, 5
      %v1344 = vrot.slane %v1343, 4
      %v1345 = vrot.slane %v269, 5
      %v1346 = vsel %vm1244, %v1344, %v1345
      %v1347 = vrot.slane %v1345, 4
      %v1348 = vrot.slane %v270, 5
      %v1349 = vsel %vm1244, %v1347, %v1348
      %v1350 = vrot.slane %v271, 5
      %v1351 = vrot.slane %v1350, 4
      %v1352 = vrot.slane %v272, 5
      %v1353 = vsel %vm1244, %v1351, %v1352
      %v1354 = vrot.slane %v1352, 4
      %v1355 = vrot.slane %v273, 5
      %v1356 = vsel %vm1244, %v1354, %v1355
      %v1357 = vunpack.c.l.b16 %v1248
      %v1358 = vunpack.c.l.b16 %v1251
      %v1359 = vunpack.c.l.b16 %v1255
      %v1360 = vunpack.c.l.b16 %v1258
      %v1361 = vunpack.c.l.b16 %v1262
      %v1362 = vunpack.c.l.b16 %v1265
      %v1363 = vunpack.c.l.b16 %v1269
      %v1364 = vunpack.c.l.b16 %v1272
      %v1365 = vunpack.c.l.b16 %v1276
      %v1366 = vunpack.c.l.b16 %v1279
      %v1367 = vunpack.c.l.b16 %v1283
      %v1368 = vunpack.c.l.b16 %v1286
      %v1369 = vunpack.c.l.b16 %v1290
      %v1370 = vunpack.c.l.b16 %v1293
      %v1371 = vunpack.c.l.b16 %v1297
      %v1372 = vunpack.c.l.b16 %v1300
      %v1373 = vunpack.c.l.b16 %v1304
      %v1374 = vunpack.c.l.b16 %v1307
      %v1375 = vunpack.c.l.b16 %v1311
      %v1376 = vunpack.c.l.b16 %v1314
      %v1377 = vunpack.c.l.b16 %v1318
      %v1378 = vunpack.c.l.b16 %v1321
      %v1379 = vunpack.c.l.b16 %v1325
      %v1380 = vunpack.c.l.b16 %v1328
      %v1381 = vunpack.c.l.b16 %v1332
      %v1382 = vunpack.c.l.b16 %v1335
      %v1383 = vunpack.c.l.b16 %v1339
      %v1384 = vunpack.c.l.b16 %v1342
      %v1385 = vunpack.c.l.b16 %v1346
      %v1386 = vunpack.c.l.b16 %v1349
      %v1387 = vunpack.c.l.b16 %v1353
      %v1388 = vunpack.c.l.b16 %v1356
      %v1389 = vpack.c.b16 %v1358, %v1357
      %v1390 = vpack.c.b16 %v1360, %v1359
      %v1391 = vpack.c.b16 %v1362, %v1361
      %v1392 = vpack.c.b16 %v1364, %v1363
      %v1393 = vpack.c.b16 %v1366, %v1365
      %v1394 = vpack.c.b16 %v1368, %v1367
      %v1395 = vpack.c.b16 %v1370, %v1369
      %v1396 = vpack.c.b16 %v1372, %v1371
      %v1397 = vpack.c.b16 %v1374, %v1373
      %v1398 = vpack.c.b16 %v1376, %v1375
      %v1399 = vpack.c.b16 %v1378, %v1377
      %v1400 = vpack.c.b16 %v1380, %v1379
      %v1401 = vpack.c.b16 %v1382, %v1381
      %v1402 = vpack.c.b16 %v1384, %v1383
      %v1403 = vpack.c.b16 %v1386, %v1385
      %v1404 = vpack.c.b16 %v1388, %v1387
      %v1406 = vsel %vm718, %v1389, 0
      %v1409 = vsel %vm718, %v1390, 0
      %v1412 = vsel %vm718, %v1391, 0
      %v1415 = vsel %vm718, %v1392, 0
      %v1418 = vsel %vm718, %v1393, 0
      %v1421 = vsel %vm718, %v1394, 0
      %v1424 = vsel %vm718, %v1395, 0
      %v1427 = vsel %vm718, %v1396, 0
      %v1430 = vsel %vm718, %v1397, 0
      %v1433 = vsel %vm718, %v1398, 0
      %v1436 = vsel %vm718, %v1399, 0
      %v1439 = vsel %vm718, %v1400, 0
      %v1442 = vsel %vm718, %v1401, 0
      %v1445 = vsel %vm718, %v1402, 0
      %v1448 = vsel %vm718, %v1403, 0
      %v1451 = vsel %vm718, %v1404, 0
      %v1454 = vsel %vm767, %v1225, 0
      %1456 = vmatprep.subr.bf16.mxu0 0
      %1457 = vmatpush1.bf16.msra.mxu0 %v1454
      %1458 = vmatprep.subr.bf16.mxu0 0
      %1459 = vmatpush1.bf16.msra.mxu0 0
      %1460 = vmatprep.subr.bf16.mxu0 0
      %1461 = vmatpush1.bf16.msra.mxu0 0
      %1462 = vmatprep.subr.bf16.mxu0 0
      %1463 = vmatpush1.bf16.msra.mxu0 0
      %1464 = vmatprep.subr.bf16.mxu0 0
      %1465 = vmatpush1.bf16.msra.mxu0 0
      %1466 = vmatprep.subr.bf16.mxu0 0
      %1467 = vmatpush1.bf16.msra.mxu0 0
      %1468 = vmatprep.subr.bf16.mxu0 0
      %1469 = vmatpush1.bf16.msra.mxu0 0
      %1470 = vmatprep.subr.bf16.mxu0 0
      %1471 = vmatpush1.bf16.msra.mxu0 0
      %1472 = vmatprep.subr.bf16.mxu0 0
      %1473 = vmatpush1.bf16.msra.mxu0 0
      %1474 = vmatprep.subr.bf16.mxu0 0
      %1475 = vmatpush1.bf16.msra.mxu0 0
      %1476 = vmatprep.subr.bf16.mxu0 0
      %1477 = vmatpush1.bf16.msra.mxu0 0
      %1478 = vmatprep.subr.bf16.mxu0 0
      %1479 = vmatpush1.bf16.msra.mxu0 0
      %1480 = vmatprep.subr.bf16.mxu0 0
      %1481 = vmatpush1.bf16.msra.mxu0 0
      %1482 = vmatprep.subr.bf16.mxu0 0
      %1483 = vmatpush1.bf16.msra.mxu0 0
      %1484 = vmatprep.subr.bf16.mxu0 0
      %1485 = vmatpush1.bf16.msra.mxu0 0
      %1486 = vmatprep.subr.bf16.mxu0 0
      %1487 = vmatpush1.bf16.msra.mxu0 0
      %1488 = vmatprep.mubr.bf16.mxu0 0
      %1489 = vmatmul.mubr.bf16.gmra.mrb[0].mxu0 %v1406
      %v1490 = vpop.f32.mrb[0].mxu0
      %v1491 = vadd.f32 0.0, %v1490
      %v1492 = vpop.f32.mrb[0].mxu0
      %v1493 = vpop.f32.mrb[0].mxu0
      %v1494 = vadd.f32 0.0, %v1493
      %v1495 = vpop.f32.mrb[0].mxu0
      %1496 = vmatprep.mubr.bf16.mxu0 0
      %1497 = vmatmul.mubr.bf16.gmra.mrb[0].mxu0 %v1409
      %v1498 = vpop.f32.mrb[0].mxu0
      %v1499 = vadd.f32 0.0, %v1498
      %v1500 = vpop.f32.mrb[0].mxu0
      %v1501 = vpop.f32.mrb[0].mxu0
      %v1502 = vadd.f32 0.0, %v1501
      %v1503 = vpop.f32.mrb[0].mxu0
      %1504 = vmatprep.mubr.bf16.mxu0 0
      %1505 = vmatmul.mubr.bf16.gmra.mrb[0].mxu0 %v1412
      %v1506 = vpop.f32.mrb[0].mxu0
      %v1507 = vadd.f32 0.0, %v1506
      %v1508 = vpop.f32.mrb[0].mxu0
      %v1509 = vpop.f32.mrb[0].mxu0
      %v1510 = vadd.f32 0.0, %v1509
      %v1511 = vpop.f32.mrb[0].mxu0
      %1512 = vmatprep.mubr.bf16.mxu0 0
      %1513 = vmatmul.mubr.bf16.gmra.mrb[0].mxu0 %v1415
      %v1514 = vpop.f32.mrb[0].mxu0
      %v1515 = vadd.f32 0.0, %v1514
      %v1516 = vpop.f32.mrb[0].mxu0
      %v1517 = vpop.f32.mrb[0].mxu0
      %v1518 = vadd.f32 0.0, %v1517
      %v1519 = vpop.f32.mrb[0].mxu0
      %1520 = vmatprep.mubr.bf16.mxu0 0
      %1521 = vmatmul.mubr.bf16.gmra.mrb[0].mxu0 %v1418
      %v1522 = vpop.f32.mrb[0].mxu0
      %v1523 = vadd.f32 0.0, %v1522
      %v1524 = vpop.f32.mrb[0].mxu0
      %v1525 = vpop.f32.mrb[0].mxu0
      %v1526 = vadd.f32 0.0, %v1525
      %v1527 = vpop.f32.mrb[0].mxu0
      %1528 = vmatprep.mubr.bf16.mxu0 0
      %1529 = vmatmul.mubr.bf16.gmra.mrb[0].mxu0 %v1421
      %v1530 = vpop.f32.mrb[0].mxu0
      %v1531 = vadd.f32 0.0, %v1530
      %v1532 = vpop.f32.mrb[0].mxu0
      %v1533 = vpop.f32.mrb[0].mxu0
      %v1534 = vadd.f32 0.0, %v1533
      %v1535 = vpop.f32.mrb[0].mxu0
      %1536 = vmatprep.mubr.bf16.mxu0 0
      %1537 = vmatmul.mubr.bf16.gmra.mrb[0].mxu0 %v1424
      %v1538 = vpop.f32.mrb[0].mxu0
      %v1539 = vadd.f32 0.0, %v1538
      %v1540 = vpop.f32.mrb[0].mxu0
      %v1541 = vpop.f32.mrb[0].mxu0
      %v1542 = vadd.f32 0.0, %v1541
      %v1543 = vpop.f32.mrb[0].mxu0
      %1544 = vmatprep.mubr.bf16.mxu0 0
      %1545 = vmatmul.mubr.bf16.gmra.mrb[0].mxu0 %v1427
      %v1546 = vpop.f32.mrb[0].mxu0
      %v1547 = vadd.f32 0.0, %v1546
      %v1548 = vpop.f32.mrb[0].mxu0
      %v1549 = vpop.f32.mrb[0].mxu0
      %v1550 = vadd.f32 0.0, %v1549
      %v1551 = vpop.f32.mrb[0].mxu0
      %1552 = vmatprep.mubr.bf16.mxu0 0
      %1553 = vmatmul.mubr.bf16.gmra.mrb[0].mxu0 %v1430
      %v1554 = vpop.f32.mrb[0].mxu0
      %v1555 = vadd.f32 0.0, %v1554
      %v1556 = vpop.f32.mrb[0].mxu0
      %v1557 = vpop.f32.mrb[0].mxu0
      %v1558 = vadd.f32 0.0, %v1557
      %v1559 = vpop.f32.mrb[0].mxu0
      %1560 = vmatprep.mubr.bf16.mxu0 0
      %1561 = vmatmul.mubr.bf16.gmra.mrb[0].mxu0 %v1433
      %v1562 = vpop.f32.mrb[0].mxu0
      %v1563 = vadd.f32 0.0, %v1562
      %v1564 = vpop.f32.mrb[0].mxu0
      %v1565 = vpop.f32.mrb[0].mxu0
      %v1566 = vadd.f32 0.0, %v1565
      %v1567 = vpop.f32.mrb[0].mxu0
      %1568 = vmatprep.mubr.bf16.mxu0 0
      %1569 = vmatmul.mubr.bf16.gmra.mrb[0].mxu0 %v1436
      %v1570 = vpop.f32.mrb[0].mxu0
      %v1571 = vadd.f32 0.0, %v1570
      %v1572 = vpop.f32.mrb[0].mxu0
      %v1573 = vpop.f32.mrb[0].mxu0
      %v1574 = vadd.f32 0.0, %v1573
      %v1575 = vpop.f32.mrb[0].mxu0
      %1576 = vmatprep.mubr.bf16.mxu0 0
      %1577 = vmatmul.mubr.bf16.gmra.mrb[0].mxu0 %v1439
      %v1578 = vpop.f32.mrb[0].mxu0
      %v1579 = vadd.f32 0.0, %v1578
      %v1580 = vpop.f32.mrb[0].mxu0
      %v1581 = vpop.f32.mrb[0].mxu0
      %v1582 = vadd.f32 0.0, %v1581
      %v1583 = vpop.f32.mrb[0].mxu0
      %1584 = vmatprep.mubr.bf16.mxu0 0
      %1585 = vmatmul.mubr.bf16.gmra.mrb[0].mxu0 %v1442
      %v1586 = vpop.f32.mrb[0].mxu0
      %v1587 = vadd.f32 0.0, %v1586
      %v1588 = vpop.f32.mrb[0].mxu0
      %v1589 = vpop.f32.mrb[0].mxu0
      %v1590 = vadd.f32 0.0, %v1589
      %v1591 = vpop.f32.mrb[0].mxu0
      %1592 = vmatprep.mubr.bf16.mxu0 0
      %1593 = vmatmul.mubr.bf16.gmra.mrb[0].mxu0 %v1445
      %v1594 = vpop.f32.mrb[0].mxu0
      %v1595 = vadd.f32 0.0, %v1594
      %v1596 = vpop.f32.mrb[0].mxu0
      %v1597 = vpop.f32.mrb[0].mxu0
      %v1598 = vadd.f32 0.0, %v1597
      %v1599 = vpop.f32.mrb[0].mxu0
      %1600 = vmatprep.mubr.bf16.mxu0 0
      %1601 = vmatmul.mubr.bf16.gmra.mrb[0].mxu0 %v1448
      %v1602 = vpop.f32.mrb[0].mxu0
      %v1603 = vadd.f32 0.0, %v1602
      %v1604 = vpop.f32.mrb[0].mxu0
      %v1605 = vpop.f32.mrb[0].mxu0
      %v1606 = vadd.f32 0.0, %v1605
      %v1607 = vpop.f32.mrb[0].mxu0
      %1608 = vmatprep.mubr.bf16.mxu0 0
      %1609 = vmatmul.mubr.bf16.gmra.mrb[0].mxu0 %v1451
      %v1610 = vpop.f32.mrb[0].mxu0
      %v1611 = vadd.f32 0.0, %v1610
      %v1612 = vpop.f32.mrb[0].mxu0
      %v1613 = vpop.f32.mrb[0].mxu0
      %v1614 = vadd.f32 0.0, %v1613
      %v1615 = vpop.f32.mrb[0].mxu0
      %1616 = vdwg.mxu0
      %v1617 = vadd.f32 %v1098, %v1491
      %v1618 = vadd.f32 %v1101, %v1494
      %v1619 = vadd.f32 %v1106, %v1499
      %v1620 = vadd.f32 %v1109, %v1502
      %v1621 = vadd.f32 %v1114, %v1507
      %v1622 = vadd.f32 %v1117, %v1510
      %v1623 = vadd.f32 %v1122, %v1515
      %v1624 = vadd.f32 %v1125, %v1518
      %v1625 = vadd.f32 %v1130, %v1523
      %v1626 = vadd.f32 %v1133, %v1526
      %v1627 = vadd.f32 %v1138, %v1531
      %v1628 = vadd.f32 %v1141, %v1534
      %v1629 = vadd.f32 %v1146, %v1539
      %v1630 = vadd.f32 %v1149, %v1542
      %v1631 = vadd.f32 %v1154, %v1547
      %v1632 = vadd.f32 %v1157, %v1550
      %v1633 = vadd.f32 %v1162, %v1555
      %v1634 = vadd.f32 %v1165, %v1558
      %v1635 = vadd.f32 %v1170, %v1563
      %v1636 = vadd.f32 %v1173, %v1566
      %v1637 = vadd.f32 %v1178, %v1571
      %v1638 = vadd.f32 %v1181, %v1574
      %v1639 = vadd.f32 %v1186, %v1579
      %v1640 = vadd.f32 %v1189, %v1582
      %v1641 = vadd.f32 %v1194, %v1587
      %v1642 = vadd.f32 %v1197, %v1590
      %v1643 = vadd.f32 %v1202, %v1595
      %v1644 = vadd.f32 %v1205, %v1598
      %v1645 = vadd.f32 %v1210, %v1603
      %v1646 = vadd.f32 %v1213, %v1606
      %v1647 = vadd.f32 %v1218, %v1611
      %v1648 = vadd.f32 %v1221, %v1614
      %s1649 = scalar_lea.vmem %s1, 6
      %v1650 = vld [vmem:[%s1649] sm:$0x3]
      %v1653 = vunpack.c.l.b16 %v274
      %v1654 = vunpack.c.l.b16 %v275
      %v1655 = vpack.c.b16 %v1654, %v1653
      %v1657 = vsel %vm718, %v1655, 0
      %v1660 = vsel %vm767, %v1650, 0
      %1662 = vmatprep.subr.bf16.mxu0 0
      %1663 = vmatpush1.bf16.msra.mxu0 %v1660
      %1664 = vmatprep.subr.bf16.mxu0 0
      %1665 = vmatpush1.bf16.msra.mxu0 0
      %1666 = vmatprep.subr.bf16.mxu0 0
      %1667 = vmatpush1.bf16.msra.mxu0 0
      %1668 = vmatprep.subr.bf16.mxu0 0
      %1669 = vmatpush1.bf16.msra.mxu0 0
      %1670 = vmatprep.subr.bf16.mxu0 0
      %1671 = vmatpush1.bf16.msra.mxu0 0
      %1672 = vmatprep.subr.bf16.mxu0 0
      %1673 = vmatpush1.bf16.msra.mxu0 0
      %1674 = vmatprep.subr.bf16.mxu0 0
      %1675 = vmatpush1.bf16.msra.mxu0 0
      %1676 = vmatprep.subr.bf16.mxu0 0
      %1677 = vmatpush1.bf16.msra.mxu0 0
      %1678 = vmatprep.subr.bf16.mxu0 0
      %1679 = vmatpush1.bf16.msra.mxu0 0
      %1680 = vmatprep.subr.bf16.mxu0 0
      %1681 = vmatpush1.bf16.msra.mxu0 0
      %1682 = vmatprep.subr.bf16.mxu0 0
      %1683 = vmatpush1.bf16.msra.mxu0 0
      %1684 = vmatprep.subr.bf16.mxu0 0
      %1685 = vmatpush1.bf16.msra.mxu0 0
      %1686 = vmatprep.subr.bf16.mxu0 0
      %1687 = vmatpush1.bf16.msra.mxu0 0
      %1688 = vmatprep.subr.bf16.mxu0 0
      %1689 = vmatpush1.bf16.msra.mxu0 0
      %1690 = vmatprep.subr.bf16.mxu0 0
      %1691 = vmatpush1.bf16.msra.mxu0 0
      %1692 = vmatprep.subr.bf16.mxu0 0
      %1693 = vmatpush1.bf16.msra.mxu0 0
      %1694 = vmatprep.mubr.bf16.mxu0 0
      %1695 = vmatmul.mubr.bf16.gmra.mrb[0].mxu0 %v1016
      %v1696 = vpop.f32.mrb[0].mxu0
      %v1697 = vadd.f32 0.0, %v1696
      %v1698 = vpop.f32.mrb[0].mxu0
      %v1699 = vpop.f32.mrb[0].mxu0
      %v1700 = vadd.f32 0.0, %v1699
      %v1701 = vpop.f32.mrb[0].mxu0
      %1702 = vmatprep.mubr.bf16.mxu0 0
      %1703 = vmatmul.mubr.bf16.gmra.mrb[0].mxu0 %v1019
      %v1704 = vpop.f32.mrb[0].mxu0
      %v1705 = vadd.f32 0.0, %v1704
      %v1706 = vpop.f32.mrb[0].mxu0
      %v1707 = vpop.f32.mrb[0].mxu0
      %v1708 = vadd.f32 0.0, %v1707
      %v1709 = vpop.f32.mrb[0].mxu0
      %1710 = vmatprep.mubr.bf16.mxu0 0
      %1711 = vmatmul.mubr.bf16.gmra.mrb[0].mxu0 %v1022
      %v1712 = vpop.f32.mrb[0].mxu0
      %v1713 = vadd.f32 0.0, %v1712
      %v1714 = vpop.f32.mrb[0].mxu0
      %v1715 = vpop.f32.mrb[0].mxu0
      %v1716 = vadd.f32 0.0, %v1715
      %v1717 = vpop.f32.mrb[0].mxu0
      %1718 = vmatprep.mubr.bf16.mxu0 0
      %1719 = vmatmul.mubr.bf16.gmra.mrb[0].mxu0 %v1025
      %v1720 = vpop.f32.mrb[0].mxu0
      %v1721 = vadd.f32 0.0, %v1720
      %v1722 = vpop.f32.mrb[0].mxu0
      %v1723 = vpop.f32.mrb[0].mxu0
      %v1724 = vadd.f32 0.0, %v1723
      %v1725 = vpop.f32.mrb[0].mxu0
      %1726 = vmatprep.mubr.bf16.mxu0 0
      %1727 = vmatmul.mubr.bf16.gmra.mrb[0].mxu0 %v1028
      %v1728 = vpop.f32.mrb[0].mxu0
      %v1729 = vadd.f32 0.0, %v1728
      %v1730 = vpop.f32.mrb[0].mxu0
      %v1731 = vpop.f32.mrb[0].mxu0
      %v1732 = vadd.f32 0.0, %v1731
      %v1733 = vpop.f32.mrb[0].mxu0
      %1734 = vmatprep.mubr.bf16.mxu0 0
      %1735 = vmatmul.mubr.bf16.gmra.mrb[0].mxu0 %v1031
      %v1736 = vpop.f32.mrb[0].mxu0
      %v1737 = vadd.f32 0.0, %v1736
      %v1738 = vpop.f32.mrb[0].mxu0
      %v1739 = vpop.f32.mrb[0].mxu0
      %v1740 = vadd.f32 0.0, %v1739
      %v1741 = vpop.f32.mrb[0].mxu0
      %1742 = vmatprep.mubr.bf16.mxu0 0
      %1743 = vmatmul.mubr.bf16.gmra.mrb[0].mxu0 %v1034
      %v1744 = vpop.f32.mrb[0].mxu0
      %v1745 = vadd.f32 0.0, %v1744
      %v1746 = vpop.f32.mrb[0].mxu0
      %v1747 = vpop.f32.mrb[0].mxu0
      %v1748 = vadd.f32 0.0, %v1747
      %v1749 = vpop.f32.mrb[0].mxu0
      %1750 = vmatprep.mubr.bf16.mxu0 0
      %1751 = vmatmul.mubr.bf16.gmra.mrb[0].mxu0 %v1037
      %v1752 = vpop.f32.mrb[0].mxu0
      %v1753 = vadd.f32 0.0, %v1752
      %v1754 = vpop.f32.mrb[0].mxu0
      %v1755 = vpop.f32.mrb[0].mxu0
      %v1756 = vadd.f32 0.0, %v1755
      %v1757 = vpop.f32.mrb[0].mxu0
      %1758 = vmatprep.mubr.bf16.mxu0 0
      %1759 = vmatmul.mubr.bf16.gmra.mrb[0].mxu0 %v1040
      %v1760 = vpop.f32.mrb[0].mxu0
      %v1761 = vadd.f32 0.0, %v1760
      %v1762 = vpop.f32.mrb[0].mxu0
      %v1763 = vpop.f32.mrb[0].mxu0
      %v1764 = vadd.f32 0.0, %v1763
      %v1765 = vpop.f32.mrb[0].mxu0
      %1766 = vmatprep.mubr.bf16.mxu0 0
      %1767 = vmatmul.mubr.bf16.gmra.mrb[0].mxu0 %v1043
      %v1768 = vpop.f32.mrb[0].mxu0
      %v1769 = vadd.f32 0.0, %v1768
      %v1770 = vpop.f32.mrb[0].mxu0
      %v1771 = vpop.f32.mrb[0].mxu0
      %v1772 = vadd.f32 0.0, %v1771
      %v1773 = vpop.f32.mrb[0].mxu0
      %1774 = vmatprep.mubr.bf16.mxu0 0
      %1775 = vmatmul.mubr.bf16.gmra.mrb[0].mxu0 %v1046
      %v1776 = vpop.f32.mrb[0].mxu0
      %v1777 = vadd.f32 0.0, %v1776
      %v1778 = vpop.f32.mrb[0].mxu0
      %v1779 = vpop.f32.mrb[0].mxu0
      %v1780 = vadd.f32 0.0, %v1779
      %v1781 = vpop.f32.mrb[0].mxu0
      %1782 = vmatprep.mubr.bf16.mxu0 0
      %1783 = vmatmul.mubr.bf16.gmra.mrb[0].mxu0 %v1049
      %v1784 = vpop.f32.mrb[0].mxu0
      %v1785 = vadd.f32 0.0, %v1784
      %v1786 = vpop.f32.mrb[0].mxu0
      %v1787 = vpop.f32.mrb[0].mxu0
      %v1788 = vadd.f32 0.0, %v1787
      %v1789 = vpop.f32.mrb[0].mxu0
      %1790 = vmatprep.mubr.bf16.mxu0 0
      %1791 = vmatmul.mubr.bf16.gmra.mrb[0].mxu0 %v1052
      %v1792 = vpop.f32.mrb[0].mxu0
      %v1793 = vadd.f32 0.0, %v1792
      %v1794 = vpop.f32.mrb[0].mxu0
      %v1795 = vpop.f32.mrb[0].mxu0
      %v1796 = vadd.f32 0.0, %v1795
      %v1797 = vpop.f32.mrb[0].mxu0
      %1798 = vmatprep.mubr.bf16.mxu0 0
      %1799 = vmatmul.mubr.bf16.gmra.mrb[0].mxu0 %v1055
      %v1800 = vpop.f32.mrb[0].mxu0
      %v1801 = vadd.f32 0.0, %v1800
      %v1802 = vpop.f32.mrb[0].mxu0
      %v1803 = vpop.f32.mrb[0].mxu0
      %v1804 = vadd.f32 0.0, %v1803
      %v1805 = vpop.f32.mrb[0].mxu0
      %1806 = vmatprep.mubr.bf16.mxu0 0
      %1807 = vmatmul.mubr.bf16.gmra.mrb[0].mxu0 %v1058
      %v1808 = vpop.f32.mrb[0].mxu0
      %v1809 = vadd.f32 0.0, %v1808
      %v1810 = vpop.f32.mrb[0].mxu0
      %v1811 = vpop.f32.mrb[0].mxu0
      %v1812 = vadd.f32 0.0, %v1811
      %v1813 = vpop.f32.mrb[0].mxu0
      %1814 = vmatprep.mubr.bf16.mxu0 0
      %1815 = vmatmul.mubr.bf16.gmra.mrb[0].mxu0 %v1657
      %v1816 = vpop.f32.mrb[0].mxu0
      %v1817 = vadd.f32 0.0, %v1816
      %v1818 = vpop.f32.mrb[0].mxu0
      %v1819 = vpop.f32.mrb[0].mxu0
      %v1820 = vadd.f32 0.0, %v1819
      %v1821 = vpop.f32.mrb[0].mxu0
      %1822 = vdwg.mxu0
      %v1823 = vadd.f32 %v1617, %v1697
      %v1824 = vadd.f32 %v1618, %v1700
      %v1825 = vadd.f32 %v1619, %v1705
      %v1826 = vadd.f32 %v1620, %v1708
      %v1827 = vadd.f32 %v1621, %v1713
      %v1828 = vadd.f32 %v1622, %v1716
      %v1829 = vadd.f32 %v1623, %v1721
      %v1830 = vadd.f32 %v1624, %v1724
      %v1831 = vadd.f32 %v1625, %v1729
      %v1832 = vadd.f32 %v1626, %v1732
      %v1833 = vadd.f32 %v1627, %v1737
      %v1834 = vadd.f32 %v1628, %v1740
      %v1835 = vadd.f32 %v1629, %v1745
      %v1836 = vadd.f32 %v1630, %v1748
      %v1837 = vadd.f32 %v1631, %v1753
      %v1838 = vadd.f32 %v1632, %v1756
      %v1839 = vadd.f32 %v1633, %v1761
      %v1840 = vadd.f32 %v1634, %v1764
      %v1841 = vadd.f32 %v1635, %v1769
      %v1842 = vadd.f32 %v1636, %v1772
      %v1843 = vadd.f32 %v1637, %v1777
      %v1844 = vadd.f32 %v1638, %v1780
      %v1845 = vadd.f32 %v1639, %v1785
      %v1846 = vadd.f32 %v1640, %v1788
      %v1847 = vadd.f32 %v1641, %v1793
      %v1848 = vadd.f32 %v1642, %v1796
      %v1849 = vadd.f32 %v1643, %v1801
      %v1850 = vadd.f32 %v1644, %v1804
      %v1851 = vadd.f32 %v1645, %v1809
      %v1852 = vadd.f32 %v1646, %v1812
      %v1853 = vadd.f32 %v1647, %v1817
      %v1854 = vadd.f32 %v1648, %v1820
      %s1855 = scalar_lea.vmem %s1, 8
      %v1856 = vld [vmem:[%s1855] sm:$0x3]
      %v1858 = vshrl.u32 %v274, 16
      %v1860 = vrot.slane %v1858, 4
      %v1861 = vshll.u32 %v274, 16
      %v1863 = vrot.slane %v1861, 5
      %v1864 = vor.u32 %v1860, %v1863
      %v1865 = vrot.slane %v1864, 4
      %v1867 = vshll.u32 %v275, 16
      %v1869 = vrot.slane %v1867, 5
      %v1870 = vsel %vm285, %v1865, %v1869
      %v1871 = vshrl.u32 %v275, 16
      %v1873 = vrot.slane %v1871, 4
      %v1874 = vor.u32 %v1873, %v1869
      %v1875 = vrot.slane %v1874, 4
      %v1877 = vshll.u32 %v276, 16
      %v1879 = vrot.slane %v1877, 5
      %v1880 = vsel %vm285, %v1875, %v1879
      %v1881 = vunpack.c.l.b16 %v1870
      %v1882 = vunpack.c.l.b16 %v1880
      %v1883 = vpack.c.b16 %v1882, %v1881
      %v1885 = vsel %vm718, %v1883, 0
      %v1888 = vsel %vm767, %v1856, 0
      %1890 = vmatprep.subr.bf16.mxu0 0
      %1891 = vmatpush1.bf16.msra.mxu0 %v1888
      %1892 = vmatprep.subr.bf16.mxu0 0
      %1893 = vmatpush1.bf16.msra.mxu0 0
      %1894 = vmatprep.subr.bf16.mxu0 0
      %1895 = vmatpush1.bf16.msra.mxu0 0
      %1896 = vmatprep.subr.bf16.mxu0 0
      %1897 = vmatpush1.bf16.msra.mxu0 0
      %1898 = vmatprep.subr.bf16.mxu0 0
      %1899 = vmatpush1.bf16.msra.mxu0 0
      %1900 = vmatprep.subr.bf16.mxu0 0
      %1901 = vmatpush1.bf16.msra.mxu0 0
      %1902 = vmatprep.subr.bf16.mxu0 0
      %1903 = vmatpush1.bf16.msra.mxu0 0
      %1904 = vmatprep.subr.bf16.mxu0 0
      %1905 = vmatpush1.bf16.msra.mxu0 0
      %1906 = vmatprep.subr.bf16.mxu0 0
      %1907 = vmatpush1.bf16.msra.mxu0 0
      %1908 = vmatprep.subr.bf16.mxu0 0
      %1909 = vmatpush1.bf16.msra.mxu0 0
      %1910 = vmatprep.subr.bf16.mxu0 0
      %1911 = vmatpush1.bf16.msra.mxu0 0
      %1912 = vmatprep.subr.bf16.mxu0 0
      %1913 = vmatpush1.bf16.msra.mxu0 0
      %1914 = vmatprep.subr.bf16.mxu0 0
      %1915 = vmatpush1.bf16.msra.mxu0 0
      %1916 = vmatprep.subr.bf16.mxu0 0
      %1917 = vmatpush1.bf16.msra.mxu0 0
      %1918 = vmatprep.subr.bf16.mxu0 0
      %1919 = vmatpush1.bf16.msra.mxu0 0
      %1920 = vmatprep.subr.bf16.mxu0 0
      %1921 = vmatpush1.bf16.msra.mxu0 0
      %1922 = vmatprep.mubr.bf16.mxu0 0
      %1923 = vmatmul.mubr.bf16.gmra.mrb[0].mxu0 %v723
      %v1924 = vpop.f32.mrb[0].mxu0
      %v1925 = vadd.f32 0.0, %v1924
      %v1926 = vpop.f32.mrb[0].mxu0
      %v1927 = vpop.f32.mrb[0].mxu0
      %v1928 = vadd.f32 0.0, %v1927
      %v1929 = vpop.f32.mrb[0].mxu0
      %1930 = vmatprep.mubr.bf16.mxu0 0
      %1931 = vmatmul.mubr.bf16.gmra.mrb[0].mxu0 %v726
      %v1932 = vpop.f32.mrb[0].mxu0
      %v1933 = vadd.f32 0.0, %v1932
      %v1934 = vpop.f32.mrb[0].mxu0
      %v1935 = vpop.f32.mrb[0].mxu0
      %v1936 = vadd.f32 0.0, %v1935
      %v1937 = vpop.f32.mrb[0].mxu0
      %1938 = vmatprep.mubr.bf16.mxu0 0
      %1939 = vmatmul.mubr.bf16.gmra.mrb[0].mxu0 %v729
      %v1940 = vpop.f32.mrb[0].mxu0
      %v1941 = vadd.f32 0.0, %v1940
      %v1942 = vpop.f32.mrb[0].mxu0
      %v1943 = vpop.f32.mrb[0].mxu0
      %v1944 = vadd.f32 0.0, %v1943
      %v1945 = vpop.f32.mrb[0].mxu0
      %1946 = vmatprep.mubr.bf16.mxu0 0
      %1947 = vmatmul.mubr.bf16.gmra.mrb[0].mxu0 %v732
      %v1948 = vpop.f32.mrb[0].mxu0
      %v1949 = vadd.f32 0.0, %v1948
      %v1950 = vpop.f32.mrb[0].mxu0
      %v1951 = vpop.f32.mrb[0].mxu0
      %v1952 = vadd.f32 0.0, %v1951
      %v1953 = vpop.f32.mrb[0].mxu0
      %1954 = vmatprep.mubr.bf16.mxu0 0
      %1955 = vmatmul.mubr.bf16.gmra.mrb[0].mxu0 %v735
      %v1956 = vpop.f32.mrb[0].mxu0
      %v1957 = vadd.f32 0.0, %v1956
      %v1958 = vpop.f32.mrb[0].mxu0
      %v1959 = vpop.f32.mrb[0].mxu0
      %v1960 = vadd.f32 0.0, %v1959
      %v1961 = vpop.f32.mrb[0].mxu0
      %1962 = vmatprep.mubr.bf16.mxu0 0
      %1963 = vmatmul.mubr.bf16.gmra.mrb[0].mxu0 %v738
      %v1964 = vpop.f32.mrb[0].mxu0
      %v1965 = vadd.f32 0.0, %v1964
      %v1966 = vpop.f32.mrb[0].mxu0
      %v1967 = vpop.f32.mrb[0].mxu0
      %v1968 = vadd.f32 0.0, %v1967
      %v1969 = vpop.f32.mrb[0].mxu0
      %1970 = vmatprep.mubr.bf16.mxu0 0
      %1971 = vmatmul.mubr.bf16.gmra.mrb[0].mxu0 %v741
      %v1972 = vpop.f32.mrb[0].mxu0
      %v1973 = vadd.f32 0.0, %v1972
      %v1974 = vpop.f32.mrb[0].mxu0
      %v1975 = vpop.f32.mrb[0].mxu0
      %v1976 = vadd.f32 0.0, %v1975
      %v1977 = vpop.f32.mrb[0].mxu0
      %1978 = vmatprep.mubr.bf16.mxu0 0
      %1979 = vmatmul.mubr.bf16.gmra.mrb[0].mxu0 %v744
      %v1980 = vpop.f32.mrb[0].mxu0
      %v1981 = vadd.f32 0.0, %v1980
      %v1982 = vpop.f32.mrb[0].mxu0
      %v1983 = vpop.f32.mrb[0].mxu0
      %v1984 = vadd.f32 0.0, %v1983
      %v1985 = vpop.f32.mrb[0].mxu0
      %1986 = vmatprep.mubr.bf16.mxu0 0
      %1987 = vmatmul.mubr.bf16.gmra.mrb[0].mxu0 %v747
      %v1988 = vpop.f32.mrb[0].mxu0
      %v1989 = vadd.f32 0.0, %v1988
      %v1990 = vpop.f32.mrb[0].mxu0
      %v1991 = vpop.f32.mrb[0].mxu0
      %v1992 = vadd.f32 0.0, %v1991
      %v1993 = vpop.f32.mrb[0].mxu0
      %1994 = vmatprep.mubr.bf16.mxu0 0
      %1995 = vmatmul.mubr.bf16.gmra.mrb[0].mxu0 %v750
      %v1996 = vpop.f32.mrb[0].mxu0
      %v1997 = vadd.f32 0.0, %v1996
      %v1998 = vpop.f32.mrb[0].mxu0
      %v1999 = vpop.f32.mrb[0].mxu0
      %v2000 = vadd.f32 0.0, %v1999
      %v2001 = vpop.f32.mrb[0].mxu0
      %2002 = vmatprep.mubr.bf16.mxu0 0
      %2003 = vmatmul.mubr.bf16.gmra.mrb[0].mxu0 %v753
      %v2004 = vpop.f32.mrb[0].mxu0
      %v2005 = vadd.f32 0.0, %v2004
      %v2006 = vpop.f32.mrb[0].mxu0
      %v2007 = vpop.f32.mrb[0].mxu0
      %v2008 = vadd.f32 0.0, %v2007
      %v2009 = vpop.f32.mrb[0].mxu0
      %2010 = vmatprep.mubr.bf16.mxu0 0
      %2011 = vmatmul.mubr.bf16.gmra.mrb[0].mxu0 %v756
      %v2012 = vpop.f32.mrb[0].mxu0
      %v2013 = vadd.f32 0.0, %v2012
      %v2014 = vpop.f32.mrb[0].mxu0
      %v2015 = vpop.f32.mrb[0].mxu0
      %v2016 = vadd.f32 0.0, %v2015
      %v2017 = vpop.f32.mrb[0].mxu0
      %2018 = vmatprep.mubr.bf16.mxu0 0
      %2019 = vmatmul.mubr.bf16.gmra.mrb[0].mxu0 %v759
      %v2020 = vpop.f32.mrb[0].mxu0
      %v2021 = vadd.f32 0.0, %v2020
      %v2022 = vpop.f32.mrb[0].mxu0
      %v2023 = vpop.f32.mrb[0].mxu0
      %v2024 = vadd.f32 0.0, %v2023
      %v2025 = vpop.f32.mrb[0].mxu0
      %2026 = vmatprep.mubr.bf16.mxu0 0
      %2027 = vmatmul.mubr.bf16.gmra.mrb[0].mxu0 %v762
      %v2028 = vpop.f32.mrb[0].mxu0
      %v2029 = vadd.f32 0.0, %v2028
      %v2030 = vpop.f32.mrb[0].mxu0
      %v2031 = vpop.f32.mrb[0].mxu0
      %v2032 = vadd.f32 0.0, %v2031
      %v2033 = vpop.f32.mrb[0].mxu0
      %2034 = vmatprep.mubr.bf16.mxu0 0
      %2035 = vmatmul.mubr.bf16.gmra.mrb[0].mxu0 %v765
      %v2036 = vpop.f32.mrb[0].mxu0
      %v2037 = vadd.f32 0.0, %v2036
      %v2038 = vpop.f32.mrb[0].mxu0
      %v2039 = vpop.f32.mrb[0].mxu0
      %v2040 = vadd.f32 0.0, %v2039
      %v2041 = vpop.f32.mrb[0].mxu0
      %2042 = vmatprep.mubr.bf16.mxu0 0
      %2043 = vmatmul.mubr.bf16.gmra.mrb[0].mxu0 %v1885
      %v2044 = vpop.f32.mrb[0].mxu0
      %v2045 = vadd.f32 0.0, %v2044
      %v2046 = vpop.f32.mrb[0].mxu0
      %v2047 = vpop.f32.mrb[0].mxu0
      %v2048 = vadd.f32 0.0, %v2047
      %v2049 = vpop.f32.mrb[0].mxu0
      %2050 = vdwg.mxu0
      %v2051 = vadd.f32 %v1823, %v1925
      %v2052 = vadd.f32 %v1824, %v1928
      %v2053 = vadd.f32 %v1825, %v1933
      %v2054 = vadd.f32 %v1826, %v1936
      %v2055 = vadd.f32 %v1827, %v1941
      %v2056 = vadd.f32 %v1828, %v1944
      %v2057 = vadd.f32 %v1829, %v1949
      %v2058 = vadd.f32 %v1830, %v1952
      %v2059 = vadd.f32 %v1831, %v1957
      %v2060 = vadd.f32 %v1832, %v1960
      %v2061 = vadd.f32 %v1833, %v1965
      %v2062 = vadd.f32 %v1834, %v1968
      %v2063 = vadd.f32 %v1835, %v1973
      %v2064 = vadd.f32 %v1836, %v1976
      %v2065 = vadd.f32 %v1837, %v1981
      %v2066 = vadd.f32 %v1838, %v1984
      %v2067 = vadd.f32 %v1839, %v1989
      %v2068 = vadd.f32 %v1840, %v1992
      %v2069 = vadd.f32 %v1841, %v1997
      %v2070 = vadd.f32 %v1842, %v2000
      %v2071 = vadd.f32 %v1843, %v2005
      %v2072 = vadd.f32 %v1844, %v2008
      %v2073 = vadd.f32 %v1845, %v2013
      %v2074 = vadd.f32 %v1846, %v2016
      %v2075 = vadd.f32 %v1847, %v2021
      %v2076 = vadd.f32 %v1848, %v2024
      %v2077 = vadd.f32 %v1849, %v2029
      %v2078 = vadd.f32 %v1850, %v2032
      %v2079 = vadd.f32 %v1851, %v2037
      %v2080 = vadd.f32 %v1852, %v2040
      %v2081 = vadd.f32 %v1853, %v2045
      %v2082 = vadd.f32 %v1854, %v2048
      %s2083 = scalar_lea.vmem %s1, 10
      %v2084 = vld [vmem:[%s2083] sm:$0x3]
      %v2086 = vrot.slane %v274, 5
      %v2087 = vrot.slane %v2086, 4
      %v2088 = vrot.slane %v275, 5
      %v2089 = vsel %vm1244, %v2087, %v2088
      %v2090 = vrot.slane %v2088, 4
      %v2091 = vrot.slane %v276, 5
      %v2092 = vsel %vm1244, %v2090, %v2091
      %v2093 = vunpack.c.l.b16 %v2089
      %v2094 = vunpack.c.l.b16 %v2092
      %v2095 = vpack.c.b16 %v2094, %v2093
      %v2097 = vsel %vm718, %v2095, 0
      %v2100 = vsel %vm767, %v2084, 0
      %2102 = vmatprep.subr.bf16.mxu0 0
      %2103 = vmatpush1.bf16.msra.mxu0 %v2100
      %2104 = vmatprep.subr.bf16.mxu0 0
      %2105 = vmatpush1.bf16.msra.mxu0 0
      %2106 = vmatprep.subr.bf16.mxu0 0
      %2107 = vmatpush1.bf16.msra.mxu0 0
      %2108 = vmatprep.subr.bf16.mxu0 0
      %2109 = vmatpush1.bf16.msra.mxu0 0
      %2110 = vmatprep.subr.bf16.mxu0 0
      %2111 = vmatpush1.bf16.msra.mxu0 0
      %2112 = vmatprep.subr.bf16.mxu0 0
      %2113 = vmatpush1.bf16.msra.mxu0 0
      %2114 = vmatprep.subr.bf16.mxu0 0
      %2115 = vmatpush1.bf16.msra.mxu0 0
      %2116 = vmatprep.subr.bf16.mxu0 0
      %2117 = vmatpush1.bf16.msra.mxu0 0
      %2118 = vmatprep.subr.bf16.mxu0 0
      %2119 = vmatpush1.bf16.msra.mxu0 0
      %2120 = vmatprep.subr.bf16.mxu0 0
      %2121 = vmatpush1.bf16.msra.mxu0 0
      %2122 = vmatprep.subr.bf16.mxu0 0
      %2123 = vmatpush1.bf16.msra.mxu0 0
      %2124 = vmatprep.subr.bf16.mxu0 0
      %2125 = vmatpush1.bf16.msra.mxu0 0
      %2126 = vmatprep.subr.bf16.mxu0 0
      %2127 = vmatpush1.bf16.msra.mxu0 0
      %2128 = vmatprep.subr.bf16.mxu0 0
      %2129 = vmatpush1.bf16.msra.mxu0 0
      %2130 = vmatprep.subr.bf16.mxu0 0
      %2131 = vmatpush1.bf16.msra.mxu0 0
      %2132 = vmatprep.subr.bf16.mxu0 0
      %2133 = vmatpush1.bf16.msra.mxu0 0
      %2134 = vmatprep.mubr.bf16.mxu0 0
      %2135 = vmatmul.mubr.bf16.gmra.mrb[0].mxu0 %v1409
      %v2136 = vpop.f32.mrb[0].mxu0
      %v2137 = vadd.f32 0.0, %v2136
      %v2138 = vpop.f32.mrb[0].mxu0
      %v2139 = vpop.f32.mrb[0].mxu0
      %v2140 = vadd.f32 0.0, %v2139
      %v2141 = vpop.f32.mrb[0].mxu0
      %2142 = vmatprep.mubr.bf16.mxu0 0
      %2143 = vmatmul.mubr.bf16.gmra.mrb[0].mxu0 %v1412
      %v2144 = vpop.f32.mrb[0].mxu0
      %v2145 = vadd.f32 0.0, %v2144
      %v2146 = vpop.f32.mrb[0].mxu0
      %v2147 = vpop.f32.mrb[0].mxu0
      %v2148 = vadd.f32 0.0, %v2147
      %v2149 = vpop.f32.mrb[0].mxu0
      %2150 = vmatprep.mubr.bf16.mxu0 0
      %2151 = vmatmul.mubr.bf16.gmra.mrb[0].mxu0 %v1415
      %v2152 = vpop.f32.mrb[0].mxu0
      %v2153 = vadd.f32 0.0, %v2152
      %v2154 = vpop.f32.mrb[0].mxu0
      %v2155 = vpop.f32.mrb[0].mxu0
      %v2156 = vadd.f32 0.0, %v2155
      %v2157 = vpop.f32.mrb[0].mxu0
      %2158 = vmatprep.mubr.bf16.mxu0 0
      %2159 = vmatmul.mubr.bf16.gmra.mrb[0].mxu0 %v1418
      %v2160 = vpop.f32.mrb[0].mxu0
      %v2161 = vadd.f32 0.0, %v2160
      %v2162 = vpop.f32.mrb[0].mxu0
      %v2163 = vpop.f32.mrb[0].mxu0
      %v2164 = vadd.f32 0.0, %v2163
      %v2165 = vpop.f32.mrb[0].mxu0
      %2166 = vmatprep.mubr.bf16.mxu0 0
      %2167 = vmatmul.mubr.bf16.gmra.mrb[0].mxu0 %v1421
      %v2168 = vpop.f32.mrb[0].mxu0
      %v2169 = vadd.f32 0.0, %v2168
      %v2170 = vpop.f32.mrb[0].mxu0
      %v2171 = vpop.f32.mrb[0].mxu0
      %v2172 = vadd.f32 0.0, %v2171
      %v2173 = vpop.f32.mrb[0].mxu0
      %2174 = vmatprep.mubr.bf16.mxu0 0
      %2175 = vmatmul.mubr.bf16.gmra.mrb[0].mxu0 %v1424
      %v2176 = vpop.f32.mrb[0].mxu0
      %v2177 = vadd.f32 0.0, %v2176
      %v2178 = vpop.f32.mrb[0].mxu0
      %v2179 = vpop.f32.mrb[0].mxu0
      %v2180 = vadd.f32 0.0, %v2179
      %v2181 = vpop.f32.mrb[0].mxu0
      %2182 = vmatprep.mubr.bf16.mxu0 0
      %2183 = vmatmul.mubr.bf16.gmra.mrb[0].mxu0 %v1427
      %v2184 = vpop.f32.mrb[0].mxu0
      %v2185 = vadd.f32 0.0, %v2184
      %v2186 = vpop.f32.mrb[0].mxu0
      %v2187 = vpop.f32.mrb[0].mxu0
      %v2188 = vadd.f32 0.0, %v2187
      %v2189 = vpop.f32.mrb[0].mxu0
      %2190 = vmatprep.mubr.bf16.mxu0 0
      %2191 = vmatmul.mubr.bf16.gmra.mrb[0].mxu0 %v1430
      %v2192 = vpop.f32.mrb[0].mxu0
      %v2193 = vadd.f32 0.0, %v2192
      %v2194 = vpop.f32.mrb[0].mxu0
      %v2195 = vpop.f32.mrb[0].mxu0
      %v2196 = vadd.f32 0.0, %v2195
      %v2197 = vpop.f32.mrb[0].mxu0
      %2198 = vmatprep.mubr.bf16.mxu0 0
      %2199 = vmatmul.mubr.bf16.gmra.mrb[0].mxu0 %v1433
      %v2200 = vpop.f32.mrb[0].mxu0
      %v2201 = vadd.f32 0.0, %v2200
      %v2202 = vpop.f32.mrb[0].mxu0
      %v2203 = vpop.f32.mrb[0].mxu0
      %v2204 = vadd.f32 0.0, %v2203
      %v2205 = vpop.f32.mrb[0].mxu0
      %2206 = vmatprep.mubr.bf16.mxu0 0
      %2207 = vmatmul.mubr.bf16.gmra.mrb[0].mxu0 %v1436
      %v2208 = vpop.f32.mrb[0].mxu0
      %v2209 = vadd.f32 0.0, %v2208
      %v2210 = vpop.f32.mrb[0].mxu0
      %v2211 = vpop.f32.mrb[0].mxu0
      %v2212 = vadd.f32 0.0, %v2211
      %v2213 = vpop.f32.mrb[0].mxu0
      %2214 = vmatprep.mubr.bf16.mxu0 0
      %2215 = vmatmul.mubr.bf16.gmra.mrb[0].mxu0 %v1439
      %v2216 = vpop.f32.mrb[0].mxu0
      %v2217 = vadd.f32 0.0, %v2216
      %v2218 = vpop.f32.mrb[0].mxu0
      %v2219 = vpop.f32.mrb[0].mxu0
      %v2220 = vadd.f32 0.0, %v2219
      %v2221 = vpop.f32.mrb[0].mxu0
      %2222 = vmatprep.mubr.bf16.mxu0 0
      %2223 = vmatmul.mubr.bf16.gmra.mrb[0].mxu0 %v1442
      %v2224 = vpop.f32.mrb[0].mxu0
      %v2225 = vadd.f32 0.0, %v2224
      %v2226 = vpop.f32.mrb[0].mxu0
      %v2227 = vpop.f32.mrb[0].mxu0
      %v2228 = vadd.f32 0.0, %v2227
      %v2229 = vpop.f32.mrb[0].mxu0
      %2230 = vmatprep.mubr.bf16.mxu0 0
      %2231 = vmatmul.mubr.bf16.gmra.mrb[0].mxu0 %v1445
      %v2232 = vpop.f32.mrb[0].mxu0
      %v2233 = vadd.f32 0.0, %v2232
      %v2234 = vpop.f32.mrb[0].mxu0
      %v2235 = vpop.f32.mrb[0].mxu0
      %v2236 = vadd.f32 0.0, %v2235
      %v2237 = vpop.f32.mrb[0].mxu0
      %2238 = vmatprep.mubr.bf16.mxu0 0
      %2239 = vmatmul.mubr.bf16.gmra.mrb[0].mxu0 %v1448
      %v2240 = vpop.f32.mrb[0].mxu0
      %v2241 = vadd.f32 0.0, %v2240
      %v2242 = vpop.f32.mrb[0].mxu0
      %v2243 = vpop.f32.mrb[0].mxu0
      %v2244 = vadd.f32 0.0, %v2243
      %v2245 = vpop.f32.mrb[0].mxu0
      %2246 = vmatprep.mubr.bf16.mxu0 0
      %2247 = vmatmul.mubr.bf16.gmra.mrb[0].mxu0 %v1451
      %v2248 = vpop.f32.mrb[0].mxu0
      %v2249 = vadd.f32 0.0, %v2248
      %v2250 = vpop.f32.mrb[0].mxu0
      %v2251 = vpop.f32.mrb[0].mxu0
      %v2252 = vadd.f32 0.0, %v2251
      %v2253 = vpop.f32.mrb[0].mxu0
      %2254 = vmatprep.mubr.bf16.mxu0 0
      %2255 = vmatmul.mubr.bf16.gmra.mrb[0].mxu0 %v2097
      %v2256 = vpop.f32.mrb[0].mxu0
      %v2257 = vadd.f32 0.0, %v2256
      %v2258 = vpop.f32.mrb[0].mxu0
      %v2259 = vpop.f32.mrb[0].mxu0
      %v2260 = vadd.f32 0.0, %v2259
      %v2261 = vpop.f32.mrb[0].mxu0
      %2262 = vdwg.mxu0
      %v2263 = vadd.f32 %v2051, %v2137
      %v2264 = vadd.f32 %v2052, %v2140
      %v2265 = vadd.f32 %v2053, %v2145
      %v2266 = vadd.f32 %v2054, %v2148
      %v2267 = vadd.f32 %v2055, %v2153
      %v2268 = vadd.f32 %v2056, %v2156
      %v2269 = vadd.f32 %v2057, %v2161
      %v2270 = vadd.f32 %v2058, %v2164
      %v2271 = vadd.f32 %v2059, %v2169
      %v2272 = vadd.f32 %v2060, %v2172
      %v2273 = vadd.f32 %v2061, %v2177
      %v2274 = vadd.f32 %v2062, %v2180
      %v2275 = vadd.f32 %v2063, %v2185
      %v2276 = vadd.f32 %v2064, %v2188
      %v2277 = vadd.f32 %v2065, %v2193
      %v2278 = vadd.f32 %v2066, %v2196
      %v2279 = vadd.f32 %v2067, %v2201
      %v2280 = vadd.f32 %v2068, %v2204
      %v2281 = vadd.f32 %v2069, %v2209
      %v2282 = vadd.f32 %v2070, %v2212
      %v2283 = vadd.f32 %v2071, %v2217
      %v2284 = vadd.f32 %v2072, %v2220
      %v2285 = vadd.f32 %v2073, %v2225
      %v2286 = vadd.f32 %v2074, %v2228
      %v2287 = vadd.f32 %v2075, %v2233
      %v2288 = vadd.f32 %v2076, %v2236
      %v2289 = vadd.f32 %v2077, %v2241
      %v2290 = vadd.f32 %v2078, %v2244
      %v2291 = vadd.f32 %v2079, %v2249
      %v2292 = vadd.f32 %v2080, %v2252
      %v2293 = vadd.f32 %v2081, %v2257
      %v2294 = vadd.f32 %v2082, %v2260
      %s2295 = scalar_lea.vmem %s1, 12
      %v2296 = vld [vmem:[%s2295] sm:$0x3]
      %v2299 = vunpack.c.l.b16 %v277
      %v2300 = vunpack.c.l.b16 %v278
      %v2301 = vpack.c.b16 %v2300, %v2299
      %v2303 = vsel %vm718, %v2301, 0
      %v2306 = vsel %vm767, %v2296, 0
      %2308 = vmatprep.subr.bf16.mxu0 0
      %2309 = vmatpush1.bf16.msra.mxu0 %v2306
      %2310 = vmatprep.subr.bf16.mxu0 0
      %2311 = vmatpush1.bf16.msra.mxu0 0
      %2312 = vmatprep.subr.bf16.mxu0 0
      %2313 = vmatpush1.bf16.msra.mxu0 0
      %2314 = vmatprep.subr.bf16.mxu0 0
      %2315 = vmatpush1.bf16.msra.mxu0 0
      %2316 = vmatprep.subr.bf16.mxu0 0
      %2317 = vmatpush1.bf16.msra.mxu0 0
      %2318 = vmatprep.subr.bf16.mxu0 0
      %2319 = vmatpush1.bf16.msra.mxu0 0
      %2320 = vmatprep.subr.bf16.mxu0 0
      %2321 = vmatpush1.bf16.msra.mxu0 0
      %2322 = vmatprep.subr.bf16.mxu0 0
      %2323 = vmatpush1.bf16.msra.mxu0 0
      %2324 = vmatprep.subr.bf16.mxu0 0
      %2325 = vmatpush1.bf16.msra.mxu0 0
      %2326 = vmatprep.subr.bf16.mxu0 0
      %2327 = vmatpush1.bf16.msra.mxu0 0
      %2328 = vmatprep.subr.bf16.mxu0 0
      %2329 = vmatpush1.bf16.msra.mxu0 0
      %2330 = vmatprep.subr.bf16.mxu0 0
      %2331 = vmatpush1.bf16.msra.mxu0 0
      %2332 = vmatprep.subr.bf16.mxu0 0
      %2333 = vmatpush1.bf16.msra.mxu0 0
      %2334 = vmatprep.subr.bf16.mxu0 0
      %2335 = vmatpush1.bf16.msra.mxu0 0
      %2336 = vmatprep.subr.bf16.mxu0 0
      %2337 = vmatpush1.bf16.msra.mxu0 0
      %2338 = vmatprep.subr.bf16.mxu0 0
      %2339 = vmatpush1.bf16.msra.mxu0 0
      %2340 = vmatprep.mubr.bf16.mxu0 0
      %2341 = vmatmul.mubr.bf16.gmra.mrb[0].mxu0 %v1019
      %v2342 = vpop.f32.mrb[0].mxu0
      %v2343 = vadd.f32 0.0, %v2342
      %v2344 = vpop.f32.mrb[0].mxu0
      %v2345 = vpop.f32.mrb[0].mxu0
      %v2346 = vadd.f32 0.0, %v2345
      %v2347 = vpop.f32.mrb[0].mxu0
      %2348 = vmatprep.mubr.bf16.mxu0 0
      %2349 = vmatmul.mubr.bf16.gmra.mrb[0].mxu0 %v1022
      %v2350 = vpop.f32.mrb[0].mxu0
      %v2351 = vadd.f32 0.0, %v2350
      %v2352 = vpop.f32.mrb[0].mxu0
      %v2353 = vpop.f32.mrb[0].mxu0
      %v2354 = vadd.f32 0.0, %v2353
      %v2355 = vpop.f32.mrb[0].mxu0
      %2356 = vmatprep.mubr.bf16.mxu0 0
      %2357 = vmatmul.mubr.bf16.gmra.mrb[0].mxu0 %v1025
      %v2358 = vpop.f32.mrb[0].mxu0
      %v2359 = vadd.f32 0.0, %v2358
      %v2360 = vpop.f32.mrb[0].mxu0
      %v2361 = vpop.f32.mrb[0].mxu0
      %v2362 = vadd.f32 0.0, %v2361
      %v2363 = vpop.f32.mrb[0].mxu0
      %2364 = vmatprep.mubr.bf16.mxu0 0
      %2365 = vmatmul.mubr.bf16.gmra.mrb[0].mxu0 %v1028
      %v2366 = vpop.f32.mrb[0].mxu0
      %v2367 = vadd.f32 0.0, %v2366
      %v2368 = vpop.f32.mrb[0].mxu0
      %v2369 = vpop.f32.mrb[0].mxu0
      %v2370 = vadd.f32 0.0, %v2369
      %v2371 = vpop.f32.mrb[0].mxu0
      %2372 = vmatprep.mubr.bf16.mxu0 0
      %2373 = vmatmul.mubr.bf16.gmra.mrb[0].mxu0 %v1031
      %v2374 = vpop.f32.mrb[0].mxu0
      %v2375 = vadd.f32 0.0, %v2374
      %v2376 = vpop.f32.mrb[0].mxu0
      %v2377 = vpop.f32.mrb[0].mxu0
      %v2378 = vadd.f32 0.0, %v2377
      %v2379 = vpop.f32.mrb[0].mxu0
      %2380 = vmatprep.mubr.bf16.mxu0 0
      %2381 = vmatmul.mubr.bf16.gmra.mrb[0].mxu0 %v1034
      %v2382 = vpop.f32.mrb[0].mxu0
      %v2383 = vadd.f32 0.0, %v2382
      %v2384 = vpop.f32.mrb[0].mxu0
      %v2385 = vpop.f32.mrb[0].mxu0
      %v2386 = vadd.f32 0.0, %v2385
      %v2387 = vpop.f32.mrb[0].mxu0
      %2388 = vmatprep.mubr.bf16.mxu0 0
      %2389 = vmatmul.mubr.bf16.gmra.mrb[0].mxu0 %v1037
      %v2390 = vpop.f32.mrb[0].mxu0
      %v2391 = vadd.f32 0.0, %v2390
      %v2392 = vpop.f32.mrb[0].mxu0
      %v2393 = vpop.f32.mrb[0].mxu0
      %v2394 = vadd.f32 0.0, %v2393
      %v2395 = vpop.f32.mrb[0].mxu0
      %2396 = vmatprep.mubr.bf16.mxu0 0
      %2397 = vmatmul.mubr.bf16.gmra.mrb[0].mxu0 %v1040
      %v2398 = vpop.f32.mrb[0].mxu0
      %v2399 = vadd.f32 0.0, %v2398
      %v2400 = vpop.f32.mrb[0].mxu0
      %v2401 = vpop.f32.mrb[0].mxu0
      %v2402 = vadd.f32 0.0, %v2401
      %v2403 = vpop.f32.mrb[0].mxu0
      %2404 = vmatprep.mubr.bf16.mxu0 0
      %2405 = vmatmul.mubr.bf16.gmra.mrb[0].mxu0 %v1043
      %v2406 = vpop.f32.mrb[0].mxu0
      %v2407 = vadd.f32 0.0, %v2406
      %v2408 = vpop.f32.mrb[0].mxu0
      %v2409 = vpop.f32.mrb[0].mxu0
      %v2410 = vadd.f32 0.0, %v2409
      %v2411 = vpop.f32.mrb[0].mxu0
      %2412 = vmatprep.mubr.bf16.mxu0 0
      %2413 = vmatmul.mubr.bf16.gmra.mrb[0].mxu0 %v1046
      %v2414 = vpop.f32.mrb[0].mxu0
      %v2415 = vadd.f32 0.0, %v2414
      %v2416 = vpop.f32.mrb[0].mxu0
      %v2417 = vpop.f32.mrb[0].mxu0
      %v2418 = vadd.f32 0.0, %v2417
      %v2419 = vpop.f32.mrb[0].mxu0
      %2420 = vmatprep.mubr.bf16.mxu0 0
      %2421 = vmatmul.mubr.bf16.gmra.mrb[0].mxu0 %v1049
      %v2422 = vpop.f32.mrb[0].mxu0
      %v2423 = vadd.f32 0.0, %v2422
      %v2424 = vpop.f32.mrb[0].mxu0
      %v2425 = vpop.f32.mrb[0].mxu0
      %v2426 = vadd.f32 0.0, %v2425
      %v2427 = vpop.f32.mrb[0].mxu0
      %2428 = vmatprep.mubr.bf16.mxu0 0
      %2429 = vmatmul.mubr.bf16.gmra.mrb[0].mxu0 %v1052
      %v2430 = vpop.f32.mrb[0].mxu0
      %v2431 = vadd.f32 0.0, %v2430
      %v2432 = vpop.f32.mrb[0].mxu0
      %v2433 = vpop.f32.mrb[0].mxu0
      %v2434 = vadd.f32 0.0, %v2433
      %v2435 = vpop.f32.mrb[0].mxu0
      %2436 = vmatprep.mubr.bf16.mxu0 0
      %2437 = vmatmul.mubr.bf16.gmra.mrb[0].mxu0 %v1055
      %v2438 = vpop.f32.mrb[0].mxu0
      %v2439 = vadd.f32 0.0, %v2438
      %v2440 = vpop.f32.mrb[0].mxu0
      %v2441 = vpop.f32.mrb[0].mxu0
      %v2442 = vadd.f32 0.0, %v2441
      %v2443 = vpop.f32.mrb[0].mxu0
      %2444 = vmatprep.mubr.bf16.mxu0 0
      %2445 = vmatmul.mubr.bf16.gmra.mrb[0].mxu0 %v1058
      %v2446 = vpop.f32.mrb[0].mxu0
      %v2447 = vadd.f32 0.0, %v2446
      %v2448 = vpop.f32.mrb[0].mxu0
      %v2449 = vpop.f32.mrb[0].mxu0
      %v2450 = vadd.f32 0.0, %v2449
      %v2451 = vpop.f32.mrb[0].mxu0
      %2452 = vmatprep.mubr.bf16.mxu0 0
      %2453 = vmatmul.mubr.bf16.gmra.mrb[0].mxu0 %v1657
      %v2454 = vpop.f32.mrb[0].mxu0
      %v2455 = vadd.f32 0.0, %v2454
      %v2456 = vpop.f32.mrb[0].mxu0
      %v2457 = vpop.f32.mrb[0].mxu0
      %v2458 = vadd.f32 0.0, %v2457
      %v2459 = vpop.f32.mrb[0].mxu0
      %2460 = vmatprep.mubr.bf16.mxu0 0
      %2461 = vmatmul.mubr.bf16.gmra.mrb[0].mxu0 %v2303
      %v2462 = vpop.f32.mrb[0].mxu0
      %v2463 = vadd.f32 0.0, %v2462
      %v2464 = vpop.f32.mrb[0].mxu0
      %v2465 = vpop.f32.mrb[0].mxu0
      %v2466 = vadd.f32 0.0, %v2465
      %v2467 = vpop.f32.mrb[0].mxu0
      %2468 = vdwg.mxu0
      %v2469 = vadd.f32 %v2263, %v2343
      %v2470 = vadd.f32 %v2264, %v2346
      %v2471 = vadd.f32 %v2265, %v2351
      %v2472 = vadd.f32 %v2266, %v2354
      %v2473 = vadd.f32 %v2267, %v2359
      %v2474 = vadd.f32 %v2268, %v2362
      %v2475 = vadd.f32 %v2269, %v2367
      %v2476 = vadd.f32 %v2270, %v2370
      %v2477 = vadd.f32 %v2271, %v2375
      %v2478 = vadd.f32 %v2272, %v2378
      %v2479 = vadd.f32 %v2273, %v2383
      %v2480 = vadd.f32 %v2274, %v2386
      %v2481 = vadd.f32 %v2275, %v2391
      %v2482 = vadd.f32 %v2276, %v2394
      %v2483 = vadd.f32 %v2277, %v2399
      %v2484 = vadd.f32 %v2278, %v2402
      %v2485 = vadd.f32 %v2279, %v2407
      %v2486 = vadd.f32 %v2280, %v2410
      %v2487 = vadd.f32 %v2281, %v2415
      %v2488 = vadd.f32 %v2282, %v2418
      %v2489 = vadd.f32 %v2283, %v2423
      %v2490 = vadd.f32 %v2284, %v2426
      %v2491 = vadd.f32 %v2285, %v2431
      %v2492 = vadd.f32 %v2286, %v2434
      %v2493 = vadd.f32 %v2287, %v2439
      %v2494 = vadd.f32 %v2288, %v2442
      %v2495 = vadd.f32 %v2289, %v2447
      %v2496 = vadd.f32 %v2290, %v2450
      %v2497 = vadd.f32 %v2291, %v2455
      %v2498 = vadd.f32 %v2292, %v2458
      %v2499 = vadd.f32 %v2293, %v2463
      %v2500 = vadd.f32 %v2294, %v2466
      %s2501 = scalar_lea.vmem %s1, 14
      %v2502 = vld [vmem:[%s2501] sm:$0x3]
      %v2504 = vshrl.u32 %v277, 16
      %v2506 = vrot.slane %v2504, 4
      %v2507 = vshll.u32 %v277, 16
      %v2509 = vrot.slane %v2507, 5
      %v2510 = vor.u32 %v2506, %v2509
      %v2511 = vrot.slane %v2510, 4
      %v2513 = vshll.u32 %v278, 16
      %v2515 = vrot.slane %v2513, 5
      %v2516 = vsel %vm285, %v2511, %v2515
      %v2517 = vshrl.u32 %v278, 16
      %v2519 = vrot.slane %v2517, 4
      %v2520 = vor.u32 %v2519, %v2515
      %v2521 = vrot.slane %v2520, 4
      %v2523 = vshll.u32 %v279, 16
      %v2525 = vrot.slane %v2523, 5
      %v2526 = vsel %vm285, %v2521, %v2525
      %v2527 = vunpack.c.l.b16 %v2516
      %v2528 = vunpack.c.l.b16 %v2526
      %v2529 = vpack.c.b16 %v2528, %v2527
      %v2531 = vsel %vm718, %v2529, 0
      %v2534 = vsel %vm767, %v2502, 0
      %2536 = vmatprep.subr.bf16.mxu0 0
      %2537 = vmatpush1.bf16.msra.mxu0 %v2534
      %2538 = vmatprep.subr.bf16.mxu0 0
      %2539 = vmatpush1.bf16.msra.mxu0 0
      %2540 = vmatprep.subr.bf16.mxu0 0
      %2541 = vmatpush1.bf16.msra.mxu0 0
      %2542 = vmatprep.subr.bf16.mxu0 0
      %2543 = vmatpush1.bf16.msra.mxu0 0
      %2544 = vmatprep.subr.bf16.mxu0 0
      %2545 = vmatpush1.bf16.msra.mxu0 0
      %2546 = vmatprep.subr.bf16.mxu0 0
      %2547 = vmatpush1.bf16.msra.mxu0 0
      %2548 = vmatprep.subr.bf16.mxu0 0
      %2549 = vmatpush1.bf16.msra.mxu0 0
      %2550 = vmatprep.subr.bf16.mxu0 0
      %2551 = vmatpush1.bf16.msra.mxu0 0
      %2552 = vmatprep.subr.bf16.mxu0 0
      %2553 = vmatpush1.bf16.msra.mxu0 0
      %2554 = vmatprep.subr.bf16.mxu0 0
      %2555 = vmatpush1.bf16.msra.mxu0 0
      %2556 = vmatprep.subr.bf16.mxu0 0
      %2557 = vmatpush1.bf16.msra.mxu0 0
      %2558 = vmatprep.subr.bf16.mxu0 0
      %2559 = vmatpush1.bf16.msra.mxu0 0
      %2560 = vmatprep.subr.bf16.mxu0 0
      %2561 = vmatpush1.bf16.msra.mxu0 0
      %2562 = vmatprep.subr.bf16.mxu0 0
      %2563 = vmatpush1.bf16.msra.mxu0 0
      %2564 = vmatprep.subr.bf16.mxu0 0
      %2565 = vmatpush1.bf16.msra.mxu0 0
      %2566 = vmatprep.subr.bf16.mxu0 0
      %2567 = vmatpush1.bf16.msra.mxu0 0
      %2568 = vmatprep.mubr.bf16.mxu0 0
      %2569 = vmatmul.mubr.bf16.gmra.mrb[0].mxu0 %v726
      %v2570 = vpop.f32.mrb[0].mxu0
      %v2571 = vadd.f32 0.0, %v2570
      %v2572 = vpop.f32.mrb[0].mxu0
      %v2573 = vpop.f32.mrb[0].mxu0
      %v2574 = vadd.f32 0.0, %v2573
      %v2575 = vpop.f32.mrb[0].mxu0
      %2576 = vmatprep.mubr.bf16.mxu0 0
      %2577 = vmatmul.mubr.bf16.gmra.mrb[0].mxu0 %v729
      %v2578 = vpop.f32.mrb[0].mxu0
      %v2579 = vadd.f32 0.0, %v2578
      %v2580 = vpop.f32.mrb[0].mxu0
      %v2581 = vpop.f32.mrb[0].mxu0
      %v2582 = vadd.f32 0.0, %v2581
      %v2583 = vpop.f32.mrb[0].mxu0
      %2584 = vmatprep.mubr.bf16.mxu0 0
      %2585 = vmatmul.mubr.bf16.gmra.mrb[0].mxu0 %v732
      %v2586 = vpop.f32.mrb[0].mxu0
      %v2587 = vadd.f32 0.0, %v2586
      %v2588 = vpop.f32.mrb[0].mxu0
      %v2589 = vpop.f32.mrb[0].mxu0
      %v2590 = vadd.f32 0.0, %v2589
      %v2591 = vpop.f32.mrb[0].mxu0
      %2592 = vmatprep.mubr.bf16.mxu0 0
      %2593 = vmatmul.mubr.bf16.gmra.mrb[0].mxu0 %v735
      %v2594 = vpop.f32.mrb[0].mxu0
      %v2595 = vadd.f32 0.0, %v2594
      %v2596 = vpop.f32.mrb[0].mxu0
      %v2597 = vpop.f32.mrb[0].mxu0
      %v2598 = vadd.f32 0.0, %v2597
      %v2599 = vpop.f32.mrb[0].mxu0
      %2600 = vmatprep.mubr.bf16.mxu0 0
      %2601 = vmatmul.mubr.bf16.gmra.mrb[0].mxu0 %v738
      %v2602 = vpop.f32.mrb[0].mxu0
      %v2603 = vadd.f32 0.0, %v2602
      %v2604 = vpop.f32.mrb[0].mxu0
      %v2605 = vpop.f32.mrb[0].mxu0
      %v2606 = vadd.f32 0.0, %v2605
      %v2607 = vpop.f32.mrb[0].mxu0
      %2608 = vmatprep.mubr.bf16.mxu0 0
      %2609 = vmatmul.mubr.bf16.gmra.mrb[0].mxu0 %v741
      %v2610 = vpop.f32.mrb[0].mxu0
      %v2611 = vadd.f32 0.0, %v2610
      %v2612 = vpop.f32.mrb[0].mxu0
      %v2613 = vpop.f32.mrb[0].mxu0
      %v2614 = vadd.f32 0.0, %v2613
      %v2615 = vpop.f32.mrb[0].mxu0
      %2616 = vmatprep.mubr.bf16.mxu0 0
      %2617 = vmatmul.mubr.bf16.gmra.mrb[0].mxu0 %v744
      %v2618 = vpop.f32.mrb[0].mxu0
      %v2619 = vadd.f32 0.0, %v2618
      %v2620 = vpop.f32.mrb[0].mxu0
      %v2621 = vpop.f32.mrb[0].mxu0
      %v2622 = vadd.f32 0.0, %v2621
      %v2623 = vpop.f32.mrb[0].mxu0
      %2624 = vmatprep.mubr.bf16.mxu0 0
      %2625 = vmatmul.mubr.bf16.gmra.mrb[0].mxu0 %v747
      %v2626 = vpop.f32.mrb[0].mxu0
      %v2627 = vadd.f32 0.0, %v2626
      %v2628 = vpop.f32.mrb[0].mxu0
      %v2629 = vpop.f32.mrb[0].mxu0
      %v2630 = vadd.f32 0.0, %v2629
      %v2631 = vpop.f32.mrb[0].mxu0
      %2632 = vmatprep.mubr.bf16.mxu0 0
      %2633 = vmatmul.mubr.bf16.gmra.mrb[0].mxu0 %v750
      %v2634 = vpop.f32.mrb[0].mxu0
      %v2635 = vadd.f32 0.0, %v2634
      %v2636 = vpop.f32.mrb[0].mxu0
      %v2637 = vpop.f32.mrb[0].mxu0
      %v2638 = vadd.f32 0.0, %v2637
      %v2639 = vpop.f32.mrb[0].mxu0
      %2640 = vmatprep.mubr.bf16.mxu0 0
      %2641 = vmatmul.mubr.bf16.gmra.mrb[0].mxu0 %v753
      %v2642 = vpop.f32.mrb[0].mxu0
      %v2643 = vadd.f32 0.0, %v2642
      %v2644 = vpop.f32.mrb[0].mxu0
      %v2645 = vpop.f32.mrb[0].mxu0
      %v2646 = vadd.f32 0.0, %v2645
      %v2647 = vpop.f32.mrb[0].mxu0
      %2648 = vmatprep.mubr.bf16.mxu0 0
      %2649 = vmatmul.mubr.bf16.gmra.mrb[0].mxu0 %v756
      %v2650 = vpop.f32.mrb[0].mxu0
      %v2651 = vadd.f32 0.0, %v2650
      %v2652 = vpop.f32.mrb[0].mxu0
      %v2653 = vpop.f32.mrb[0].mxu0
      %v2654 = vadd.f32 0.0, %v2653
      %v2655 = vpop.f32.mrb[0].mxu0
      %2656 = vmatprep.mubr.bf16.mxu0 0
      %2657 = vmatmul.mubr.bf16.gmra.mrb[0].mxu0 %v759
      %v2658 = vpop.f32.mrb[0].mxu0
      %v2659 = vadd.f32 0.0, %v2658
      %v2660 = vpop.f32.mrb[0].mxu0
      %v2661 = vpop.f32.mrb[0].mxu0
      %v2662 = vadd.f32 0.0, %v2661
      %v2663 = vpop.f32.mrb[0].mxu0
      %2664 = vmatprep.mubr.bf16.mxu0 0
      %2665 = vmatmul.mubr.bf16.gmra.mrb[0].mxu0 %v762
      %v2666 = vpop.f32.mrb[0].mxu0
      %v2667 = vadd.f32 0.0, %v2666
      %v2668 = vpop.f32.mrb[0].mxu0
      %v2669 = vpop.f32.mrb[0].mxu0
      %v2670 = vadd.f32 0.0, %v2669
      %v2671 = vpop.f32.mrb[0].mxu0
      %2672 = vmatprep.mubr.bf16.mxu0 0
      %2673 = vmatmul.mubr.bf16.gmra.mrb[0].mxu0 %v765
      %v2674 = vpop.f32.mrb[0].mxu0
      %v2675 = vadd.f32 0.0, %v2674
      %v2676 = vpop.f32.mrb[0].mxu0
      %v2677 = vpop.f32.mrb[0].mxu0
      %v2678 = vadd.f32 0.0, %v2677
      %v2679 = vpop.f32.mrb[0].mxu0
      %2680 = vmatprep.mubr.bf16.mxu0 0
      %2681 = vmatmul.mubr.bf16.gmra.mrb[0].mxu0 %v1885
      %v2682 = vpop.f32.mrb[0].mxu0
      %v2683 = vadd.f32 0.0, %v2682
      %v2684 = vpop.f32.mrb[0].mxu0
      %v2685 = vpop.f32.mrb[0].mxu0
      %v2686 = vadd.f32 0.0, %v2685
      %v2687 = vpop.f32.mrb[0].mxu0
      %2688 = vmatprep.mubr.bf16.mxu0 0
      %2689 = vmatmul.mubr.bf16.gmra.mrb[0].mxu0 %v2531
      %v2690 = vpop.f32.mrb[0].mxu0
      %v2691 = vadd.f32 0.0, %v2690
      %v2692 = vpop.f32.mrb[0].mxu0
      %v2693 = vpop.f32.mrb[0].mxu0
      %v2694 = vadd.f32 0.0, %v2693
      %v2695 = vpop.f32.mrb[0].mxu0
      %2696 = vdwg.mxu0
      %v2697 = vadd.f32 %v2469, %v2571
      %v2698 = vadd.f32 %v2470, %v2574
      %v2699 = vadd.f32 %v2471, %v2579
      %v2700 = vadd.f32 %v2472, %v2582
      %v2701 = vadd.f32 %v2473, %v2587
      %v2702 = vadd.f32 %v2474, %v2590
      %v2703 = vadd.f32 %v2475, %v2595
      %v2704 = vadd.f32 %v2476, %v2598
      %v2705 = vadd.f32 %v2477, %v2603
      %v2706 = vadd.f32 %v2478, %v2606
      %v2707 = vadd.f32 %v2479, %v2611
      %v2708 = vadd.f32 %v2480, %v2614
      %v2709 = vadd.f32 %v2481, %v2619
      %v2710 = vadd.f32 %v2482, %v2622
      %v2711 = vadd.f32 %v2483, %v2627
      %v2712 = vadd.f32 %v2484, %v2630
      %v2713 = vadd.f32 %v2485, %v2635
      %v2714 = vadd.f32 %v2486, %v2638
      %v2715 = vadd.f32 %v2487, %v2643
      %v2716 = vadd.f32 %v2488, %v2646
      %v2717 = vadd.f32 %v2489, %v2651
      %v2718 = vadd.f32 %v2490, %v2654
      %v2719 = vadd.f32 %v2491, %v2659
      %v2720 = vadd.f32 %v2492, %v2662
      %v2721 = vadd.f32 %v2493, %v2667
      %v2722 = vadd.f32 %v2494, %v2670
      %v2723 = vadd.f32 %v2495, %v2675
      %v2724 = vadd.f32 %v2496, %v2678
      %v2725 = vadd.f32 %v2497, %v2683
      %v2726 = vadd.f32 %v2498, %v2686
      %v2727 = vadd.f32 %v2499, %v2691
      %v2728 = vadd.f32 %v2500, %v2694
      %s2729 = scalar_lea.vmem %s1, 16
      %v2730 = vld [vmem:[%s2729] sm:$0x3]
      %v2732 = vrot.slane %v277, 5
      %v2733 = vrot.slane %v2732, 4
      %v2734 = vrot.slane %v278, 5
      %v2735 = vsel %vm1244, %v2733, %v2734
      %v2736 = vrot.slane %v2734, 4
      %v2737 = vrot.slane %v279, 5
      %v2738 = vsel %vm1244, %v2736, %v2737
      %v2739 = vunpack.c.l.b16 %v2735
      %v2740 = vunpack.c.l.b16 %v2738
      %v2741 = vpack.c.b16 %v2740, %v2739
      %v2743 = vsel %vm718, %v2741, 0
      %v2746 = vsel %vm767, %v2730, 0
      %2748 = vmatprep.subr.bf16.mxu0 0
      %2749 = vmatpush1.bf16.msra.mxu0 %v2746
      %2750 = vmatprep.subr.bf16.mxu0 0
      %2751 = vmatpush1.bf16.msra.mxu0 0
      %2752 = vmatprep.subr.bf16.mxu0 0
      %2753 = vmatpush1.bf16.msra.mxu0 0
      %2754 = vmatprep.subr.bf16.mxu0 0
      %2755 = vmatpush1.bf16.msra.mxu0 0
      %2756 = vmatprep.subr.bf16.mxu0 0
      %2757 = vmatpush1.bf16.msra.mxu0 0
      %2758 = vmatprep.subr.bf16.mxu0 0
      %2759 = vmatpush1.bf16.msra.mxu0 0
      %2760 = vmatprep.subr.bf16.mxu0 0
      %2761 = vmatpush1.bf16.msra.mxu0 0
      %2762 = vmatprep.subr.bf16.mxu0 0
      %2763 = vmatpush1.bf16.msra.mxu0 0
      %2764 = vmatprep.subr.bf16.mxu0 0
      %2765 = vmatpush1.bf16.msra.mxu0 0
      %2766 = vmatprep.subr.bf16.mxu0 0
      %2767 = vmatpush1.bf16.msra.mxu0 0
      %2768 = vmatprep.subr.bf16.mxu0 0
      %2769 = vmatpush1.bf16.msra.mxu0 0
      %2770 = vmatprep.subr.bf16.mxu0 0
      %2771 = vmatpush1.bf16.msra.mxu0 0
      %2772 = vmatprep.subr.bf16.mxu0 0
      %2773 = vmatpush1.bf16.msra.mxu0 0
      %2774 = vmatprep.subr.bf16.mxu0 0
      %2775 = vmatpush1.bf16.msra.mxu0 0
      %2776 = vmatprep.subr.bf16.mxu0 0
      %2777 = vmatpush1.bf16.msra.mxu0 0
      %2778 = vmatprep.subr.bf16.mxu0 0
      %2779 = vmatpush1.bf16.msra.mxu0 0
      %2780 = vmatprep.mubr.bf16.mxu0 0
      %2781 = vmatmul.mubr.bf16.gmra.mrb[0].mxu0 %v1412
      %v2782 = vpop.f32.mrb[0].mxu0
      %v2783 = vadd.f32 0.0, %v2782
      %v2784 = vpop.f32.mrb[0].mxu0
      %v2785 = vpop.f32.mrb[0].mxu0
      %v2786 = vadd.f32 0.0, %v2785
      %v2787 = vpop.f32.mrb[0].mxu0
      %2788 = vmatprep.mubr.bf16.mxu0 0
      %2789 = vmatmul.mubr.bf16.gmra.mrb[0].mxu0 %v1415
      %v2790 = vpop.f32.mrb[0].mxu0
      %v2791 = vadd.f32 0.0, %v2790
      %v2792 = vpop.f32.mrb[0].mxu0
      %v2793 = vpop.f32.mrb[0].mxu0
      %v2794 = vadd.f32 0.0, %v2793
      %v2795 = vpop.f32.mrb[0].mxu0
      %2796 = vmatprep.mubr.bf16.mxu0 0
      %2797 = vmatmul.mubr.bf16.gmra.mrb[0].mxu0 %v1418
      %v2798 = vpop.f32.mrb[0].mxu0
      %v2799 = vadd.f32 0.0, %v2798
      %v2800 = vpop.f32.mrb[0].mxu0
      %v2801 = vpop.f32.mrb[0].mxu0
      %v2802 = vadd.f32 0.0, %v2801
      %v2803 = vpop.f32.mrb[0].mxu0
      %2804 = vmatprep.mubr.bf16.mxu0 0
      %2805 = vmatmul.mubr.bf16.gmra.mrb[0].mxu0 %v1421
      %v2806 = vpop.f32.mrb[0].mxu0
      %v2807 = vadd.f32 0.0, %v2806
      %v2808 = vpop.f32.mrb[0].mxu0
      %v2809 = vpop.f32.mrb[0].mxu0
      %v2810 = vadd.f32 0.0, %v2809
      %v2811 = vpop.f32.mrb[0].mxu0
      %2812 = vmatprep.mubr.bf16.mxu0 0
      %2813 = vmatmul.mubr.bf16.gmra.mrb[0].mxu0 %v1424
      %v2814 = vpop.f32.mrb[0].mxu0
      %v2815 = vadd.f32 0.0, %v2814
      %v2816 = vpop.f32.mrb[0].mxu0
      %v2817 = vpop.f32.mrb[0].mxu0
      %v2818 = vadd.f32 0.0, %v2817
      %v2819 = vpop.f32.mrb[0].mxu0
      %2820 = vmatprep.mubr.bf16.mxu0 0
      %2821 = vmatmul.mubr.bf16.gmra.mrb[0].mxu0 %v1427
      %v2822 = vpop.f32.mrb[0].mxu0
      %v2823 = vadd.f32 0.0, %v2822
      %v2824 = vpop.f32.mrb[0].mxu0
      %v2825 = vpop.f32.mrb[0].mxu0
      %v2826 = vadd.f32 0.0, %v2825
      %v2827 = vpop.f32.mrb[0].mxu0
      %2828 = vmatprep.mubr.bf16.mxu0 0
      %2829 = vmatmul.mubr.bf16.gmra.mrb[0].mxu0 %v1430
      %v2830 = vpop.f32.mrb[0].mxu0
      %v2831 = vadd.f32 0.0, %v2830
      %v2832 = vpop.f32.mrb[0].mxu0
      %v2833 = vpop.f32.mrb[0].mxu0
      %v2834 = vadd.f32 0.0, %v2833
      %v2835 = vpop.f32.mrb[0].mxu0
      %2836 = vmatprep.mubr.bf16.mxu0 0
      %2837 = vmatmul.mubr.bf16.gmra.mrb[0].mxu0 %v1433
      %v2838 = vpop.f32.mrb[0].mxu0
      %v2839 = vadd.f32 0.0, %v2838
      %v2840 = vpop.f32.mrb[0].mxu0
      %v2841 = vpop.f32.mrb[0].mxu0
      %v2842 = vadd.f32 0.0, %v2841
      %v2843 = vpop.f32.mrb[0].mxu0
      %2844 = vmatprep.mubr.bf16.mxu0 0
      %2845 = vmatmul.mubr.bf16.gmra.mrb[0].mxu0 %v1436
      %v2846 = vpop.f32.mrb[0].mxu0
      %v2847 = vadd.f32 0.0, %v2846
      %v2848 = vpop.f32.mrb[0].mxu0
      %v2849 = vpop.f32.mrb[0].mxu0
      %v2850 = vadd.f32 0.0, %v2849
      %v2851 = vpop.f32.mrb[0].mxu0
      %2852 = vmatprep.mubr.bf16.mxu0 0
      %2853 = vmatmul.mubr.bf16.gmra.mrb[0].mxu0 %v1439
      %v2854 = vpop.f32.mrb[0].mxu0
      %v2855 = vadd.f32 0.0, %v2854
      %v2856 = vpop.f32.mrb[0].mxu0
      %v2857 = vpop.f32.mrb[0].mxu0
      %v2858 = vadd.f32 0.0, %v2857
      %v2859 = vpop.f32.mrb[0].mxu0
      %2860 = vmatprep.mubr.bf16.mxu0 0
      %2861 = vmatmul.mubr.bf16.gmra.mrb[0].mxu0 %v1442
      %v2862 = vpop.f32.mrb[0].mxu0
      %v2863 = vadd.f32 0.0, %v2862
      %v2864 = vpop.f32.mrb[0].mxu0
      %v2865 = vpop.f32.mrb[0].mxu0
      %v2866 = vadd.f32 0.0, %v2865
      %v2867 = vpop.f32.mrb[0].mxu0
      %2868 = vmatprep.mubr.bf16.mxu0 0
      %2869 = vmatmul.mubr.bf16.gmra.mrb[0].mxu0 %v1445
      %v2870 = vpop.f32.mrb[0].mxu0
      %v2871 = vadd.f32 0.0, %v2870
      %v2872 = vpop.f32.mrb[0].mxu0
      %v2873 = vpop.f32.mrb[0].mxu0
      %v2874 = vadd.f32 0.0, %v2873
      %v2875 = vpop.f32.mrb[0].mxu0
      %2876 = vmatprep.mubr.bf16.mxu0 0
      %2877 = vmatmul.mubr.bf16.gmra.mrb[0].mxu0 %v1448
      %v2878 = vpop.f32.mrb[0].mxu0
      %v2879 = vadd.f32 0.0, %v2878
      %v2880 = vpop.f32.mrb[0].mxu0
      %v2881 = vpop.f32.mrb[0].mxu0
      %v2882 = vadd.f32 0.0, %v2881
      %v2883 = vpop.f32.mrb[0].mxu0
      %2884 = vmatprep.mubr.bf16.mxu0 0
      %2885 = vmatmul.mubr.bf16.gmra.mrb[0].mxu0 %v1451
      %v2886 = vpop.f32.mrb[0].mxu0
      %v2887 = vadd.f32 0.0, %v2886
      %v2888 = vpop.f32.mrb[0].mxu0
      %v2889 = vpop.f32.mrb[0].mxu0
      %v2890 = vadd.f32 0.0, %v2889
      %v2891 = vpop.f32.mrb[0].mxu0
      %2892 = vmatprep.mubr.bf16.mxu0 0
      %2893 = vmatmul.mubr.bf16.gmra.mrb[0].mxu0 %v2097
      %v2894 = vpop.f32.mrb[0].mxu0
      %v2895 = vadd.f32 0.0, %v2894
      %v2896 = vpop.f32.mrb[0].mxu0
      %v2897 = vpop.f32.mrb[0].mxu0
      %v2898 = vadd.f32 0.0, %v2897
      %v2899 = vpop.f32.mrb[0].mxu0
      %2900 = vmatprep.mubr.bf16.mxu0 0
      %2901 = vmatmul.mubr.bf16.gmra.mrb[0].mxu0 %v2743
      %v2902 = vpop.f32.mrb[0].mxu0
      %v2903 = vadd.f32 0.0, %v2902
      %v2904 = vpop.f32.mrb[0].mxu0
      %v2905 = vpop.f32.mrb[0].mxu0
      %v2906 = vadd.f32 0.0, %v2905
      %v2907 = vpop.f32.mrb[0].mxu0
      %2908 = vdwg.mxu0
      %v2909 = vadd.f32 %v2697, %v2783
      %v2910 = vadd.f32 %v2698, %v2786
      %v2911 = vadd.f32 %v2699, %v2791
      %v2912 = vadd.f32 %v2700, %v2794
      %v2913 = vadd.f32 %v2701, %v2799
      %v2914 = vadd.f32 %v2702, %v2802
      %v2915 = vadd.f32 %v2703, %v2807
      %v2916 = vadd.f32 %v2704, %v2810
      %v2917 = vadd.f32 %v2705, %v2815
      %v2918 = vadd.f32 %v2706, %v2818
      %v2919 = vadd.f32 %v2707, %v2823
      %v2920 = vadd.f32 %v2708, %v2826
      %v2921 = vadd.f32 %v2709, %v2831
      %v2922 = vadd.f32 %v2710, %v2834
      %v2923 = vadd.f32 %v2711, %v2839
      %v2924 = vadd.f32 %v2712, %v2842
      %v2925 = vadd.f32 %v2713, %v2847
      %v2926 = vadd.f32 %v2714, %v2850
      %v2927 = vadd.f32 %v2715, %v2855
      %v2928 = vadd.f32 %v2716, %v2858
      %v2929 = vadd.f32 %v2717, %v2863
      %v2930 = vadd.f32 %v2718, %v2866
      %v2931 = vadd.f32 %v2719, %v2871
      %v2932 = vadd.f32 %v2720, %v2874
      %v2933 = vadd.f32 %v2721, %v2879
      %v2934 = vadd.f32 %v2722, %v2882
      %v2935 = vadd.f32 %v2723, %v2887
      %v2936 = vadd.f32 %v2724, %v2890
      %v2937 = vadd.f32 %v2725, %v2895
      %v2938 = vadd.f32 %v2726, %v2898
      %v2939 = vadd.f32 %v2727, %v2903
      %v2940 = vadd.f32 %v2728, %v2906
      %v2941 = vld [vmem:[%s2] sm:$0x1]
      %v2943 = vlaneseq
      %v2944 = vshrl.u32 %v2943, 7
      %v2945 = vsub.s32 0, %v2944
      %v2946 = vrot.slane %v2941, %v2945
      %v2948 = vadd.f32 %v2909, %v2946
      %v2949 = vadd.f32 %v2910, %v2946
      %v2950 = vadd.f32 %v2911, %v2946
      %v2951 = vadd.f32 %v2912, %v2946
      %v2952 = vadd.f32 %v2913, %v2946
      %v2953 = vadd.f32 %v2914, %v2946
      %v2954 = vadd.f32 %v2915, %v2946
      %v2955 = vadd.f32 %v2916, %v2946
      %v2956 = vadd.f32 %v2917, %v2946
      %v2957 = vadd.f32 %v2918, %v2946
      %v2958 = vadd.f32 %v2919, %v2946
      %v2959 = vadd.f32 %v2920, %v2946
      %v2960 = vadd.f32 %v2921, %v2946
      %v2961 = vadd.f32 %v2922, %v2946
      %v2962 = vadd.f32 %v2923, %v2946
      %v2963 = vadd.f32 %v2924, %v2946
      %v2964 = vadd.f32 %v2925, %v2946
      %v2965 = vadd.f32 %v2926, %v2946
      %v2966 = vadd.f32 %v2927, %v2946
      %v2967 = vadd.f32 %v2928, %v2946
      %v2968 = vadd.f32 %v2929, %v2946
      %v2969 = vadd.f32 %v2930, %v2946
      %v2970 = vadd.f32 %v2931, %v2946
      %v2971 = vadd.f32 %v2932, %v2946
      %v2972 = vadd.f32 %v2933, %v2946
      %v2973 = vadd.f32 %v2934, %v2946
      %v2974 = vadd.f32 %v2935, %v2946
      %v2975 = vadd.f32 %v2936, %v2946
      %v2976 = vadd.f32 %v2937, %v2946
      %v2977 = vadd.f32 %v2938, %v2946
      %v2978 = vadd.f32 %v2939, %v2946
      %v2979 = vadd.f32 %v2940, %v2946
      %v2980 = vmax.f32 %v2948, 0.0
      %v2981 = vmax.f32 %v2949, 0.0
      %v2982 = vmax.f32 %v2950, 0.0
      %v2983 = vmax.f32 %v2951, 0.0
      %v2984 = vmax.f32 %v2952, 0.0
      %v2985 = vmax.f32 %v2953, 0.0
      %v2986 = vmax.f32 %v2954, 0.0
      %v2987 = vmax.f32 %v2955, 0.0
      %v2988 = vmax.f32 %v2956, 0.0
      %v2989 = vmax.f32 %v2957, 0.0
      %v2990 = vmax.f32 %v2958, 0.0
      %v2991 = vmax.f32 %v2959, 0.0
      %v2992 = vmax.f32 %v2960, 0.0
      %v2993 = vmax.f32 %v2961, 0.0
      %v2994 = vmax.f32 %v2962, 0.0
      %v2995 = vmax.f32 %v2963, 0.0
      %v2996 = vmax.f32 %v2964, 0.0
      %v2997 = vmax.f32 %v2965, 0.0
      %v2998 = vmax.f32 %v2966, 0.0
      %v2999 = vmax.f32 %v2967, 0.0
      %v3000 = vmax.f32 %v2968, 0.0
      %v3001 = vmax.f32 %v2969, 0.0
      %v3002 = vmax.f32 %v2970, 0.0
      %v3003 = vmax.f32 %v2971, 0.0
      %v3004 = vmax.f32 %v2972, 0.0
      %v3005 = vmax.f32 %v2973, 0.0
      %v3006 = vmax.f32 %v2974, 0.0
      %v3007 = vmax.f32 %v2975, 0.0
      %v3008 = vmax.f32 %v2976, 0.0
      %v3009 = vmax.f32 %v2977, 0.0
      %v3010 = vmax.f32 %v2978, 0.0
      %v3011 = vmax.f32 %v2979, 0.0
      %3012 = vst [vmem:[#allocation2] sm:$0xf] 0
      %3013 = vst [vmem:[#allocation2 + $0x4] sm:$0xf] 0
      %3014 = vst [vmem:[#allocation2 + $0x8] sm:$0x1] 0
      %s3015 = scalar_lea.vmem [#allocation2], 204
      %3016 = vst [vmem:[%s3015] sm:$0xf] 0
      %3017 = vst [vmem:[%s3015 + $0x4] sm:$0xf] 0
      %3018 = vst [vmem:[%s3015 + $0x8] sm:$0x1] 0
      %vm3019 = vcmask 1040384
      %vm3020 = vsmask.f32 256
      %vm3021 = vmand %vm3019, %vm3020
      %v3022 = vld [vmem:[#allocation2] sm:$0x1]
      %v3023 = vsel %vm3021, 0, %v3022
      %3024 = vst [vmem:[#allocation2] sm:$0x1] %v3023
      %v3025 = vld [vmem:[#allocation2 + $0xc] sm:$0x1]
      %v3026 = vsel %vm3021, 0, %v3025
      %3027 = vst [vmem:[#allocation2 + $0xc] sm:$0x1] %v3026
      %v3028 = vld [vmem:[#allocation2 + $0x18] sm:$0x1]
      %v3029 = vsel %vm3021, 0, %v3028
      %3030 = vst [vmem:[#allocation2 + $0x18] sm:$0x1] %v3029
      %v3031 = vld [vmem:[#allocation2 + $0x24] sm:$0x1]
      %v3032 = vsel %vm3021, 0, %v3031
      %3033 = vst [vmem:[#allocation2 + $0x24] sm:$0x1] %v3032
      %v3034 = vld [vmem:[#allocation2 + $0x30] sm:$0x1]
      %v3035 = vsel %vm3021, 0, %v3034
      %3036 = vst [vmem:[#allocation2 + $0x30] sm:$0x1] %v3035
      %v3037 = vld [vmem:[#allocation2 + $0x3c] sm:$0x1]
      %v3038 = vsel %vm3021, 0, %v3037
      %3039 = vst [vmem:[#allocation2 + $0x3c] sm:$0x1] %v3038
      %v3040 = vld [vmem:[#allocation2 + $0x48] sm:$0x1]
      %v3041 = vsel %vm3021, 0, %v3040
      %3042 = vst [vmem:[#allocation2 + $0x48] sm:$0x1] %v3041
      %v3043 = vld [vmem:[#allocation2 + $0x54] sm:$0x1]
      %v3044 = vsel %vm3021, 0, %v3043
      %3045 = vst [vmem:[#allocation2 + $0x54] sm:$0x1] %v3044
      %v3046 = vld [vmem:[#allocation2 + $0x60] sm:$0x1]
      %v3047 = vsel %vm3021, 0, %v3046
      %3048 = vst [vmem:[#allocation2 + $0x60] sm:$0x1] %v3047
      %v3049 = vld [vmem:[#allocation2 + $0x6c] sm:$0x1]
      %v3050 = vsel %vm3021, 0, %v3049
      %3051 = vst [vmem:[#allocation2 + $0x6c] sm:$0x1] %v3050
      %v3052 = vld [vmem:[#allocation2 + $0x78] sm:$0x1]
      %v3053 = vsel %vm3021, 0, %v3052
      %3054 = vst [vmem:[#allocation2 + $0x78] sm:$0x1] %v3053
      %v3055 = vld [vmem:[#allocation2 + $0x84] sm:$0x1]
      %v3056 = vsel %vm3021, 0, %v3055
      %3057 = vst [vmem:[#allocation2 + $0x84] sm:$0x1] %v3056
      %v3058 = vld [vmem:[#allocation2 + $0x90] sm:$0x1]
      %v3059 = vsel %vm3021, 0, %v3058
      %3060 = vst [vmem:[#allocation2 + $0x90] sm:$0x1] %v3059
      %v3061 = vld [vmem:[#allocation2 + $0x9c] sm:$0x1]
      %v3062 = vsel %vm3021, 0, %v3061
      %3063 = vst [vmem:[#allocation2 + $0x9c] sm:$0x1] %v3062
      %v3064 = vld [vmem:[#allocation2 + $0xa8] sm:$0x1]
      %v3065 = vsel %vm3021, 0, %v3064
      %3066 = vst [vmem:[#allocation2 + $0xa8] sm:$0x1] %v3065
      %v3067 = vld [vmem:[#allocation2 + $0xb4] sm:$0x1]
      %v3068 = vsel %vm3021, 0, %v3067
      %3069 = vst [vmem:[#allocation2 + $0xb4] sm:$0x1] %v3068
      %v3070 = vld [vmem:[#allocation2 + $0xc0] sm:$0x1]
      %v3071 = vsel %vm3021, 0, %v3070
      %3072 = vst [vmem:[#allocation2 + $0xc0] sm:$0x1] %v3071
      %v3073 = vld [vmem:[#allocation2 + $0xcc] sm:$0x1]
      %v3074 = vsel %vm3021, 0, %v3073
      %3075 = vst [vmem:[#allocation2 + $0xcc] sm:$0x1] %v3074
      %vm3076 = vsmask.f32 7938
      %vm3077 = vmand %vm3019, %vm3076
      %v3078 = vld [vmem:[#allocation2 + $0x8] sm:$0x1]
      %v3079 = vsel %vm3077, 0, %v3078
      %3080 = vst [vmem:[#allocation2 + $0x8] sm:$0x1] %v3079
      %v3081 = vld [vmem:[#allocation2 + $0x14] sm:$0x1]
      %v3082 = vsel %vm3077, 0, %v3081
      %3083 = vst [vmem:[#allocation2 + $0x14] sm:$0x1] %v3082
      %v3084 = vld [vmem:[#allocation2 + $0x20] sm:$0x1]
      %v3085 = vsel %vm3077, 0, %v3084
      %3086 = vst [vmem:[#allocation2 + $0x20] sm:$0x1] %v3085
      %v3087 = vld [vmem:[#allocation2 + $0x2c] sm:$0x1]
      %v3088 = vsel %vm3077, 0, %v3087
      %3089 = vst [vmem:[#allocation2 + $0x2c] sm:$0x1] %v3088
      %v3090 = vld [vmem:[#allocation2 + $0x38] sm:$0x1]
      %v3091 = vsel %vm3077, 0, %v3090
      %3092 = vst [vmem:[#allocation2 + $0x38] sm:$0x1] %v3091
      %v3093 = vld [vmem:[#allocation2 + $0x44] sm:$0x1]
      %v3094 = vsel %vm3077, 0, %v3093
      %3095 = vst [vmem:[#allocation2 + $0x44] sm:$0x1] %v3094
      %v3096 = vld [vmem:[#allocation2 + $0x50] sm:$0x1]
      %v3097 = vsel %vm3077, 0, %v3096
      %3098 = vst [vmem:[#allocation2 + $0x50] sm:$0x1] %v3097
      %v3099 = vld [vmem:[#allocation2 + $0x5c] sm:$0x1]
      %v3100 = vsel %vm3077, 0, %v3099
      %3101 = vst [vmem:[#allocation2 + $0x5c] sm:$0x1] %v3100
      %v3102 = vld [vmem:[#allocation2 + $0x68] sm:$0x1]
      %v3103 = vsel %vm3077, 0, %v3102
      %3104 = vst [vmem:[#allocation2 + $0x68] sm:$0x1] %v3103
      %v3105 = vld [vmem:[#allocation2 + $0x74] sm:$0x1]
      %v3106 = vsel %vm3077, 0, %v3105
      %3107 = vst [vmem:[#allocation2 + $0x74] sm:$0x1] %v3106
      %v3108 = vld [vmem:[#allocation2 + $0x80] sm:$0x1]
      %v3109 = vsel %vm3077, 0, %v3108
      %3110 = vst [vmem:[#allocation2 + $0x80] sm:$0x1] %v3109
      %v3111 = vld [vmem:[#allocation2 + $0x8c] sm:$0x1]
      %v3112 = vsel %vm3077, 0, %v3111
      %3113 = vst [vmem:[#allocation2 + $0x8c] sm:$0x1] %v3112
      %v3114 = vld [vmem:[#allocation2 + $0x98] sm:$0x1]
      %v3115 = vsel %vm3077, 0, %v3114
      %3116 = vst [vmem:[#allocation2 + $0x98] sm:$0x1] %v3115
      %v3117 = vld [vmem:[#allocation2 + $0xa4] sm:$0x1]
      %v3118 = vsel %vm3077, 0, %v3117
      %3119 = vst [vmem:[#allocation2 + $0xa4] sm:$0x1] %v3118
      %v3120 = vld [vmem:[#allocation2 + $0xb0] sm:$0x1]
      %v3121 = vsel %vm3077, 0, %v3120
      %3122 = vst [vmem:[#allocation2 + $0xb0] sm:$0x1] %v3121
      %v3123 = vld [vmem:[#allocation2 + $0xbc] sm:$0x1]
      %v3124 = vsel %vm3077, 0, %v3123
      %3125 = vst [vmem:[#allocation2 + $0xbc] sm:$0x1] %v3124
      %v3126 = vld [vmem:[#allocation2 + $0xc8] sm:$0x1]
      %v3127 = vsel %vm3077, 0, %v3126
      %3128 = vst [vmem:[#allocation2 + $0xc8] sm:$0x1] %v3127
      %v3129 = vld [vmem:[#allocation2 + $0xd4] sm:$0x1]
      %v3130 = vsel %vm3077, 0, %v3129
      %3131 = vst [vmem:[#allocation2 + $0xd4] sm:$0x1] %v3130
      %v3132 = vpack.c.bf16 %v2981, %v2980
      %v3133 = vpack.c.bf16 %v2983, %v2982
      %v3134 = vpack.c.bf16 %v2985, %v2984
      %v3135 = vpack.c.bf16 %v2987, %v2986
      %v3136 = vpack.c.bf16 %v2989, %v2988
      %v3137 = vpack.c.bf16 %v2991, %v2990
      %v3138 = vpack.c.bf16 %v2993, %v2992
      %v3139 = vpack.c.bf16 %v2995, %v2994
      %v3140 = vpack.c.bf16 %v2997, %v2996
      %v3141 = vpack.c.bf16 %v2999, %v2998
      %v3142 = vpack.c.bf16 %v3001, %v3000
      %v3143 = vpack.c.bf16 %v3003, %v3002
      %v3144 = vpack.c.bf16 %v3005, %v3004
      %v3145 = vpack.c.bf16 %v3007, %v3006
      %v3146 = vpack.c.bf16 %v3009, %v3008
      %v3147 = vpack.c.bf16 %v3011, %v3010
      %v3164 = vunpack.c.l.b16 %v3132
      %v3165 = vunpack.c.h.b16 %v3132
      %v3166 = vunpack.c.l.b16 %v3133
      %v3167 = vunpack.c.h.b16 %v3133
      %v3168 = vunpack.c.l.b16 %v3134
      %v3169 = vunpack.c.h.b16 %v3134
      %v3170 = vunpack.c.l.b16 %v3135
      %v3171 = vunpack.c.h.b16 %v3135
      %v3172 = vunpack.c.l.b16 %v3136
      %v3173 = vunpack.c.h.b16 %v3136
      %v3174 = vunpack.c.l.b16 %v3137
      %v3175 = vunpack.c.h.b16 %v3137
      %v3176 = vunpack.c.l.b16 %v3138
      %v3177 = vunpack.c.h.b16 %v3138
      %v3178 = vunpack.c.l.b16 %v3139
      %v3179 = vunpack.c.h.b16 %v3139
      %v3180 = vunpack.c.l.b16 %v3140
      %v3181 = vunpack.c.h.b16 %v3140
      %v3182 = vunpack.c.l.b16 %v3141
      %v3183 = vunpack.c.h.b16 %v3141
      %v3184 = vunpack.c.l.b16 %v3142
      %v3185 = vunpack.c.h.b16 %v3142
      %v3186 = vunpack.c.l.b16 %v3143
      %v3187 = vunpack.c.h.b16 %v3143
      %v3188 = vunpack.c.l.b16 %v3144
      %v3189 = vunpack.c.h.b16 %v3144
      %v3190 = vunpack.c.l.b16 %v3145
      %v3191 = vunpack.c.h.b16 %v3145
      %v3192 = vunpack.c.l.b16 %v3146
      %v3193 = vunpack.c.h.b16 %v3146
      %v3194 = vunpack.c.l.b16 %v3147
      %v3195 = vunpack.c.h.b16 %v3147
      %v3196 = vpack.c.b16 %v3164, %v3164
      %v3197 = vpack.c.b16 %v3165, %v3165
      %v3198 = vpack.c.b16 %v3166, %v3166
      %v3199 = vpack.c.b16 %v3167, %v3167
      %v3200 = vpack.c.b16 %v3168, %v3168
      %v3201 = vpack.c.b16 %v3169, %v3169
      %v3202 = vpack.c.b16 %v3170, %v3170
      %v3203 = vpack.c.b16 %v3171, %v3171
      %v3204 = vpack.c.b16 %v3172, %v3172
      %v3205 = vpack.c.b16 %v3173, %v3173
      %v3206 = vpack.c.b16 %v3174, %v3174
      %v3207 = vpack.c.b16 %v3175, %v3175
      %v3208 = vpack.c.b16 %v3176, %v3176
      %v3209 = vpack.c.b16 %v3177, %v3177
      %v3210 = vpack.c.b16 %v3178, %v3178
      %v3211 = vpack.c.b16 %v3179, %v3179
      %v3212 = vpack.c.b16 %v3180, %v3180
      %v3213 = vpack.c.b16 %v3181, %v3181
      %v3214 = vpack.c.b16 %v3182, %v3182
      %v3215 = vpack.c.b16 %v3183, %v3183
      %v3216 = vpack.c.b16 %v3184, %v3184
      %v3217 = vpack.c.b16 %v3185, %v3185
      %v3218 = vpack.c.b16 %v3186, %v3186
      %v3219 = vpack.c.b16 %v3187, %v3187
      %v3220 = vpack.c.b16 %v3188, %v3188
      %v3221 = vpack.c.b16 %v3189, %v3189
      %v3222 = vpack.c.b16 %v3190, %v3190
      %v3223 = vpack.c.b16 %v3191, %v3191
      %v3224 = vpack.c.b16 %v3192, %v3192
      %v3225 = vpack.c.b16 %v3193, %v3193
      %v3226 = vpack.c.b16 %v3194, %v3194
      %v3227 = vpack.c.b16 %v3195, %v3195
      %vm3228 = vsmask.f32 4368
      %vm3229 = vmor %vm3020, %vm3228
      %v3231 = vshrl.u32 %v3196, 16
      %v3233 = vrot.slane %v3231, 7
      %v3234 = vshll.u32 %v3196, 16
      %v3236 = vor.u32 %v3233, %v3234
      %v3237 = vrot.slane %v3233, 4
      %v3239 = vshrl.u32 %v3197, 16
      %v3241 = vrot.slane %v3239, 7
      %v3242 = vshll.u32 %v3197, 16
      %v3244 = vor.u32 %v3241, %v3242
      %v3245 = vsel %vm3229, %v3237, %v3244
      %v3246 = vrot.slane %v3241, 4
      %v3248 = vshrl.u32 %v3198, 16
      %v3250 = vrot.slane %v3248, 7
      %v3251 = vshll.u32 %v3198, 16
      %v3253 = vor.u32 %v3250, %v3251
      %v3254 = vrot.slane %v3250, 4
      %v3256 = vshrl.u32 %v3199, 16
      %v3258 = vrot.slane %v3256, 7
      %v3259 = vshll.u32 %v3199, 16
      %v3261 = vor.u32 %v3258, %v3259
      %v3262 = vsel %vm3229, %v3254, %v3261
      %v3263 = vrot.slane %v3258, 4
      %v3265 = vshrl.u32 %v3200, 16
      %v3267 = vrot.slane %v3265, 7
      %v3268 = vshll.u32 %v3200, 16
      %v3270 = vor.u32 %v3267, %v3268
      %v3271 = vrot.slane %v3267, 4
      %v3273 = vshrl.u32 %v3201, 16
      %v3275 = vrot.slane %v3273, 7
      %v3276 = vshll.u32 %v3201, 16
      %v3278 = vor.u32 %v3275, %v3276
      %v3279 = vsel %vm3229, %v3271, %v3278
      %v3280 = vrot.slane %v3275, 4
      %v3282 = vshrl.u32 %v3202, 16
      %v3284 = vrot.slane %v3282, 7
      %v3285 = vshll.u32 %v3202, 16
      %v3287 = vor.u32 %v3284, %v3285
      %v3288 = vrot.slane %v3284, 4
      %v3290 = vshrl.u32 %v3203, 16
      %v3292 = vrot.slane %v3290, 7
      %v3293 = vshll.u32 %v3203, 16
      %v3295 = vor.u32 %v3292, %v3293
      %v3296 = vsel %vm3229, %v3288, %v3295
      %v3297 = vrot.slane %v3292, 4
      %v3299 = vshrl.u32 %v3204, 16
      %v3301 = vrot.slane %v3299, 7
      %v3302 = vshll.u32 %v3204, 16
      %v3304 = vor.u32 %v3301, %v3302
      %v3305 = vrot.slane %v3301, 4
      %v3307 = vshrl.u32 %v3205, 16
      %v3309 = vrot.slane %v3307, 7
      %v3310 = vshll.u32 %v3205, 16
      %v3312 = vor.u32 %v3309, %v3310
      %v3313 = vsel %vm3229, %v3305, %v3312
      %v3314 = vrot.slane %v3309, 4
      %v3316 = vshrl.u32 %v3206, 16
      %v3318 = vrot.slane %v3316, 7
      %v3319 = vshll.u32 %v3206, 16
      %v3321 = vor.u32 %v3318, %v3319
      %v3322 = vrot.slane %v3318, 4
      %v3324 = vshrl.u32 %v3207, 16
      %v3326 = vrot.slane %v3324, 7
      %v3327 = vshll.u32 %v3207, 16
      %v3329 = vor.u32 %v3326, %v3327
      %v3330 = vsel %vm3229, %v3322, %v3329
      %v3331 = vrot.slane %v3326, 4
      %v3333 = vshrl.u32 %v3208, 16
      %v3335 = vrot.slane %v3333, 7
      %v3336 = vshll.u32 %v3208, 16
      %v3338 = vor.u32 %v3335, %v3336
      %v3339 = vrot.slane %v3335, 4
      %v3341 = vshrl.u32 %v3209, 16
      %v3343 = vrot.slane %v3341, 7
      %v3344 = vshll.u32 %v3209, 16
      %v3346 = vor.u32 %v3343, %v3344
      %v3347 = vsel %vm3229, %v3339, %v3346
      %v3348 = vrot.slane %v3343, 4
      %v3350 = vshrl.u32 %v3210, 16
      %v3352 = vrot.slane %v3350, 7
      %v3353 = vshll.u32 %v3210, 16
      %v3355 = vor.u32 %v3352, %v3353
      %v3356 = vrot.slane %v3352, 4
      %v3358 = vshrl.u32 %v3211, 16
      %v3360 = vrot.slane %v3358, 7
      %v3361 = vshll.u32 %v3211, 16
      %v3363 = vor.u32 %v3360, %v3361
      %v3364 = vsel %vm3229, %v3356, %v3363
      %v3365 = vrot.slane %v3360, 4
      %v3367 = vshrl.u32 %v3212, 16
      %v3369 = vrot.slane %v3367, 7
      %v3370 = vshll.u32 %v3212, 16
      %v3372 = vor.u32 %v3369, %v3370
      %v3373 = vrot.slane %v3369, 4
      %v3375 = vshrl.u32 %v3213, 16
      %v3377 = vrot.slane %v3375, 7
      %v3378 = vshll.u32 %v3213, 16
      %v3380 = vor.u32 %v3377, %v3378
      %v3381 = vsel %vm3229, %v3373, %v3380
      %v3382 = vrot.slane %v3377, 4
      %v3384 = vshrl.u32 %v3214, 16
      %v3386 = vrot.slane %v3384, 7
      %v3387 = vshll.u32 %v3214, 16
      %v3389 = vor.u32 %v3386, %v3387
      %v3390 = vrot.slane %v3386, 4
      %v3392 = vshrl.u32 %v3215, 16
      %v3394 = vrot.slane %v3392, 7
      %v3395 = vshll.u32 %v3215, 16
      %v3397 = vor.u32 %v3394, %v3395
      %v3398 = vsel %vm3229, %v3390, %v3397
      %v3399 = vrot.slane %v3394, 4
      %v3401 = vshrl.u32 %v3216, 16
      %v3403 = vrot.slane %v3401, 7
      %v3404 = vshll.u32 %v3216, 16
      %v3406 = vor.u32 %v3403, %v3404
      %v3407 = vrot.slane %v3403, 4
      %v3409 = vshrl.u32 %v3217, 16
      %v3411 = vrot.slane %v3409, 7
      %v3412 = vshll.u32 %v3217, 16
      %v3414 = vor.u32 %v3411, %v3412
      %v3415 = vsel %vm3229, %v3407, %v3414
      %v3416 = vrot.slane %v3411, 4
      %v3418 = vshrl.u32 %v3218, 16
      %v3420 = vrot.slane %v3418, 7
      %v3421 = vshll.u32 %v3218, 16
      %v3423 = vor.u32 %v3420, %v3421
      %v3424 = vrot.slane %v3420, 4
      %v3426 = vshrl.u32 %v3219, 16
      %v3428 = vrot.slane %v3426, 7
      %v3429 = vshll.u32 %v3219, 16
      %v3431 = vor.u32 %v3428, %v3429
      %v3432 = vsel %vm3229, %v3424, %v3431
      %v3433 = vrot.slane %v3428, 4
      %v3435 = vshrl.u32 %v3220, 16
      %v3437 = vrot.slane %v3435, 7
      %v3438 = vshll.u32 %v3220, 16
      %v3440 = vor.u32 %v3437, %v3438
      %v3441 = vrot.slane %v3437, 4
      %v3443 = vshrl.u32 %v3221, 16
      %v3445 = vrot.slane %v3443, 7
      %v3446 = vshll.u32 %v3221, 16
      %v3448 = vor.u32 %v3445, %v3446
      %v3449 = vsel %vm3229, %v3441, %v3448
      %v3450 = vrot.slane %v3445, 4
      %v3452 = vshrl.u32 %v3222, 16
      %v3454 = vrot.slane %v3452, 7
      %v3455 = vshll.u32 %v3222, 16
      %v3457 = vor.u32 %v3454, %v3455
      %v3458 = vrot.slane %v3454, 4
      %v3460 = vshrl.u32 %v3223, 16
      %v3462 = vrot.slane %v3460, 7
      %v3463 = vshll.u32 %v3223, 16
      %v3465 = vor.u32 %v3462, %v3463
      %v3466 = vsel %vm3229, %v3458, %v3465
      %v3467 = vrot.slane %v3462, 4
      %v3469 = vshrl.u32 %v3224, 16
      %v3471 = vrot.slane %v3469, 7
      %v3472 = vshll.u32 %v3224, 16
      %v3474 = vor.u32 %v3471, %v3472
      %v3475 = vrot.slane %v3471, 4
      %v3477 = vshrl.u32 %v3225, 16
      %v3479 = vrot.slane %v3477, 7
      %v3480 = vshll.u32 %v3225, 16
      %v3482 = vor.u32 %v3479, %v3480
      %v3483 = vsel %vm3229, %v3475, %v3482
      %v3484 = vrot.slane %v3479, 4
      %v3486 = vshrl.u32 %v3226, 16
      %v3488 = vrot.slane %v3486, 7
      %v3489 = vshll.u32 %v3226, 16
      %v3491 = vor.u32 %v3488, %v3489
      %v3492 = vrot.slane %v3488, 4
      %v3494 = vshrl.u32 %v3227, 16
      %v3496 = vrot.slane %v3494, 7
      %v3497 = vshll.u32 %v3227, 16
      %v3499 = vor.u32 %v3496, %v3497
      %v3500 = vsel %vm3229, %v3492, %v3499
      %v3501 = vrot.slane %v3496, 4
      %s3550 = scalar_lea.vmem [#allocation2], 12
      %vm3551 = vcmask 1043456
      %vm3552 = vmand %vm3551, %vm3076
      %v3553 = vld [vmem:[%s3550] sm:$0xf]
      %v3554 = vsel %vm3552, %v3236, %v3553
      %3555 = vst [vmem:[%s3550] sm:$0xf] %v3554
      %3556 = vst [vmem:[%s3550 + $0x4] sm:$0xf] %v3245
      %v3557 = vld [vmem:[%s3550 + $0x8] sm:$0x1]
      %v3558 = vsel %vm3021, %v3246, %v3557
      %3559 = vst [vmem:[%s3550 + $0x8] sm:$0x1] %v3558
      %v3560 = vld [vmem:[%s3550 + $0xc] sm:$0xf]
      %v3561 = vsel %vm3552, %v3253, %v3560
      %3562 = vst [vmem:[%s3550 + $0xc] sm:$0xf] %v3561
      %3563 = vst [vmem:[%s3550 + $0x10] sm:$0xf] %v3262
      %v3564 = vld [vmem:[%s3550 + $0x14] sm:$0x1]
      %v3565 = vsel %vm3021, %v3263, %v3564
      %3566 = vst [vmem:[%s3550 + $0x14] sm:$0x1] %v3565
      %v3567 = vld [vmem:[%s3550 + $0x18] sm:$0xf]
      %v3568 = vsel %vm3552, %v3270, %v3567
      %3569 = vst [vmem:[%s3550 + $0x18] sm:$0xf] %v3568
      %3570 = vst [vmem:[%s3550 + $0x1c] sm:$0xf] %v3279
      %v3571 = vld [vmem:[%s3550 + $0x20] sm:$0x1]
      %v3572 = vsel %vm3021, %v3280, %v3571
      %3573 = vst [vmem:[%s3550 + $0x20] sm:$0x1] %v3572
      %v3574 = vld [vmem:[%s3550 + $0x24] sm:$0xf]
      %v3575 = vsel %vm3552, %v3287, %v3574
      %3576 = vst [vmem:[%s3550 + $0x24] sm:$0xf] %v3575
      %3577 = vst [vmem:[%s3550 + $0x28] sm:$0xf] %v3296
      %v3578 = vld [vmem:[%s3550 + $0x2c] sm:$0x1]
      %v3579 = vsel %vm3021, %v3297, %v3578
      %3580 = vst [vmem:[%s3550 + $0x2c] sm:$0x1] %v3579
      %v3581 = vld [vmem:[%s3550 + $0x30] sm:$0xf]
      %v3582 = vsel %vm3552, %v3304, %v3581
      %3583 = vst [vmem:[%s3550 + $0x30] sm:$0xf] %v3582
      %3584 = vst [vmem:[%s3550 + $0x34] sm:$0xf] %v3313
      %v3585 = vld [vmem:[%s3550 + $0x38] sm:$0x1]
      %v3586 = vsel %vm3021, %v3314, %v3585
      %3587 = vst [vmem:[%s3550 + $0x38] sm:$0x1] %v3586
      %v3588 = vld [vmem:[%s3550 + $0x3c] sm:$0xf]
      %v3589 = vsel %vm3552, %v3321, %v3588
      %3590 = vst [vmem:[%s3550 + $0x3c] sm:$0xf] %v3589
      %3591 = vst [vmem:[%s3550 + $0x40] sm:$0xf] %v3330
      %v3592 = vld [vmem:[%s3550 + $0x44] sm:$0x1]
      %v3593 = vsel %vm3021, %v3331, %v3592
      %3594 = vst [vmem:[%s3550 + $0x44] sm:$0x1] %v3593
      %v3595 = vld [vmem:[%s3550 + $0x48] sm:$0xf]
      %v3596 = vsel %vm3552, %v3338, %v3595
      %3597 = vst [vmem:[%s3550 + $0x48] sm:$0xf] %v3596
      %3598 = vst [vmem:[%s3550 + $0x4c] sm:$0xf] %v3347
      %v3599 = vld [vmem:[%s3550 + $0x50] sm:$0x1]
      %v3600 = vsel %vm3021, %v3348, %v3599
      %3601 = vst [vmem:[%s3550 + $0x50] sm:$0x1] %v3600
      %v3602 = vld [vmem:[%s3550 + $0x54] sm:$0xf]
      %v3603 = vsel %vm3552, %v3355, %v3602
      %3604 = vst [vmem:[%s3550 + $0x54] sm:$0xf] %v3603
      %3605 = vst [vmem:[%s3550 + $0x58] sm:$0xf] %v3364
      %v3606 = vld [vmem:[%s3550 + $0x5c] sm:$0x1]
      %v3607 = vsel %vm3021, %v3365, %v3606
      %3608 = vst [vmem:[%s3550 + $0x5c] sm:$0x1] %v3607
      %v3609 = vld [vmem:[%s3550 + $0x60] sm:$0xf]
      %v3610 = vsel %vm3552, %v3372, %v3609
      %3611 = vst [vmem:[%s3550 + $0x60] sm:$0xf] %v3610
      %3612 = vst [vmem:[%s3550 + $0x64] sm:$0xf] %v3381
      %v3613 = vld [vmem:[%s3550 + $0x68] sm:$0x1]
      %v3614 = vsel %vm3021, %v3382, %v3613
      %3615 = vst [vmem:[%s3550 + $0x68] sm:$0x1] %v3614
      %v3616 = vld [vmem:[%s3550 + $0x6c] sm:$0xf]
      %v3617 = vsel %vm3552, %v3389, %v3616
      %3618 = vst [vmem:[%s3550 + $0x6c] sm:$0xf] %v3617
      %3619 = vst [vmem:[%s3550 + $0x70] sm:$0xf] %v3398
      %v3620 = vld [vmem:[%s3550 + $0x74] sm:$0x1]
      %v3621 = vsel %vm3021, %v3399, %v3620
      %3622 = vst [vmem:[%s3550 + $0x74] sm:$0x1] %v3621
      %v3623 = vld [vmem:[%s3550 + $0x78] sm:$0xf]
      %v3624 = vsel %vm3552, %v3406, %v3623
      %3625 = vst [vmem:[%s3550 + $0x78] sm:$0xf] %v3624
      %3626 = vst [vmem:[%s3550 + $0x7c] sm:$0xf] %v3415
      %v3627 = vld [vmem:[%s3550 + $0x80] sm:$0x1]
      %v3628 = vsel %vm3021, %v3416, %v3627
      %3629 = vst [vmem:[%s3550 + $0x80] sm:$0x1] %v3628
      %v3630 = vld [vmem:[%s3550 + $0x84] sm:$0xf]
      %v3631 = vsel %vm3552, %v3423, %v3630
      %3632 = vst [vmem:[%s3550 + $0x84] sm:$0xf] %v3631
      %3633 = vst [vmem:[%s3550 + $0x88] sm:$0xf] %v3432
      %v3634 = vld [vmem:[%s3550 + $0x8c] sm:$0x1]
      %v3635 = vsel %vm3021, %v3433, %v3634
      %3636 = vst [vmem:[%s3550 + $0x8c] sm:$0x1] %v3635
      %v3637 = vld [vmem:[%s3550 + $0x90] sm:$0xf]
      %v3638 = vsel %vm3552, %v3440, %v3637
      %3639 = vst [vmem:[%s3550 + $0x90] sm:$0xf] %v3638
      %3640 = vst [vmem:[%s3550 + $0x94] sm:$0xf] %v3449
      %v3641 = vld [vmem:[%s3550 + $0x98] sm:$0x1]
      %v3642 = vsel %vm3021, %v3450, %v3641
      %3643 = vst [vmem:[%s3550 + $0x98] sm:$0x1] %v3642
      %v3644 = vld [vmem:[%s3550 + $0x9c] sm:$0xf]
      %v3645 = vsel %vm3552, %v3457, %v3644
      %3646 = vst [vmem:[%s3550 + $0x9c] sm:$0xf] %v3645
      %3647 = vst [vmem:[%s3550 + $0xa0] sm:$0xf] %v3466
      %v3648 = vld [vmem:[%s3550 + $0xa4] sm:$0x1]
      %v3649 = vsel %vm3021, %v3467, %v3648
      %3650 = vst [vmem:[%s3550 + $0xa4] sm:$0x1] %v3649
      %v3651 = vld [vmem:[%s3550 + $0xa8] sm:$0xf]
      %v3652 = vsel %vm3552, %v3474, %v3651
      %3653 = vst [vmem:[%s3550 + $0xa8] sm:$0xf] %v3652
      %3654 = vst [vmem:[%s3550 + $0xac] sm:$0xf] %v3483
      %v3655 = vld [vmem:[%s3550 + $0xb0] sm:$0x1]
      %v3656 = vsel %vm3021, %v3484, %v3655
      %3657 = vst [vmem:[%s3550 + $0xb0] sm:$0x1] %v3656
      %v3658 = vld [vmem:[%s3550 + $0xb4] sm:$0xf]
      %v3659 = vsel %vm3552, %v3491, %v3658
      %3660 = vst [vmem:[%s3550 + $0xb4] sm:$0xf] %v3659
      %3661 = vst [vmem:[%s3550 + $0xb8] sm:$0xf] %v3500
      %v3662 = vld [vmem:[%s3550 + $0xbc] sm:$0x1]
      %v3663 = vsel %vm3021, %v3501, %v3662
      %3664 = vst [vmem:[%s3550 + $0xbc] sm:$0x1] %v3663
      %v3665 = vld [vmem:[#allocation2] sm:$0xf]
      %v3666 = vld [vmem:[#allocation2 + $0x4] sm:$0xf]
      %v3667 = vld [vmem:[#allocation2 + $0xc] sm:$0xf]
      %v3668 = vld [vmem:[#allocation2 + $0x10] sm:$0xf]
      %v3669 = vld [vmem:[#allocation2 + $0x18] sm:$0xf]
      %v3670 = vld [vmem:[#allocation2 + $0x1c] sm:$0xf]
      %v3671 = vld [vmem:[#allocation2 + $0x24] sm:$0xf]
      %v3672 = vld [vmem:[#allocation2 + $0x28] sm:$0xf]
      %v3673 = vld [vmem:[#allocation2 + $0x30] sm:$0xf]
      %v3674 = vld [vmem:[#allocation2 + $0x34] sm:$0xf]
      %v3675 = vld [vmem:[#allocation2 + $0x3c] sm:$0xf]
      %v3676 = vld [vmem:[#allocation2 + $0x40] sm:$0xf]
      %v3677 = vld [vmem:[#allocation2 + $0x48] sm:$0xf]
      %v3678 = vld [vmem:[#allocation2 + $0x4c] sm:$0xf]
      %v3679 = vld [vmem:[#allocation2 + $0x54] sm:$0xf]
      %v3680 = vld [vmem:[#allocation2 + $0x58] sm:$0xf]
      %v3681 = vld [vmem:[#allocation2 + $0x60] sm:$0xf]
      %v3682 = vld [vmem:[#allocation2 + $0x64] sm:$0xf]
      %v3683 = vld [vmem:[#allocation2 + $0x6c] sm:$0xf]
      %v3684 = vld [vmem:[#allocation2 + $0x70] sm:$0xf]
      %v3685 = vld [vmem:[#allocation2 + $0x78] sm:$0xf]
      %v3686 = vld [vmem:[#allocation2 + $0x7c] sm:$0xf]
      %v3687 = vld [vmem:[#allocation2 + $0x84] sm:$0xf]
      %v3688 = vld [vmem:[#allocation2 + $0x88] sm:$0xf]
      %v3689 = vld [vmem:[#allocation2 + $0x90] sm:$0xf]
      %v3690 = vld [vmem:[#allocation2 + $0x94] sm:$0xf]
      %v3691 = vld [vmem:[#allocation2 + $0x9c] sm:$0xf]
      %v3692 = vld [vmem:[#allocation2 + $0xa0] sm:$0xf]
      %v3693 = vld [vmem:[#allocation2 + $0xa8] sm:$0xf]
      %v3694 = vld [vmem:[#allocation2 + $0xac] sm:$0xf]
      %v3695 = vld [vmem:[#allocation2 + $0xb4] sm:$0xf]
      %v3696 = vld [vmem:[#allocation2 + $0xb8] sm:$0xf]
      %v3697 = vld [vmem:[%s3] sm:$0xf]
      %v3698 = vld [vmem:[%s3 + $0x4] sm:$0xf]
      %v3699 = vld [vmem:[%s3 + $0x8] sm:$0xf]
      %v3700 = vld [vmem:[%s3 + $0xc] sm:$0xf]
      %v3701 = vld [vmem:[%s3 + $0x10] sm:$0xf]
      %v3702 = vld [vmem:[%s3 + $0x14] sm:$0xf]
      %v3703 = vld [vmem:[%s3 + $0x18] sm:$0xf]
      %v3704 = vld [vmem:[%s3 + $0x1c] sm:$0xf]
      %v3705 = vld [vmem:[%s3 + $0x20] sm:$0xf]
      %v3706 = vld [vmem:[%s3 + $0x24] sm:$0xf]
      %v3707 = vld [vmem:[%s3 + $0x28] sm:$0xf]
      %v3708 = vld [vmem:[%s3 + $0x2c] sm:$0xf]
      %v3709 = vld [vmem:[%s3 + $0x30] sm:$0xf]
      %v3710 = vld [vmem:[%s3 + $0x34] sm:$0xf]
      %v3711 = vld [vmem:[%s3 + $0x38] sm:$0xf]
      %v3712 = vld [vmem:[%s3 + $0x3c] sm:$0xf]
      %v3713 = vld [vmem:[#allocation2 + $0x8] sm:$0x1]
      %v3714 = vld [vmem:[#allocation2 + $0x14] sm:$0x1]
      %v3715 = vld [vmem:[#allocation2 + $0x20] sm:$0x1]
      %v3716 = vld [vmem:[#allocation2 + $0x2c] sm:$0x1]
      %v3717 = vld [vmem:[#allocation2 + $0x38] sm:$0x1]
      %v3718 = vld [vmem:[#allocation2 + $0x44] sm:$0x1]
      %v3719 = vld [vmem:[#allocation2 + $0x50] sm:$0x1]
      %v3720 = vld [vmem:[#allocation2 + $0x5c] sm:$0x1]
      %v3721 = vld [vmem:[#allocation2 + $0x68] sm:$0x1]
      %v3722 = vld [vmem:[#allocation2 + $0x74] sm:$0x1]
      %v3723 = vld [vmem:[#allocation2 + $0x80] sm:$0x1]
      %v3724 = vld [vmem:[#allocation2 + $0x8c] sm:$0x1]
      %v3725 = vld [vmem:[#allocation2 + $0x98] sm:$0x1]
      %v3726 = vld [vmem:[#allocation2 + $0xa4] sm:$0x1]
      %v3727 = vld [vmem:[#allocation2 + $0xb0] sm:$0x1]
      %v3728 = vld [vmem:[#allocation2 + $0xbc] sm:$0x1]
      %s3729 = scalar_lea.vmem %s3, 64
      %v3730 = vld [vmem:[%s3729] sm:$0xf]
      %v3731 = vld [vmem:[%s3729 + $0x4] sm:$0xf]
      %v3732 = vld [vmem:[%s3729 + $0x8] sm:$0xf]
      %v3733 = vld [vmem:[%s3729 + $0xc] sm:$0xf]
      %v3734 = vld [vmem:[%s3729 + $0x10] sm:$0xf]
      %v3735 = vld [vmem:[%s3729 + $0x14] sm:$0xf]
      %v3736 = vld [vmem:[%s3729 + $0x18] sm:$0xf]
      %v3737 = vld [vmem:[%s3729 + $0x1c] sm:$0xf]
      %v3738 = vld [vmem:[%s3729 + $0x20] sm:$0xf]
      %v3739 = vld [vmem:[%s3729 + $0x24] sm:$0xf]
      %v3740 = vld [vmem:[%s3729 + $0x28] sm:$0xf]
      %v3741 = vld [vmem:[%s3729 + $0x2c] sm:$0xf]
      %v3742 = vld [vmem:[%s3729 + $0x30] sm:$0xf]
      %v3743 = vld [vmem:[%s3729 + $0x34] sm:$0xf]
      %v3744 = vld [vmem:[%s3729 + $0x38] sm:$0xf]
      %v3745 = vld [vmem:[%s3729 + $0x3c] sm:$0xf]
      %v3747 = vshrl.u32 %v3665, 16
      %v3749 = vrot.slane %v3747, 4
      %v3750 = vshll.u32 %v3665, 16
      %v3752 = vrot.slane %v3750, 5
      %v3753 = vor.u32 %v3749, %v3752
      %v3754 = vrot.slane %v3753, 4
      %v3756 = vshll.u32 %v3666, 16
      %v3758 = vrot.slane %v3756, 5
      %v3759 = vsel %vm285, %v3754, %v3758
      %v3760 = vshrl.u32 %v3666, 16
      %v3762 = vrot.slane %v3760, 4
      %v3763 = vor.u32 %v3762, %v3758
      %v3764 = vrot.slane %v3763, 4
      %v3766 = vshll.u32 %v3713, 16
      %v3768 = vrot.slane %v3766, 5
      %v3769 = vsel %vm285, %v3764, %v3768
      %v3771 = vshrl.u32 %v3667, 16
      %v3773 = vrot.slane %v3771, 4
      %v3774 = vshll.u32 %v3667, 16
      %v3776 = vrot.slane %v3774, 5
      %v3777 = vor.u32 %v3773, %v3776
      %v3778 = vrot.slane %v3777, 4
      %v3780 = vshll.u32 %v3668, 16
      %v3782 = vrot.slane %v3780, 5
      %v3783 = vsel %vm285, %v3778, %v3782
      %v3784 = vshrl.u32 %v3668, 16
      %v3786 = vrot.slane %v3784, 4
      %v3787 = vor.u32 %v3786, %v3782
      %v3788 = vrot.slane %v3787, 4
      %v3790 = vshll.u32 %v3714, 16
      %v3792 = vrot.slane %v3790, 5
      %v3793 = vsel %vm285, %v3788, %v3792
      %v3795 = vshrl.u32 %v3669, 16
      %v3797 = vrot.slane %v3795, 4
      %v3798 = vshll.u32 %v3669, 16
      %v3800 = vrot.slane %v3798, 5
      %v3801 = vor.u32 %v3797, %v3800
      %v3802 = vrot.slane %v3801, 4
      %v3804 = vshll.u32 %v3670, 16
      %v3806 = vrot.slane %v3804, 5
      %v3807 = vsel %vm285, %v3802, %v3806
      %v3808 = vshrl.u32 %v3670, 16
      %v3810 = vrot.slane %v3808, 4
      %v3811 = vor.u32 %v3810, %v3806
      %v3812 = vrot.slane %v3811, 4
      %v3814 = vshll.u32 %v3715, 16
      %v3816 = vrot.slane %v3814, 5
      %v3817 = vsel %vm285, %v3812, %v3816
      %v3819 = vshrl.u32 %v3671, 16
      %v3821 = vrot.slane %v3819, 4
      %v3822 = vshll.u32 %v3671, 16
      %v3824 = vrot.slane %v3822, 5
      %v3825 = vor.u32 %v3821, %v3824
      %v3826 = vrot.slane %v3825, 4
      %v3828 = vshll.u32 %v3672, 16
      %v3830 = vrot.slane %v3828, 5
      %v3831 = vsel %vm285, %v3826, %v3830
      %v3832 = vshrl.u32 %v3672, 16
      %v3834 = vrot.slane %v3832, 4
      %v3835 = vor.u32 %v3834, %v3830
      %v3836 = vrot.slane %v3835, 4
      %v3838 = vshll.u32 %v3716, 16
      %v3840 = vrot.slane %v3838, 5
      %v3841 = vsel %vm285, %v3836, %v3840
      %v3843 = vshrl.u32 %v3673, 16
      %v3845 = vrot.slane %v3843, 4
      %v3846 = vshll.u32 %v3673, 16
      %v3848 = vrot.slane %v3846, 5
      %v3849 = vor.u32 %v3845, %v3848
      %v3850 = vrot.slane %v3849, 4
      %v3852 = vshll.u32 %v3674, 16
      %v3854 = vrot.slane %v3852, 5
      %v3855 = vsel %vm285, %v3850, %v3854
      %v3856 = vshrl.u32 %v3674, 16
      %v3858 = vrot.slane %v3856, 4
      %v3859 = vor.u32 %v3858, %v3854
      %v3860 = vrot.slane %v3859, 4
      %v3862 = vshll.u32 %v3717, 16
      %v3864 = vrot.slane %v3862, 5
      %v3865 = vsel %vm285, %v3860, %v3864
      %v3867 = vshrl.u32 %v3675, 16
      %v3869 = vrot.slane %v3867, 4
      %v3870 = vshll.u32 %v3675, 16
      %v3872 = vrot.slane %v3870, 5
      %v3873 = vor.u32 %v3869, %v3872
      %v3874 = vrot.slane %v3873, 4
      %v3876 = vshll.u32 %v3676, 16
      %v3878 = vrot.slane %v3876, 5
      %v3879 = vsel %vm285, %v3874, %v3878
      %v3880 = vshrl.u32 %v3676, 16
      %v3882 = vrot.slane %v3880, 4
      %v3883 = vor.u32 %v3882, %v3878
      %v3884 = vrot.slane %v3883, 4
      %v3886 = vshll.u32 %v3718, 16
      %v3888 = vrot.slane %v3886, 5
      %v3889 = vsel %vm285, %v3884, %v3888
      %v3891 = vshrl.u32 %v3677, 16
      %v3893 = vrot.slane %v3891, 4
      %v3894 = vshll.u32 %v3677, 16
      %v3896 = vrot.slane %v3894, 5
      %v3897 = vor.u32 %v3893, %v3896
      %v3898 = vrot.slane %v3897, 4
      %v3900 = vshll.u32 %v3678, 16
      %v3902 = vrot.slane %v3900, 5
      %v3903 = vsel %vm285, %v3898, %v3902
      %v3904 = vshrl.u32 %v3678, 16
      %v3906 = vrot.slane %v3904, 4
      %v3907 = vor.u32 %v3906, %v3902
      %v3908 = vrot.slane %v3907, 4
      %v3910 = vshll.u32 %v3719, 16
      %v3912 = vrot.slane %v3910, 5
      %v3913 = vsel %vm285, %v3908, %v3912
      %v3915 = vshrl.u32 %v3679, 16
      %v3917 = vrot.slane %v3915, 4
      %v3918 = vshll.u32 %v3679, 16
      %v3920 = vrot.slane %v3918, 5
      %v3921 = vor.u32 %v3917, %v3920
      %v3922 = vrot.slane %v3921, 4
      %v3924 = vshll.u32 %v3680, 16
      %v3926 = vrot.slane %v3924, 5
      %v3927 = vsel %vm285, %v3922, %v3926
      %v3928 = vshrl.u32 %v3680, 16
      %v3930 = vrot.slane %v3928, 4
      %v3931 = vor.u32 %v3930, %v3926
      %v3932 = vrot.slane %v3931, 4
      %v3934 = vshll.u32 %v3720, 16
      %v3936 = vrot.slane %v3934, 5
      %v3937 = vsel %vm285, %v3932, %v3936
      %v3939 = vshrl.u32 %v3681, 16
      %v3941 = vrot.slane %v3939, 4
      %v3942 = vshll.u32 %v3681, 16
      %v3944 = vrot.slane %v3942, 5
      %v3945 = vor.u32 %v3941, %v3944
      %v3946 = vrot.slane %v3945, 4
      %v3948 = vshll.u32 %v3682, 16
      %v3950 = vrot.slane %v3948, 5
      %v3951 = vsel %vm285, %v3946, %v3950
      %v3952 = vshrl.u32 %v3682, 16
      %v3954 = vrot.slane %v3952, 4
      %v3955 = vor.u32 %v3954, %v3950
      %v3956 = vrot.slane %v3955, 4
      %v3958 = vshll.u32 %v3721, 16
      %v3960 = vrot.slane %v3958, 5
      %v3961 = vsel %vm285, %v3956, %v3960
      %v3963 = vshrl.u32 %v3683, 16
      %v3965 = vrot.slane %v3963, 4
      %v3966 = vshll.u32 %v3683, 16
      %v3968 = vrot.slane %v3966, 5
      %v3969 = vor.u32 %v3965, %v3968
      %v3970 = vrot.slane %v3969, 4
      %v3972 = vshll.u32 %v3684, 16
      %v3974 = vrot.slane %v3972, 5
      %v3975 = vsel %vm285, %v3970, %v3974
      %v3976 = vshrl.u32 %v3684, 16
      %v3978 = vrot.slane %v3976, 4
      %v3979 = vor.u32 %v3978, %v3974
      %v3980 = vrot.slane %v3979, 4
      %v3982 = vshll.u32 %v3722, 16
      %v3984 = vrot.slane %v3982, 5
      %v3985 = vsel %vm285, %v3980, %v3984
      %v3987 = vshrl.u32 %v3685, 16
      %v3989 = vrot.slane %v3987, 4
      %v3990 = vshll.u32 %v3685, 16
      %v3992 = vrot.slane %v3990, 5
      %v3993 = vor.u32 %v3989, %v3992
      %v3994 = vrot.slane %v3993, 4
      %v3996 = vshll.u32 %v3686, 16
      %v3998 = vrot.slane %v3996, 5
      %v3999 = vsel %vm285, %v3994, %v3998
      %v4000 = vshrl.u32 %v3686, 16
      %v4002 = vrot.slane %v4000, 4
      %v4003 = vor.u32 %v4002, %v3998
      %v4004 = vrot.slane %v4003, 4
      %v4006 = vshll.u32 %v3723, 16
      %v4008 = vrot.slane %v4006, 5
      %v4009 = vsel %vm285, %v4004, %v4008
      %v4011 = vshrl.u32 %v3687, 16
      %v4013 = vrot.slane %v4011, 4
      %v4014 = vshll.u32 %v3687, 16
      %v4016 = vrot.slane %v4014, 5
      %v4017 = vor.u32 %v4013, %v4016
      %v4018 = vrot.slane %v4017, 4
      %v4020 = vshll.u32 %v3688, 16
      %v4022 = vrot.slane %v4020, 5
      %v4023 = vsel %vm285, %v4018, %v4022
      %v4024 = vshrl.u32 %v3688, 16
      %v4026 = vrot.slane %v4024, 4
      %v4027 = vor.u32 %v4026, %v4022
      %v4028 = vrot.slane %v4027, 4
      %v4030 = vshll.u32 %v3724, 16
      %v4032 = vrot.slane %v4030, 5
      %v4033 = vsel %vm285, %v4028, %v4032
      %v4035 = vshrl.u32 %v3689, 16
      %v4037 = vrot.slane %v4035, 4
      %v4038 = vshll.u32 %v3689, 16
      %v4040 = vrot.slane %v4038, 5
      %v4041 = vor.u32 %v4037, %v4040
      %v4042 = vrot.slane %v4041, 4
      %v4044 = vshll.u32 %v3690, 16
      %v4046 = vrot.slane %v4044, 5
      %v4047 = vsel %vm285, %v4042, %v4046
      %v4048 = vshrl.u32 %v3690, 16
      %v4050 = vrot.slane %v4048, 4
      %v4051 = vor.u32 %v4050, %v4046
      %v4052 = vrot.slane %v4051, 4
      %v4054 = vshll.u32 %v3725, 16
      %v4056 = vrot.slane %v4054, 5
      %v4057 = vsel %vm285, %v4052, %v4056
      %v4059 = vshrl.u32 %v3691, 16
      %v4061 = vrot.slane %v4059, 4
      %v4062 = vshll.u32 %v3691, 16
      %v4064 = vrot.slane %v4062, 5
      %v4065 = vor.u32 %v4061, %v4064
      %v4066 = vrot.slane %v4065, 4
      %v4068 = vshll.u32 %v3692, 16
      %v4070 = vrot.slane %v4068, 5
      %v4071 = vsel %vm285, %v4066, %v4070
      %v4072 = vshrl.u32 %v3692, 16
      %v4074 = vrot.slane %v4072, 4
      %v4075 = vor.u32 %v4074, %v4070
      %v4076 = vrot.slane %v4075, 4
      %v4078 = vshll.u32 %v3726, 16
      %v4080 = vrot.slane %v4078, 5
      %v4081 = vsel %vm285, %v4076, %v4080
      %v4083 = vshrl.u32 %v3693, 16
      %v4085 = vrot.slane %v4083, 4
      %v4086 = vshll.u32 %v3693, 16
      %v4088 = vrot.slane %v4086, 5
      %v4089 = vor.u32 %v4085, %v4088
      %v4090 = vrot.slane %v4089, 4
      %v4092 = vshll.u32 %v3694, 16
      %v4094 = vrot.slane %v4092, 5
      %v4095 = vsel %vm285, %v4090, %v4094
      %v4096 = vshrl.u32 %v3694, 16
      %v4098 = vrot.slane %v4096, 4
      %v4099 = vor.u32 %v4098, %v4094
      %v4100 = vrot.slane %v4099, 4
      %v4102 = vshll.u32 %v3727, 16
      %v4104 = vrot.slane %v4102, 5
      %v4105 = vsel %vm285, %v4100, %v4104
      %v4107 = vshrl.u32 %v3695, 16
      %v4109 = vrot.slane %v4107, 4
      %v4110 = vshll.u32 %v3695, 16
      %v4112 = vrot.slane %v4110, 5
      %v4113 = vor.u32 %v4109, %v4112
      %v4114 = vrot.slane %v4113, 4
      %v4116 = vshll.u32 %v3696, 16
      %v4118 = vrot.slane %v4116, 5
      %v4119 = vsel %vm285, %v4114, %v4118
      %v4120 = vshrl.u32 %v3696, 16
      %v4122 = vrot.slane %v4120, 4
      %v4123 = vor.u32 %v4122, %v4118
      %v4124 = vrot.slane %v4123, 4
      %v4126 = vshll.u32 %v3728, 16
      %v4128 = vrot.slane %v4126, 5
      %v4129 = vsel %vm285, %v4124, %v4128
      %v4130 = vunpack.c.l.b16 %v3759
      %v4131 = vunpack.c.l.b16 %v3769
      %v4132 = vunpack.c.l.b16 %v3783
      %v4133 = vunpack.c.l.b16 %v3793
      %v4134 = vunpack.c.l.b16 %v3807
      %v4135 = vunpack.c.l.b16 %v3817
      %v4136 = vunpack.c.l.b16 %v3831
      %v4137 = vunpack.c.l.b16 %v3841
      %v4138 = vunpack.c.l.b16 %v3855
      %v4139 = vunpack.c.l.b16 %v3865
      %v4140 = vunpack.c.l.b16 %v3879
      %v4141 = vunpack.c.l.b16 %v3889
      %v4142 = vunpack.c.l.b16 %v3903
      %v4143 = vunpack.c.l.b16 %v3913
      %v4144 = vunpack.c.l.b16 %v3927
      %v4145 = vunpack.c.l.b16 %v3937
      %v4146 = vunpack.c.l.b16 %v3951
      %v4147 = vunpack.c.l.b16 %v3961
      %v4148 = vunpack.c.l.b16 %v3975
      %v4149 = vunpack.c.l.b16 %v3985
      %v4150 = vunpack.c.l.b16 %v3999
      %v4151 = vunpack.c.l.b16 %v4009
      %v4152 = vunpack.c.l.b16 %v4023
      %v4153 = vunpack.c.l.b16 %v4033
      %v4154 = vunpack.c.l.b16 %v4047
      %v4155 = vunpack.c.l.b16 %v4057
      %v4156 = vunpack.c.l.b16 %v4071
      %v4157 = vunpack.c.l.b16 %v4081
      %v4158 = vunpack.c.l.b16 %v4095
      %v4159 = vunpack.c.l.b16 %v4105
      %v4160 = vunpack.c.l.b16 %v4119
      %v4161 = vunpack.c.l.b16 %v4129
      %v4162 = vpack.c.b16 %v4131, %v4130
      %v4163 = vpack.c.b16 %v4133, %v4132
      %v4164 = vpack.c.b16 %v4135, %v4134
      %v4165 = vpack.c.b16 %v4137, %v4136
      %v4166 = vpack.c.b16 %v4139, %v4138
      %v4167 = vpack.c.b16 %v4141, %v4140
      %v4168 = vpack.c.b16 %v4143, %v4142
      %v4169 = vpack.c.b16 %v4145, %v4144
      %v4170 = vpack.c.b16 %v4147, %v4146
      %v4171 = vpack.c.b16 %v4149, %v4148
      %v4172 = vpack.c.b16 %v4151, %v4150
      %v4173 = vpack.c.b16 %v4153, %v4152
      %v4174 = vpack.c.b16 %v4155, %v4154
      %v4175 = vpack.c.b16 %v4157, %v4156
      %v4176 = vpack.c.b16 %v4159, %v4158
      %v4177 = vpack.c.b16 %v4161, %v4160
      %v4210 = vunpack.c.l.b16 %v3730
      %v4211 = vunpack.c.l.b16 %v3731
      %v4212 = vunpack.c.l.b16 %v3732
      %v4213 = vunpack.c.l.b16 %v3733
      %v4214 = vunpack.c.l.b16 %v3734
      %v4215 = vunpack.c.l.b16 %v3735
      %v4216 = vunpack.c.l.b16 %v3736
      %v4217 = vunpack.c.l.b16 %v3737
      %v4218 = vunpack.c.l.b16 %v3738
      %v4219 = vunpack.c.l.b16 %v3739
      %v4220 = vunpack.c.l.b16 %v3740
      %v4221 = vunpack.c.l.b16 %v3741
      %v4222 = vunpack.c.l.b16 %v3742
      %v4223 = vunpack.c.l.b16 %v3743
      %v4224 = vunpack.c.l.b16 %v3744
      %v4225 = vunpack.c.l.b16 %v3745
      %v4226 = vpack.c.b16 %v4211, %v4210
      %v4227 = vpack.c.b16 %v4213, %v4212
      %v4228 = vpack.c.b16 %v4215, %v4214
      %v4229 = vpack.c.b16 %v4217, %v4216
      %v4230 = vpack.c.b16 %v4219, %v4218
      %v4231 = vpack.c.b16 %v4221, %v4220
      %v4232 = vpack.c.b16 %v4223, %v4222
      %v4233 = vpack.c.b16 %v4225, %v4224
      %4242 = vmatprep.subr.bf16.mxu0 0
      %4243 = vmatpush1.bf16.msra.mxu0 %v4226
      %4244 = vmatprep.subr.bf16.mxu0 0
      %4245 = vmatpush1.bf16.msra.mxu0 %v4227
      %4246 = vmatprep.subr.bf16.mxu0 0
      %4247 = vmatpush1.bf16.msra.mxu0 %v4228
      %4248 = vmatprep.subr.bf16.mxu0 0
      %4249 = vmatpush1.bf16.msra.mxu0 %v4229
      %4250 = vmatprep.subr.bf16.mxu0 0
      %4251 = vmatpush1.bf16.msra.mxu0 %v4230
      %4252 = vmatprep.subr.bf16.mxu0 0
      %4253 = vmatpush1.bf16.msra.mxu0 %v4231
      %4254 = vmatprep.subr.bf16.mxu0 0
      %4255 = vmatpush1.bf16.msra.mxu0 %v4232
      %4256 = vmatprep.subr.bf16.mxu0 0
      %4257 = vmatpush1.bf16.msra.mxu0 %v4233
      %4258 = vmatprep.subr.bf16.mxu0 0
      %4259 = vmatpush1.bf16.msra.mxu0 0
      %4260 = vmatprep.subr.bf16.mxu0 0
      %4261 = vmatpush1.bf16.msra.mxu0 0
      %4262 = vmatprep.subr.bf16.mxu0 0
      %4263 = vmatpush1.bf16.msra.mxu0 0
      %4264 = vmatprep.subr.bf16.mxu0 0
      %4265 = vmatpush1.bf16.msra.mxu0 0
      %4266 = vmatprep.subr.bf16.mxu0 0
      %4267 = vmatpush1.bf16.msra.mxu0 0
      %4268 = vmatprep.subr.bf16.mxu0 0
      %4269 = vmatpush1.bf16.msra.mxu0 0
      %4270 = vmatprep.subr.bf16.mxu0 0
      %4271 = vmatpush1.bf16.msra.mxu0 0
      %4272 = vmatprep.subr.bf16.mxu0 0
      %4273 = vmatpush1.bf16.msra.mxu0 0
      %4274 = vmatprep.mubr.bf16.mxu0 0
      %4275 = vmatmul.mubr.bf16.gmra.mrb[0].mxu0 %v4162
      %v4276 = vpop.f32.mrb[0].mxu0
      %v4277 = vadd.f32 0.0, %v4276
      %v4278 = vpop.f32.mrb[0].mxu0
      %v4279 = vpop.f32.mrb[0].mxu0
      %v4280 = vadd.f32 0.0, %v4279
      %v4281 = vpop.f32.mrb[0].mxu0
      %4282 = vmatprep.mubr.bf16.mxu0 0
      %4283 = vmatmul.mubr.bf16.gmra.mrb[0].mxu0 %v4163
      %v4284 = vpop.f32.mrb[0].mxu0
      %v4285 = vadd.f32 0.0, %v4284
      %v4286 = vpop.f32.mrb[0].mxu0
      %v4287 = vpop.f32.mrb[0].mxu0
      %v4288 = vadd.f32 0.0, %v4287
      %v4289 = vpop.f32.mrb[0].mxu0
      %4290 = vmatprep.mubr.bf16.mxu0 0
      %4291 = vmatmul.mubr.bf16.gmra.mrb[0].mxu0 %v4164
      %v4292 = vpop.f32.mrb[0].mxu0
      %v4293 = vadd.f32 0.0, %v4292
      %v4294 = vpop.f32.mrb[0].mxu0
      %v4295 = vpop.f32.mrb[0].mxu0
      %v4296 = vadd.f32 0.0, %v4295
      %v4297 = vpop.f32.mrb[0].mxu0
      %4298 = vmatprep.mubr.bf16.mxu0 0
      %4299 = vmatmul.mubr.bf16.gmra.mrb[0].mxu0 %v4165
      %v4300 = vpop.f32.mrb[0].mxu0
      %v4301 = vadd.f32 0.0, %v4300
      %v4302 = vpop.f32.mrb[0].mxu0
      %v4303 = vpop.f32.mrb[0].mxu0
      %v4304 = vadd.f32 0.0, %v4303
      %v4305 = vpop.f32.mrb[0].mxu0
      %4306 = vmatprep.mubr.bf16.mxu0 0
      %4307 = vmatmul.mubr.bf16.gmra.mrb[0].mxu0 %v4166
      %v4308 = vpop.f32.mrb[0].mxu0
      %v4309 = vadd.f32 0.0, %v4308
      %v4310 = vpop.f32.mrb[0].mxu0
      %v4311 = vpop.f32.mrb[0].mxu0
      %v4312 = vadd.f32 0.0, %v4311
      %v4313 = vpop.f32.mrb[0].mxu0
      %4314 = vmatprep.mubr.bf16.mxu0 0
      %4315 = vmatmul.mubr.bf16.gmra.mrb[0].mxu0 %v4167
      %v4316 = vpop.f32.mrb[0].mxu0
      %v4317 = vadd.f32 0.0, %v4316
      %v4318 = vpop.f32.mrb[0].mxu0
      %v4319 = vpop.f32.mrb[0].mxu0
      %v4320 = vadd.f32 0.0, %v4319
      %v4321 = vpop.f32.mrb[0].mxu0
      %4322 = vmatprep.mubr.bf16.mxu0 0
      %4323 = vmatmul.mubr.bf16.gmra.mrb[0].mxu0 %v4168
      %v4324 = vpop.f32.mrb[0].mxu0
      %v4325 = vadd.f32 0.0, %v4324
      %v4326 = vpop.f32.mrb[0].mxu0
      %v4327 = vpop.f32.mrb[0].mxu0
      %v4328 = vadd.f32 0.0, %v4327
      %v4329 = vpop.f32.mrb[0].mxu0
      %4330 = vmatprep.mubr.bf16.mxu0 0
      %4331 = vmatmul.mubr.bf16.gmra.mrb[0].mxu0 %v4169
      %v4332 = vpop.f32.mrb[0].mxu0
      %v4333 = vadd.f32 0.0, %v4332
      %v4334 = vpop.f32.mrb[0].mxu0
      %v4335 = vpop.f32.mrb[0].mxu0
      %v4336 = vadd.f32 0.0, %v4335
      %v4337 = vpop.f32.mrb[0].mxu0
      %4338 = vmatprep.mubr.bf16.mxu0 0
      %4339 = vmatmul.mubr.bf16.gmra.mrb[0].mxu0 %v4170
      %v4340 = vpop.f32.mrb[0].mxu0
      %v4341 = vadd.f32 0.0, %v4340
      %v4342 = vpop.f32.mrb[0].mxu0
      %v4343 = vpop.f32.mrb[0].mxu0
      %v4344 = vadd.f32 0.0, %v4343
      %v4345 = vpop.f32.mrb[0].mxu0
      %4346 = vmatprep.mubr.bf16.mxu0 0
      %4347 = vmatmul.mubr.bf16.gmra.mrb[0].mxu0 %v4171
      %v4348 = vpop.f32.mrb[0].mxu0
      %v4349 = vadd.f32 0.0, %v4348
      %v4350 = vpop.f32.mrb[0].mxu0
      %v4351 = vpop.f32.mrb[0].mxu0
      %v4352 = vadd.f32 0.0, %v4351
      %v4353 = vpop.f32.mrb[0].mxu0
      %4354 = vmatprep.mubr.bf16.mxu0 0
      %4355 = vmatmul.mubr.bf16.gmra.mrb[0].mxu0 %v4172
      %v4356 = vpop.f32.mrb[0].mxu0
      %v4357 = vadd.f32 0.0, %v4356
      %v4358 = vpop.f32.mrb[0].mxu0
      %v4359 = vpop.f32.mrb[0].mxu0
      %v4360 = vadd.f32 0.0, %v4359
      %v4361 = vpop.f32.mrb[0].mxu0
      %4362 = vmatprep.mubr.bf16.mxu0 0
      %4363 = vmatmul.mubr.bf16.gmra.mrb[0].mxu0 %v4173
      %v4364 = vpop.f32.mrb[0].mxu0
      %v4365 = vadd.f32 0.0, %v4364
      %v4366 = vpop.f32.mrb[0].mxu0
      %v4367 = vpop.f32.mrb[0].mxu0
      %v4368 = vadd.f32 0.0, %v4367
      %v4369 = vpop.f32.mrb[0].mxu0
      %4370 = vmatprep.mubr.bf16.mxu0 0
      %4371 = vmatmul.mubr.bf16.gmra.mrb[0].mxu0 %v4174
      %v4372 = vpop.f32.mrb[0].mxu0
      %v4373 = vadd.f32 0.0, %v4372
      %v4374 = vpop.f32.mrb[0].mxu0
      %v4375 = vpop.f32.mrb[0].mxu0
      %v4376 = vadd.f32 0.0, %v4375
      %v4377 = vpop.f32.mrb[0].mxu0
      %4378 = vmatprep.mubr.bf16.mxu0 0
      %4379 = vmatmul.mubr.bf16.gmra.mrb[0].mxu0 %v4175
      %v4380 = vpop.f32.mrb[0].mxu0
      %v4381 = vadd.f32 0.0, %v4380
      %v4382 = vpop.f32.mrb[0].mxu0
      %v4383 = vpop.f32.mrb[0].mxu0
      %v4384 = vadd.f32 0.0, %v4383
      %v4385 = vpop.f32.mrb[0].mxu0
      %4386 = vmatprep.mubr.bf16.mxu0 0
      %4387 = vmatmul.mubr.bf16.gmra.mrb[0].mxu0 %v4176
      %v4388 = vpop.f32.mrb[0].mxu0
      %v4389 = vadd.f32 0.0, %v4388
      %v4390 = vpop.f32.mrb[0].mxu0
      %v4391 = vpop.f32.mrb[0].mxu0
      %v4392 = vadd.f32 0.0, %v4391
      %v4393 = vpop.f32.mrb[0].mxu0
      %4394 = vmatprep.mubr.bf16.mxu0 0
      %4395 = vmatmul.mubr.bf16.gmra.mrb[0].mxu0 %v4177
      %v4396 = vpop.f32.mrb[0].mxu0
      %v4397 = vadd.f32 0.0, %v4396
      %v4398 = vpop.f32.mrb[0].mxu0
      %v4399 = vpop.f32.mrb[0].mxu0
      %v4400 = vadd.f32 0.0, %v4399
      %v4401 = vpop.f32.mrb[0].mxu0
      %4402 = vdwg.mxu0
      %v4435 = vunpack.c.l.b16 %v3665
      %v4436 = vunpack.c.l.b16 %v3666
      %v4437 = vunpack.c.l.b16 %v3667
      %v4438 = vunpack.c.l.b16 %v3668
      %v4439 = vunpack.c.l.b16 %v3669
      %v4440 = vunpack.c.l.b16 %v3670
      %v4441 = vunpack.c.l.b16 %v3671
      %v4442 = vunpack.c.l.b16 %v3672
      %v4443 = vunpack.c.l.b16 %v3673
      %v4444 = vunpack.c.l.b16 %v3674
      %v4445 = vunpack.c.l.b16 %v3675
      %v4446 = vunpack.c.l.b16 %v3676
      %v4447 = vunpack.c.l.b16 %v3677
      %v4448 = vunpack.c.l.b16 %v3678
      %v4449 = vunpack.c.l.b16 %v3679
      %v4450 = vunpack.c.l.b16 %v3680
      %v4451 = vunpack.c.l.b16 %v3681
      %v4452 = vunpack.c.l.b16 %v3682
      %v4453 = vunpack.c.l.b16 %v3683
      %v4454 = vunpack.c.l.b16 %v3684
      %v4455 = vunpack.c.l.b16 %v3685
      %v4456 = vunpack.c.l.b16 %v3686
      %v4457 = vunpack.c.l.b16 %v3687
      %v4458 = vunpack.c.l.b16 %v3688
      %v4459 = vunpack.c.l.b16 %v3689
      %v4460 = vunpack.c.l.b16 %v3690
      %v4461 = vunpack.c.l.b16 %v3691
      %v4462 = vunpack.c.l.b16 %v3692
      %v4463 = vunpack.c.l.b16 %v3693
      %v4464 = vunpack.c.l.b16 %v3694
      %v4465 = vunpack.c.l.b16 %v3695
      %v4466 = vunpack.c.l.b16 %v3696
      %v4467 = vpack.c.b16 %v4436, %v4435
      %v4468 = vpack.c.b16 %v4438, %v4437
      %v4469 = vpack.c.b16 %v4440, %v4439
      %v4470 = vpack.c.b16 %v4442, %v4441
      %v4471 = vpack.c.b16 %v4444, %v4443
      %v4472 = vpack.c.b16 %v4446, %v4445
      %v4473 = vpack.c.b16 %v4448, %v4447
      %v4474 = vpack.c.b16 %v4450, %v4449
      %v4475 = vpack.c.b16 %v4452, %v4451
      %v4476 = vpack.c.b16 %v4454, %v4453
      %v4477 = vpack.c.b16 %v4456, %v4455
      %v4478 = vpack.c.b16 %v4458, %v4457
      %v4479 = vpack.c.b16 %v4460, %v4459
      %v4480 = vpack.c.b16 %v4462, %v4461
      %v4481 = vpack.c.b16 %v4464, %v4463
      %v4482 = vpack.c.b16 %v4466, %v4465
      %v4515 = vunpack.c.l.b16 %v3697
      %v4516 = vunpack.c.l.b16 %v3698
      %v4517 = vunpack.c.l.b16 %v3699
      %v4518 = vunpack.c.l.b16 %v3700
      %v4519 = vunpack.c.l.b16 %v3701
      %v4520 = vunpack.c.l.b16 %v3702
      %v4521 = vunpack.c.l.b16 %v3703
      %v4522 = vunpack.c.l.b16 %v3704
      %v4523 = vunpack.c.l.b16 %v3705
      %v4524 = vunpack.c.l.b16 %v3706
      %v4525 = vunpack.c.l.b16 %v3707
      %v4526 = vunpack.c.l.b16 %v3708
      %v4527 = vunpack.c.l.b16 %v3709
      %v4528 = vunpack.c.l.b16 %v3710
      %v4529 = vunpack.c.l.b16 %v3711
      %v4530 = vunpack.c.l.b16 %v3712
      %v4531 = vpack.c.b16 %v4516, %v4515
      %v4532 = vpack.c.b16 %v4518, %v4517
      %v4533 = vpack.c.b16 %v4520, %v4519
      %v4534 = vpack.c.b16 %v4522, %v4521
      %v4535 = vpack.c.b16 %v4524, %v4523
      %v4536 = vpack.c.b16 %v4526, %v4525
      %v4537 = vpack.c.b16 %v4528, %v4527
      %v4538 = vpack.c.b16 %v4530, %v4529
      %4547 = vmatprep.subr.bf16.mxu0 0
      %4548 = vmatpush1.bf16.msra.mxu0 %v4531
      %4549 = vmatprep.subr.bf16.mxu0 0
      %4550 = vmatpush1.bf16.msra.mxu0 %v4532
      %4551 = vmatprep.subr.bf16.mxu0 0
      %4552 = vmatpush1.bf16.msra.mxu0 %v4533
      %4553 = vmatprep.subr.bf16.mxu0 0
      %4554 = vmatpush1.bf16.msra.mxu0 %v4534
      %4555 = vmatprep.subr.bf16.mxu0 0
      %4556 = vmatpush1.bf16.msra.mxu0 %v4535
      %4557 = vmatprep.subr.bf16.mxu0 0
      %4558 = vmatpush1.bf16.msra.mxu0 %v4536
      %4559 = vmatprep.subr.bf16.mxu0 0
      %4560 = vmatpush1.bf16.msra.mxu0 %v4537
      %4561 = vmatprep.subr.bf16.mxu0 0
      %4562 = vmatpush1.bf16.msra.mxu0 %v4538
      %4563 = vmatprep.subr.bf16.mxu0 0
      %4564 = vmatpush1.bf16.msra.mxu0 0
      %4565 = vmatprep.subr.bf16.mxu0 0
      %4566 = vmatpush1.bf16.msra.mxu0 0
      %4567 = vmatprep.subr.bf16.mxu0 0
      %4568 = vmatpush1.bf16.msra.mxu0 0
      %4569 = vmatprep.subr.bf16.mxu0 0
      %4570 = vmatpush1.bf16.msra.mxu0 0
      %4571 = vmatprep.subr.bf16.mxu0 0
      %4572 = vmatpush1.bf16.msra.mxu0 0
      %4573 = vmatprep.subr.bf16.mxu0 0
      %4574 = vmatpush1.bf16.msra.mxu0 0
      %4575 = vmatprep.subr.bf16.mxu0 0
      %4576 = vmatpush1.bf16.msra.mxu0 0
      %4577 = vmatprep.subr.bf16.mxu0 0
      %4578 = vmatpush1.bf16.msra.mxu0 0
      %4579 = vmatprep.mubr.bf16.mxu0 0
      %4580 = vmatmul.mubr.bf16.gmra.mrb[0].mxu0 %v4467
      %v4581 = vpop.f32.mrb[0].mxu0
      %v4582 = vadd.f32 %v4277, %v4581
      %v4583 = vpop.f32.mrb[0].mxu0
      %v4584 = vpop.f32.mrb[0].mxu0
      %v4585 = vadd.f32 %v4280, %v4584
      %v4586 = vpop.f32.mrb[0].mxu0
      %4587 = vmatprep.mubr.bf16.mxu0 0
      %4588 = vmatmul.mubr.bf16.gmra.mrb[0].mxu0 %v4468
      %v4589 = vpop.f32.mrb[0].mxu0
      %v4590 = vadd.f32 %v4285, %v4589
      %v4591 = vpop.f32.mrb[0].mxu0
      %v4592 = vpop.f32.mrb[0].mxu0
      %v4593 = vadd.f32 %v4288, %v4592
      %v4594 = vpop.f32.mrb[0].mxu0
      %4595 = vmatprep.mubr.bf16.mxu0 0
      %4596 = vmatmul.mubr.bf16.gmra.mrb[0].mxu0 %v4469
      %v4597 = vpop.f32.mrb[0].mxu0
      %v4598 = vadd.f32 %v4293, %v4597
      %v4599 = vpop.f32.mrb[0].mxu0
      %v4600 = vpop.f32.mrb[0].mxu0
      %v4601 = vadd.f32 %v4296, %v4600
      %v4602 = vpop.f32.mrb[0].mxu0
      %4603 = vmatprep.mubr.bf16.mxu0 0
      %4604 = vmatmul.mubr.bf16.gmra.mrb[0].mxu0 %v4470
      %v4605 = vpop.f32.mrb[0].mxu0
      %v4606 = vadd.f32 %v4301, %v4605
      %v4607 = vpop.f32.mrb[0].mxu0
      %v4608 = vpop.f32.mrb[0].mxu0
      %v4609 = vadd.f32 %v4304, %v4608
      %v4610 = vpop.f32.mrb[0].mxu0
      %4611 = vmatprep.mubr.bf16.mxu0 0
      %4612 = vmatmul.mubr.bf16.gmra.mrb[0].mxu0 %v4471
      %v4613 = vpop.f32.mrb[0].mxu0
      %v4614 = vadd.f32 %v4309, %v4613
      %v4615 = vpop.f32.mrb[0].mxu0
      %v4616 = vpop.f32.mrb[0].mxu0
      %v4617 = vadd.f32 %v4312, %v4616
      %v4618 = vpop.f32.mrb[0].mxu0
      %4619 = vmatprep.mubr.bf16.mxu0 0
      %4620 = vmatmul.mubr.bf16.gmra.mrb[0].mxu0 %v4472
      %v4621 = vpop.f32.mrb[0].mxu0
      %v4622 = vadd.f32 %v4317, %v4621
      %v4623 = vpop.f32.mrb[0].mxu0
      %v4624 = vpop.f32.mrb[0].mxu0
      %v4625 = vadd.f32 %v4320, %v4624
      %v4626 = vpop.f32.mrb[0].mxu0
      %4627 = vmatprep.mubr.bf16.mxu0 0
      %4628 = vmatmul.mubr.bf16.gmra.mrb[0].mxu0 %v4473
      %v4629 = vpop.f32.mrb[0].mxu0
      %v4630 = vadd.f32 %v4325, %v4629
      %v4631 = vpop.f32.mrb[0].mxu0
      %v4632 = vpop.f32.mrb[0].mxu0
      %v4633 = vadd.f32 %v4328, %v4632
      %v4634 = vpop.f32.mrb[0].mxu0
      %4635 = vmatprep.mubr.bf16.mxu0 0
      %4636 = vmatmul.mubr.bf16.gmra.mrb[0].mxu0 %v4474
      %v4637 = vpop.f32.mrb[0].mxu0
      %v4638 = vadd.f32 %v4333, %v4637
      %v4639 = vpop.f32.mrb[0].mxu0
      %v4640 = vpop.f32.mrb[0].mxu0
      %v4641 = vadd.f32 %v4336, %v4640
      %v4642 = vpop.f32.mrb[0].mxu0
      %4643 = vmatprep.mubr.bf16.mxu0 0
      %4644 = vmatmul.mubr.bf16.gmra.mrb[0].mxu0 %v4475
      %v4645 = vpop.f32.mrb[0].mxu0
      %v4646 = vadd.f32 %v4341, %v4645
      %v4647 = vpop.f32.mrb[0].mxu0
      %v4648 = vpop.f32.mrb[0].mxu0
      %v4649 = vadd.f32 %v4344, %v4648
      %v4650 = vpop.f32.mrb[0].mxu0
      %4651 = vmatprep.mubr.bf16.mxu0 0
      %4652 = vmatmul.mubr.bf16.gmra.mrb[0].mxu0 %v4476
      %v4653 = vpop.f32.mrb[0].mxu0
      %v4654 = vadd.f32 %v4349, %v4653
      %v4655 = vpop.f32.mrb[0].mxu0
      %v4656 = vpop.f32.mrb[0].mxu0
      %v4657 = vadd.f32 %v4352, %v4656
      %v4658 = vpop.f32.mrb[0].mxu0
      %4659 = vmatprep.mubr.bf16.mxu0 0
      %4660 = vmatmul.mubr.bf16.gmra.mrb[0].mxu0 %v4477
      %v4661 = vpop.f32.mrb[0].mxu0
      %v4662 = vadd.f32 %v4357, %v4661
      %v4663 = vpop.f32.mrb[0].mxu0
      %v4664 = vpop.f32.mrb[0].mxu0
      %v4665 = vadd.f32 %v4360, %v4664
      %v4666 = vpop.f32.mrb[0].mxu0
      %4667 = vmatprep.mubr.bf16.mxu0 0
      %4668 = vmatmul.mubr.bf16.gmra.mrb[0].mxu0 %v4478
      %v4669 = vpop.f32.mrb[0].mxu0
      %v4670 = vadd.f32 %v4365, %v4669
      %v4671 = vpop.f32.mrb[0].mxu0
      %v4672 = vpop.f32.mrb[0].mxu0
      %v4673 = vadd.f32 %v4368, %v4672
      %v4674 = vpop.f32.mrb[0].mxu0
      %4675 = vmatprep.mubr.bf16.mxu0 0
      %4676 = vmatmul.mubr.bf16.gmra.mrb[0].mxu0 %v4479
      %v4677 = vpop.f32.mrb[0].mxu0
      %v4678 = vadd.f32 %v4373, %v4677
      %v4679 = vpop.f32.mrb[0].mxu0
      %v4680 = vpop.f32.mrb[0].mxu0
      %v4681 = vadd.f32 %v4376, %v4680
      %v4682 = vpop.f32.mrb[0].mxu0
      %4683 = vmatprep.mubr.bf16.mxu0 0
      %4684 = vmatmul.mubr.bf16.gmra.mrb[0].mxu0 %v4480
      %v4685 = vpop.f32.mrb[0].mxu0
      %v4686 = vadd.f32 %v4381, %v4685
      %v4687 = vpop.f32.mrb[0].mxu0
      %v4688 = vpop.f32.mrb[0].mxu0
      %v4689 = vadd.f32 %v4384, %v4688
      %v4690 = vpop.f32.mrb[0].mxu0
      %4691 = vmatprep.mubr.bf16.mxu0 0
      %4692 = vmatmul.mubr.bf16.gmra.mrb[0].mxu0 %v4481
      %v4693 = vpop.f32.mrb[0].mxu0
      %v4694 = vadd.f32 %v4389, %v4693
      %v4695 = vpop.f32.mrb[0].mxu0
      %v4696 = vpop.f32.mrb[0].mxu0
      %v4697 = vadd.f32 %v4392, %v4696
      %v4698 = vpop.f32.mrb[0].mxu0
      %4699 = vmatprep.mubr.bf16.mxu0 0
      %4700 = vmatmul.mubr.bf16.gmra.mrb[0].mxu0 %v4482
      %v4701 = vpop.f32.mrb[0].mxu0
      %v4702 = vadd.f32 %v4397, %v4701
      %v4703 = vpop.f32.mrb[0].mxu0
      %v4704 = vpop.f32.mrb[0].mxu0
      %v4705 = vadd.f32 %v4400, %v4704
      %v4706 = vpop.f32.mrb[0].mxu0
      %4707 = vdwg.mxu0
      %v4708 = vld [vmem:[#allocation2] sm:$0xe]
      %v4709 = vld [vmem:[#allocation2 + $0xc] sm:$0xe]
      %v4710 = vld [vmem:[#allocation2 + $0x18] sm:$0xe]
      %v4711 = vld [vmem:[#allocation2 + $0x24] sm:$0xe]
      %v4712 = vld [vmem:[#allocation2 + $0x30] sm:$0xe]
      %v4713 = vld [vmem:[#allocation2 + $0x3c] sm:$0xe]
      %v4714 = vld [vmem:[#allocation2 + $0x48] sm:$0xe]
      %v4715 = vld [vmem:[#allocation2 + $0x54] sm:$0xe]
      %v4716 = vld [vmem:[#allocation2 + $0x60] sm:$0xe]
      %v4717 = vld [vmem:[#allocation2 + $0x6c] sm:$0xe]
      %v4718 = vld [vmem:[#allocation2 + $0x78] sm:$0xe]
      %v4719 = vld [vmem:[#allocation2 + $0x84] sm:$0xe]
      %v4720 = vld [vmem:[#allocation2 + $0x90] sm:$0xe]
      %v4721 = vld [vmem:[#allocation2 + $0x9c] sm:$0xe]
      %v4722 = vld [vmem:[#allocation2 + $0xa8] sm:$0xe]
      %v4723 = vld [vmem:[#allocation2 + $0xb4] sm:$0xe]
      %s4724 = scalar_lea.vmem %s3, 128
      %v4725 = vld [vmem:[%s4724] sm:$0xf]
      %v4726 = vld [vmem:[%s4724 + $0x4] sm:$0xf]
      %v4727 = vld [vmem:[%s4724 + $0x8] sm:$0xf]
      %v4728 = vld [vmem:[%s4724 + $0xc] sm:$0xf]
      %v4729 = vld [vmem:[%s4724 + $0x10] sm:$0xf]
      %v4730 = vld [vmem:[%s4724 + $0x14] sm:$0xf]
      %v4731 = vld [vmem:[%s4724 + $0x18] sm:$0xf]
      %v4732 = vld [vmem:[%s4724 + $0x1c] sm:$0xf]
      %v4733 = vld [vmem:[%s4724 + $0x20] sm:$0xf]
      %v4734 = vld [vmem:[%s4724 + $0x24] sm:$0xf]
      %v4735 = vld [vmem:[%s4724 + $0x28] sm:$0xf]
      %v4736 = vld [vmem:[%s4724 + $0x2c] sm:$0xf]
      %v4737 = vld [vmem:[%s4724 + $0x30] sm:$0xf]
      %v4738 = vld [vmem:[%s4724 + $0x34] sm:$0xf]
      %v4739 = vld [vmem:[%s4724 + $0x38] sm:$0xf]
      %v4740 = vld [vmem:[%s4724 + $0x3c] sm:$0xf]
      %v4773 = vrot.slane %v4708, 5
      %v4774 = vrot.slane %v4773, 4
      %v4775 = vrot.slane %v3666, 5
      %v4776 = vsel %vm1244, %v4774, %v4775
      %v4777 = vrot.slane %v4775, 4
      %v4778 = vrot.slane %v3713, 5
      %v4779 = vsel %vm1244, %v4777, %v4778
      %v4780 = vrot.slane %v4709, 5
      %v4781 = vrot.slane %v4780, 4
      %v4782 = vrot.slane %v3668, 5
      %v4783 = vsel %vm1244, %v4781, %v4782
      %v4784 = vrot.slane %v4782, 4
      %v4785 = vrot.slane %v3714, 5
      %v4786 = vsel %vm1244, %v4784, %v4785
      %v4787 = vrot.slane %v4710, 5
      %v4788 = vrot.slane %v4787, 4
      %v4789 = vrot.slane %v3670, 5
      %v4790 = vsel %vm1244, %v4788, %v4789
      %v4791 = vrot.slane %v4789, 4
      %v4792 = vrot.slane %v3715, 5
      %v4793 = vsel %vm1244, %v4791, %v4792
      %v4794 = vrot.slane %v4711, 5
      %v4795 = vrot.slane %v4794, 4
      %v4796 = vrot.slane %v3672, 5
      %v4797 = vsel %vm1244, %v4795, %v4796
      %v4798 = vrot.slane %v4796, 4
      %v4799 = vrot.slane %v3716, 5
      %v4800 = vsel %vm1244, %v4798, %v4799
      %v4801 = vrot.slane %v4712, 5
      %v4802 = vrot.slane %v4801, 4
      %v4803 = vrot.slane %v3674, 5
      %v4804 = vsel %vm1244, %v4802, %v4803
      %v4805 = vrot.slane %v4803, 4
      %v4806 = vrot.slane %v3717, 5
      %v4807 = vsel %vm1244, %v4805, %v4806
      %v4808 = vrot.slane %v4713, 5
      %v4809 = vrot.slane %v4808, 4
      %v4810 = vrot.slane %v3676, 5
      %v4811 = vsel %vm1244, %v4809, %v4810
      %v4812 = vrot.slane %v4810, 4
      %v4813 = vrot.slane %v3718, 5
      %v4814 = vsel %vm1244, %v4812, %v4813
      %v4815 = vrot.slane %v4714, 5
      %v4816 = vrot.slane %v4815, 4
      %v4817 = vrot.slane %v3678, 5
      %v4818 = vsel %vm1244, %v4816, %v4817
      %v4819 = vrot.slane %v4817, 4
      %v4820 = vrot.slane %v3719, 5
      %v4821 = vsel %vm1244, %v4819, %v4820
      %v4822 = vrot.slane %v4715, 5
      %v4823 = vrot.slane %v4822, 4
      %v4824 = vrot.slane %v3680, 5
      %v4825 = vsel %vm1244, %v4823, %v4824
      %v4826 = vrot.slane %v4824, 4
      %v4827 = vrot.slane %v3720, 5
      %v4828 = vsel %vm1244, %v4826, %v4827
      %v4829 = vrot.slane %v4716, 5
      %v4830 = vrot.slane %v4829, 4
      %v4831 = vrot.slane %v3682, 5
      %v4832 = vsel %vm1244, %v4830, %v4831
      %v4833 = vrot.slane %v4831, 4
      %v4834 = vrot.slane %v3721, 5
      %v4835 = vsel %vm1244, %v4833, %v4834
      %v4836 = vrot.slane %v4717, 5
      %v4837 = vrot.slane %v4836, 4
      %v4838 = vrot.slane %v3684, 5
      %v4839 = vsel %vm1244, %v4837, %v4838
      %v4840 = vrot.slane %v4838, 4
      %v4841 = vrot.slane %v3722, 5
      %v4842 = vsel %vm1244, %v4840, %v4841
      %v4843 = vrot.slane %v4718, 5
      %v4844 = vrot.slane %v4843, 4
      %v4845 = vrot.slane %v3686, 5
      %v4846 = vsel %vm1244, %v4844, %v4845
      %v4847 = vrot.slane %v4845, 4
      %v4848 = vrot.slane %v3723, 5
      %v4849 = vsel %vm1244, %v4847, %v4848
      %v4850 = vrot.slane %v4719, 5
      %v4851 = vrot.slane %v4850, 4
      %v4852 = vrot.slane %v3688, 5
      %v4853 = vsel %vm1244, %v4851, %v4852
      %v4854 = vrot.slane %v4852, 4
      %v4855 = vrot.slane %v3724, 5
      %v4856 = vsel %vm1244, %v4854, %v4855
      %v4857 = vrot.slane %v4720, 5
      %v4858 = vrot.slane %v4857, 4
      %v4859 = vrot.slane %v3690, 5
      %v4860 = vsel %vm1244, %v4858, %v4859
      %v4861 = vrot.slane %v4859, 4
      %v4862 = vrot.slane %v3725, 5
      %v4863 = vsel %vm1244, %v4861, %v4862
      %v4864 = vrot.slane %v4721, 5
      %v4865 = vrot.slane %v4864, 4
      %v4866 = vrot.slane %v3692, 5
      %v4867 = vsel %vm1244, %v4865, %v4866
      %v4868 = vrot.slane %v4866, 4
      %v4869 = vrot.slane %v3726, 5
      %v4870 = vsel %vm1244, %v4868, %v4869
      %v4871 = vrot.slane %v4722, 5
      %v4872 = vrot.slane %v4871, 4
      %v4873 = vrot.slane %v3694, 5
      %v4874 = vsel %vm1244, %v4872, %v4873
      %v4875 = vrot.slane %v4873, 4
      %v4876 = vrot.slane %v3727, 5
      %v4877 = vsel %vm1244, %v4875, %v4876
      %v4878 = vrot.slane %v4723, 5
      %v4879 = vrot.slane %v4878, 4
      %v4880 = vrot.slane %v3696, 5
      %v4881 = vsel %vm1244, %v4879, %v4880
      %v4882 = vrot.slane %v4880, 4
      %v4883 = vrot.slane %v3728, 5
      %v4884 = vsel %vm1244, %v4882, %v4883
      %v4885 = vunpack.c.l.b16 %v4776
      %v4886 = vunpack.c.l.b16 %v4779
      %v4887 = vunpack.c.l.b16 %v4783
      %v4888 = vunpack.c.l.b16 %v4786
      %v4889 = vunpack.c.l.b16 %v4790
      %v4890 = vunpack.c.l.b16 %v4793
      %v4891 = vunpack.c.l.b16 %v4797
      %v4892 = vunpack.c.l.b16 %v4800
      %v4893 = vunpack.c.l.b16 %v4804
      %v4894 = vunpack.c.l.b16 %v4807
      %v4895 = vunpack.c.l.b16 %v4811
      %v4896 = vunpack.c.l.b16 %v4814
      %v4897 = vunpack.c.l.b16 %v4818
      %v4898 = vunpack.c.l.b16 %v4821
      %v4899 = vunpack.c.l.b16 %v4825
      %v4900 = vunpack.c.l.b16 %v4828
      %v4901 = vunpack.c.l.b16 %v4832
      %v4902 = vunpack.c.l.b16 %v4835
      %v4903 = vunpack.c.l.b16 %v4839
      %v4904 = vunpack.c.l.b16 %v4842
      %v4905 = vunpack.c.l.b16 %v4846
      %v4906 = vunpack.c.l.b16 %v4849
      %v4907 = vunpack.c.l.b16 %v4853
      %v4908 = vunpack.c.l.b16 %v4856
      %v4909 = vunpack.c.l.b16 %v4860
      %v4910 = vunpack.c.l.b16 %v4863
      %v4911 = vunpack.c.l.b16 %v4867
      %v4912 = vunpack.c.l.b16 %v4870
      %v4913 = vunpack.c.l.b16 %v4874
      %v4914 = vunpack.c.l.b16 %v4877
      %v4915 = vunpack.c.l.b16 %v4881
      %v4916 = vunpack.c.l.b16 %v4884
      %v4917 = vpack.c.b16 %v4886, %v4885
      %v4918 = vpack.c.b16 %v4888, %v4887
      %v4919 = vpack.c.b16 %v4890, %v4889
      %v4920 = vpack.c.b16 %v4892, %v4891
      %v4921 = vpack.c.b16 %v4894, %v4893
      %v4922 = vpack.c.b16 %v4896, %v4895
      %v4923 = vpack.c.b16 %v4898, %v4897
      %v4924 = vpack.c.b16 %v4900, %v4899
      %v4925 = vpack.c.b16 %v4902, %v4901
      %v4926 = vpack.c.b16 %v4904, %v4903
      %v4927 = vpack.c.b16 %v4906, %v4905
      %v4928 = vpack.c.b16 %v4908, %v4907
      %v4929 = vpack.c.b16 %v4910, %v4909
      %v4930 = vpack.c.b16 %v4912, %v4911
      %v4931 = vpack.c.b16 %v4914, %v4913
      %v4932 = vpack.c.b16 %v4916, %v4915
      %v4965 = vunpack.c.l.b16 %v4725
      %v4966 = vunpack.c.l.b16 %v4726
      %v4967 = vunpack.c.l.b16 %v4727
      %v4968 = vunpack.c.l.b16 %v4728
      %v4969 = vunpack.c.l.b16 %v4729
      %v4970 = vunpack.c.l.b16 %v4730
      %v4971 = vunpack.c.l.b16 %v4731
      %v4972 = vunpack.c.l.b16 %v4732
      %v4973 = vunpack.c.l.b16 %v4733
      %v4974 = vunpack.c.l.b16 %v4734
      %v4975 = vunpack.c.l.b16 %v4735
      %v4976 = vunpack.c.l.b16 %v4736
      %v4977 = vunpack.c.l.b16 %v4737
      %v4978 = vunpack.c.l.b16 %v4738
      %v4979 = vunpack.c.l.b16 %v4739
      %v4980 = vunpack.c.l.b16 %v4740
      %v4981 = vpack.c.b16 %v4966, %v4965
      %v4982 = vpack.c.b16 %v4968, %v4967
      %v4983 = vpack.c.b16 %v4970, %v4969
      %v4984 = vpack.c.b16 %v4972, %v4971
      %v4985 = vpack.c.b16 %v4974, %v4973
      %v4986 = vpack.c.b16 %v4976, %v4975
      %v4987 = vpack.c.b16 %v4978, %v4977
      %v4988 = vpack.c.b16 %v4980, %v4979
      %4997 = vmatprep.subr.bf16.mxu0 0
      %4998 = vmatpush1.bf16.msra.mxu0 %v4981
      %4999 = vmatprep.subr.bf16.mxu0 0
      %5000 = vmatpush1.bf16.msra.mxu0 %v4982
      %5001 = vmatprep.subr.bf16.mxu0 0
      %5002 = vmatpush1.bf16.msra.mxu0 %v4983
      %5003 = vmatprep.subr.bf16.mxu0 0
      %5004 = vmatpush1.bf16.msra.mxu0 %v4984
      %5005 = vmatprep.subr.bf16.mxu0 0
      %5006 = vmatpush1.bf16.msra.mxu0 %v4985
      %5007 = vmatprep.subr.bf16.mxu0 0
      %5008 = vmatpush1.bf16.msra.mxu0 %v4986
      %5009 = vmatprep.subr.bf16.mxu0 0
      %5010 = vmatpush1.bf16.msra.mxu0 %v4987
      %5011 = vmatprep.subr.bf16.mxu0 0
      %5012 = vmatpush1.bf16.msra.mxu0 %v4988
      %5013 = vmatprep.subr.bf16.mxu0 0
      %5014 = vmatpush1.bf16.msra.mxu0 0
      %5015 = vmatprep.subr.bf16.mxu0 0
      %5016 = vmatpush1.bf16.msra.mxu0 0
      %5017 = vmatprep.subr.bf16.mxu0 0
      %5018 = vmatpush1.bf16.msra.mxu0 0
      %5019 = vmatprep.subr.bf16.mxu0 0
      %5020 = vmatpush1.bf16.msra.mxu0 0
      %5021 = vmatprep.subr.bf16.mxu0 0
      %5022 = vmatpush1.bf16.msra.mxu0 0
      %5023 = vmatprep.subr.bf16.mxu0 0
      %5024 = vmatpush1.bf16.msra.mxu0 0
      %5025 = vmatprep.subr.bf16.mxu0 0
      %5026 = vmatpush1.bf16.msra.mxu0 0
      %5027 = vmatprep.subr.bf16.mxu0 0
      %5028 = vmatpush1.bf16.msra.mxu0 0
      %5029 = vmatprep.mubr.bf16.mxu0 0
      %5030 = vmatmul.mubr.bf16.gmra.mrb[0].mxu0 %v4917
      %v5031 = vpop.f32.mrb[0].mxu0
      %v5032 = vadd.f32 0.0, %v5031
      %v5033 = vpop.f32.mrb[0].mxu0
      %v5034 = vpop.f32.mrb[0].mxu0
      %v5035 = vadd.f32 0.0, %v5034
      %v5036 = vpop.f32.mrb[0].mxu0
      %5037 = vmatprep.mubr.bf16.mxu0 0
      %5038 = vmatmul.mubr.bf16.gmra.mrb[0].mxu0 %v4918
      %v5039 = vpop.f32.mrb[0].mxu0
      %v5040 = vadd.f32 0.0, %v5039
      %v5041 = vpop.f32.mrb[0].mxu0
      %v5042 = vpop.f32.mrb[0].mxu0
      %v5043 = vadd.f32 0.0, %v5042
      %v5044 = vpop.f32.mrb[0].mxu0
      %5045 = vmatprep.mubr.bf16.mxu0 0
      %5046 = vmatmul.mubr.bf16.gmra.mrb[0].mxu0 %v4919
      %v5047 = vpop.f32.mrb[0].mxu0
      %v5048 = vadd.f32 0.0, %v5047
      %v5049 = vpop.f32.mrb[0].mxu0
      %v5050 = vpop.f32.mrb[0].mxu0
      %v5051 = vadd.f32 0.0, %v5050
      %v5052 = vpop.f32.mrb[0].mxu0
      %5053 = vmatprep.mubr.bf16.mxu0 0
      %5054 = vmatmul.mubr.bf16.gmra.mrb[0].mxu0 %v4920
      %v5055 = vpop.f32.mrb[0].mxu0
      %v5056 = vadd.f32 0.0, %v5055
      %v5057 = vpop.f32.mrb[0].mxu0
      %v5058 = vpop.f32.mrb[0].mxu0
      %v5059 = vadd.f32 0.0, %v5058
      %v5060 = vpop.f32.mrb[0].mxu0
      %5061 = vmatprep.mubr.bf16.mxu0 0
      %5062 = vmatmul.mubr.bf16.gmra.mrb[0].mxu0 %v4921
      %v5063 = vpop.f32.mrb[0].mxu0
      %v5064 = vadd.f32 0.0, %v5063
      %v5065 = vpop.f32.mrb[0].mxu0
      %v5066 = vpop.f32.mrb[0].mxu0
      %v5067 = vadd.f32 0.0, %v5066
      %v5068 = vpop.f32.mrb[0].mxu0
      %5069 = vmatprep.mubr.bf16.mxu0 0
      %5070 = vmatmul.mubr.bf16.gmra.mrb[0].mxu0 %v4922
      %v5071 = vpop.f32.mrb[0].mxu0
      %v5072 = vadd.f32 0.0, %v5071
      %v5073 = vpop.f32.mrb[0].mxu0
      %v5074 = vpop.f32.mrb[0].mxu0
      %v5075 = vadd.f32 0.0, %v5074
      %v5076 = vpop.f32.mrb[0].mxu0
      %5077 = vmatprep.mubr.bf16.mxu0 0
      %5078 = vmatmul.mubr.bf16.gmra.mrb[0].mxu0 %v4923
      %v5079 = vpop.f32.mrb[0].mxu0
      %v5080 = vadd.f32 0.0, %v5079
      %v5081 = vpop.f32.mrb[0].mxu0
      %v5082 = vpop.f32.mrb[0].mxu0
      %v5083 = vadd.f32 0.0, %v5082
      %v5084 = vpop.f32.mrb[0].mxu0
      %5085 = vmatprep.mubr.bf16.mxu0 0
      %5086 = vmatmul.mubr.bf16.gmra.mrb[0].mxu0 %v4924
      %v5087 = vpop.f32.mrb[0].mxu0
      %v5088 = vadd.f32 0.0, %v5087
      %v5089 = vpop.f32.mrb[0].mxu0
      %v5090 = vpop.f32.mrb[0].mxu0
      %v5091 = vadd.f32 0.0, %v5090
      %v5092 = vpop.f32.mrb[0].mxu0
      %5093 = vmatprep.mubr.bf16.mxu0 0
      %5094 = vmatmul.mubr.bf16.gmra.mrb[0].mxu0 %v4925
      %v5095 = vpop.f32.mrb[0].mxu0
      %v5096 = vadd.f32 0.0, %v5095
      %v5097 = vpop.f32.mrb[0].mxu0
      %v5098 = vpop.f32.mrb[0].mxu0
      %v5099 = vadd.f32 0.0, %v5098
      %v5100 = vpop.f32.mrb[0].mxu0
      %5101 = vmatprep.mubr.bf16.mxu0 0
      %5102 = vmatmul.mubr.bf16.gmra.mrb[0].mxu0 %v4926
      %v5103 = vpop.f32.mrb[0].mxu0
      %v5104 = vadd.f32 0.0, %v5103
      %v5105 = vpop.f32.mrb[0].mxu0
      %v5106 = vpop.f32.mrb[0].mxu0
      %v5107 = vadd.f32 0.0, %v5106
      %v5108 = vpop.f32.mrb[0].mxu0
      %5109 = vmatprep.mubr.bf16.mxu0 0
      %5110 = vmatmul.mubr.bf16.gmra.mrb[0].mxu0 %v4927
      %v5111 = vpop.f32.mrb[0].mxu0
      %v5112 = vadd.f32 0.0, %v5111
      %v5113 = vpop.f32.mrb[0].mxu0
      %v5114 = vpop.f32.mrb[0].mxu0
      %v5115 = vadd.f32 0.0, %v5114
      %v5116 = vpop.f32.mrb[0].mxu0
      %5117 = vmatprep.mubr.bf16.mxu0 0
      %5118 = vmatmul.mubr.bf16.gmra.mrb[0].mxu0 %v4928
      %v5119 = vpop.f32.mrb[0].mxu0
      %v5120 = vadd.f32 0.0, %v5119
      %v5121 = vpop.f32.mrb[0].mxu0
      %v5122 = vpop.f32.mrb[0].mxu0
      %v5123 = vadd.f32 0.0, %v5122
      %v5124 = vpop.f32.mrb[0].mxu0
      %5125 = vmatprep.mubr.bf16.mxu0 0
      %5126 = vmatmul.mubr.bf16.gmra.mrb[0].mxu0 %v4929
      %v5127 = vpop.f32.mrb[0].mxu0
      %v5128 = vadd.f32 0.0, %v5127
      %v5129 = vpop.f32.mrb[0].mxu0
      %v5130 = vpop.f32.mrb[0].mxu0
      %v5131 = vadd.f32 0.0, %v5130
      %v5132 = vpop.f32.mrb[0].mxu0
      %5133 = vmatprep.mubr.bf16.mxu0 0
      %5134 = vmatmul.mubr.bf16.gmra.mrb[0].mxu0 %v4930
      %v5135 = vpop.f32.mrb[0].mxu0
      %v5136 = vadd.f32 0.0, %v5135
      %v5137 = vpop.f32.mrb[0].mxu0
      %v5138 = vpop.f32.mrb[0].mxu0
      %v5139 = vadd.f32 0.0, %v5138
      %v5140 = vpop.f32.mrb[0].mxu0
      %5141 = vmatprep.mubr.bf16.mxu0 0
      %5142 = vmatmul.mubr.bf16.gmra.mrb[0].mxu0 %v4931
      %v5143 = vpop.f32.mrb[0].mxu0
      %v5144 = vadd.f32 0.0, %v5143
      %v5145 = vpop.f32.mrb[0].mxu0
      %v5146 = vpop.f32.mrb[0].mxu0
      %v5147 = vadd.f32 0.0, %v5146
      %v5148 = vpop.f32.mrb[0].mxu0
      %5149 = vmatprep.mubr.bf16.mxu0 0
      %5150 = vmatmul.mubr.bf16.gmra.mrb[0].mxu0 %v4932
      %v5151 = vpop.f32.mrb[0].mxu0
      %v5152 = vadd.f32 0.0, %v5151
      %v5153 = vpop.f32.mrb[0].mxu0
      %v5154 = vpop.f32.mrb[0].mxu0
      %v5155 = vadd.f32 0.0, %v5154
      %v5156 = vpop.f32.mrb[0].mxu0
      %5157 = vdwg.mxu0
      %v5158 = vadd.f32 %v4582, %v5032
      %v5159 = vadd.f32 %v4585, %v5035
      %v5160 = vadd.f32 %v4590, %v5040
      %v5161 = vadd.f32 %v4593, %v5043
      %v5162 = vadd.f32 %v4598, %v5048
      %v5163 = vadd.f32 %v4601, %v5051
      %v5164 = vadd.f32 %v4606, %v5056
      %v5165 = vadd.f32 %v4609, %v5059
      %v5166 = vadd.f32 %v4614, %v5064
      %v5167 = vadd.f32 %v4617, %v5067
      %v5168 = vadd.f32 %v4622, %v5072
      %v5169 = vadd.f32 %v4625, %v5075
      %v5170 = vadd.f32 %v4630, %v5080
      %v5171 = vadd.f32 %v4633, %v5083
      %v5172 = vadd.f32 %v4638, %v5088
      %v5173 = vadd.f32 %v4641, %v5091
      %v5174 = vadd.f32 %v4646, %v5096
      %v5175 = vadd.f32 %v4649, %v5099
      %v5176 = vadd.f32 %v4654, %v5104
      %v5177 = vadd.f32 %v4657, %v5107
      %v5178 = vadd.f32 %v4662, %v5112
      %v5179 = vadd.f32 %v4665, %v5115
      %v5180 = vadd.f32 %v4670, %v5120
      %v5181 = vadd.f32 %v4673, %v5123
      %v5182 = vadd.f32 %v4678, %v5128
      %v5183 = vadd.f32 %v4681, %v5131
      %v5184 = vadd.f32 %v4686, %v5136
      %v5185 = vadd.f32 %v4689, %v5139
      %v5186 = vadd.f32 %v4694, %v5144
      %v5187 = vadd.f32 %v4697, %v5147
      %v5188 = vadd.f32 %v4702, %v5152
      %v5189 = vadd.f32 %v4705, %v5155
      %v5190 = vld [vmem:[%s3550] sm:$0xf]
      %v5191 = vld [vmem:[%s3550 + $0x4] sm:$0xf]
      %v5192 = vld [vmem:[%s3550 + $0xc] sm:$0xf]
      %v5193 = vld [vmem:[%s3550 + $0x10] sm:$0xf]
      %v5194 = vld [vmem:[%s3550 + $0x18] sm:$0xf]
      %v5195 = vld [vmem:[%s3550 + $0x1c] sm:$0xf]
      %v5196 = vld [vmem:[%s3550 + $0x24] sm:$0xf]
      %v5197 = vld [vmem:[%s3550 + $0x28] sm:$0xf]
      %v5198 = vld [vmem:[%s3550 + $0x30] sm:$0xf]
      %v5199 = vld [vmem:[%s3550 + $0x34] sm:$0xf]
      %v5200 = vld [vmem:[%s3550 + $0x3c] sm:$0xf]
      %v5201 = vld [vmem:[%s3550 + $0x40] sm:$0xf]
      %v5202 = vld [vmem:[%s3550 + $0x48] sm:$0xf]
      %v5203 = vld [vmem:[%s3550 + $0x4c] sm:$0xf]
      %v5204 = vld [vmem:[%s3550 + $0x54] sm:$0xf]
      %v5205 = vld [vmem:[%s3550 + $0x58] sm:$0xf]
      %v5206 = vld [vmem:[%s3550 + $0x60] sm:$0xf]
      %v5207 = vld [vmem:[%s3550 + $0x64] sm:$0xf]
      %v5208 = vld [vmem:[%s3550 + $0x6c] sm:$0xf]
      %v5209 = vld [vmem:[%s3550 + $0x70] sm:$0xf]
      %v5210 = vld [vmem:[%s3550 + $0x78] sm:$0xf]
      %v5211 = vld [vmem:[%s3550 + $0x7c] sm:$0xf]
      %v5212 = vld [vmem:[%s3550 + $0x84] sm:$0xf]
      %v5213 = vld [vmem:[%s3550 + $0x88] sm:$0xf]
      %v5214 = vld [vmem:[%s3550 + $0x90] sm:$0xf]
      %v5215 = vld [vmem:[%s3550 + $0x94] sm:$0xf]
      %v5216 = vld [vmem:[%s3550 + $0x9c] sm:$0xf]
      %v5217 = vld [vmem:[%s3550 + $0xa0] sm:$0xf]
      %v5218 = vld [vmem:[%s3550 + $0xa8] sm:$0xf]
      %v5219 = vld [vmem:[%s3550 + $0xac] sm:$0xf]
      %v5220 = vld [vmem:[%s3550 + $0xb4] sm:$0xf]
      %v5221 = vld [vmem:[%s3550 + $0xb8] sm:$0xf]
      %s5222 = scalar_lea.vmem %s3, 192
      %v5223 = vld [vmem:[%s5222] sm:$0xf]
      %v5224 = vld [vmem:[%s5222 + $0x4] sm:$0xf]
      %v5225 = vld [vmem:[%s5222 + $0x8] sm:$0xf]
      %v5226 = vld [vmem:[%s5222 + $0xc] sm:$0xf]
      %v5227 = vld [vmem:[%s5222 + $0x10] sm:$0xf]
      %v5228 = vld [vmem:[%s5222 + $0x14] sm:$0xf]
      %v5229 = vld [vmem:[%s5222 + $0x18] sm:$0xf]
      %v5230 = vld [vmem:[%s5222 + $0x1c] sm:$0xf]
      %v5231 = vld [vmem:[%s5222 + $0x20] sm:$0xf]
      %v5232 = vld [vmem:[%s5222 + $0x24] sm:$0xf]
      %v5233 = vld [vmem:[%s5222 + $0x28] sm:$0xf]
      %v5234 = vld [vmem:[%s5222 + $0x2c] sm:$0xf]
      %v5235 = vld [vmem:[%s5222 + $0x30] sm:$0xf]
      %v5236 = vld [vmem:[%s5222 + $0x34] sm:$0xf]
      %v5237 = vld [vmem:[%s5222 + $0x38] sm:$0xf]
      %v5238 = vld [vmem:[%s5222 + $0x3c] sm:$0xf]
      %v5271 = vunpack.c.l.b16 %v5190
      %v5272 = vunpack.c.l.b16 %v5191
      %v5273 = vunpack.c.l.b16 %v5192
      %v5274 = vunpack.c.l.b16 %v5193
      %v5275 = vunpack.c.l.b16 %v5194
      %v5276 = vunpack.c.l.b16 %v5195
      %v5277 = vunpack.c.l.b16 %v5196
      %v5278 = vunpack.c.l.b16 %v5197
      %v5279 = vunpack.c.l.b16 %v5198
      %v5280 = vunpack.c.l.b16 %v5199
      %v5281 = vunpack.c.l.b16 %v5200
      %v5282 = vunpack.c.l.b16 %v5201
      %v5283 = vunpack.c.l.b16 %v5202
      %v5284 = vunpack.c.l.b16 %v5203
      %v5285 = vunpack.c.l.b16 %v5204
      %v5286 = vunpack.c.l.b16 %v5205
      %v5287 = vunpack.c.l.b16 %v5206
      %v5288 = vunpack.c.l.b16 %v5207
      %v5289 = vunpack.c.l.b16 %v5208
      %v5290 = vunpack.c.l.b16 %v5209
      %v5291 = vunpack.c.l.b16 %v5210
      %v5292 = vunpack.c.l.b16 %v5211
      %v5293 = vunpack.c.l.b16 %v5212
      %v5294 = vunpack.c.l.b16 %v5213
      %v5295 = vunpack.c.l.b16 %v5214
      %v5296 = vunpack.c.l.b16 %v5215
      %v5297 = vunpack.c.l.b16 %v5216
      %v5298 = vunpack.c.l.b16 %v5217
      %v5299 = vunpack.c.l.b16 %v5218
      %v5300 = vunpack.c.l.b16 %v5219
      %v5301 = vunpack.c.l.b16 %v5220
      %v5302 = vunpack.c.l.b16 %v5221
      %v5303 = vpack.c.b16 %v5272, %v5271
      %v5304 = vpack.c.b16 %v5274, %v5273
      %v5305 = vpack.c.b16 %v5276, %v5275
      %v5306 = vpack.c.b16 %v5278, %v5277
      %v5307 = vpack.c.b16 %v5280, %v5279
      %v5308 = vpack.c.b16 %v5282, %v5281
      %v5309 = vpack.c.b16 %v5284, %v5283
      %v5310 = vpack.c.b16 %v5286, %v5285
      %v5311 = vpack.c.b16 %v5288, %v5287
      %v5312 = vpack.c.b16 %v5290, %v5289
      %v5313 = vpack.c.b16 %v5292, %v5291
      %v5314 = vpack.c.b16 %v5294, %v5293
      %v5315 = vpack.c.b16 %v5296, %v5295
      %v5316 = vpack.c.b16 %v5298, %v5297
      %v5317 = vpack.c.b16 %v5300, %v5299
      %v5318 = vpack.c.b16 %v5302, %v5301
      %v5351 = vunpack.c.l.b16 %v5223
      %v5352 = vunpack.c.l.b16 %v5224
      %v5353 = vunpack.c.l.b16 %v5225
      %v5354 = vunpack.c.l.b16 %v5226
      %v5355 = vunpack.c.l.b16 %v5227
      %v5356 = vunpack.c.l.b16 %v5228
      %v5357 = vunpack.c.l.b16 %v5229
      %v5358 = vunpack.c.l.b16 %v5230
      %v5359 = vunpack.c.l.b16 %v5231
      %v5360 = vunpack.c.l.b16 %v5232
      %v5361 = vunpack.c.l.b16 %v5233
      %v5362 = vunpack.c.l.b16 %v5234
      %v5363 = vunpack.c.l.b16 %v5235
      %v5364 = vunpack.c.l.b16 %v5236
      %v5365 = vunpack.c.l.b16 %v5237
      %v5366 = vunpack.c.l.b16 %v5238
      %v5367 = vpack.c.b16 %v5352, %v5351
      %v5368 = vpack.c.b16 %v5354, %v5353
      %v5369 = vpack.c.b16 %v5356, %v5355
      %v5370 = vpack.c.b16 %v5358, %v5357
      %v5371 = vpack.c.b16 %v5360, %v5359
      %v5372 = vpack.c.b16 %v5362, %v5361
      %v5373 = vpack.c.b16 %v5364, %v5363
      %v5374 = vpack.c.b16 %v5366, %v5365
      %5383 = vmatprep.subr.bf16.mxu0 0
      %5384 = vmatpush1.bf16.msra.mxu0 %v5367
      %5385 = vmatprep.subr.bf16.mxu0 0
      %5386 = vmatpush1.bf16.msra.mxu0 %v5368
      %5387 = vmatprep.subr.bf16.mxu0 0
      %5388 = vmatpush1.bf16.msra.mxu0 %v5369
      %5389 = vmatprep.subr.bf16.mxu0 0
      %5390 = vmatpush1.bf16.msra.mxu0 %v5370
      %5391 = vmatprep.subr.bf16.mxu0 0
      %5392 = vmatpush1.bf16.msra.mxu0 %v5371
      %5393 = vmatprep.subr.bf16.mxu0 0
      %5394 = vmatpush1.bf16.msra.mxu0 %v5372
      %5395 = vmatprep.subr.bf16.mxu0 0
      %5396 = vmatpush1.bf16.msra.mxu0 %v5373
      %5397 = vmatprep.subr.bf16.mxu0 0
      %5398 = vmatpush1.bf16.msra.mxu0 %v5374
      %5399 = vmatprep.subr.bf16.mxu0 0
      %5400 = vmatpush1.bf16.msra.mxu0 0
      %5401 = vmatprep.subr.bf16.mxu0 0
      %5402 = vmatpush1.bf16.msra.mxu0 0
      %5403 = vmatprep.subr.bf16.mxu0 0
      %5404 = vmatpush1.bf16.msra.mxu0 0
      %5405 = vmatprep.subr.bf16.mxu0 0
      %5406 = vmatpush1.bf16.msra.mxu0 0
      %5407 = vmatprep.subr.bf16.mxu0 0
      %5408 = vmatpush1.bf16.msra.mxu0 0
      %5409 = vmatprep.subr.bf16.mxu0 0
      %5410 = vmatpush1.bf16.msra.mxu0 0
      %5411 = vmatprep.subr.bf16.mxu0 0
      %5412 = vmatpush1.bf16.msra.mxu0 0
      %5413 = vmatprep.subr.bf16.mxu0 0
      %5414 = vmatpush1.bf16.msra.mxu0 0
      %5415 = vmatprep.mubr.bf16.mxu0 0
      %5416 = vmatmul.mubr.bf16.gmra.mrb[0].mxu0 %v5303
      %v5417 = vpop.f32.mrb[0].mxu0
      %v5418 = vadd.f32 0.0, %v5417
      %v5419 = vpop.f32.mrb[0].mxu0
      %v5420 = vpop.f32.mrb[0].mxu0
      %v5421 = vadd.f32 0.0, %v5420
      %v5422 = vpop.f32.mrb[0].mxu0
      %5423 = vmatprep.mubr.bf16.mxu0 0
      %5424 = vmatmul.mubr.bf16.gmra.mrb[0].mxu0 %v5304
      %v5425 = vpop.f32.mrb[0].mxu0
      %v5426 = vadd.f32 0.0, %v5425
      %v5427 = vpop.f32.mrb[0].mxu0
      %v5428 = vpop.f32.mrb[0].mxu0
      %v5429 = vadd.f32 0.0, %v5428
      %v5430 = vpop.f32.mrb[0].mxu0
      %5431 = vmatprep.mubr.bf16.mxu0 0
      %5432 = vmatmul.mubr.bf16.gmra.mrb[0].mxu0 %v5305
      %v5433 = vpop.f32.mrb[0].mxu0
      %v5434 = vadd.f32 0.0, %v5433
      %v5435 = vpop.f32.mrb[0].mxu0
      %v5436 = vpop.f32.mrb[0].mxu0
      %v5437 = vadd.f32 0.0, %v5436
      %v5438 = vpop.f32.mrb[0].mxu0
      %5439 = vmatprep.mubr.bf16.mxu0 0
      %5440 = vmatmul.mubr.bf16.gmra.mrb[0].mxu0 %v5306
      %v5441 = vpop.f32.mrb[0].mxu0
      %v5442 = vadd.f32 0.0, %v5441
      %v5443 = vpop.f32.mrb[0].mxu0
      %v5444 = vpop.f32.mrb[0].mxu0
      %v5445 = vadd.f32 0.0, %v5444
      %v5446 = vpop.f32.mrb[0].mxu0
      %5447 = vmatprep.mubr.bf16.mxu0 0
      %5448 = vmatmul.mubr.bf16.gmra.mrb[0].mxu0 %v5307
      %v5449 = vpop.f32.mrb[0].mxu0
      %v5450 = vadd.f32 0.0, %v5449
      %v5451 = vpop.f32.mrb[0].mxu0
      %v5452 = vpop.f32.mrb[0].mxu0
      %v5453 = vadd.f32 0.0, %v5452
      %v5454 = vpop.f32.mrb[0].mxu0
      %5455 = vmatprep.mubr.bf16.mxu0 0
      %5456 = vmatmul.mubr.bf16.gmra.mrb[0].mxu0 %v5308
      %v5457 = vpop.f32.mrb[0].mxu0
      %v5458 = vadd.f32 0.0, %v5457
      %v5459 = vpop.f32.mrb[0].mxu0
      %v5460 = vpop.f32.mrb[0].mxu0
      %v5461 = vadd.f32 0.0, %v5460
      %v5462 = vpop.f32.mrb[0].mxu0
      %5463 = vmatprep.mubr.bf16.mxu0 0
      %5464 = vmatmul.mubr.bf16.gmra.mrb[0].mxu0 %v5309
      %v5465 = vpop.f32.mrb[0].mxu0
      %v5466 = vadd.f32 0.0, %v5465
      %v5467 = vpop.f32.mrb[0].mxu0
      %v5468 = vpop.f32.mrb[0].mxu0
      %v5469 = vadd.f32 0.0, %v5468
      %v5470 = vpop.f32.mrb[0].mxu0
      %5471 = vmatprep.mubr.bf16.mxu0 0
      %5472 = vmatmul.mubr.bf16.gmra.mrb[0].mxu0 %v5310
      %v5473 = vpop.f32.mrb[0].mxu0
      %v5474 = vadd.f32 0.0, %v5473
      %v5475 = vpop.f32.mrb[0].mxu0
      %v5476 = vpop.f32.mrb[0].mxu0
      %v5477 = vadd.f32 0.0, %v5476
      %v5478 = vpop.f32.mrb[0].mxu0
      %5479 = vmatprep.mubr.bf16.mxu0 0
      %5480 = vmatmul.mubr.bf16.gmra.mrb[0].mxu0 %v5311
      %v5481 = vpop.f32.mrb[0].mxu0
      %v5482 = vadd.f32 0.0, %v5481
      %v5483 = vpop.f32.mrb[0].mxu0
      %v5484 = vpop.f32.mrb[0].mxu0
      %v5485 = vadd.f32 0.0, %v5484
      %v5486 = vpop.f32.mrb[0].mxu0
      %5487 = vmatprep.mubr.bf16.mxu0 0
      %5488 = vmatmul.mubr.bf16.gmra.mrb[0].mxu0 %v5312
      %v5489 = vpop.f32.mrb[0].mxu0
      %v5490 = vadd.f32 0.0, %v5489
      %v5491 = vpop.f32.mrb[0].mxu0
      %v5492 = vpop.f32.mrb[0].mxu0
      %v5493 = vadd.f32 0.0, %v5492
      %v5494 = vpop.f32.mrb[0].mxu0
      %5495 = vmatprep.mubr.bf16.mxu0 0
      %5496 = vmatmul.mubr.bf16.gmra.mrb[0].mxu0 %v5313
      %v5497 = vpop.f32.mrb[0].mxu0
      %v5498 = vadd.f32 0.0, %v5497
      %v5499 = vpop.f32.mrb[0].mxu0
      %v5500 = vpop.f32.mrb[0].mxu0
      %v5501 = vadd.f32 0.0, %v5500
      %v5502 = vpop.f32.mrb[0].mxu0
      %5503 = vmatprep.mubr.bf16.mxu0 0
      %5504 = vmatmul.mubr.bf16.gmra.mrb[0].mxu0 %v5314
      %v5505 = vpop.f32.mrb[0].mxu0
      %v5506 = vadd.f32 0.0, %v5505
      %v5507 = vpop.f32.mrb[0].mxu0
      %v5508 = vpop.f32.mrb[0].mxu0
      %v5509 = vadd.f32 0.0, %v5508
      %v5510 = vpop.f32.mrb[0].mxu0
      %5511 = vmatprep.mubr.bf16.mxu0 0
      %5512 = vmatmul.mubr.bf16.gmra.mrb[0].mxu0 %v5315
      %v5513 = vpop.f32.mrb[0].mxu0
      %v5514 = vadd.f32 0.0, %v5513
      %v5515 = vpop.f32.mrb[0].mxu0
      %v5516 = vpop.f32.mrb[0].mxu0
      %v5517 = vadd.f32 0.0, %v5516
      %v5518 = vpop.f32.mrb[0].mxu0
      %5519 = vmatprep.mubr.bf16.mxu0 0
      %5520 = vmatmul.mubr.bf16.gmra.mrb[0].mxu0 %v5316
      %v5521 = vpop.f32.mrb[0].mxu0
      %v5522 = vadd.f32 0.0, %v5521
      %v5523 = vpop.f32.mrb[0].mxu0
      %v5524 = vpop.f32.mrb[0].mxu0
      %v5525 = vadd.f32 0.0, %v5524
      %v5526 = vpop.f32.mrb[0].mxu0
      %5527 = vmatprep.mubr.bf16.mxu0 0
      %5528 = vmatmul.mubr.bf16.gmra.mrb[0].mxu0 %v5317
      %v5529 = vpop.f32.mrb[0].mxu0
      %v5530 = vadd.f32 0.0, %v5529
      %v5531 = vpop.f32.mrb[0].mxu0
      %v5532 = vpop.f32.mrb[0].mxu0
      %v5533 = vadd.f32 0.0, %v5532
      %v5534 = vpop.f32.mrb[0].mxu0
      %5535 = vmatprep.mubr.bf16.mxu0 0
      %5536 = vmatmul.mubr.bf16.gmra.mrb[0].mxu0 %v5318
      %v5537 = vpop.f32.mrb[0].mxu0
      %v5538 = vadd.f32 0.0, %v5537
      %v5539 = vpop.f32.mrb[0].mxu0
      %v5540 = vpop.f32.mrb[0].mxu0
      %v5541 = vadd.f32 0.0, %v5540
      %v5542 = vpop.f32.mrb[0].mxu0
      %5543 = vdwg.mxu0
      %v5544 = vadd.f32 %v5158, %v5418
      %v5545 = vadd.f32 %v5159, %v5421
      %v5546 = vadd.f32 %v5160, %v5426
      %v5547 = vadd.f32 %v5161, %v5429
      %v5548 = vadd.f32 %v5162, %v5434
      %v5549 = vadd.f32 %v5163, %v5437
      %v5550 = vadd.f32 %v5164, %v5442
      %v5551 = vadd.f32 %v5165, %v5445
      %v5552 = vadd.f32 %v5166, %v5450
      %v5553 = vadd.f32 %v5167, %v5453
      %v5554 = vadd.f32 %v5168, %v5458
      %v5555 = vadd.f32 %v5169, %v5461
      %v5556 = vadd.f32 %v5170, %v5466
      %v5557 = vadd.f32 %v5171, %v5469
      %v5558 = vadd.f32 %v5172, %v5474
      %v5559 = vadd.f32 %v5173, %v5477
      %v5560 = vadd.f32 %v5174, %v5482
      %v5561 = vadd.f32 %v5175, %v5485
      %v5562 = vadd.f32 %v5176, %v5490
      %v5563 = vadd.f32 %v5177, %v5493
      %v5564 = vadd.f32 %v5178, %v5498
      %v5565 = vadd.f32 %v5179, %v5501
      %v5566 = vadd.f32 %v5180, %v5506
      %v5567 = vadd.f32 %v5181, %v5509
      %v5568 = vadd.f32 %v5182, %v5514
      %v5569 = vadd.f32 %v5183, %v5517
      %v5570 = vadd.f32 %v5184, %v5522
      %v5571 = vadd.f32 %v5185, %v5525
      %v5572 = vadd.f32 %v5186, %v5530
      %v5573 = vadd.f32 %v5187, %v5533
      %v5574 = vadd.f32 %v5188, %v5538
      %v5575 = vadd.f32 %v5189, %v5541
      %v5576 = vld [vmem:[%s3550] sm:$0xf]
      %v5577 = vld [vmem:[%s3550 + $0x4] sm:$0xf]
      %v5578 = vld [vmem:[%s3550 + $0x8] sm:$0x1]
      %v5579 = vld [vmem:[%s3550 + $0xc] sm:$0xf]
      %v5580 = vld [vmem:[%s3550 + $0x10] sm:$0xf]
      %v5581 = vld [vmem:[%s3550 + $0x14] sm:$0x1]
      %v5582 = vld [vmem:[%s3550 + $0x18] sm:$0xf]
      %v5583 = vld [vmem:[%s3550 + $0x1c] sm:$0xf]
      %v5584 = vld [vmem:[%s3550 + $0x20] sm:$0x1]
      %v5585 = vld [vmem:[%s3550 + $0x24] sm:$0xf]
      %v5586 = vld [vmem:[%s3550 + $0x28] sm:$0xf]
      %v5587 = vld [vmem:[%s3550 + $0x2c] sm:$0x1]
      %v5588 = vld [vmem:[%s3550 + $0x30] sm:$0xf]
      %v5589 = vld [vmem:[%s3550 + $0x34] sm:$0xf]
      %v5590 = vld [vmem:[%s3550 + $0x38] sm:$0x1]
      %v5591 = vld [vmem:[%s3550 + $0x3c] sm:$0xf]
      %v5592 = vld [vmem:[%s3550 + $0x40] sm:$0xf]
      %v5593 = vld [vmem:[%s3550 + $0x44] sm:$0x1]
      %v5594 = vld [vmem:[%s3550 + $0x48] sm:$0xf]
      %v5595 = vld [vmem:[%s3550 + $0x4c] sm:$0xf]
      %v5596 = vld [vmem:[%s3550 + $0x50] sm:$0x1]
      %v5597 = vld [vmem:[%s3550 + $0x54] sm:$0xf]
      %v5598 = vld [vmem:[%s3550 + $0x58] sm:$0xf]
      %v5599 = vld [vmem:[%s3550 + $0x5c] sm:$0x1]
      %v5600 = vld [vmem:[%s3550 + $0x60] sm:$0xf]
      %v5601 = vld [vmem:[%s3550 + $0x64] sm:$0xf]
      %v5602 = vld [vmem:[%s3550 + $0x68] sm:$0x1]
      %v5603 = vld [vmem:[%s3550 + $0x6c] sm:$0xf]
      %v5604 = vld [vmem:[%s3550 + $0x70] sm:$0xf]
      %v5605 = vld [vmem:[%s3550 + $0x74] sm:$0x1]
      %v5606 = vld [vmem:[%s3550 + $0x78] sm:$0xf]
      %v5607 = vld [vmem:[%s3550 + $0x7c] sm:$0xf]
      %v5608 = vld [vmem:[%s3550 + $0x80] sm:$0x1]
      %v5609 = vld [vmem:[%s3550 + $0x84] sm:$0xf]
      %v5610 = vld [vmem:[%s3550 + $0x88] sm:$0xf]
      %v5611 = vld [vmem:[%s3550 + $0x8c] sm:$0x1]
      %v5612 = vld [vmem:[%s3550 + $0x90] sm:$0xf]
      %v5613 = vld [vmem:[%s3550 + $0x94] sm:$0xf]
      %v5614 = vld [vmem:[%s3550 + $0x98] sm:$0x1]
      %v5615 = vld [vmem:[%s3550 + $0x9c] sm:$0xf]
      %v5616 = vld [vmem:[%s3550 + $0xa0] sm:$0xf]
      %v5617 = vld [vmem:[%s3550 + $0xa4] sm:$0x1]
      %v5618 = vld [vmem:[%s3550 + $0xa8] sm:$0xf]
      %v5619 = vld [vmem:[%s3550 + $0xac] sm:$0xf]
      %v5620 = vld [vmem:[%s3550 + $0xb0] sm:$0x1]
      %v5621 = vld [vmem:[%s3550 + $0xb4] sm:$0xf]
      %v5622 = vld [vmem:[%s3550 + $0xb8] sm:$0xf]
      %v5623 = vld [vmem:[%s3550 + $0xbc] sm:$0x1]
      %s5624 = scalar_lea.vmem %s3, 256
      %v5625 = vld [vmem:[%s5624] sm:$0xf]
      %v5626 = vld [vmem:[%s5624 + $0x4] sm:$0xf]
      %v5627 = vld [vmem:[%s5624 + $0x8] sm:$0xf]
      %v5628 = vld [vmem:[%s5624 + $0xc] sm:$0xf]
      %v5629 = vld [vmem:[%s5624 + $0x10] sm:$0xf]
      %v5630 = vld [vmem:[%s5624 + $0x14] sm:$0xf]
      %v5631 = vld [vmem:[%s5624 + $0x18] sm:$0xf]
      %v5632 = vld [vmem:[%s5624 + $0x1c] sm:$0xf]
      %v5633 = vld [vmem:[%s5624 + $0x20] sm:$0xf]
      %v5634 = vld [vmem:[%s5624 + $0x24] sm:$0xf]
      %v5635 = vld [vmem:[%s5624 + $0x28] sm:$0xf]
      %v5636 = vld [vmem:[%s5624 + $0x2c] sm:$0xf]
      %v5637 = vld [vmem:[%s5624 + $0x30] sm:$0xf]
      %v5638 = vld [vmem:[%s5624 + $0x34] sm:$0xf]
      %v5639 = vld [vmem:[%s5624 + $0x38] sm:$0xf]
      %v5640 = vld [vmem:[%s5624 + $0x3c] sm:$0xf]
      %v5642 = vshrl.u32 %v5576, 16
      %v5644 = vrot.slane %v5642, 4
      %v5645 = vshll.u32 %v5576, 16
      %v5647 = vrot.slane %v5645, 5
      %v5648 = vor.u32 %v5644, %v5647
      %v5649 = vrot.slane %v5648, 4
      %v5651 = vshll.u32 %v5577, 16
      %v5653 = vrot.slane %v5651, 5
      %v5654 = vsel %vm285, %v5649, %v5653
      %v5655 = vshrl.u32 %v5577, 16
      %v5657 = vrot.slane %v5655, 4
      %v5658 = vor.u32 %v5657, %v5653
      %v5659 = vrot.slane %v5658, 4
      %v5661 = vshll.u32 %v5578, 16
      %v5663 = vrot.slane %v5661, 5
      %v5664 = vsel %vm285, %v5659, %v5663
      %v5666 = vshrl.u32 %v5579, 16
      %v5668 = vrot.slane %v5666, 4
      %v5669 = vshll.u32 %v5579, 16
      %v5671 = vrot.slane %v5669, 5
      %v5672 = vor.u32 %v5668, %v5671
      %v5673 = vrot.slane %v5672, 4
      %v5675 = vshll.u32 %v5580, 16
      %v5677 = vrot.slane %v5675, 5
      %v5678 = vsel %vm285, %v5673, %v5677
      %v5679 = vshrl.u32 %v5580, 16
      %v5681 = vrot.slane %v5679, 4
      %v5682 = vor.u32 %v5681, %v5677
      %v5683 = vrot.slane %v5682, 4
      %v5685 = vshll.u32 %v5581, 16
      %v5687 = vrot.slane %v5685, 5
      %v5688 = vsel %vm285, %v5683, %v5687
      %v5690 = vshrl.u32 %v5582, 16
      %v5692 = vrot.slane %v5690, 4
      %v5693 = vshll.u32 %v5582, 16
      %v5695 = vrot.slane %v5693, 5
      %v5696 = vor.u32 %v5692, %v5695
      %v5697 = vrot.slane %v5696, 4
      %v5699 = vshll.u32 %v5583, 16
      %v5701 = vrot.slane %v5699, 5
      %v5702 = vsel %vm285, %v5697, %v5701
      %v5703 = vshrl.u32 %v5583, 16
      %v5705 = vrot.slane %v5703, 4
      %v5706 = vor.u32 %v5705, %v5701
      %v5707 = vrot.slane %v5706, 4
      %v5709 = vshll.u32 %v5584, 16
      %v5711 = vrot.slane %v5709, 5
      %v5712 = vsel %vm285, %v5707, %v5711
      %v5714 = vshrl.u32 %v5585, 16
      %v5716 = vrot.slane %v5714, 4
      %v5717 = vshll.u32 %v5585, 16
      %v5719 = vrot.slane %v5717, 5
      %v5720 = vor.u32 %v5716, %v5719
      %v5721 = vrot.slane %v5720, 4
      %v5723 = vshll.u32 %v5586, 16
      %v5725 = vrot.slane %v5723, 5
      %v5726 = vsel %vm285, %v5721, %v5725
      %v5727 = vshrl.u32 %v5586, 16
      %v5729 = vrot.slane %v5727, 4
      %v5730 = vor.u32 %v5729, %v5725
      %v5731 = vrot.slane %v5730, 4
      %v5733 = vshll.u32 %v5587, 16
      %v5735 = vrot.slane %v5733, 5
      %v5736 = vsel %vm285, %v5731, %v5735
      %v5738 = vshrl.u32 %v5588, 16
      %v5740 = vrot.slane %v5738, 4
      %v5741 = vshll.u32 %v5588, 16
      %v5743 = vrot.slane %v5741, 5
      %v5744 = vor.u32 %v5740, %v5743
      %v5745 = vrot.slane %v5744, 4
      %v5747 = vshll.u32 %v5589, 16
      %v5749 = vrot.slane %v5747, 5
      %v5750 = vsel %vm285, %v5745, %v5749
      %v5751 = vshrl.u32 %v5589, 16
      %v5753 = vrot.slane %v5751, 4
      %v5754 = vor.u32 %v5753, %v5749
      %v5755 = vrot.slane %v5754, 4
      %v5757 = vshll.u32 %v5590, 16
      %v5759 = vrot.slane %v5757, 5
      %v5760 = vsel %vm285, %v5755, %v5759
      %v5762 = vshrl.u32 %v5591, 16
      %v5764 = vrot.slane %v5762, 4
      %v5765 = vshll.u32 %v5591, 16
      %v5767 = vrot.slane %v5765, 5
      %v5768 = vor.u32 %v5764, %v5767
      %v5769 = vrot.slane %v5768, 4
      %v5771 = vshll.u32 %v5592, 16
      %v5773 = vrot.slane %v5771, 5
      %v5774 = vsel %vm285, %v5769, %v5773
      %v5775 = vshrl.u32 %v5592, 16
      %v5777 = vrot.slane %v5775, 4
      %v5778 = vor.u32 %v5777, %v5773
      %v5779 = vrot.slane %v5778, 4
      %v5781 = vshll.u32 %v5593, 16
      %v5783 = vrot.slane %v5781, 5
      %v5784 = vsel %vm285, %v5779, %v5783
      %v5786 = vshrl.u32 %v5594, 16
      %v5788 = vrot.slane %v5786, 4
      %v5789 = vshll.u32 %v5594, 16
      %v5791 = vrot.slane %v5789, 5
      %v5792 = vor.u32 %v5788, %v5791
      %v5793 = vrot.slane %v5792, 4
      %v5795 = vshll.u32 %v5595, 16
      %v5797 = vrot.slane %v5795, 5
      %v5798 = vsel %vm285, %v5793, %v5797
      %v5799 = vshrl.u32 %v5595, 16
      %v5801 = vrot.slane %v5799, 4
      %v5802 = vor.u32 %v5801, %v5797
      %v5803 = vrot.slane %v5802, 4
      %v5805 = vshll.u32 %v5596, 16
      %v5807 = vrot.slane %v5805, 5
      %v5808 = vsel %vm285, %v5803, %v5807
      %v5810 = vshrl.u32 %v5597, 16
      %v5812 = vrot.slane %v5810, 4
      %v5813 = vshll.u32 %v5597, 16
      %v5815 = vrot.slane %v5813, 5
      %v5816 = vor.u32 %v5812, %v5815
      %v5817 = vrot.slane %v5816, 4
      %v5819 = vshll.u32 %v5598, 16
      %v5821 = vrot.slane %v5819, 5
      %v5822 = vsel %vm285, %v5817, %v5821
      %v5823 = vshrl.u32 %v5598, 16
      %v5825 = vrot.slane %v5823, 4
      %v5826 = vor.u32 %v5825, %v5821
      %v5827 = vrot.slane %v5826, 4
      %v5829 = vshll.u32 %v5599, 16
      %v5831 = vrot.slane %v5829, 5
      %v5832 = vsel %vm285, %v5827, %v5831
      %v5834 = vshrl.u32 %v5600, 16
      %v5836 = vrot.slane %v5834, 4
      %v5837 = vshll.u32 %v5600, 16
      %v5839 = vrot.slane %v5837, 5
      %v5840 = vor.u32 %v5836, %v5839
      %v5841 = vrot.slane %v5840, 4
      %v5843 = vshll.u32 %v5601, 16
      %v5845 = vrot.slane %v5843, 5
      %v5846 = vsel %vm285, %v5841, %v5845
      %v5847 = vshrl.u32 %v5601, 16
      %v5849 = vrot.slane %v5847, 4
      %v5850 = vor.u32 %v5849, %v5845
      %v5851 = vrot.slane %v5850, 4
      %v5853 = vshll.u32 %v5602, 16
      %v5855 = vrot.slane %v5853, 5
      %v5856 = vsel %vm285, %v5851, %v5855
      %v5858 = vshrl.u32 %v5603, 16
      %v5860 = vrot.slane %v5858, 4
      %v5861 = vshll.u32 %v5603, 16
      %v5863 = vrot.slane %v5861, 5
      %v5864 = vor.u32 %v5860, %v5863
      %v5865 = vrot.slane %v5864, 4
      %v5867 = vshll.u32 %v5604, 16
      %v5869 = vrot.slane %v5867, 5
      %v5870 = vsel %vm285, %v5865, %v5869
      %v5871 = vshrl.u32 %v5604, 16
      %v5873 = vrot.slane %v5871, 4
      %v5874 = vor.u32 %v5873, %v5869
      %v5875 = vrot.slane %v5874, 4
      %v5877 = vshll.u32 %v5605, 16
      %v5879 = vrot.slane %v5877, 5
      %v5880 = vsel %vm285, %v5875, %v5879
      %v5882 = vshrl.u32 %v5606, 16
      %v5884 = vrot.slane %v5882, 4
      %v5885 = vshll.u32 %v5606, 16
      %v5887 = vrot.slane %v5885, 5
      %v5888 = vor.u32 %v5884, %v5887
      %v5889 = vrot.slane %v5888, 4
      %v5891 = vshll.u32 %v5607, 16
      %v5893 = vrot.slane %v5891, 5
      %v5894 = vsel %vm285, %v5889, %v5893
      %v5895 = vshrl.u32 %v5607, 16
      %v5897 = vrot.slane %v5895, 4
      %v5898 = vor.u32 %v5897, %v5893
      %v5899 = vrot.slane %v5898, 4
      %v5901 = vshll.u32 %v5608, 16
      %v5903 = vrot.slane %v5901, 5
      %v5904 = vsel %vm285, %v5899, %v5903
      %v5906 = vshrl.u32 %v5609, 16
      %v5908 = vrot.slane %v5906, 4
      %v5909 = vshll.u32 %v5609, 16
      %v5911 = vrot.slane %v5909, 5
      %v5912 = vor.u32 %v5908, %v5911
      %v5913 = vrot.slane %v5912, 4
      %v5915 = vshll.u32 %v5610, 16
      %v5917 = vrot.slane %v5915, 5
      %v5918 = vsel %vm285, %v5913, %v5917
      %v5919 = vshrl.u32 %v5610, 16
      %v5921 = vrot.slane %v5919, 4
      %v5922 = vor.u32 %v5921, %v5917
      %v5923 = vrot.slane %v5922, 4
      %v5925 = vshll.u32 %v5611, 16
      %v5927 = vrot.slane %v5925, 5
      %v5928 = vsel %vm285, %v5923, %v5927
      %v5930 = vshrl.u32 %v5612, 16
      %v5932 = vrot.slane %v5930, 4
      %v5933 = vshll.u32 %v5612, 16
      %v5935 = vrot.slane %v5933, 5
      %v5936 = vor.u32 %v5932, %v5935
      %v5937 = vrot.slane %v5936, 4
      %v5939 = vshll.u32 %v5613, 16
      %v5941 = vrot.slane %v5939, 5
      %v5942 = vsel %vm285, %v5937, %v5941
      %v5943 = vshrl.u32 %v5613, 16
      %v5945 = vrot.slane %v5943, 4
      %v5946 = vor.u32 %v5945, %v5941
      %v5947 = vrot.slane %v5946, 4
      %v5949 = vshll.u32 %v5614, 16
      %v5951 = vrot.slane %v5949, 5
      %v5952 = vsel %vm285, %v5947, %v5951
      %v5954 = vshrl.u32 %v5615, 16
      %v5956 = vrot.slane %v5954, 4
      %v5957 = vshll.u32 %v5615, 16
      %v5959 = vrot.slane %v5957, 5
      %v5960 = vor.u32 %v5956, %v5959
      %v5961 = vrot.slane %v5960, 4
      %v5963 = vshll.u32 %v5616, 16
      %v5965 = vrot.slane %v5963, 5
      %v5966 = vsel %vm285, %v5961, %v5965
      %v5967 = vshrl.u32 %v5616, 16
      %v5969 = vrot.slane %v5967, 4
      %v5970 = vor.u32 %v5969, %v5965
      %v5971 = vrot.slane %v5970, 4
      %v5973 = vshll.u32 %v5617, 16
      %v5975 = vrot.slane %v5973, 5
      %v5976 = vsel %vm285, %v5971, %v5975
      %v5978 = vshrl.u32 %v5618, 16
      %v5980 = vrot.slane %v5978, 4
      %v5981 = vshll.u32 %v5618, 16
      %v5983 = vrot.slane %v5981, 5
      %v5984 = vor.u32 %v5980, %v5983
      %v5985 = vrot.slane %v5984, 4
      %v5987 = vshll.u32 %v5619, 16
      %v5989 = vrot.slane %v5987, 5
      %v5990 = vsel %vm285, %v5985, %v5989
      %v5991 = vshrl.u32 %v5619, 16
      %v5993 = vrot.slane %v5991, 4
      %v5994 = vor.u32 %v5993, %v5989
      %v5995 = vrot.slane %v5994, 4
      %v5997 = vshll.u32 %v5620, 16
      %v5999 = vrot.slane %v5997, 5
      %v6000 = vsel %vm285, %v5995, %v5999
      %v6002 = vshrl.u32 %v5621, 16
      %v6004 = vrot.slane %v6002, 4
      %v6005 = vshll.u32 %v5621, 16
      %v6007 = vrot.slane %v6005, 5
      %v6008 = vor.u32 %v6004, %v6007
      %v6009 = vrot.slane %v6008, 4
      %v6011 = vshll.u32 %v5622, 16
      %v6013 = vrot.slane %v6011, 5
      %v6014 = vsel %vm285, %v6009, %v6013
      %v6015 = vshrl.u32 %v5622, 16
      %v6017 = vrot.slane %v6015, 4
      %v6018 = vor.u32 %v6017, %v6013
      %v6019 = vrot.slane %v6018, 4
      %v6021 = vshll.u32 %v5623, 16
      %v6023 = vrot.slane %v6021, 5
      %v6024 = vsel %vm285, %v6019, %v6023
      %v6025 = vunpack.c.l.b16 %v5654
      %v6026 = vunpack.c.l.b16 %v5664
      %v6027 = vunpack.c.l.b16 %v5678
      %v6028 = vunpack.c.l.b16 %v5688
      %v6029 = vunpack.c.l.b16 %v5702
      %v6030 = vunpack.c.l.b16 %v5712
      %v6031 = vunpack.c.l.b16 %v5726
      %v6032 = vunpack.c.l.b16 %v5736
      %v6033 = vunpack.c.l.b16 %v5750
      %v6034 = vunpack.c.l.b16 %v5760
      %v6035 = vunpack.c.l.b16 %v5774
      %v6036 = vunpack.c.l.b16 %v5784
      %v6037 = vunpack.c.l.b16 %v5798
      %v6038 = vunpack.c.l.b16 %v5808
      %v6039 = vunpack.c.l.b16 %v5822
      %v6040 = vunpack.c.l.b16 %v5832
      %v6041 = vunpack.c.l.b16 %v5846
      %v6042 = vunpack.c.l.b16 %v5856
      %v6043 = vunpack.c.l.b16 %v5870
      %v6044 = vunpack.c.l.b16 %v5880
      %v6045 = vunpack.c.l.b16 %v5894
      %v6046 = vunpack.c.l.b16 %v5904
      %v6047 = vunpack.c.l.b16 %v5918
      %v6048 = vunpack.c.l.b16 %v5928
      %v6049 = vunpack.c.l.b16 %v5942
      %v6050 = vunpack.c.l.b16 %v5952
      %v6051 = vunpack.c.l.b16 %v5966
      %v6052 = vunpack.c.l.b16 %v5976
      %v6053 = vunpack.c.l.b16 %v5990
      %v6054 = vunpack.c.l.b16 %v6000
      %v6055 = vunpack.c.l.b16 %v6014
      %v6056 = vunpack.c.l.b16 %v6024
      %v6057 = vpack.c.b16 %v6026, %v6025
      %v6058 = vpack.c.b16 %v6028, %v6027
      %v6059 = vpack.c.b16 %v6030, %v6029
      %v6060 = vpack.c.b16 %v6032, %v6031
      %v6061 = vpack.c.b16 %v6034, %v6033
      %v6062 = vpack.c.b16 %v6036, %v6035
      %v6063 = vpack.c.b16 %v6038, %v6037
      %v6064 = vpack.c.b16 %v6040, %v6039
      %v6065 = vpack.c.b16 %v6042, %v6041
      %v6066 = vpack.c.b16 %v6044, %v6043
      %v6067 = vpack.c.b16 %v6046, %v6045
      %v6068 = vpack.c.b16 %v6048, %v6047
      %v6069 = vpack.c.b16 %v6050, %v6049
      %v6070 = vpack.c.b16 %v6052, %v6051
      %v6071 = vpack.c.b16 %v6054, %v6053
      %v6072 = vpack.c.b16 %v6056, %v6055
      %v6105 = vunpack.c.l.b16 %v5625
      %v6106 = vunpack.c.l.b16 %v5626
      %v6107 = vunpack.c.l.b16 %v5627
      %v6108 = vunpack.c.l.b16 %v5628
      %v6109 = vunpack.c.l.b16 %v5629
      %v6110 = vunpack.c.l.b16 %v5630
      %v6111 = vunpack.c.l.b16 %v5631
      %v6112 = vunpack.c.l.b16 %v5632
      %v6113 = vunpack.c.l.b16 %v5633
      %v6114 = vunpack.c.l.b16 %v5634
      %v6115 = vunpack.c.l.b16 %v5635
      %v6116 = vunpack.c.l.b16 %v5636
      %v6117 = vunpack.c.l.b16 %v5637
      %v6118 = vunpack.c.l.b16 %v5638
      %v6119 = vunpack.c.l.b16 %v5639
      %v6120 = vunpack.c.l.b16 %v5640
      %v6121 = vpack.c.b16 %v6106, %v6105
      %v6122 = vpack.c.b16 %v6108, %v6107
      %v6123 = vpack.c.b16 %v6110, %v6109
      %v6124 = vpack.c.b16 %v6112, %v6111
      %v6125 = vpack.c.b16 %v6114, %v6113
      %v6126 = vpack.c.b16 %v6116, %v6115
      %v6127 = vpack.c.b16 %v6118, %v6117
      %v6128 = vpack.c.b16 %v6120, %v6119
      %6137 = vmatprep.subr.bf16.mxu0 0
      %6138 = vmatpush1.bf16.msra.mxu0 %v6121
      %6139 = vmatprep.subr.bf16.mxu0 0
      %6140 = vmatpush1.bf16.msra.mxu0 %v6122
      %6141 = vmatprep.subr.bf16.mxu0 0
      %6142 = vmatpush1.bf16.msra.mxu0 %v6123
      %6143 = vmatprep.subr.bf16.mxu0 0
      %6144 = vmatpush1.bf16.msra.mxu0 %v6124
      %6145 = vmatprep.subr.bf16.mxu0 0
      %6146 = vmatpush1.bf16.msra.mxu0 %v6125
      %6147 = vmatprep.subr.bf16.mxu0 0
      %6148 = vmatpush1.bf16.msra.mxu0 %v6126
      %6149 = vmatprep.subr.bf16.mxu0 0
      %6150 = vmatpush1.bf16.msra.mxu0 %v6127
      %6151 = vmatprep.subr.bf16.mxu0 0
      %6152 = vmatpush1.bf16.msra.mxu0 %v6128
      %6153 = vmatprep.subr.bf16.mxu0 0
      %6154 = vmatpush1.bf16.msra.mxu0 0
      %6155 = vmatprep.subr.bf16.mxu0 0
      %6156 = vmatpush1.bf16.msra.mxu0 0
      %6157 = vmatprep.subr.bf16.mxu0 0
      %6158 = vmatpush1.bf16.msra.mxu0 0
      %6159 = vmatprep.subr.bf16.mxu0 0
      %6160 = vmatpush1.bf16.msra.mxu0 0
      %6161 = vmatprep.subr.bf16.mxu0 0
      %6162 = vmatpush1.bf16.msra.mxu0 0
      %6163 = vmatprep.subr.bf16.mxu0 0
      %6164 = vmatpush1.bf16.msra.mxu0 0
      %6165 = vmatprep.subr.bf16.mxu0 0
      %6166 = vmatpush1.bf16.msra.mxu0 0
      %6167 = vmatprep.subr.bf16.mxu0 0
      %6168 = vmatpush1.bf16.msra.mxu0 0
      %6169 = vmatprep.mubr.bf16.mxu0 0
      %6170 = vmatmul.mubr.bf16.gmra.mrb[0].mxu0 %v6057
      %v6171 = vpop.f32.mrb[0].mxu0
      %v6172 = vadd.f32 0.0, %v6171
      %v6173 = vpop.f32.mrb[0].mxu0
      %v6174 = vpop.f32.mrb[0].mxu0
      %v6175 = vadd.f32 0.0, %v6174
      %v6176 = vpop.f32.mrb[0].mxu0
      %6177 = vmatprep.mubr.bf16.mxu0 0
      %6178 = vmatmul.mubr.bf16.gmra.mrb[0].mxu0 %v6058
      %v6179 = vpop.f32.mrb[0].mxu0
      %v6180 = vadd.f32 0.0, %v6179
      %v6181 = vpop.f32.mrb[0].mxu0
      %v6182 = vpop.f32.mrb[0].mxu0
      %v6183 = vadd.f32 0.0, %v6182
      %v6184 = vpop.f32.mrb[0].mxu0
      %6185 = vmatprep.mubr.bf16.mxu0 0
      %6186 = vmatmul.mubr.bf16.gmra.mrb[0].mxu0 %v6059
      %v6187 = vpop.f32.mrb[0].mxu0
      %v6188 = vadd.f32 0.0, %v6187
      %v6189 = vpop.f32.mrb[0].mxu0
      %v6190 = vpop.f32.mrb[0].mxu0
      %v6191 = vadd.f32 0.0, %v6190
      %v6192 = vpop.f32.mrb[0].mxu0
      %6193 = vmatprep.mubr.bf16.mxu0 0
      %6194 = vmatmul.mubr.bf16.gmra.mrb[0].mxu0 %v6060
      %v6195 = vpop.f32.mrb[0].mxu0
      %v6196 = vadd.f32 0.0, %v6195
      %v6197 = vpop.f32.mrb[0].mxu0
      %v6198 = vpop.f32.mrb[0].mxu0
      %v6199 = vadd.f32 0.0, %v6198
      %v6200 = vpop.f32.mrb[0].mxu0
      %6201 = vmatprep.mubr.bf16.mxu0 0
      %6202 = vmatmul.mubr.bf16.gmra.mrb[0].mxu0 %v6061
      %v6203 = vpop.f32.mrb[0].mxu0
      %v6204 = vadd.f32 0.0, %v6203
      %v6205 = vpop.f32.mrb[0].mxu0
      %v6206 = vpop.f32.mrb[0].mxu0
      %v6207 = vadd.f32 0.0, %v6206
      %v6208 = vpop.f32.mrb[0].mxu0
      %6209 = vmatprep.mubr.bf16.mxu0 0
      %6210 = vmatmul.mubr.bf16.gmra.mrb[0].mxu0 %v6062
      %v6211 = vpop.f32.mrb[0].mxu0
      %v6212 = vadd.f32 0.0, %v6211
      %v6213 = vpop.f32.mrb[0].mxu0
      %v6214 = vpop.f32.mrb[0].mxu0
      %v6215 = vadd.f32 0.0, %v6214
      %v6216 = vpop.f32.mrb[0].mxu0
      %6217 = vmatprep.mubr.bf16.mxu0 0
      %6218 = vmatmul.mubr.bf16.gmra.mrb[0].mxu0 %v6063
      %v6219 = vpop.f32.mrb[0].mxu0
      %v6220 = vadd.f32 0.0, %v6219
      %v6221 = vpop.f32.mrb[0].mxu0
      %v6222 = vpop.f32.mrb[0].mxu0
      %v6223 = vadd.f32 0.0, %v6222
      %v6224 = vpop.f32.mrb[0].mxu0
      %6225 = vmatprep.mubr.bf16.mxu0 0
      %6226 = vmatmul.mubr.bf16.gmra.mrb[0].mxu0 %v6064
      %v6227 = vpop.f32.mrb[0].mxu0
      %v6228 = vadd.f32 0.0, %v6227
      %v6229 = vpop.f32.mrb[0].mxu0
      %v6230 = vpop.f32.mrb[0].mxu0
      %v6231 = vadd.f32 0.0, %v6230
      %v6232 = vpop.f32.mrb[0].mxu0
      %6233 = vmatprep.mubr.bf16.mxu0 0
      %6234 = vmatmul.mubr.bf16.gmra.mrb[0].mxu0 %v6065
      %v6235 = vpop.f32.mrb[0].mxu0
      %v6236 = vadd.f32 0.0, %v6235
      %v6237 = vpop.f32.mrb[0].mxu0
      %v6238 = vpop.f32.mrb[0].mxu0
      %v6239 = vadd.f32 0.0, %v6238
      %v6240 = vpop.f32.mrb[0].mxu0
      %6241 = vmatprep.mubr.bf16.mxu0 0
      %6242 = vmatmul.mubr.bf16.gmra.mrb[0].mxu0 %v6066
      %v6243 = vpop.f32.mrb[0].mxu0
      %v6244 = vadd.f32 0.0, %v6243
      %v6245 = vpop.f32.mrb[0].mxu0
      %v6246 = vpop.f32.mrb[0].mxu0
      %v6247 = vadd.f32 0.0, %v6246
      %v6248 = vpop.f32.mrb[0].mxu0
      %6249 = vmatprep.mubr.bf16.mxu0 0
      %6250 = vmatmul.mubr.bf16.gmra.mrb[0].mxu0 %v6067
      %v6251 = vpop.f32.mrb[0].mxu0
      %v6252 = vadd.f32 0.0, %v6251
      %v6253 = vpop.f32.mrb[0].mxu0
      %v6254 = vpop.f32.mrb[0].mxu0
      %v6255 = vadd.f32 0.0, %v6254
      %v6256 = vpop.f32.mrb[0].mxu0
      %6257 = vmatprep.mubr.bf16.mxu0 0
      %6258 = vmatmul.mubr.bf16.gmra.mrb[0].mxu0 %v6068
      %v6259 = vpop.f32.mrb[0].mxu0
      %v6260 = vadd.f32 0.0, %v6259
      %v6261 = vpop.f32.mrb[0].mxu0
      %v6262 = vpop.f32.mrb[0].mxu0
      %v6263 = vadd.f32 0.0, %v6262
      %v6264 = vpop.f32.mrb[0].mxu0
      %6265 = vmatprep.mubr.bf16.mxu0 0
      %6266 = vmatmul.mubr.bf16.gmra.mrb[0].mxu0 %v6069
      %v6267 = vpop.f32.mrb[0].mxu0
      %v6268 = vadd.f32 0.0, %v6267
      %v6269 = vpop.f32.mrb[0].mxu0
      %v6270 = vpop.f32.mrb[0].mxu0
      %v6271 = vadd.f32 0.0, %v6270
      %v6272 = vpop.f32.mrb[0].mxu0
      %6273 = vmatprep.mubr.bf16.mxu0 0
      %6274 = vmatmul.mubr.bf16.gmra.mrb[0].mxu0 %v6070
      %v6275 = vpop.f32.mrb[0].mxu0
      %v6276 = vadd.f32 0.0, %v6275
      %v6277 = vpop.f32.mrb[0].mxu0
      %v6278 = vpop.f32.mrb[0].mxu0
      %v6279 = vadd.f32 0.0, %v6278
      %v6280 = vpop.f32.mrb[0].mxu0
      %6281 = vmatprep.mubr.bf16.mxu0 0
      %6282 = vmatmul.mubr.bf16.gmra.mrb[0].mxu0 %v6071
      %v6283 = vpop.f32.mrb[0].mxu0
      %v6284 = vadd.f32 0.0, %v6283
      %v6285 = vpop.f32.mrb[0].mxu0
      %v6286 = vpop.f32.mrb[0].mxu0
      %v6287 = vadd.f32 0.0, %v6286
      %v6288 = vpop.f32.mrb[0].mxu0
      %6289 = vmatprep.mubr.bf16.mxu0 0
      %6290 = vmatmul.mubr.bf16.gmra.mrb[0].mxu0 %v6072
      %v6291 = vpop.f32.mrb[0].mxu0
      %v6292 = vadd.f32 0.0, %v6291
      %v6293 = vpop.f32.mrb[0].mxu0
      %v6294 = vpop.f32.mrb[0].mxu0
      %v6295 = vadd.f32 0.0, %v6294
      %v6296 = vpop.f32.mrb[0].mxu0
      %6297 = vdwg.mxu0
      %v6298 = vadd.f32 %v5544, %v6172
      %v6299 = vadd.f32 %v5545, %v6175
      %v6300 = vadd.f32 %v5546, %v6180
      %v6301 = vadd.f32 %v5547, %v6183
      %v6302 = vadd.f32 %v5548, %v6188
      %v6303 = vadd.f32 %v5549, %v6191
      %v6304 = vadd.f32 %v5550, %v6196
      %v6305 = vadd.f32 %v5551, %v6199
      %v6306 = vadd.f32 %v5552, %v6204
      %v6307 = vadd.f32 %v5553, %v6207
      %v6308 = vadd.f32 %v5554, %v6212
      %v6309 = vadd.f32 %v5555, %v6215
      %v6310 = vadd.f32 %v5556, %v6220
      %v6311 = vadd.f32 %v5557, %v6223
      %v6312 = vadd.f32 %v5558, %v6228
      %v6313 = vadd.f32 %v5559, %v6231
      %v6314 = vadd.f32 %v5560, %v6236
      %v6315 = vadd.f32 %v5561, %v6239
      %v6316 = vadd.f32 %v5562, %v6244
      %v6317 = vadd.f32 %v5563, %v6247
      %v6318 = vadd.f32 %v5564, %v6252
      %v6319 = vadd.f32 %v5565, %v6255
      %v6320 = vadd.f32 %v5566, %v6260
      %v6321 = vadd.f32 %v5567, %v6263
      %v6322 = vadd.f32 %v5568, %v6268
      %v6323 = vadd.f32 %v5569, %v6271
      %v6324 = vadd.f32 %v5570, %v6276
      %v6325 = vadd.f32 %v5571, %v6279
      %v6326 = vadd.f32 %v5572, %v6284
      %v6327 = vadd.f32 %v5573, %v6287
      %v6328 = vadd.f32 %v5574, %v6292
      %v6329 = vadd.f32 %v5575, %v6295
      %v6330 = vld [vmem:[%s3550] sm:$0xe]
      %v6331 = vld [vmem:[%s3550 + $0xc] sm:$0xe]
      %v6332 = vld [vmem:[%s3550 + $0x18] sm:$0xe]
      %v6333 = vld [vmem:[%s3550 + $0x24] sm:$0xe]
      %v6334 = vld [vmem:[%s3550 + $0x30] sm:$0xe]
      %v6335 = vld [vmem:[%s3550 + $0x3c] sm:$0xe]
      %v6336 = vld [vmem:[%s3550 + $0x48] sm:$0xe]
      %v6337 = vld [vmem:[%s3550 + $0x54] sm:$0xe]
      %v6338 = vld [vmem:[%s3550 + $0x60] sm:$0xe]
      %v6339 = vld [vmem:[%s3550 + $0x6c] sm:$0xe]
      %v6340 = vld [vmem:[%s3550 + $0x78] sm:$0xe]
      %v6341 = vld [vmem:[%s3550 + $0x84] sm:$0xe]
      %v6342 = vld [vmem:[%s3550 + $0x90] sm:$0xe]
      %v6343 = vld [vmem:[%s3550 + $0x9c] sm:$0xe]
      %v6344 = vld [vmem:[%s3550 + $0xa8] sm:$0xe]
      %v6345 = vld [vmem:[%s3550 + $0xb4] sm:$0xe]
      %s6346 = scalar_lea.vmem %s3, 320
      %v6347 = vld [vmem:[%s6346] sm:$0xf]
      %v6348 = vld [vmem:[%s6346 + $0x4] sm:$0xf]
      %v6349 = vld [vmem:[%s6346 + $0x8] sm:$0xf]
      %v6350 = vld [vmem:[%s6346 + $0xc] sm:$0xf]
      %v6351 = vld [vmem:[%s6346 + $0x10] sm:$0xf]
      %v6352 = vld [vmem:[%s6346 + $0x14] sm:$0xf]
      %v6353 = vld [vmem:[%s6346 + $0x18] sm:$0xf]
      %v6354 = vld [vmem:[%s6346 + $0x1c] sm:$0xf]
      %v6355 = vld [vmem:[%s6346 + $0x20] sm:$0xf]
      %v6356 = vld [vmem:[%s6346 + $0x24] sm:$0xf]
      %v6357 = vld [vmem:[%s6346 + $0x28] sm:$0xf]
      %v6358 = vld [vmem:[%s6346 + $0x2c] sm:$0xf]
      %v6359 = vld [vmem:[%s6346 + $0x30] sm:$0xf]
      %v6360 = vld [vmem:[%s6346 + $0x34] sm:$0xf]
      %v6361 = vld [vmem:[%s6346 + $0x38] sm:$0xf]
      %v6362 = vld [vmem:[%s6346 + $0x3c] sm:$0xf]
      %v6411 = vrot.slane %v6330, 5
      %v6412 = vrot.slane %v6411, 4
      %v6413 = vrot.slane %v5577, 5
      %v6414 = vsel %vm1244, %v6412, %v6413
      %v6415 = vrot.slane %v6413, 4
      %v6416 = vrot.slane %v5578, 5
      %v6417 = vsel %vm1244, %v6415, %v6416
      %v6418 = vrot.slane %v6331, 5
      %v6419 = vrot.slane %v6418, 4
      %v6420 = vrot.slane %v5580, 5
      %v6421 = vsel %vm1244, %v6419, %v6420
      %v6422 = vrot.slane %v6420, 4
      %v6423 = vrot.slane %v5581, 5
      %v6424 = vsel %vm1244, %v6422, %v6423
      %v6425 = vrot.slane %v6332, 5
      %v6426 = vrot.slane %v6425, 4
      %v6427 = vrot.slane %v5583, 5
      %v6428 = vsel %vm1244, %v6426, %v6427
      %v6429 = vrot.slane %v6427, 4
      %v6430 = vrot.slane %v5584, 5
      %v6431 = vsel %vm1244, %v6429, %v6430
      %v6432 = vrot.slane %v6333, 5
      %v6433 = vrot.slane %v6432, 4
      %v6434 = vrot.slane %v5586, 5
      %v6435 = vsel %vm1244, %v6433, %v6434
      %v6436 = vrot.slane %v6434, 4
      %v6437 = vrot.slane %v5587, 5
      %v6438 = vsel %vm1244, %v6436, %v6437
      %v6439 = vrot.slane %v6334, 5
      %v6440 = vrot.slane %v6439, 4
      %v6441 = vrot.slane %v5589, 5
      %v6442 = vsel %vm1244, %v6440, %v6441
      %v6443 = vrot.slane %v6441, 4
      %v6444 = vrot.slane %v5590, 5
      %v6445 = vsel %vm1244, %v6443, %v6444
      %v6446 = vrot.slane %v6335, 5
      %v6447 = vrot.slane %v6446, 4
      %v6448 = vrot.slane %v5592, 5
      %v6449 = vsel %vm1244, %v6447, %v6448
      %v6450 = vrot.slane %v6448, 4
      %v6451 = vrot.slane %v5593, 5
      %v6452 = vsel %vm1244, %v6450, %v6451
      %v6453 = vrot.slane %v6336, 5
      %v6454 = vrot.slane %v6453, 4
      %v6455 = vrot.slane %v5595, 5
      %v6456 = vsel %vm1244, %v6454, %v6455
      %v6457 = vrot.slane %v6455, 4
      %v6458 = vrot.slane %v5596, 5
      %v6459 = vsel %vm1244, %v6457, %v6458
      %v6460 = vrot.slane %v6337, 5
      %v6461 = vrot.slane %v6460, 4
      %v6462 = vrot.slane %v5598, 5
      %v6463 = vsel %vm1244, %v6461, %v6462
      %v6464 = vrot.slane %v6462, 4
      %v6465 = vrot.slane %v5599, 5
      %v6466 = vsel %vm1244, %v6464, %v6465
      %v6467 = vrot.slane %v6338, 5
      %v6468 = vrot.slane %v6467, 4
      %v6469 = vrot.slane %v5601, 5
      %v6470 = vsel %vm1244, %v6468, %v6469
      %v6471 = vrot.slane %v6469, 4
      %v6472 = vrot.slane %v5602, 5
      %v6473 = vsel %vm1244, %v6471, %v6472
      %v6474 = vrot.slane %v6339, 5
      %v6475 = vrot.slane %v6474, 4
      %v6476 = vrot.slane %v5604, 5
      %v6477 = vsel %vm1244, %v6475, %v6476
      %v6478 = vrot.slane %v6476, 4
      %v6479 = vrot.slane %v5605, 5
      %v6480 = vsel %vm1244, %v6478, %v6479
      %v6481 = vrot.slane %v6340, 5
      %v6482 = vrot.slane %v6481, 4
      %v6483 = vrot.slane %v5607, 5
      %v6484 = vsel %vm1244, %v6482, %v6483
      %v6485 = vrot.slane %v6483, 4
      %v6486 = vrot.slane %v5608, 5
      %v6487 = vsel %vm1244, %v6485, %v6486
      %v6488 = vrot.slane %v6341, 5
      %v6489 = vrot.slane %v6488, 4
      %v6490 = vrot.slane %v5610, 5
      %v6491 = vsel %vm1244, %v6489, %v6490
      %v6492 = vrot.slane %v6490, 4
      %v6493 = vrot.slane %v5611, 5
      %v6494 = vsel %vm1244, %v6492, %v6493
      %v6495 = vrot.slane %v6342, 5
      %v6496 = vrot.slane %v6495, 4
      %v6497 = vrot.slane %v5613, 5
      %v6498 = vsel %vm1244, %v6496, %v6497
      %v6499 = vrot.slane %v6497, 4
      %v6500 = vrot.slane %v5614, 5
      %v6501 = vsel %vm1244, %v6499, %v6500
      %v6502 = vrot.slane %v6343, 5
      %v6503 = vrot.slane %v6502, 4
      %v6504 = vrot.slane %v5616, 5
      %v6505 = vsel %vm1244, %v6503, %v6504
      %v6506 = vrot.slane %v6504, 4
      %v6507 = vrot.slane %v5617, 5
      %v6508 = vsel %vm1244, %v6506, %v6507
      %v6509 = vrot.slane %v6344, 5
      %v6510 = vrot.slane %v6509, 4
      %v6511 = vrot.slane %v5619, 5
      %v6512 = vsel %vm1244, %v6510, %v6511
      %v6513 = vrot.slane %v6511, 4
      %v6514 = vrot.slane %v5620, 5
      %v6515 = vsel %vm1244, %v6513, %v6514
      %v6516 = vrot.slane %v6345, 5
      %v6517 = vrot.slane %v6516, 4
      %v6518 = vrot.slane %v5622, 5
      %v6519 = vsel %vm1244, %v6517, %v6518
      %v6520 = vrot.slane %v6518, 4
      %v6521 = vrot.slane %v5623, 5
      %v6522 = vsel %vm1244, %v6520, %v6521
      %v6523 = vunpack.c.l.b16 %v6414
      %v6524 = vunpack.c.l.b16 %v6417
      %v6525 = vunpack.c.l.b16 %v6421
      %v6526 = vunpack.c.l.b16 %v6424
      %v6527 = vunpack.c.l.b16 %v6428
      %v6528 = vunpack.c.l.b16 %v6431
      %v6529 = vunpack.c.l.b16 %v6435
      %v6530 = vunpack.c.l.b16 %v6438
      %v6531 = vunpack.c.l.b16 %v6442
      %v6532 = vunpack.c.l.b16 %v6445
      %v6533 = vunpack.c.l.b16 %v6449
      %v6534 = vunpack.c.l.b16 %v6452
      %v6535 = vunpack.c.l.b16 %v6456
      %v6536 = vunpack.c.l.b16 %v6459
      %v6537 = vunpack.c.l.b16 %v6463
      %v6538 = vunpack.c.l.b16 %v6466
      %v6539 = vunpack.c.l.b16 %v6470
      %v6540 = vunpack.c.l.b16 %v6473
      %v6541 = vunpack.c.l.b16 %v6477
      %v6542 = vunpack.c.l.b16 %v6480
      %v6543 = vunpack.c.l.b16 %v6484
      %v6544 = vunpack.c.l.b16 %v6487
      %v6545 = vunpack.c.l.b16 %v6491
      %v6546 = vunpack.c.l.b16 %v6494
      %v6547 = vunpack.c.l.b16 %v6498
      %v6548 = vunpack.c.l.b16 %v6501
      %v6549 = vunpack.c.l.b16 %v6505
      %v6550 = vunpack.c.l.b16 %v6508
      %v6551 = vunpack.c.l.b16 %v6512
      %v6552 = vunpack.c.l.b16 %v6515
      %v6553 = vunpack.c.l.b16 %v6519
      %v6554 = vunpack.c.l.b16 %v6522
      %v6555 = vpack.c.b16 %v6524, %v6523
      %v6556 = vpack.c.b16 %v6526, %v6525
      %v6557 = vpack.c.b16 %v6528, %v6527
      %v6558 = vpack.c.b16 %v6530, %v6529
      %v6559 = vpack.c.b16 %v6532, %v6531
      %v6560 = vpack.c.b16 %v6534, %v6533
      %v6561 = vpack.c.b16 %v6536, %v6535
      %v6562 = vpack.c.b16 %v6538, %v6537
      %v6563 = vpack.c.b16 %v6540, %v6539
      %v6564 = vpack.c.b16 %v6542, %v6541
      %v6565 = vpack.c.b16 %v6544, %v6543
      %v6566 = vpack.c.b16 %v6546, %v6545
      %v6567 = vpack.c.b16 %v6548, %v6547
      %v6568 = vpack.c.b16 %v6550, %v6549
      %v6569 = vpack.c.b16 %v6552, %v6551
      %v6570 = vpack.c.b16 %v6554, %v6553
      %v6603 = vunpack.c.l.b16 %v6347
      %v6604 = vunpack.c.l.b16 %v6348
      %v6605 = vunpack.c.l.b16 %v6349
      %v6606 = vunpack.c.l.b16 %v6350
      %v6607 = vunpack.c.l.b16 %v6351
      %v6608 = vunpack.c.l.b16 %v6352
      %v6609 = vunpack.c.l.b16 %v6353
      %v6610 = vunpack.c.l.b16 %v6354
      %v6611 = vunpack.c.l.b16 %v6355
      %v6612 = vunpack.c.l.b16 %v6356
      %v6613 = vunpack.c.l.b16 %v6357
      %v6614 = vunpack.c.l.b16 %v6358
      %v6615 = vunpack.c.l.b16 %v6359
      %v6616 = vunpack.c.l.b16 %v6360
      %v6617 = vunpack.c.l.b16 %v6361
      %v6618 = vunpack.c.l.b16 %v6362
      %v6619 = vpack.c.b16 %v6604, %v6603
      %v6620 = vpack.c.b16 %v6606, %v6605
      %v6621 = vpack.c.b16 %v6608, %v6607
      %v6622 = vpack.c.b16 %v6610, %v6609
      %v6623 = vpack.c.b16 %v6612, %v6611
      %v6624 = vpack.c.b16 %v6614, %v6613
      %v6625 = vpack.c.b16 %v6616, %v6615
      %v6626 = vpack.c.b16 %v6618, %v6617
      %6635 = vmatprep.subr.bf16.mxu0 0
      %6636 = vmatpush1.bf16.msra.mxu0 %v6619
      %6637 = vmatprep.subr.bf16.mxu0 0
      %6638 = vmatpush1.bf16.msra.mxu0 %v6620
      %6639 = vmatprep.subr.bf16.mxu0 0
      %6640 = vmatpush1.bf16.msra.mxu0 %v6621
      %6641 = vmatprep.subr.bf16.mxu0 0
      %6642 = vmatpush1.bf16.msra.mxu0 %v6622
      %6643 = vmatprep.subr.bf16.mxu0 0
      %6644 = vmatpush1.bf16.msra.mxu0 %v6623
      %6645 = vmatprep.subr.bf16.mxu0 0
      %6646 = vmatpush1.bf16.msra.mxu0 %v6624
      %6647 = vmatprep.subr.bf16.mxu0 0
      %6648 = vmatpush1.bf16.msra.mxu0 %v6625
      %6649 = vmatprep.subr.bf16.mxu0 0
      %6650 = vmatpush1.bf16.msra.mxu0 %v6626
      %6651 = vmatprep.subr.bf16.mxu0 0
      %6652 = vmatpush1.bf16.msra.mxu0 0
      %6653 = vmatprep.subr.bf16.mxu0 0
      %6654 = vmatpush1.bf16.msra.mxu0 0
      %6655 = vmatprep.subr.bf16.mxu0 0
      %6656 = vmatpush1.bf16.msra.mxu0 0
      %6657 = vmatprep.subr.bf16.mxu0 0
      %6658 = vmatpush1.bf16.msra.mxu0 0
      %6659 = vmatprep.subr.bf16.mxu0 0
      %6660 = vmatpush1.bf16.msra.mxu0 0
      %6661 = vmatprep.subr.bf16.mxu0 0
      %6662 = vmatpush1.bf16.msra.mxu0 0
      %6663 = vmatprep.subr.bf16.mxu0 0
      %6664 = vmatpush1.bf16.msra.mxu0 0
      %6665 = vmatprep.subr.bf16.mxu0 0
      %6666 = vmatpush1.bf16.msra.mxu0 0
      %6667 = vmatprep.mubr.bf16.mxu0 0
      %6668 = vmatmul.mubr.bf16.gmra.mrb[0].mxu0 %v6555
      %v6669 = vpop.f32.mrb[0].mxu0
      %v6670 = vadd.f32 0.0, %v6669
      %v6671 = vpop.f32.mrb[0].mxu0
      %v6672 = vpop.f32.mrb[0].mxu0
      %v6673 = vadd.f32 0.0, %v6672
      %v6674 = vpop.f32.mrb[0].mxu0
      %6675 = vmatprep.mubr.bf16.mxu0 0
      %6676 = vmatmul.mubr.bf16.gmra.mrb[0].mxu0 %v6556
      %v6677 = vpop.f32.mrb[0].mxu0
      %v6678 = vadd.f32 0.0, %v6677
      %v6679 = vpop.f32.mrb[0].mxu0
      %v6680 = vpop.f32.mrb[0].mxu0
      %v6681 = vadd.f32 0.0, %v6680
      %v6682 = vpop.f32.mrb[0].mxu0
      %6683 = vmatprep.mubr.bf16.mxu0 0
      %6684 = vmatmul.mubr.bf16.gmra.mrb[0].mxu0 %v6557
      %v6685 = vpop.f32.mrb[0].mxu0
      %v6686 = vadd.f32 0.0, %v6685
      %v6687 = vpop.f32.mrb[0].mxu0
      %v6688 = vpop.f32.mrb[0].mxu0
      %v6689 = vadd.f32 0.0, %v6688
      %v6690 = vpop.f32.mrb[0].mxu0
      %6691 = vmatprep.mubr.bf16.mxu0 0
      %6692 = vmatmul.mubr.bf16.gmra.mrb[0].mxu0 %v6558
      %v6693 = vpop.f32.mrb[0].mxu0
      %v6694 = vadd.f32 0.0, %v6693
      %v6695 = vpop.f32.mrb[0].mxu0
      %v6696 = vpop.f32.mrb[0].mxu0
      %v6697 = vadd.f32 0.0, %v6696
      %v6698 = vpop.f32.mrb[0].mxu0
      %6699 = vmatprep.mubr.bf16.mxu0 0
      %6700 = vmatmul.mubr.bf16.gmra.mrb[0].mxu0 %v6559
      %v6701 = vpop.f32.mrb[0].mxu0
      %v6702 = vadd.f32 0.0, %v6701
      %v6703 = vpop.f32.mrb[0].mxu0
      %v6704 = vpop.f32.mrb[0].mxu0
      %v6705 = vadd.f32 0.0, %v6704
      %v6706 = vpop.f32.mrb[0].mxu0
      %6707 = vmatprep.mubr.bf16.mxu0 0
      %6708 = vmatmul.mubr.bf16.gmra.mrb[0].mxu0 %v6560
      %v6709 = vpop.f32.mrb[0].mxu0
      %v6710 = vadd.f32 0.0, %v6709
      %v6711 = vpop.f32.mrb[0].mxu0
      %v6712 = vpop.f32.mrb[0].mxu0
      %v6713 = vadd.f32 0.0, %v6712
      %v6714 = vpop.f32.mrb[0].mxu0
      %6715 = vmatprep.mubr.bf16.mxu0 0
      %6716 = vmatmul.mubr.bf16.gmra.mrb[0].mxu0 %v6561
      %v6717 = vpop.f32.mrb[0].mxu0
      %v6718 = vadd.f32 0.0, %v6717
      %v6719 = vpop.f32.mrb[0].mxu0
      %v6720 = vpop.f32.mrb[0].mxu0
      %v6721 = vadd.f32 0.0, %v6720
      %v6722 = vpop.f32.mrb[0].mxu0
      %6723 = vmatprep.mubr.bf16.mxu0 0
      %6724 = vmatmul.mubr.bf16.gmra.mrb[0].mxu0 %v6562
      %v6725 = vpop.f32.mrb[0].mxu0
      %v6726 = vadd.f32 0.0, %v6725
      %v6727 = vpop.f32.mrb[0].mxu0
      %v6728 = vpop.f32.mrb[0].mxu0
      %v6729 = vadd.f32 0.0, %v6728
      %v6730 = vpop.f32.mrb[0].mxu0
      %6731 = vmatprep.mubr.bf16.mxu0 0
      %6732 = vmatmul.mubr.bf16.gmra.mrb[0].mxu0 %v6563
      %v6733 = vpop.f32.mrb[0].mxu0
      %v6734 = vadd.f32 0.0, %v6733
      %v6735 = vpop.f32.mrb[0].mxu0
      %v6736 = vpop.f32.mrb[0].mxu0
      %v6737 = vadd.f32 0.0, %v6736
      %v6738 = vpop.f32.mrb[0].mxu0
      %6739 = vmatprep.mubr.bf16.mxu0 0
      %6740 = vmatmul.mubr.bf16.gmra.mrb[0].mxu0 %v6564
      %v6741 = vpop.f32.mrb[0].mxu0
      %v6742 = vadd.f32 0.0, %v6741
      %v6743 = vpop.f32.mrb[0].mxu0
      %v6744 = vpop.f32.mrb[0].mxu0
      %v6745 = vadd.f32 0.0, %v6744
      %v6746 = vpop.f32.mrb[0].mxu0
      %6747 = vmatprep.mubr.bf16.mxu0 0
      %6748 = vmatmul.mubr.bf16.gmra.mrb[0].mxu0 %v6565
      %v6749 = vpop.f32.mrb[0].mxu0
      %v6750 = vadd.f32 0.0, %v6749
      %v6751 = vpop.f32.mrb[0].mxu0
      %v6752 = vpop.f32.mrb[0].mxu0
      %v6753 = vadd.f32 0.0, %v6752
      %v6754 = vpop.f32.mrb[0].mxu0
      %6755 = vmatprep.mubr.bf16.mxu0 0
      %6756 = vmatmul.mubr.bf16.gmra.mrb[0].mxu0 %v6566
      %v6757 = vpop.f32.mrb[0].mxu0
      %v6758 = vadd.f32 0.0, %v6757
      %v6759 = vpop.f32.mrb[0].mxu0
      %v6760 = vpop.f32.mrb[0].mxu0
      %v6761 = vadd.f32 0.0, %v6760
      %v6762 = vpop.f32.mrb[0].mxu0
      %6763 = vmatprep.mubr.bf16.mxu0 0
      %6764 = vmatmul.mubr.bf16.gmra.mrb[0].mxu0 %v6567
      %v6765 = vpop.f32.mrb[0].mxu0
      %v6766 = vadd.f32 0.0, %v6765
      %v6767 = vpop.f32.mrb[0].mxu0
      %v6768 = vpop.f32.mrb[0].mxu0
      %v6769 = vadd.f32 0.0, %v6768
      %v6770 = vpop.f32.mrb[0].mxu0
      %6771 = vmatprep.mubr.bf16.mxu0 0
      %6772 = vmatmul.mubr.bf16.gmra.mrb[0].mxu0 %v6568
      %v6773 = vpop.f32.mrb[0].mxu0
      %v6774 = vadd.f32 0.0, %v6773
      %v6775 = vpop.f32.mrb[0].mxu0
      %v6776 = vpop.f32.mrb[0].mxu0
      %v6777 = vadd.f32 0.0, %v6776
      %v6778 = vpop.f32.mrb[0].mxu0
      %6779 = vmatprep.mubr.bf16.mxu0 0
      %6780 = vmatmul.mubr.bf16.gmra.mrb[0].mxu0 %v6569
      %v6781 = vpop.f32.mrb[0].mxu0
      %v6782 = vadd.f32 0.0, %v6781
      %v6783 = vpop.f32.mrb[0].mxu0
      %v6784 = vpop.f32.mrb[0].mxu0
      %v6785 = vadd.f32 0.0, %v6784
      %v6786 = vpop.f32.mrb[0].mxu0
      %6787 = vmatprep.mubr.bf16.mxu0 0
      %6788 = vmatmul.mubr.bf16.gmra.mrb[0].mxu0 %v6570
      %v6789 = vpop.f32.mrb[0].mxu0
      %v6790 = vadd.f32 0.0, %v6789
      %v6791 = vpop.f32.mrb[0].mxu0
      %v6792 = vpop.f32.mrb[0].mxu0
      %v6793 = vadd.f32 0.0, %v6792
      %v6794 = vpop.f32.mrb[0].mxu0
      %6795 = vdwg.mxu0
      %v6796 = vadd.f32 %v6298, %v6670
      %v6797 = vadd.f32 %v6299, %v6673
      %v6798 = vadd.f32 %v6300, %v6678
      %v6799 = vadd.f32 %v6301, %v6681
      %v6800 = vadd.f32 %v6302, %v6686
      %v6801 = vadd.f32 %v6303, %v6689
      %v6802 = vadd.f32 %v6304, %v6694
      %v6803 = vadd.f32 %v6305, %v6697
      %v6804 = vadd.f32 %v6306, %v6702
      %v6805 = vadd.f32 %v6307, %v6705
      %v6806 = vadd.f32 %v6308, %v6710
      %v6807 = vadd.f32 %v6309, %v6713
      %v6808 = vadd.f32 %v6310, %v6718
      %v6809 = vadd.f32 %v6311, %v6721
      %v6810 = vadd.f32 %v6312, %v6726
      %v6811 = vadd.f32 %v6313, %v6729
      %v6812 = vadd.f32 %v6314, %v6734
      %v6813 = vadd.f32 %v6315, %v6737
      %v6814 = vadd.f32 %v6316, %v6742
      %v6815 = vadd.f32 %v6317, %v6745
      %v6816 = vadd.f32 %v6318, %v6750
      %v6817 = vadd.f32 %v6319, %v6753
      %v6818 = vadd.f32 %v6320, %v6758
      %v6819 = vadd.f32 %v6321, %v6761
      %v6820 = vadd.f32 %v6322, %v6766
      %v6821 = vadd.f32 %v6323, %v6769
      %v6822 = vadd.f32 %v6324, %v6774
      %v6823 = vadd.f32 %v6325, %v6777
      %v6824 = vadd.f32 %v6326, %v6782
      %v6825 = vadd.f32 %v6327, %v6785
      %v6826 = vadd.f32 %v6328, %v6790
      %v6827 = vadd.f32 %v6329, %v6793
      %s6828 = scalar_lea.vmem [#allocation2], 24
      %v6829 = vld [vmem:[%s6828] sm:$0xf]
      %v6830 = vld [vmem:[%s6828 + $0x4] sm:$0xf]
      %v6831 = vld [vmem:[%s6828 + $0xc] sm:$0xf]
      %v6832 = vld [vmem:[%s6828 + $0x10] sm:$0xf]
      %v6833 = vld [vmem:[%s6828 + $0x18] sm:$0xf]
      %v6834 = vld [vmem:[%s6828 + $0x1c] sm:$0xf]
      %v6835 = vld [vmem:[%s6828 + $0x24] sm:$0xf]
      %v6836 = vld [vmem:[%s6828 + $0x28] sm:$0xf]
      %v6837 = vld [vmem:[%s6828 + $0x30] sm:$0xf]
      %v6838 = vld [vmem:[%s6828 + $0x34] sm:$0xf]
      %v6839 = vld [vmem:[%s6828 + $0x3c] sm:$0xf]
      %v6840 = vld [vmem:[%s6828 + $0x40] sm:$0xf]
      %v6841 = vld [vmem:[%s6828 + $0x48] sm:$0xf]
      %v6842 = vld [vmem:[%s6828 + $0x4c] sm:$0xf]
      %v6843 = vld [vmem:[%s6828 + $0x54] sm:$0xf]
      %v6844 = vld [vmem:[%s6828 + $0x58] sm:$0xf]
      %v6845 = vld [vmem:[%s6828 + $0x60] sm:$0xf]
      %v6846 = vld [vmem:[%s6828 + $0x64] sm:$0xf]
      %v6847 = vld [vmem:[%s6828 + $0x6c] sm:$0xf]
      %v6848 = vld [vmem:[%s6828 + $0x70] sm:$0xf]
      %v6849 = vld [vmem:[%s6828 + $0x78] sm:$0xf]
      %v6850 = vld [vmem:[%s6828 + $0x7c] sm:$0xf]
      %v6851 = vld [vmem:[%s6828 + $0x84] sm:$0xf]
      %v6852 = vld [vmem:[%s6828 + $0x88] sm:$0xf]
      %v6853 = vld [vmem:[%s6828 + $0x90] sm:$0xf]
      %v6854 = vld [vmem:[%s6828 + $0x94] sm:$0xf]
      %v6855 = vld [vmem:[%s6828 + $0x9c] sm:$0xf]
      %v6856 = vld [vmem:[%s6828 + $0xa0] sm:$0xf]
      %v6857 = vld [vmem:[%s6828 + $0xa8] sm:$0xf]
      %v6858 = vld [vmem:[%s6828 + $0xac] sm:$0xf]
      %v6859 = vld [vmem:[%s6828 + $0xb4] sm:$0xf]
      %v6860 = vld [vmem:[%s6828 + $0xb8] sm:$0xf]
      %s6861 = scalar_lea.vmem %s3, 384
      %v6862 = vld [vmem:[%s6861] sm:$0xf]
      %v6863 = vld [vmem:[%s6861 + $0x4] sm:$0xf]
      %v6864 = vld [vmem:[%s6861 + $0x8] sm:$0xf]
      %v6865 = vld [vmem:[%s6861 + $0xc] sm:$0xf]
      %v6866 = vld [vmem:[%s6861 + $0x10] sm:$0xf]
      %v6867 = vld [vmem:[%s6861 + $0x14] sm:$0xf]
      %v6868 = vld [vmem:[%s6861 + $0x18] sm:$0xf]
      %v6869 = vld [vmem:[%s6861 + $0x1c] sm:$0xf]
      %v6870 = vld [vmem:[%s6861 + $0x20] sm:$0xf]
      %v6871 = vld [vmem:[%s6861 + $0x24] sm:$0xf]
      %v6872 = vld [vmem:[%s6861 + $0x28] sm:$0xf]
      %v6873 = vld [vmem:[%s6861 + $0x2c] sm:$0xf]
      %v6874 = vld [vmem:[%s6861 + $0x30] sm:$0xf]
      %v6875 = vld [vmem:[%s6861 + $0x34] sm:$0xf]
      %v6876 = vld [vmem:[%s6861 + $0x38] sm:$0xf]
      %v6877 = vld [vmem:[%s6861 + $0x3c] sm:$0xf]
      %v6910 = vunpack.c.l.b16 %v6829
      %v6911 = vunpack.c.l.b16 %v6830
      %v6912 = vunpack.c.l.b16 %v6831
      %v6913 = vunpack.c.l.b16 %v6832
      %v6914 = vunpack.c.l.b16 %v6833
      %v6915 = vunpack.c.l.b16 %v6834
      %v6916 = vunpack.c.l.b16 %v6835
      %v6917 = vunpack.c.l.b16 %v6836
      %v6918 = vunpack.c.l.b16 %v6837
      %v6919 = vunpack.c.l.b16 %v6838
      %v6920 = vunpack.c.l.b16 %v6839
      %v6921 = vunpack.c.l.b16 %v6840
      %v6922 = vunpack.c.l.b16 %v6841
      %v6923 = vunpack.c.l.b16 %v6842
      %v6924 = vunpack.c.l.b16 %v6843
      %v6925 = vunpack.c.l.b16 %v6844
      %v6926 = vunpack.c.l.b16 %v6845
      %v6927 = vunpack.c.l.b16 %v6846
      %v6928 = vunpack.c.l.b16 %v6847
      %v6929 = vunpack.c.l.b16 %v6848
      %v6930 = vunpack.c.l.b16 %v6849
      %v6931 = vunpack.c.l.b16 %v6850
      %v6932 = vunpack.c.l.b16 %v6851
      %v6933 = vunpack.c.l.b16 %v6852
      %v6934 = vunpack.c.l.b16 %v6853
      %v6935 = vunpack.c.l.b16 %v6854
      %v6936 = vunpack.c.l.b16 %v6855
      %v6937 = vunpack.c.l.b16 %v6856
      %v6938 = vunpack.c.l.b16 %v6857
      %v6939 = vunpack.c.l.b16 %v6858
      %v6940 = vunpack.c.l.b16 %v6859
      %v6941 = vunpack.c.l.b16 %v6860
      %v6942 = vpack.c.b16 %v6911, %v6910
      %v6943 = vpack.c.b16 %v6913, %v6912
      %v6944 = vpack.c.b16 %v6915, %v6914
      %v6945 = vpack.c.b16 %v6917, %v6916
      %v6946 = vpack.c.b16 %v6919, %v6918
      %v6947 = vpack.c.b16 %v6921, %v6920
      %v6948 = vpack.c.b16 %v6923, %v6922
      %v6949 = vpack.c.b16 %v6925, %v6924
      %v6950 = vpack.c.b16 %v6927, %v6926
      %v6951 = vpack.c.b16 %v6929, %v6928
      %v6952 = vpack.c.b16 %v6931, %v6930
      %v6953 = vpack.c.b16 %v6933, %v6932
      %v6954 = vpack.c.b16 %v6935, %v6934
      %v6955 = vpack.c.b16 %v6937, %v6936
      %v6956 = vpack.c.b16 %v6939, %v6938
      %v6957 = vpack.c.b16 %v6941, %v6940
      %v6990 = vunpack.c.l.b16 %v6862
      %v6991 = vunpack.c.l.b16 %v6863
      %v6992 = vunpack.c.l.b16 %v6864
      %v6993 = vunpack.c.l.b16 %v6865
      %v6994 = vunpack.c.l.b16 %v6866
      %v6995 = vunpack.c.l.b16 %v6867
      %v6996 = vunpack.c.l.b16 %v6868
      %v6997 = vunpack.c.l.b16 %v6869
      %v6998 = vunpack.c.l.b16 %v6870
      %v6999 = vunpack.c.l.b16 %v6871
      %v7000 = vunpack.c.l.b16 %v6872
      %v7001 = vunpack.c.l.b16 %v6873
      %v7002 = vunpack.c.l.b16 %v6874
      %v7003 = vunpack.c.l.b16 %v6875
      %v7004 = vunpack.c.l.b16 %v6876
      %v7005 = vunpack.c.l.b16 %v6877
      %v7006 = vpack.c.b16 %v6991, %v6990
      %v7007 = vpack.c.b16 %v6993, %v6992
      %v7008 = vpack.c.b16 %v6995, %v6994
      %v7009 = vpack.c.b16 %v6997, %v6996
      %v7010 = vpack.c.b16 %v6999, %v6998
      %v7011 = vpack.c.b16 %v7001, %v7000
      %v7012 = vpack.c.b16 %v7003, %v7002
      %v7013 = vpack.c.b16 %v7005, %v7004
      %7022 = vmatprep.subr.bf16.mxu0 0
      %7023 = vmatpush1.bf16.msra.mxu0 %v7006
      %7024 = vmatprep.subr.bf16.mxu0 0
      %7025 = vmatpush1.bf16.msra.mxu0 %v7007
      %7026 = vmatprep.subr.bf16.mxu0 0
      %7027 = vmatpush1.bf16.msra.mxu0 %v7008
      %7028 = vmatprep.subr.bf16.mxu0 0
      %7029 = vmatpush1.bf16.msra.mxu0 %v7009
      %7030 = vmatprep.subr.bf16.mxu0 0
      %7031 = vmatpush1.bf16.msra.mxu0 %v7010
      %7032 = vmatprep.subr.bf16.mxu0 0
      %7033 = vmatpush1.bf16.msra.mxu0 %v7011
      %7034 = vmatprep.subr.bf16.mxu0 0
      %7035 = vmatpush1.bf16.msra.mxu0 %v7012
      %7036 = vmatprep.subr.bf16.mxu0 0
      %7037 = vmatpush1.bf16.msra.mxu0 %v7013
      %7038 = vmatprep.subr.bf16.mxu0 0
      %7039 = vmatpush1.bf16.msra.mxu0 0
      %7040 = vmatprep.subr.bf16.mxu0 0
      %7041 = vmatpush1.bf16.msra.mxu0 0
      %7042 = vmatprep.subr.bf16.mxu0 0
      %7043 = vmatpush1.bf16.msra.mxu0 0
      %7044 = vmatprep.subr.bf16.mxu0 0
      %7045 = vmatpush1.bf16.msra.mxu0 0
      %7046 = vmatprep.subr.bf16.mxu0 0
      %7047 = vmatpush1.bf16.msra.mxu0 0
      %7048 = vmatprep.subr.bf16.mxu0 0
      %7049 = vmatpush1.bf16.msra.mxu0 0
      %7050 = vmatprep.subr.bf16.mxu0 0
      %7051 = vmatpush1.bf16.msra.mxu0 0
      %7052 = vmatprep.subr.bf16.mxu0 0
      %7053 = vmatpush1.bf16.msra.mxu0 0
      %7054 = vmatprep.mubr.bf16.mxu0 0
      %7055 = vmatmul.mubr.bf16.gmra.mrb[0].mxu0 %v6942
      %v7056 = vpop.f32.mrb[0].mxu0
      %v7057 = vadd.f32 0.0, %v7056
      %v7058 = vpop.f32.mrb[0].mxu0
      %v7059 = vpop.f32.mrb[0].mxu0
      %v7060 = vadd.f32 0.0, %v7059
      %v7061 = vpop.f32.mrb[0].mxu0
      %7062 = vmatprep.mubr.bf16.mxu0 0
      %7063 = vmatmul.mubr.bf16.gmra.mrb[0].mxu0 %v6943
      %v7064 = vpop.f32.mrb[0].mxu0
      %v7065 = vadd.f32 0.0, %v7064
      %v7066 = vpop.f32.mrb[0].mxu0
      %v7067 = vpop.f32.mrb[0].mxu0
      %v7068 = vadd.f32 0.0, %v7067
      %v7069 = vpop.f32.mrb[0].mxu0
      %7070 = vmatprep.mubr.bf16.mxu0 0
      %7071 = vmatmul.mubr.bf16.gmra.mrb[0].mxu0 %v6944
      %v7072 = vpop.f32.mrb[0].mxu0
      %v7073 = vadd.f32 0.0, %v7072
      %v7074 = vpop.f32.mrb[0].mxu0
      %v7075 = vpop.f32.mrb[0].mxu0
      %v7076 = vadd.f32 0.0, %v7075
      %v7077 = vpop.f32.mrb[0].mxu0
      %7078 = vmatprep.mubr.bf16.mxu0 0
      %7079 = vmatmul.mubr.bf16.gmra.mrb[0].mxu0 %v6945
      %v7080 = vpop.f32.mrb[0].mxu0
      %v7081 = vadd.f32 0.0, %v7080
      %v7082 = vpop.f32.mrb[0].mxu0
      %v7083 = vpop.f32.mrb[0].mxu0
      %v7084 = vadd.f32 0.0, %v7083
      %v7085 = vpop.f32.mrb[0].mxu0
      %7086 = vmatprep.mubr.bf16.mxu0 0
      %7087 = vmatmul.mubr.bf16.gmra.mrb[0].mxu0 %v6946
      %v7088 = vpop.f32.mrb[0].mxu0
      %v7089 = vadd.f32 0.0, %v7088
      %v7090 = vpop.f32.mrb[0].mxu0
      %v7091 = vpop.f32.mrb[0].mxu0
      %v7092 = vadd.f32 0.0, %v7091
      %v7093 = vpop.f32.mrb[0].mxu0
      %7094 = vmatprep.mubr.bf16.mxu0 0
      %7095 = vmatmul.mubr.bf16.gmra.mrb[0].mxu0 %v6947
      %v7096 = vpop.f32.mrb[0].mxu0
      %v7097 = vadd.f32 0.0, %v7096
      %v7098 = vpop.f32.mrb[0].mxu0
      %v7099 = vpop.f32.mrb[0].mxu0
      %v7100 = vadd.f32 0.0, %v7099
      %v7101 = vpop.f32.mrb[0].mxu0
      %7102 = vmatprep.mubr.bf16.mxu0 0
      %7103 = vmatmul.mubr.bf16.gmra.mrb[0].mxu0 %v6948
      %v7104 = vpop.f32.mrb[0].mxu0
      %v7105 = vadd.f32 0.0, %v7104
      %v7106 = vpop.f32.mrb[0].mxu0
      %v7107 = vpop.f32.mrb[0].mxu0
      %v7108 = vadd.f32 0.0, %v7107
      %v7109 = vpop.f32.mrb[0].mxu0
      %7110 = vmatprep.mubr.bf16.mxu0 0
      %7111 = vmatmul.mubr.bf16.gmra.mrb[0].mxu0 %v6949
      %v7112 = vpop.f32.mrb[0].mxu0
      %v7113 = vadd.f32 0.0, %v7112
      %v7114 = vpop.f32.mrb[0].mxu0
      %v7115 = vpop.f32.mrb[0].mxu0
      %v7116 = vadd.f32 0.0, %v7115
      %v7117 = vpop.f32.mrb[0].mxu0
      %7118 = vmatprep.mubr.bf16.mxu0 0
      %7119 = vmatmul.mubr.bf16.gmra.mrb[0].mxu0 %v6950
      %v7120 = vpop.f32.mrb[0].mxu0
      %v7121 = vadd.f32 0.0, %v7120
      %v7122 = vpop.f32.mrb[0].mxu0
      %v7123 = vpop.f32.mrb[0].mxu0
      %v7124 = vadd.f32 0.0, %v7123
      %v7125 = vpop.f32.mrb[0].mxu0
      %7126 = vmatprep.mubr.bf16.mxu0 0
      %7127 = vmatmul.mubr.bf16.gmra.mrb[0].mxu0 %v6951
      %v7128 = vpop.f32.mrb[0].mxu0
      %v7129 = vadd.f32 0.0, %v7128
      %v7130 = vpop.f32.mrb[0].mxu0
      %v7131 = vpop.f32.mrb[0].mxu0
      %v7132 = vadd.f32 0.0, %v7131
      %v7133 = vpop.f32.mrb[0].mxu0
      %7134 = vmatprep.mubr.bf16.mxu0 0
      %7135 = vmatmul.mubr.bf16.gmra.mrb[0].mxu0 %v6952
      %v7136 = vpop.f32.mrb[0].mxu0
      %v7137 = vadd.f32 0.0, %v7136
      %v7138 = vpop.f32.mrb[0].mxu0
      %v7139 = vpop.f32.mrb[0].mxu0
      %v7140 = vadd.f32 0.0, %v7139
      %v7141 = vpop.f32.mrb[0].mxu0
      %7142 = vmatprep.mubr.bf16.mxu0 0
      %7143 = vmatmul.mubr.bf16.gmra.mrb[0].mxu0 %v6953
      %v7144 = vpop.f32.mrb[0].mxu0
      %v7145 = vadd.f32 0.0, %v7144
      %v7146 = vpop.f32.mrb[0].mxu0
      %v7147 = vpop.f32.mrb[0].mxu0
      %v7148 = vadd.f32 0.0, %v7147
      %v7149 = vpop.f32.mrb[0].mxu0
      %7150 = vmatprep.mubr.bf16.mxu0 0
      %7151 = vmatmul.mubr.bf16.gmra.mrb[0].mxu0 %v6954
      %v7152 = vpop.f32.mrb[0].mxu0
      %v7153 = vadd.f32 0.0, %v7152
      %v7154 = vpop.f32.mrb[0].mxu0
      %v7155 = vpop.f32.mrb[0].mxu0
      %v7156 = vadd.f32 0.0, %v7155
      %v7157 = vpop.f32.mrb[0].mxu0
      %7158 = vmatprep.mubr.bf16.mxu0 0
      %7159 = vmatmul.mubr.bf16.gmra.mrb[0].mxu0 %v6955
      %v7160 = vpop.f32.mrb[0].mxu0
      %v7161 = vadd.f32 0.0, %v7160
      %v7162 = vpop.f32.mrb[0].mxu0
      %v7163 = vpop.f32.mrb[0].mxu0
      %v7164 = vadd.f32 0.0, %v7163
      %v7165 = vpop.f32.mrb[0].mxu0
      %7166 = vmatprep.mubr.bf16.mxu0 0
      %7167 = vmatmul.mubr.bf16.gmra.mrb[0].mxu0 %v6956
      %v7168 = vpop.f32.mrb[0].mxu0
      %v7169 = vadd.f32 0.0, %v7168
      %v7170 = vpop.f32.mrb[0].mxu0
      %v7171 = vpop.f32.mrb[0].mxu0
      %v7172 = vadd.f32 0.0, %v7171
      %v7173 = vpop.f32.mrb[0].mxu0
      %7174 = vmatprep.mubr.bf16.mxu0 0
      %7175 = vmatmul.mubr.bf16.gmra.mrb[0].mxu0 %v6957
      %v7176 = vpop.f32.mrb[0].mxu0
      %v7177 = vadd.f32 0.0, %v7176
      %v7178 = vpop.f32.mrb[0].mxu0
      %v7179 = vpop.f32.mrb[0].mxu0
      %v7180 = vadd.f32 0.0, %v7179
      %v7181 = vpop.f32.mrb[0].mxu0
      %7182 = vdwg.mxu0
      %v7183 = vadd.f32 %v6796, %v7057
      %v7184 = vadd.f32 %v6797, %v7060
      %v7185 = vadd.f32 %v6798, %v7065
      %v7186 = vadd.f32 %v6799, %v7068
      %v7187 = vadd.f32 %v6800, %v7073
      %v7188 = vadd.f32 %v6801, %v7076
      %v7189 = vadd.f32 %v6802, %v7081
      %v7190 = vadd.f32 %v6803, %v7084
      %v7191 = vadd.f32 %v6804, %v7089
      %v7192 = vadd.f32 %v6805, %v7092
      %v7193 = vadd.f32 %v6806, %v7097
      %v7194 = vadd.f32 %v6807, %v7100
      %v7195 = vadd.f32 %v6808, %v7105
      %v7196 = vadd.f32 %v6809, %v7108
      %v7197 = vadd.f32 %v6810, %v7113
      %v7198 = vadd.f32 %v6811, %v7116
      %v7199 = vadd.f32 %v6812, %v7121
      %v7200 = vadd.f32 %v6813, %v7124
      %v7201 = vadd.f32 %v6814, %v7129
      %v7202 = vadd.f32 %v6815, %v7132
      %v7203 = vadd.f32 %v6816, %v7137
      %v7204 = vadd.f32 %v6817, %v7140
      %v7205 = vadd.f32 %v6818, %v7145
      %v7206 = vadd.f32 %v6819, %v7148
      %v7207 = vadd.f32 %v6820, %v7153
      %v7208 = vadd.f32 %v6821, %v7156
      %v7209 = vadd.f32 %v6822, %v7161
      %v7210 = vadd.f32 %v6823, %v7164
      %v7211 = vadd.f32 %v6824, %v7169
      %v7212 = vadd.f32 %v6825, %v7172
      %v7213 = vadd.f32 %v6826, %v7177
      %v7214 = vadd.f32 %v6827, %v7180
      %v7215 = vld [vmem:[%s6828] sm:$0xf]
      %v7216 = vld [vmem:[%s6828 + $0x4] sm:$0xf]
      %v7217 = vld [vmem:[%s6828 + $0x8] sm:$0x1]
      %v7218 = vld [vmem:[%s6828 + $0xc] sm:$0xf]
      %v7219 = vld [vmem:[%s6828 + $0x10] sm:$0xf]
      %v7220 = vld [vmem:[%s6828 + $0x14] sm:$0x1]
      %v7221 = vld [vmem:[%s6828 + $0x18] sm:$0xf]
      %v7222 = vld [vmem:[%s6828 + $0x1c] sm:$0xf]
      %v7223 = vld [vmem:[%s6828 + $0x20] sm:$0x1]
      %v7224 = vld [vmem:[%s6828 + $0x24] sm:$0xf]
      %v7225 = vld [vmem:[%s6828 + $0x28] sm:$0xf]
      %v7226 = vld [vmem:[%s6828 + $0x2c] sm:$0x1]
      %v7227 = vld [vmem:[%s6828 + $0x30] sm:$0xf]
      %v7228 = vld [vmem:[%s6828 + $0x34] sm:$0xf]
      %v7229 = vld [vmem:[%s6828 + $0x38] sm:$0x1]
      %v7230 = vld [vmem:[%s6828 + $0x3c] sm:$0xf]
      %v7231 = vld [vmem:[%s6828 + $0x40] sm:$0xf]
      %v7232 = vld [vmem:[%s6828 + $0x44] sm:$0x1]
      %v7233 = vld [vmem:[%s6828 + $0x48] sm:$0xf]
      %v7234 = vld [vmem:[%s6828 + $0x4c] sm:$0xf]
      %v7235 = vld [vmem:[%s6828 + $0x50] sm:$0x1]
      %v7236 = vld [vmem:[%s6828 + $0x54] sm:$0xf]
      %v7237 = vld [vmem:[%s6828 + $0x58] sm:$0xf]
      %v7238 = vld [vmem:[%s6828 + $0x5c] sm:$0x1]
      %v7239 = vld [vmem:[%s6828 + $0x60] sm:$0xf]
      %v7240 = vld [vmem:[%s6828 + $0x64] sm:$0xf]
      %v7241 = vld [vmem:[%s6828 + $0x68] sm:$0x1]
      %v7242 = vld [vmem:[%s6828 + $0x6c] sm:$0xf]
      %v7243 = vld [vmem:[%s6828 + $0x70] sm:$0xf]
      %v7244 = vld [vmem:[%s6828 + $0x74] sm:$0x1]
      %v7245 = vld [vmem:[%s6828 + $0x78] sm:$0xf]
      %v7246 = vld [vmem:[%s6828 + $0x7c] sm:$0xf]
      %v7247 = vld [vmem:[%s6828 + $0x80] sm:$0x1]
      %v7248 = vld [vmem:[%s6828 + $0x84] sm:$0xf]
      %v7249 = vld [vmem:[%s6828 + $0x88] sm:$0xf]
      %v7250 = vld [vmem:[%s6828 + $0x8c] sm:$0x1]
      %v7251 = vld [vmem:[%s6828 + $0x90] sm:$0xf]
      %v7252 = vld [vmem:[%s6828 + $0x94] sm:$0xf]
      %v7253 = vld [vmem:[%s6828 + $0x98] sm:$0x1]
      %v7254 = vld [vmem:[%s6828 + $0x9c] sm:$0xf]
      %v7255 = vld [vmem:[%s6828 + $0xa0] sm:$0xf]
      %v7256 = vld [vmem:[%s6828 + $0xa4] sm:$0x1]
      %v7257 = vld [vmem:[%s6828 + $0xa8] sm:$0xf]
      %v7258 = vld [vmem:[%s6828 + $0xac] sm:$0xf]
      %v7259 = vld [vmem:[%s6828 + $0xb0] sm:$0x1]
      %v7260 = vld [vmem:[%s6828 + $0xb4] sm:$0xf]
      %v7261 = vld [vmem:[%s6828 + $0xb8] sm:$0xf]
      %v7262 = vld [vmem:[%s6828 + $0xbc] sm:$0x1]
      %s7263 = scalar_lea.vmem %s3, 448
      %v7264 = vld [vmem:[%s7263] sm:$0xf]
      %v7265 = vld [vmem:[%s7263 + $0x4] sm:$0xf]
      %v7266 = vld [vmem:[%s7263 + $0x8] sm:$0xf]
      %v7267 = vld [vmem:[%s7263 + $0xc] sm:$0xf]
      %v7268 = vld [vmem:[%s7263 + $0x10] sm:$0xf]
      %v7269 = vld [vmem:[%s7263 + $0x14] sm:$0xf]
      %v7270 = vld [vmem:[%s7263 + $0x18] sm:$0xf]
      %v7271 = vld [vmem:[%s7263 + $0x1c] sm:$0xf]
      %v7272 = vld [vmem:[%s7263 + $0x20] sm:$0xf]
      %v7273 = vld [vmem:[%s7263 + $0x24] sm:$0xf]
      %v7274 = vld [vmem:[%s7263 + $0x28] sm:$0xf]
      %v7275 = vld [vmem:[%s7263 + $0x2c] sm:$0xf]
      %v7276 = vld [vmem:[%s7263 + $0x30] sm:$0xf]
      %v7277 = vld [vmem:[%s7263 + $0x34] sm:$0xf]
      %v7278 = vld [vmem:[%s7263 + $0x38] sm:$0xf]
      %v7279 = vld [vmem:[%s7263 + $0x3c] sm:$0xf]
      %v7281 = vshrl.u32 %v7215, 16
      %v7283 = vrot.slane %v7281, 4
      %v7284 = vshll.u32 %v7215, 16
      %v7286 = vrot.slane %v7284, 5
      %v7287 = vor.u32 %v7283, %v7286
      %v7288 = vrot.slane %v7287, 4
      %v7290 = vshll.u32 %v7216, 16
      %v7292 = vrot.slane %v7290, 5
      %v7293 = vsel %vm285, %v7288, %v7292
      %v7294 = vshrl.u32 %v7216, 16
      %v7296 = vrot.slane %v7294, 4
      %v7297 = vor.u32 %v7296, %v7292
      %v7298 = vrot.slane %v7297, 4
      %v7300 = vshll.u32 %v7217, 16
      %v7302 = vrot.slane %v7300, 5
      %v7303 = vsel %vm285, %v7298, %v7302
      %v7305 = vshrl.u32 %v7218, 16
      %v7307 = vrot.slane %v7305, 4
      %v7308 = vshll.u32 %v7218, 16
      %v7310 = vrot.slane %v7308, 5
      %v7311 = vor.u32 %v7307, %v7310
      %v7312 = vrot.slane %v7311, 4
      %v7314 = vshll.u32 %v7219, 16
      %v7316 = vrot.slane %v7314, 5
      %v7317 = vsel %vm285, %v7312, %v7316
      %v7318 = vshrl.u32 %v7219, 16
      %v7320 = vrot.slane %v7318, 4
      %v7321 = vor.u32 %v7320, %v7316
      %v7322 = vrot.slane %v7321, 4
      %v7324 = vshll.u32 %v7220, 16
      %v7326 = vrot.slane %v7324, 5
      %v7327 = vsel %vm285, %v7322, %v7326
      %v7329 = vshrl.u32 %v7221, 16
      %v7331 = vrot.slane %v7329, 4
      %v7332 = vshll.u32 %v7221, 16
      %v7334 = vrot.slane %v7332, 5
      %v7335 = vor.u32 %v7331, %v7334
      %v7336 = vrot.slane %v7335, 4
      %v7338 = vshll.u32 %v7222, 16
      %v7340 = vrot.slane %v7338, 5
      %v7341 = vsel %vm285, %v7336, %v7340
      %v7342 = vshrl.u32 %v7222, 16
      %v7344 = vrot.slane %v7342, 4
      %v7345 = vor.u32 %v7344, %v7340
      %v7346 = vrot.slane %v7345, 4
      %v7348 = vshll.u32 %v7223, 16
      %v7350 = vrot.slane %v7348, 5
      %v7351 = vsel %vm285, %v7346, %v7350
      %v7353 = vshrl.u32 %v7224, 16
      %v7355 = vrot.slane %v7353, 4
      %v7356 = vshll.u32 %v7224, 16
      %v7358 = vrot.slane %v7356, 5
      %v7359 = vor.u32 %v7355, %v7358
      %v7360 = vrot.slane %v7359, 4
      %v7362 = vshll.u32 %v7225, 16
      %v7364 = vrot.slane %v7362, 5
      %v7365 = vsel %vm285, %v7360, %v7364
      %v7366 = vshrl.u32 %v7225, 16
      %v7368 = vrot.slane %v7366, 4
      %v7369 = vor.u32 %v7368, %v7364
      %v7370 = vrot.slane %v7369, 4
      %v7372 = vshll.u32 %v7226, 16
      %v7374 = vrot.slane %v7372, 5
      %v7375 = vsel %vm285, %v7370, %v7374
      %v7377 = vshrl.u32 %v7227, 16
      %v7379 = vrot.slane %v7377, 4
      %v7380 = vshll.u32 %v7227, 16
      %v7382 = vrot.slane %v7380, 5
      %v7383 = vor.u32 %v7379, %v7382
      %v7384 = vrot.slane %v7383, 4
      %v7386 = vshll.u32 %v7228, 16
      %v7388 = vrot.slane %v7386, 5
      %v7389 = vsel %vm285, %v7384, %v7388
      %v7390 = vshrl.u32 %v7228, 16
      %v7392 = vrot.slane %v7390, 4
      %v7393 = vor.u32 %v7392, %v7388
      %v7394 = vrot.slane %v7393, 4
      %v7396 = vshll.u32 %v7229, 16
      %v7398 = vrot.slane %v7396, 5
      %v7399 = vsel %vm285, %v7394, %v7398
      %v7401 = vshrl.u32 %v7230, 16
      %v7403 = vrot.slane %v7401, 4
      %v7404 = vshll.u32 %v7230, 16
      %v7406 = vrot.slane %v7404, 5
      %v7407 = vor.u32 %v7403, %v7406
      %v7408 = vrot.slane %v7407, 4
      %v7410 = vshll.u32 %v7231, 16
      %v7412 = vrot.slane %v7410, 5
      %v7413 = vsel %vm285, %v7408, %v7412
      %v7414 = vshrl.u32 %v7231, 16
      %v7416 = vrot.slane %v7414, 4
      %v7417 = vor.u32 %v7416, %v7412
      %v7418 = vrot.slane %v7417, 4
      %v7420 = vshll.u32 %v7232, 16
      %v7422 = vrot.slane %v7420, 5
      %v7423 = vsel %vm285, %v7418, %v7422
      %v7425 = vshrl.u32 %v7233, 16
      %v7427 = vrot.slane %v7425, 4
      %v7428 = vshll.u32 %v7233, 16
      %v7430 = vrot.slane %v7428, 5
      %v7431 = vor.u32 %v7427, %v7430
      %v7432 = vrot.slane %v7431, 4
      %v7434 = vshll.u32 %v7234, 16
      %v7436 = vrot.slane %v7434, 5
      %v7437 = vsel %vm285, %v7432, %v7436
      %v7438 = vshrl.u32 %v7234, 16
      %v7440 = vrot.slane %v7438, 4
      %v7441 = vor.u32 %v7440, %v7436
      %v7442 = vrot.slane %v7441, 4
      %v7444 = vshll.u32 %v7235, 16
      %v7446 = vrot.slane %v7444, 5
      %v7447 = vsel %vm285, %v7442, %v7446
      %v7449 = vshrl.u32 %v7236, 16
      %v7451 = vrot.slane %v7449, 4
      %v7452 = vshll.u32 %v7236, 16
      %v7454 = vrot.slane %v7452, 5
      %v7455 = vor.u32 %v7451, %v7454
      %v7456 = vrot.slane %v7455, 4
      %v7458 = vshll.u32 %v7237, 16
      %v7460 = vrot.slane %v7458, 5
      %v7461 = vsel %vm285, %v7456, %v7460
      %v7462 = vshrl.u32 %v7237, 16
      %v7464 = vrot.slane %v7462, 4
      %v7465 = vor.u32 %v7464, %v7460
      %v7466 = vrot.slane %v7465, 4
      %v7468 = vshll.u32 %v7238, 16
      %v7470 = vrot.slane %v7468, 5
      %v7471 = vsel %vm285, %v7466, %v7470
      %v7473 = vshrl.u32 %v7239, 16
      %v7475 = vrot.slane %v7473, 4
      %v7476 = vshll.u32 %v7239, 16
      %v7478 = vrot.slane %v7476, 5
      %v7479 = vor.u32 %v7475, %v7478
      %v7480 = vrot.slane %v7479, 4
      %v7482 = vshll.u32 %v7240, 16
      %v7484 = vrot.slane %v7482, 5
      %v7485 = vsel %vm285, %v7480, %v7484
      %v7486 = vshrl.u32 %v7240, 16
      %v7488 = vrot.slane %v7486, 4
      %v7489 = vor.u32 %v7488, %v7484
      %v7490 = vrot.slane %v7489, 4
      %v7492 = vshll.u32 %v7241, 16
      %v7494 = vrot.slane %v7492, 5
      %v7495 = vsel %vm285, %v7490, %v7494
      %v7497 = vshrl.u32 %v7242, 16
      %v7499 = vrot.slane %v7497, 4
      %v7500 = vshll.u32 %v7242, 16
      %v7502 = vrot.slane %v7500, 5
      %v7503 = vor.u32 %v7499, %v7502
      %v7504 = vrot.slane %v7503, 4
      %v7506 = vshll.u32 %v7243, 16
      %v7508 = vrot.slane %v7506, 5
      %v7509 = vsel %vm285, %v7504, %v7508
      %v7510 = vshrl.u32 %v7243, 16
      %v7512 = vrot.slane %v7510, 4
      %v7513 = vor.u32 %v7512, %v7508
      %v7514 = vrot.slane %v7513, 4
      %v7516 = vshll.u32 %v7244, 16
      %v7518 = vrot.slane %v7516, 5
      %v7519 = vsel %vm285, %v7514, %v7518
      %v7521 = vshrl.u32 %v7245, 16
      %v7523 = vrot.slane %v7521, 4
      %v7524 = vshll.u32 %v7245, 16
      %v7526 = vrot.slane %v7524, 5
      %v7527 = vor.u32 %v7523, %v7526
      %v7528 = vrot.slane %v7527, 4
      %v7530 = vshll.u32 %v7246, 16
      %v7532 = vrot.slane %v7530, 5
      %v7533 = vsel %vm285, %v7528, %v7532
      %v7534 = vshrl.u32 %v7246, 16
      %v7536 = vrot.slane %v7534, 4
      %v7537 = vor.u32 %v7536, %v7532
      %v7538 = vrot.slane %v7537, 4
      %v7540 = vshll.u32 %v7247, 16
      %v7542 = vrot.slane %v7540, 5
      %v7543 = vsel %vm285, %v7538, %v7542
      %v7545 = vshrl.u32 %v7248, 16
      %v7547 = vrot.slane %v7545, 4
      %v7548 = vshll.u32 %v7248, 16
      %v7550 = vrot.slane %v7548, 5
      %v7551 = vor.u32 %v7547, %v7550
      %v7552 = vrot.slane %v7551, 4
      %v7554 = vshll.u32 %v7249, 16
      %v7556 = vrot.slane %v7554, 5
      %v7557 = vsel %vm285, %v7552, %v7556
      %v7558 = vshrl.u32 %v7249, 16
      %v7560 = vrot.slane %v7558, 4
      %v7561 = vor.u32 %v7560, %v7556
      %v7562 = vrot.slane %v7561, 4
      %v7564 = vshll.u32 %v7250, 16
      %v7566 = vrot.slane %v7564, 5
      %v7567 = vsel %vm285, %v7562, %v7566
      %v7569 = vshrl.u32 %v7251, 16
      %v7571 = vrot.slane %v7569, 4
      %v7572 = vshll.u32 %v7251, 16
      %v7574 = vrot.slane %v7572, 5
      %v7575 = vor.u32 %v7571, %v7574
      %v7576 = vrot.slane %v7575, 4
      %v7578 = vshll.u32 %v7252, 16
      %v7580 = vrot.slane %v7578, 5
      %v7581 = vsel %vm285, %v7576, %v7580
      %v7582 = vshrl.u32 %v7252, 16
      %v7584 = vrot.slane %v7582, 4
      %v7585 = vor.u32 %v7584, %v7580
      %v7586 = vrot.slane %v7585, 4
      %v7588 = vshll.u32 %v7253, 16
      %v7590 = vrot.slane %v7588, 5
      %v7591 = vsel %vm285, %v7586, %v7590
      %v7593 = vshrl.u32 %v7254, 16
      %v7595 = vrot.slane %v7593, 4
      %v7596 = vshll.u32 %v7254, 16
      %v7598 = vrot.slane %v7596, 5
      %v7599 = vor.u32 %v7595, %v7598
      %v7600 = vrot.slane %v7599, 4
      %v7602 = vshll.u32 %v7255, 16
      %v7604 = vrot.slane %v7602, 5
      %v7605 = vsel %vm285, %v7600, %v7604
      %v7606 = vshrl.u32 %v7255, 16
      %v7608 = vrot.slane %v7606, 4
      %v7609 = vor.u32 %v7608, %v7604
      %v7610 = vrot.slane %v7609, 4
      %v7612 = vshll.u32 %v7256, 16
      %v7614 = vrot.slane %v7612, 5
      %v7615 = vsel %vm285, %v7610, %v7614
      %v7617 = vshrl.u32 %v7257, 16
      %v7619 = vrot.slane %v7617, 4
      %v7620 = vshll.u32 %v7257, 16
      %v7622 = vrot.slane %v7620, 5
      %v7623 = vor.u32 %v7619, %v7622
      %v7624 = vrot.slane %v7623, 4
      %v7626 = vshll.u32 %v7258, 16
      %v7628 = vrot.slane %v7626, 5
      %v7629 = vsel %vm285, %v7624, %v7628
      %v7630 = vshrl.u32 %v7258, 16
      %v7632 = vrot.slane %v7630, 4
      %v7633 = vor.u32 %v7632, %v7628
      %v7634 = vrot.slane %v7633, 4
      %v7636 = vshll.u32 %v7259, 16
      %v7638 = vrot.slane %v7636, 5
      %v7639 = vsel %vm285, %v7634, %v7638
      %v7641 = vshrl.u32 %v7260, 16
      %v7643 = vrot.slane %v7641, 4
      %v7644 = vshll.u32 %v7260, 16
      %v7646 = vrot.slane %v7644, 5
      %v7647 = vor.u32 %v7643, %v7646
      %v7648 = vrot.slane %v7647, 4
      %v7650 = vshll.u32 %v7261, 16
      %v7652 = vrot.slane %v7650, 5
      %v7653 = vsel %vm285, %v7648, %v7652
      %v7654 = vshrl.u32 %v7261, 16
      %v7656 = vrot.slane %v7654, 4
      %v7657 = vor.u32 %v7656, %v7652
      %v7658 = vrot.slane %v7657, 4
      %v7660 = vshll.u32 %v7262, 16
      %v7662 = vrot.slane %v7660, 5
      %v7663 = vsel %vm285, %v7658, %v7662
      %v7664 = vunpack.c.l.b16 %v7293
      %v7665 = vunpack.c.l.b16 %v7303
      %v7666 = vunpack.c.l.b16 %v7317
      %v7667 = vunpack.c.l.b16 %v7327
      %v7668 = vunpack.c.l.b16 %v7341
      %v7669 = vunpack.c.l.b16 %v7351
      %v7670 = vunpack.c.l.b16 %v7365
      %v7671 = vunpack.c.l.b16 %v7375
      %v7672 = vunpack.c.l.b16 %v7389
      %v7673 = vunpack.c.l.b16 %v7399
      %v7674 = vunpack.c.l.b16 %v7413
      %v7675 = vunpack.c.l.b16 %v7423
      %v7676 = vunpack.c.l.b16 %v7437
      %v7677 = vunpack.c.l.b16 %v7447
      %v7678 = vunpack.c.l.b16 %v7461
      %v7679 = vunpack.c.l.b16 %v7471
      %v7680 = vunpack.c.l.b16 %v7485
      %v7681 = vunpack.c.l.b16 %v7495
      %v7682 = vunpack.c.l.b16 %v7509
      %v7683 = vunpack.c.l.b16 %v7519
      %v7684 = vunpack.c.l.b16 %v7533
      %v7685 = vunpack.c.l.b16 %v7543
      %v7686 = vunpack.c.l.b16 %v7557
      %v7687 = vunpack.c.l.b16 %v7567
      %v7688 = vunpack.c.l.b16 %v7581
      %v7689 = vunpack.c.l.b16 %v7591
      %v7690 = vunpack.c.l.b16 %v7605
      %v7691 = vunpack.c.l.b16 %v7615
      %v7692 = vunpack.c.l.b16 %v7629
      %v7693 = vunpack.c.l.b16 %v7639
      %v7694 = vunpack.c.l.b16 %v7653
      %v7695 = vunpack.c.l.b16 %v7663
      %v7696 = vpack.c.b16 %v7665, %v7664
      %v7697 = vpack.c.b16 %v7667, %v7666
      %v7698 = vpack.c.b16 %v7669, %v7668
      %v7699 = vpack.c.b16 %v7671, %v7670
      %v7700 = vpack.c.b16 %v7673, %v7672
      %v7701 = vpack.c.b16 %v7675, %v7674
      %v7702 = vpack.c.b16 %v7677, %v7676
      %v7703 = vpack.c.b16 %v7679, %v7678
      %v7704 = vpack.c.b16 %v7681, %v7680
      %v7705 = vpack.c.b16 %v7683, %v7682
      %v7706 = vpack.c.b16 %v7685, %v7684
      %v7707 = vpack.c.b16 %v7687, %v7686
      %v7708 = vpack.c.b16 %v7689, %v7688
      %v7709 = vpack.c.b16 %v7691, %v7690
      %v7710 = vpack.c.b16 %v7693, %v7692
      %v7711 = vpack.c.b16 %v7695, %v7694
      %v7744 = vunpack.c.l.b16 %v7264
      %v7745 = vunpack.c.l.b16 %v7265
      %v7746 = vunpack.c.l.b16 %v7266
      %v7747 = vunpack.c.l.b16 %v7267
      %v7748 = vunpack.c.l.b16 %v7268
      %v7749 = vunpack.c.l.b16 %v7269
      %v7750 = vunpack.c.l.b16 %v7270
      %v7751 = vunpack.c.l.b16 %v7271
      %v7752 = vunpack.c.l.b16 %v7272
      %v7753 = vunpack.c.l.b16 %v7273
      %v7754 = vunpack.c.l.b16 %v7274
      %v7755 = vunpack.c.l.b16 %v7275
      %v7756 = vunpack.c.l.b16 %v7276
      %v7757 = vunpack.c.l.b16 %v7277
      %v7758 = vunpack.c.l.b16 %v7278
      %v7759 = vunpack.c.l.b16 %v7279
      %v7760 = vpack.c.b16 %v7745, %v7744
      %v7761 = vpack.c.b16 %v7747, %v7746
      %v7762 = vpack.c.b16 %v7749, %v7748
      %v7763 = vpack.c.b16 %v7751, %v7750
      %v7764 = vpack.c.b16 %v7753, %v7752
      %v7765 = vpack.c.b16 %v7755, %v7754
      %v7766 = vpack.c.b16 %v7757, %v7756
      %v7767 = vpack.c.b16 %v7759, %v7758
      %7776 = vmatprep.subr.bf16.mxu0 0
      %7777 = vmatpush1.bf16.msra.mxu0 %v7760
      %7778 = vmatprep.subr.bf16.mxu0 0
      %7779 = vmatpush1.bf16.msra.mxu0 %v7761
      %7780 = vmatprep.subr.bf16.mxu0 0
      %7781 = vmatpush1.bf16.msra.mxu0 %v7762
      %7782 = vmatprep.subr.bf16.mxu0 0
      %7783 = vmatpush1.bf16.msra.mxu0 %v7763
      %7784 = vmatprep.subr.bf16.mxu0 0
      %7785 = vmatpush1.bf16.msra.mxu0 %v7764
      %7786 = vmatprep.subr.bf16.mxu0 0
      %7787 = vmatpush1.bf16.msra.mxu0 %v7765
      %7788 = vmatprep.subr.bf16.mxu0 0
      %7789 = vmatpush1.bf16.msra.mxu0 %v7766
      %7790 = vmatprep.subr.bf16.mxu0 0
      %7791 = vmatpush1.bf16.msra.mxu0 %v7767
      %7792 = vmatprep.subr.bf16.mxu0 0
      %7793 = vmatpush1.bf16.msra.mxu0 0
      %7794 = vmatprep.subr.bf16.mxu0 0
      %7795 = vmatpush1.bf16.msra.mxu0 0
      %7796 = vmatprep.subr.bf16.mxu0 0
      %7797 = vmatpush1.bf16.msra.mxu0 0
      %7798 = vmatprep.subr.bf16.mxu0 0
      %7799 = vmatpush1.bf16.msra.mxu0 0
      %7800 = vmatprep.subr.bf16.mxu0 0
      %7801 = vmatpush1.bf16.msra.mxu0 0
      %7802 = vmatprep.subr.bf16.mxu0 0
      %7803 = vmatpush1.bf16.msra.mxu0 0
      %7804 = vmatprep.subr.bf16.mxu0 0
      %7805 = vmatpush1.bf16.msra.mxu0 0
      %7806 = vmatprep.subr.bf16.mxu0 0
      %7807 = vmatpush1.bf16.msra.mxu0 0
      %7808 = vmatprep.mubr.bf16.mxu0 0
      %7809 = vmatmul.mubr.bf16.gmra.mrb[0].mxu0 %v7696
      %v7810 = vpop.f32.mrb[0].mxu0
      %v7811 = vadd.f32 0.0, %v7810
      %v7812 = vpop.f32.mrb[0].mxu0
      %v7813 = vpop.f32.mrb[0].mxu0
      %v7814 = vadd.f32 0.0, %v7813
      %v7815 = vpop.f32.mrb[0].mxu0
      %7816 = vmatprep.mubr.bf16.mxu0 0
      %7817 = vmatmul.mubr.bf16.gmra.mrb[0].mxu0 %v7697
      %v7818 = vpop.f32.mrb[0].mxu0
      %v7819 = vadd.f32 0.0, %v7818
      %v7820 = vpop.f32.mrb[0].mxu0
      %v7821 = vpop.f32.mrb[0].mxu0
      %v7822 = vadd.f32 0.0, %v7821
      %v7823 = vpop.f32.mrb[0].mxu0
      %7824 = vmatprep.mubr.bf16.mxu0 0
      %7825 = vmatmul.mubr.bf16.gmra.mrb[0].mxu0 %v7698
      %v7826 = vpop.f32.mrb[0].mxu0
      %v7827 = vadd.f32 0.0, %v7826
      %v7828 = vpop.f32.mrb[0].mxu0
      %v7829 = vpop.f32.mrb[0].mxu0
      %v7830 = vadd.f32 0.0, %v7829
      %v7831 = vpop.f32.mrb[0].mxu0
      %7832 = vmatprep.mubr.bf16.mxu0 0
      %7833 = vmatmul.mubr.bf16.gmra.mrb[0].mxu0 %v7699
      %v7834 = vpop.f32.mrb[0].mxu0
      %v7835 = vadd.f32 0.0, %v7834
      %v7836 = vpop.f32.mrb[0].mxu0
      %v7837 = vpop.f32.mrb[0].mxu0
      %v7838 = vadd.f32 0.0, %v7837
      %v7839 = vpop.f32.mrb[0].mxu0
      %7840 = vmatprep.mubr.bf16.mxu0 0
      %7841 = vmatmul.mubr.bf16.gmra.mrb[0].mxu0 %v7700
      %v7842 = vpop.f32.mrb[0].mxu0
      %v7843 = vadd.f32 0.0, %v7842
      %v7844 = vpop.f32.mrb[0].mxu0
      %v7845 = vpop.f32.mrb[0].mxu0
      %v7846 = vadd.f32 0.0, %v7845
      %v7847 = vpop.f32.mrb[0].mxu0
      %7848 = vmatprep.mubr.bf16.mxu0 0
      %7849 = vmatmul.mubr.bf16.gmra.mrb[0].mxu0 %v7701
      %v7850 = vpop.f32.mrb[0].mxu0
      %v7851 = vadd.f32 0.0, %v7850
      %v7852 = vpop.f32.mrb[0].mxu0
      %v7853 = vpop.f32.mrb[0].mxu0
      %v7854 = vadd.f32 0.0, %v7853
      %v7855 = vpop.f32.mrb[0].mxu0
      %7856 = vmatprep.mubr.bf16.mxu0 0
      %7857 = vmatmul.mubr.bf16.gmra.mrb[0].mxu0 %v7702
      %v7858 = vpop.f32.mrb[0].mxu0
      %v7859 = vadd.f32 0.0, %v7858
      %v7860 = vpop.f32.mrb[0].mxu0
      %v7861 = vpop.f32.mrb[0].mxu0
      %v7862 = vadd.f32 0.0, %v7861
      %v7863 = vpop.f32.mrb[0].mxu0
      %7864 = vmatprep.mubr.bf16.mxu0 0
      %7865 = vmatmul.mubr.bf16.gmra.mrb[0].mxu0 %v7703
      %v7866 = vpop.f32.mrb[0].mxu0
      %v7867 = vadd.f32 0.0, %v7866
      %v7868 = vpop.f32.mrb[0].mxu0
      %v7869 = vpop.f32.mrb[0].mxu0
      %v7870 = vadd.f32 0.0, %v7869
      %v7871 = vpop.f32.mrb[0].mxu0
      %7872 = vmatprep.mubr.bf16.mxu0 0
      %7873 = vmatmul.mubr.bf16.gmra.mrb[0].mxu0 %v7704
      %v7874 = vpop.f32.mrb[0].mxu0
      %v7875 = vadd.f32 0.0, %v7874
      %v7876 = vpop.f32.mrb[0].mxu0
      %v7877 = vpop.f32.mrb[0].mxu0
      %v7878 = vadd.f32 0.0, %v7877
      %v7879 = vpop.f32.mrb[0].mxu0
      %7880 = vmatprep.mubr.bf16.mxu0 0
      %7881 = vmatmul.mubr.bf16.gmra.mrb[0].mxu0 %v7705
      %v7882 = vpop.f32.mrb[0].mxu0
      %v7883 = vadd.f32 0.0, %v7882
      %v7884 = vpop.f32.mrb[0].mxu0
      %v7885 = vpop.f32.mrb[0].mxu0
      %v7886 = vadd.f32 0.0, %v7885
      %v7887 = vpop.f32.mrb[0].mxu0
      %7888 = vmatprep.mubr.bf16.mxu0 0
      %7889 = vmatmul.mubr.bf16.gmra.mrb[0].mxu0 %v7706
      %v7890 = vpop.f32.mrb[0].mxu0
      %v7891 = vadd.f32 0.0, %v7890
      %v7892 = vpop.f32.mrb[0].mxu0
      %v7893 = vpop.f32.mrb[0].mxu0
      %v7894 = vadd.f32 0.0, %v7893
      %v7895 = vpop.f32.mrb[0].mxu0
      %7896 = vmatprep.mubr.bf16.mxu0 0
      %7897 = vmatmul.mubr.bf16.gmra.mrb[0].mxu0 %v7707
      %v7898 = vpop.f32.mrb[0].mxu0
      %v7899 = vadd.f32 0.0, %v7898
      %v7900 = vpop.f32.mrb[0].mxu0
      %v7901 = vpop.f32.mrb[0].mxu0
      %v7902 = vadd.f32 0.0, %v7901
      %v7903 = vpop.f32.mrb[0].mxu0
      %7904 = vmatprep.mubr.bf16.mxu0 0
      %7905 = vmatmul.mubr.bf16.gmra.mrb[0].mxu0 %v7708
      %v7906 = vpop.f32.mrb[0].mxu0
      %v7907 = vadd.f32 0.0, %v7906
      %v7908 = vpop.f32.mrb[0].mxu0
      %v7909 = vpop.f32.mrb[0].mxu0
      %v7910 = vadd.f32 0.0, %v7909
      %v7911 = vpop.f32.mrb[0].mxu0
      %7912 = vmatprep.mubr.bf16.mxu0 0
      %7913 = vmatmul.mubr.bf16.gmra.mrb[0].mxu0 %v7709
      %v7914 = vpop.f32.mrb[0].mxu0
      %v7915 = vadd.f32 0.0, %v7914
      %v7916 = vpop.f32.mrb[0].mxu0
      %v7917 = vpop.f32.mrb[0].mxu0
      %v7918 = vadd.f32 0.0, %v7917
      %v7919 = vpop.f32.mrb[0].mxu0
      %7920 = vmatprep.mubr.bf16.mxu0 0
      %7921 = vmatmul.mubr.bf16.gmra.mrb[0].mxu0 %v7710
      %v7922 = vpop.f32.mrb[0].mxu0
      %v7923 = vadd.f32 0.0, %v7922
      %v7924 = vpop.f32.mrb[0].mxu0
      %v7925 = vpop.f32.mrb[0].mxu0
      %v7926 = vadd.f32 0.0, %v7925
      %v7927 = vpop.f32.mrb[0].mxu0
      %7928 = vmatprep.mubr.bf16.mxu0 0
      %7929 = vmatmul.mubr.bf16.gmra.mrb[0].mxu0 %v7711
      %v7930 = vpop.f32.mrb[0].mxu0
      %v7931 = vadd.f32 0.0, %v7930
      %v7932 = vpop.f32.mrb[0].mxu0
      %v7933 = vpop.f32.mrb[0].mxu0
      %v7934 = vadd.f32 0.0, %v7933
      %v7935 = vpop.f32.mrb[0].mxu0
      %7936 = vdwg.mxu0
      %v7937 = vadd.f32 %v7183, %v7811
      %v7938 = vadd.f32 %v7184, %v7814
      %v7939 = vadd.f32 %v7185, %v7819
      %v7940 = vadd.f32 %v7186, %v7822
      %v7941 = vadd.f32 %v7187, %v7827
      %v7942 = vadd.f32 %v7188, %v7830
      %v7943 = vadd.f32 %v7189, %v7835
      %v7944 = vadd.f32 %v7190, %v7838
      %v7945 = vadd.f32 %v7191, %v7843
      %v7946 = vadd.f32 %v7192, %v7846
      %v7947 = vadd.f32 %v7193, %v7851
      %v7948 = vadd.f32 %v7194, %v7854
      %v7949 = vadd.f32 %v7195, %v7859
      %v7950 = vadd.f32 %v7196, %v7862
      %v7951 = vadd.f32 %v7197, %v7867
      %v7952 = vadd.f32 %v7198, %v7870
      %v7953 = vadd.f32 %v7199, %v7875
      %v7954 = vadd.f32 %v7200, %v7878
      %v7955 = vadd.f32 %v7201, %v7883
      %v7956 = vadd.f32 %v7202, %v7886
      %v7957 = vadd.f32 %v7203, %v7891
      %v7958 = vadd.f32 %v7204, %v7894
      %v7959 = vadd.f32 %v7205, %v7899
      %v7960 = vadd.f32 %v7206, %v7902
      %v7961 = vadd.f32 %v7207, %v7907
      %v7962 = vadd.f32 %v7208, %v7910
      %v7963 = vadd.f32 %v7209, %v7915
      %v7964 = vadd.f32 %v7210, %v7918
      %v7965 = vadd.f32 %v7211, %v7923
      %v7966 = vadd.f32 %v7212, %v7926
      %v7967 = vadd.f32 %v7213, %v7931
      %v7968 = vadd.f32 %v7214, %v7934
      %v7969 = vld [vmem:[%s6828] sm:$0xe]
      %v7970 = vld [vmem:[%s6828 + $0xc] sm:$0xe]
      %v7971 = vld [vmem:[%s6828 + $0x18] sm:$0xe]
      %v7972 = vld [vmem:[%s6828 + $0x24] sm:$0xe]
      %v7973 = vld [vmem:[%s6828 + $0x30] sm:$0xe]
      %v7974 = vld [vmem:[%s6828 + $0x3c] sm:$0xe]
      %v7975 = vld [vmem:[%s6828 + $0x48] sm:$0xe]
      %v7976 = vld [vmem:[%s6828 + $0x54] sm:$0xe]
      %v7977 = vld [vmem:[%s6828 + $0x60] sm:$0xe]
      %v7978 = vld [vmem:[%s6828 + $0x6c] sm:$0xe]
      %v7979 = vld [vmem:[%s6828 + $0x78] sm:$0xe]
      %v7980 = vld [vmem:[%s6828 + $0x84] sm:$0xe]
      %v7981 = vld [vmem:[%s6828 + $0x90] sm:$0xe]
      %v7982 = vld [vmem:[%s6828 + $0x9c] sm:$0xe]
      %v7983 = vld [vmem:[%s6828 + $0xa8] sm:$0xe]
      %v7984 = vld [vmem:[%s6828 + $0xb4] sm:$0xe]
      %s7985 = scalar_lea.vmem %s3, 512
      %v7986 = vld [vmem:[%s7985] sm:$0xf]
      %v7987 = vld [vmem:[%s7985 + $0x4] sm:$0xf]
      %v7988 = vld [vmem:[%s7985 + $0x8] sm:$0xf]
      %v7989 = vld [vmem:[%s7985 + $0xc] sm:$0xf]
      %v7990 = vld [vmem:[%s7985 + $0x10] sm:$0xf]
      %v7991 = vld [vmem:[%s7985 + $0x14] sm:$0xf]
      %v7992 = vld [vmem:[%s7985 + $0x18] sm:$0xf]
      %v7993 = vld [vmem:[%s7985 + $0x1c] sm:$0xf]
      %v7994 = vld [vmem:[%s7985 + $0x20] sm:$0xf]
      %v7995 = vld [vmem:[%s7985 + $0x24] sm:$0xf]
      %v7996 = vld [vmem:[%s7985 + $0x28] sm:$0xf]
      %v7997 = vld [vmem:[%s7985 + $0x2c] sm:$0xf]
      %v7998 = vld [vmem:[%s7985 + $0x30] sm:$0xf]
      %v7999 = vld [vmem:[%s7985 + $0x34] sm:$0xf]
      %v8000 = vld [vmem:[%s7985 + $0x38] sm:$0xf]
      %v8001 = vld [vmem:[%s7985 + $0x3c] sm:$0xf]
      %v8050 = vrot.slane %v7969, 5
      %v8051 = vrot.slane %v8050, 4
      %v8052 = vrot.slane %v7216, 5
      %v8053 = vsel %vm1244, %v8051, %v8052
      %v8054 = vrot.slane %v8052, 4
      %v8055 = vrot.slane %v7217, 5
      %v8056 = vsel %vm1244, %v8054, %v8055
      %v8057 = vrot.slane %v7970, 5
      %v8058 = vrot.slane %v8057, 4
      %v8059 = vrot.slane %v7219, 5
      %v8060 = vsel %vm1244, %v8058, %v8059
      %v8061 = vrot.slane %v8059, 4
      %v8062 = vrot.slane %v7220, 5
      %v8063 = vsel %vm1244, %v8061, %v8062
      %v8064 = vrot.slane %v7971, 5
      %v8065 = vrot.slane %v8064, 4
      %v8066 = vrot.slane %v7222, 5
      %v8067 = vsel %vm1244, %v8065, %v8066
      %v8068 = vrot.slane %v8066, 4
      %v8069 = vrot.slane %v7223, 5
      %v8070 = vsel %vm1244, %v8068, %v8069
      %v8071 = vrot.slane %v7972, 5
      %v8072 = vrot.slane %v8071, 4
      %v8073 = vrot.slane %v7225, 5
      %v8074 = vsel %vm1244, %v8072, %v8073
      %v8075 = vrot.slane %v8073, 4
      %v8076 = vrot.slane %v7226, 5
      %v8077 = vsel %vm1244, %v8075, %v8076
      %v8078 = vrot.slane %v7973, 5
      %v8079 = vrot.slane %v8078, 4
      %v8080 = vrot.slane %v7228, 5
      %v8081 = vsel %vm1244, %v8079, %v8080
      %v8082 = vrot.slane %v8080, 4
      %v8083 = vrot.slane %v7229, 5
      %v8084 = vsel %vm1244, %v8082, %v8083
      %v8085 = vrot.slane %v7974, 5
      %v8086 = vrot.slane %v8085, 4
      %v8087 = vrot.slane %v7231, 5
      %v8088 = vsel %vm1244, %v8086, %v8087
      %v8089 = vrot.slane %v8087, 4
      %v8090 = vrot.slane %v7232, 5
      %v8091 = vsel %vm1244, %v8089, %v8090
      %v8092 = vrot.slane %v7975, 5
      %v8093 = vrot.slane %v8092, 4
      %v8094 = vrot.slane %v7234, 5
      %v8095 = vsel %vm1244, %v8093, %v8094
      %v8096 = vrot.slane %v8094, 4
      %v8097 = vrot.slane %v7235, 5
      %v8098 = vsel %vm1244, %v8096, %v8097
      %v8099 = vrot.slane %v7976, 5
      %v8100 = vrot.slane %v8099, 4
      %v8101 = vrot.slane %v7237, 5
      %v8102 = vsel %vm1244, %v8100, %v8101
      %v8103 = vrot.slane %v8101, 4
      %v8104 = vrot.slane %v7238, 5
      %v8105 = vsel %vm1244, %v8103, %v8104
      %v8106 = vrot.slane %v7977, 5
      %v8107 = vrot.slane %v8106, 4
      %v8108 = vrot.slane %v7240, 5
      %v8109 = vsel %vm1244, %v8107, %v8108
      %v8110 = vrot.slane %v8108, 4
      %v8111 = vrot.slane %v7241, 5
      %v8112 = vsel %vm1244, %v8110, %v8111
      %v8113 = vrot.slane %v7978, 5
      %v8114 = vrot.slane %v8113, 4
      %v8115 = vrot.slane %v7243, 5
      %v8116 = vsel %vm1244, %v8114, %v8115
      %v8117 = vrot.slane %v8115, 4
      %v8118 = vrot.slane %v7244, 5
      %v8119 = vsel %vm1244, %v8117, %v8118
      %v8120 = vrot.slane %v7979, 5
      %v8121 = vrot.slane %v8120, 4
      %v8122 = vrot.slane %v7246, 5
      %v8123 = vsel %vm1244, %v8121, %v8122
      %v8124 = vrot.slane %v8122, 4
      %v8125 = vrot.slane %v7247, 5
      %v8126 = vsel %vm1244, %v8124, %v8125
      %v8127 = vrot.slane %v7980, 5
      %v8128 = vrot.slane %v8127, 4
      %v8129 = vrot.slane %v7249, 5
      %v8130 = vsel %vm1244, %v8128, %v8129
      %v8131 = vrot.slane %v8129, 4
      %v8132 = vrot.slane %v7250, 5
      %v8133 = vsel %vm1244, %v8131, %v8132
      %v8134 = vrot.slane %v7981, 5
      %v8135 = vrot.slane %v8134, 4
      %v8136 = vrot.slane %v7252, 5
      %v8137 = vsel %vm1244, %v8135, %v8136
      %v8138 = vrot.slane %v8136, 4
      %v8139 = vrot.slane %v7253, 5
      %v8140 = vsel %vm1244, %v8138, %v8139
      %v8141 = vrot.slane %v7982, 5
      %v8142 = vrot.slane %v8141, 4
      %v8143 = vrot.slane %v7255, 5
      %v8144 = vsel %vm1244, %v8142, %v8143
      %v8145 = vrot.slane %v8143, 4
      %v8146 = vrot.slane %v7256, 5
      %v8147 = vsel %vm1244, %v8145, %v8146
      %v8148 = vrot.slane %v7983, 5
      %v8149 = vrot.slane %v8148, 4
      %v8150 = vrot.slane %v7258, 5
      %v8151 = vsel %vm1244, %v8149, %v8150
      %v8152 = vrot.slane %v8150, 4
      %v8153 = vrot.slane %v7259, 5
      %v8154 = vsel %vm1244, %v8152, %v8153
      %v8155 = vrot.slane %v7984, 5
      %v8156 = vrot.slane %v8155, 4
      %v8157 = vrot.slane %v7261, 5
      %v8158 = vsel %vm1244, %v8156, %v8157
      %v8159 = vrot.slane %v8157, 4
      %v8160 = vrot.slane %v7262, 5
      %v8161 = vsel %vm1244, %v8159, %v8160
      %v8162 = vunpack.c.l.b16 %v8053
      %v8163 = vunpack.c.l.b16 %v8056
      %v8164 = vunpack.c.l.b16 %v8060
      %v8165 = vunpack.c.l.b16 %v8063
      %v8166 = vunpack.c.l.b16 %v8067
      %v8167 = vunpack.c.l.b16 %v8070
      %v8168 = vunpack.c.l.b16 %v8074
      %v8169 = vunpack.c.l.b16 %v8077
      %v8170 = vunpack.c.l.b16 %v8081
      %v8171 = vunpack.c.l.b16 %v8084
      %v8172 = vunpack.c.l.b16 %v8088
      %v8173 = vunpack.c.l.b16 %v8091
      %v8174 = vunpack.c.l.b16 %v8095
      %v8175 = vunpack.c.l.b16 %v8098
      %v8176 = vunpack.c.l.b16 %v8102
      %v8177 = vunpack.c.l.b16 %v8105
      %v8178 = vunpack.c.l.b16 %v8109
      %v8179 = vunpack.c.l.b16 %v8112
      %v8180 = vunpack.c.l.b16 %v8116
      %v8181 = vunpack.c.l.b16 %v8119
      %v8182 = vunpack.c.l.b16 %v8123
      %v8183 = vunpack.c.l.b16 %v8126
      %v8184 = vunpack.c.l.b16 %v8130
      %v8185 = vunpack.c.l.b16 %v8133
      %v8186 = vunpack.c.l.b16 %v8137
      %v8187 = vunpack.c.l.b16 %v8140
      %v8188 = vunpack.c.l.b16 %v8144
      %v8189 = vunpack.c.l.b16 %v8147
      %v8190 = vunpack.c.l.b16 %v8151
      %v8191 = vunpack.c.l.b16 %v8154
      %v8192 = vunpack.c.l.b16 %v8158
      %v8193 = vunpack.c.l.b16 %v8161
      %v8194 = vpack.c.b16 %v8163, %v8162
      %v8195 = vpack.c.b16 %v8165, %v8164
      %v8196 = vpack.c.b16 %v8167, %v8166
      %v8197 = vpack.c.b16 %v8169, %v8168
      %v8198 = vpack.c.b16 %v8171, %v8170
      %v8199 = vpack.c.b16 %v8173, %v8172
      %v8200 = vpack.c.b16 %v8175, %v8174
      %v8201 = vpack.c.b16 %v8177, %v8176
      %v8202 = vpack.c.b16 %v8179, %v8178
      %v8203 = vpack.c.b16 %v8181, %v8180
      %v8204 = vpack.c.b16 %v8183, %v8182
      %v8205 = vpack.c.b16 %v8185, %v8184
      %v8206 = vpack.c.b16 %v8187, %v8186
      %v8207 = vpack.c.b16 %v8189, %v8188
      %v8208 = vpack.c.b16 %v8191, %v8190
      %v8209 = vpack.c.b16 %v8193, %v8192
      %v8242 = vunpack.c.l.b16 %v7986
      %v8243 = vunpack.c.l.b16 %v7987
      %v8244 = vunpack.c.l.b16 %v7988
      %v8245 = vunpack.c.l.b16 %v7989
      %v8246 = vunpack.c.l.b16 %v7990
      %v8247 = vunpack.c.l.b16 %v7991
      %v8248 = vunpack.c.l.b16 %v7992
      %v8249 = vunpack.c.l.b16 %v7993
      %v8250 = vunpack.c.l.b16 %v7994
      %v8251 = vunpack.c.l.b16 %v7995
      %v8252 = vunpack.c.l.b16 %v7996
      %v8253 = vunpack.c.l.b16 %v7997
      %v8254 = vunpack.c.l.b16 %v7998
      %v8255 = vunpack.c.l.b16 %v7999
      %v8256 = vunpack.c.l.b16 %v8000
      %v8257 = vunpack.c.l.b16 %v8001
      %v8258 = vpack.c.b16 %v8243, %v8242
      %v8259 = vpack.c.b16 %v8245, %v8244
      %v8260 = vpack.c.b16 %v8247, %v8246
      %v8261 = vpack.c.b16 %v8249, %v8248
      %v8262 = vpack.c.b16 %v8251, %v8250
      %v8263 = vpack.c.b16 %v8253, %v8252
      %v8264 = vpack.c.b16 %v8255, %v8254
      %v8265 = vpack.c.b16 %v8257, %v8256
      %8274 = vmatprep.subr.bf16.mxu0 0
      %8275 = vmatpush1.bf16.msra.mxu0 %v8258
      %8276 = vmatprep.subr.bf16.mxu0 0
      %8277 = vmatpush1.bf16.msra.mxu0 %v8259
      %8278 = vmatprep.subr.bf16.mxu0 0
      %8279 = vmatpush1.bf16.msra.mxu0 %v8260
      %8280 = vmatprep.subr.bf16.mxu0 0
      %8281 = vmatpush1.bf16.msra.mxu0 %v8261
      %8282 = vmatprep.subr.bf16.mxu0 0
      %8283 = vmatpush1.bf16.msra.mxu0 %v8262
      %8284 = vmatprep.subr.bf16.mxu0 0
      %8285 = vmatpush1.bf16.msra.mxu0 %v8263
      %8286 = vmatprep.subr.bf16.mxu0 0
      %8287 = vmatpush1.bf16.msra.mxu0 %v8264
      %8288 = vmatprep.subr.bf16.mxu0 0
      %8289 = vmatpush1.bf16.msra.mxu0 %v8265
      %8290 = vmatprep.subr.bf16.mxu0 0
      %8291 = vmatpush1.bf16.msra.mxu0 0
      %8292 = vmatprep.subr.bf16.mxu0 0
      %8293 = vmatpush1.bf16.msra.mxu0 0
      %8294 = vmatprep.subr.bf16.mxu0 0
      %8295 = vmatpush1.bf16.msra.mxu0 0
      %8296 = vmatprep.subr.bf16.mxu0 0
      %8297 = vmatpush1.bf16.msra.mxu0 0
      %8298 = vmatprep.subr.bf16.mxu0 0
      %8299 = vmatpush1.bf16.msra.mxu0 0
      %8300 = vmatprep.subr.bf16.mxu0 0
      %8301 = vmatpush1.bf16.msra.mxu0 0
      %8302 = vmatprep.subr.bf16.mxu0 0
      %8303 = vmatpush1.bf16.msra.mxu0 0
      %8304 = vmatprep.subr.bf16.mxu0 0
      %8305 = vmatpush1.bf16.msra.mxu0 0
      %8306 = vmatprep.mubr.bf16.mxu0 0
      %8307 = vmatmul.mubr.bf16.gmra.mrb[0].mxu0 %v8194
      %v8308 = vpop.f32.mrb[0].mxu0
      %v8309 = vadd.f32 0.0, %v8308
      %v8310 = vpop.f32.mrb[0].mxu0
      %v8311 = vpop.f32.mrb[0].mxu0
      %v8312 = vadd.f32 0.0, %v8311
      %v8313 = vpop.f32.mrb[0].mxu0
      %8314 = vmatprep.mubr.bf16.mxu0 0
      %8315 = vmatmul.mubr.bf16.gmra.mrb[0].mxu0 %v8195
      %v8316 = vpop.f32.mrb[0].mxu0
      %v8317 = vadd.f32 0.0, %v8316
      %v8318 = vpop.f32.mrb[0].mxu0
      %v8319 = vpop.f32.mrb[0].mxu0
      %v8320 = vadd.f32 0.0, %v8319
      %v8321 = vpop.f32.mrb[0].mxu0
      %8322 = vmatprep.mubr.bf16.mxu0 0
      %8323 = vmatmul.mubr.bf16.gmra.mrb[0].mxu0 %v8196
      %v8324 = vpop.f32.mrb[0].mxu0
      %v8325 = vadd.f32 0.0, %v8324
      %v8326 = vpop.f32.mrb[0].mxu0
      %v8327 = vpop.f32.mrb[0].mxu0
      %v8328 = vadd.f32 0.0, %v8327
      %v8329 = vpop.f32.mrb[0].mxu0
      %8330 = vmatprep.mubr.bf16.mxu0 0
      %8331 = vmatmul.mubr.bf16.gmra.mrb[0].mxu0 %v8197
      %v8332 = vpop.f32.mrb[0].mxu0
      %v8333 = vadd.f32 0.0, %v8332
      %v8334 = vpop.f32.mrb[0].mxu0
      %v8335 = vpop.f32.mrb[0].mxu0
      %v8336 = vadd.f32 0.0, %v8335
      %v8337 = vpop.f32.mrb[0].mxu0
      %8338 = vmatprep.mubr.bf16.mxu0 0
      %8339 = vmatmul.mubr.bf16.gmra.mrb[0].mxu0 %v8198
      %v8340 = vpop.f32.mrb[0].mxu0
      %v8341 = vadd.f32 0.0, %v8340
      %v8342 = vpop.f32.mrb[0].mxu0
      %v8343 = vpop.f32.mrb[0].mxu0
      %v8344 = vadd.f32 0.0, %v8343
      %v8345 = vpop.f32.mrb[0].mxu0
      %8346 = vmatprep.mubr.bf16.mxu0 0
      %8347 = vmatmul.mubr.bf16.gmra.mrb[0].mxu0 %v8199
      %v8348 = vpop.f32.mrb[0].mxu0
      %v8349 = vadd.f32 0.0, %v8348
      %v8350 = vpop.f32.mrb[0].mxu0
      %v8351 = vpop.f32.mrb[0].mxu0
      %v8352 = vadd.f32 0.0, %v8351
      %v8353 = vpop.f32.mrb[0].mxu0
      %8354 = vmatprep.mubr.bf16.mxu0 0
      %8355 = vmatmul.mubr.bf16.gmra.mrb[0].mxu0 %v8200
      %v8356 = vpop.f32.mrb[0].mxu0
      %v8357 = vadd.f32 0.0, %v8356
      %v8358 = vpop.f32.mrb[0].mxu0
      %v8359 = vpop.f32.mrb[0].mxu0
      %v8360 = vadd.f32 0.0, %v8359
      %v8361 = vpop.f32.mrb[0].mxu0
      %8362 = vmatprep.mubr.bf16.mxu0 0
      %8363 = vmatmul.mubr.bf16.gmra.mrb[0].mxu0 %v8201
      %v8364 = vpop.f32.mrb[0].mxu0
      %v8365 = vadd.f32 0.0, %v8364
      %v8366 = vpop.f32.mrb[0].mxu0
      %v8367 = vpop.f32.mrb[0].mxu0
      %v8368 = vadd.f32 0.0, %v8367
      %v8369 = vpop.f32.mrb[0].mxu0
      %8370 = vmatprep.mubr.bf16.mxu0 0
      %8371 = vmatmul.mubr.bf16.gmra.mrb[0].mxu0 %v8202
      %v8372 = vpop.f32.mrb[0].mxu0
      %v8373 = vadd.f32 0.0, %v8372
      %v8374 = vpop.f32.mrb[0].mxu0
      %v8375 = vpop.f32.mrb[0].mxu0
      %v8376 = vadd.f32 0.0, %v8375
      %v8377 = vpop.f32.mrb[0].mxu0
      %8378 = vmatprep.mubr.bf16.mxu0 0
      %8379 = vmatmul.mubr.bf16.gmra.mrb[0].mxu0 %v8203
      %v8380 = vpop.f32.mrb[0].mxu0
      %v8381 = vadd.f32 0.0, %v8380
      %v8382 = vpop.f32.mrb[0].mxu0
      %v8383 = vpop.f32.mrb[0].mxu0
      %v8384 = vadd.f32 0.0, %v8383
      %v8385 = vpop.f32.mrb[0].mxu0
      %8386 = vmatprep.mubr.bf16.mxu0 0
      %8387 = vmatmul.mubr.bf16.gmra.mrb[0].mxu0 %v8204
      %v8388 = vpop.f32.mrb[0].mxu0
      %v8389 = vadd.f32 0.0, %v8388
      %v8390 = vpop.f32.mrb[0].mxu0
      %v8391 = vpop.f32.mrb[0].mxu0
      %v8392 = vadd.f32 0.0, %v8391
      %v8393 = vpop.f32.mrb[0].mxu0
      %8394 = vmatprep.mubr.bf16.mxu0 0
      %8395 = vmatmul.mubr.bf16.gmra.mrb[0].mxu0 %v8205
      %v8396 = vpop.f32.mrb[0].mxu0
      %v8397 = vadd.f32 0.0, %v8396
      %v8398 = vpop.f32.mrb[0].mxu0
      %v8399 = vpop.f32.mrb[0].mxu0
      %v8400 = vadd.f32 0.0, %v8399
      %v8401 = vpop.f32.mrb[0].mxu0
      %8402 = vmatprep.mubr.bf16.mxu0 0
      %8403 = vmatmul.mubr.bf16.gmra.mrb[0].mxu0 %v8206
      %v8404 = vpop.f32.mrb[0].mxu0
      %v8405 = vadd.f32 0.0, %v8404
      %v8406 = vpop.f32.mrb[0].mxu0
      %v8407 = vpop.f32.mrb[0].mxu0
      %v8408 = vadd.f32 0.0, %v8407
      %v8409 = vpop.f32.mrb[0].mxu0
      %8410 = vmatprep.mubr.bf16.mxu0 0
      %8411 = vmatmul.mubr.bf16.gmra.mrb[0].mxu0 %v8207
      %v8412 = vpop.f32.mrb[0].mxu0
      %v8413 = vadd.f32 0.0, %v8412
      %v8414 = vpop.f32.mrb[0].mxu0
      %v8415 = vpop.f32.mrb[0].mxu0
      %v8416 = vadd.f32 0.0, %v8415
      %v8417 = vpop.f32.mrb[0].mxu0
      %8418 = vmatprep.mubr.bf16.mxu0 0
      %8419 = vmatmul.mubr.bf16.gmra.mrb[0].mxu0 %v8208
      %v8420 = vpop.f32.mrb[0].mxu0
      %v8421 = vadd.f32 0.0, %v8420
      %v8422 = vpop.f32.mrb[0].mxu0
      %v8423 = vpop.f32.mrb[0].mxu0
      %v8424 = vadd.f32 0.0, %v8423
      %v8425 = vpop.f32.mrb[0].mxu0
      %8426 = vmatprep.mubr.bf16.mxu0 0
      %8427 = vmatmul.mubr.bf16.gmra.mrb[0].mxu0 %v8209
      %v8428 = vpop.f32.mrb[0].mxu0
      %v8429 = vadd.f32 0.0, %v8428
      %v8430 = vpop.f32.mrb[0].mxu0
      %v8431 = vpop.f32.mrb[0].mxu0
      %v8432 = vadd.f32 0.0, %v8431
      %v8433 = vpop.f32.mrb[0].mxu0
      %8434 = vdwg.mxu0
      %v8435 = vadd.f32 %v7937, %v8309
      %v8436 = vadd.f32 %v7938, %v8312
      %v8437 = vadd.f32 %v7939, %v8317
      %v8438 = vadd.f32 %v7940, %v8320
      %v8439 = vadd.f32 %v7941, %v8325
      %v8440 = vadd.f32 %v7942, %v8328
      %v8441 = vadd.f32 %v7943, %v8333
      %v8442 = vadd.f32 %v7944, %v8336
      %v8443 = vadd.f32 %v7945, %v8341
      %v8444 = vadd.f32 %v7946, %v8344
      %v8445 = vadd.f32 %v7947, %v8349
      %v8446 = vadd.f32 %v7948, %v8352
      %v8447 = vadd.f32 %v7949, %v8357
      %v8448 = vadd.f32 %v7950, %v8360
      %v8449 = vadd.f32 %v7951, %v8365
      %v8450 = vadd.f32 %v7952, %v8368
      %v8451 = vadd.f32 %v7953, %v8373
      %v8452 = vadd.f32 %v7954, %v8376
      %v8453 = vadd.f32 %v7955, %v8381
      %v8454 = vadd.f32 %v7956, %v8384
      %v8455 = vadd.f32 %v7957, %v8389
      %v8456 = vadd.f32 %v7958, %v8392
      %v8457 = vadd.f32 %v7959, %v8397
      %v8458 = vadd.f32 %v7960, %v8400
      %v8459 = vadd.f32 %v7961, %v8405
      %v8460 = vadd.f32 %v7962, %v8408
      %v8461 = vadd.f32 %v7963, %v8413
      %v8462 = vadd.f32 %v7964, %v8416
      %v8463 = vadd.f32 %v7965, %v8421
      %v8464 = vadd.f32 %v7966, %v8424
      %v8465 = vadd.f32 %v7967, %v8429
      %v8466 = vadd.f32 %v7968, %v8432
      %v8467 = vld [vmem:[%s4] sm:$0x1]
      %v8469 = vlaneseq
      %v8470 = vshrl.u32 %v8469, 7
      %v8471 = vsub.s32 0, %v8470
      %v8472 = vrot.slane %v8467, %v8471
      %v8474 = vadd.f32 %v8435, %v8472
      %v8475 = vadd.f32 %v8436, %v8472
      %v8476 = vadd.f32 %v8437, %v8472
      %v8477 = vadd.f32 %v8438, %v8472
      %v8478 = vadd.f32 %v8439, %v8472
      %v8479 = vadd.f32 %v8440, %v8472
      %v8480 = vadd.f32 %v8441, %v8472
      %v8481 = vadd.f32 %v8442, %v8472
      %v8482 = vadd.f32 %v8443, %v8472
      %v8483 = vadd.f32 %v8444, %v8472
      %v8484 = vadd.f32 %v8445, %v8472
      %v8485 = vadd.f32 %v8446, %v8472
      %v8486 = vadd.f32 %v8447, %v8472
      %v8487 = vadd.f32 %v8448, %v8472
      %v8488 = vadd.f32 %v8449, %v8472
      %v8489 = vadd.f32 %v8450, %v8472
      %v8490 = vadd.f32 %v8451, %v8472
      %v8491 = vadd.f32 %v8452, %v8472
      %v8492 = vadd.f32 %v8453, %v8472
      %v8493 = vadd.f32 %v8454, %v8472
      %v8494 = vadd.f32 %v8455, %v8472
      %v8495 = vadd.f32 %v8456, %v8472
      %v8496 = vadd.f32 %v8457, %v8472
      %v8497 = vadd.f32 %v8458, %v8472
      %v8498 = vadd.f32 %v8459, %v8472
      %v8499 = vadd.f32 %v8460, %v8472
      %v8500 = vadd.f32 %v8461, %v8472
      %v8501 = vadd.f32 %v8462, %v8472
      %v8502 = vadd.f32 %v8463, %v8472
      %v8503 = vadd.f32 %v8464, %v8472
      %v8504 = vadd.f32 %v8465, %v8472
      %v8505 = vadd.f32 %v8466, %v8472
      %v8506 = vmax.f32 %v8474, 0.0
      %v8507 = vmax.f32 %v8475, 0.0
      %v8508 = vmax.f32 %v8476, 0.0
      %v8509 = vmax.f32 %v8477, 0.0
      %v8510 = vmax.f32 %v8478, 0.0
      %v8511 = vmax.f32 %v8479, 0.0
      %v8512 = vmax.f32 %v8480, 0.0
      %v8513 = vmax.f32 %v8481, 0.0
      %v8514 = vmax.f32 %v8482, 0.0
      %v8515 = vmax.f32 %v8483, 0.0
      %v8516 = vmax.f32 %v8484, 0.0
      %v8517 = vmax.f32 %v8485, 0.0
      %v8518 = vmax.f32 %v8486, 0.0
      %v8519 = vmax.f32 %v8487, 0.0
      %v8520 = vmax.f32 %v8488, 0.0
      %v8521 = vmax.f32 %v8489, 0.0
      %v8522 = vmax.f32 %v8490, 0.0
      %v8523 = vmax.f32 %v8491, 0.0
      %v8524 = vmax.f32 %v8492, 0.0
      %v8525 = vmax.f32 %v8493, 0.0
      %v8526 = vmax.f32 %v8494, 0.0
      %v8527 = vmax.f32 %v8495, 0.0
      %v8528 = vmax.f32 %v8496, 0.0
      %v8529 = vmax.f32 %v8497, 0.0
      %v8530 = vmax.f32 %v8498, 0.0
      %v8531 = vmax.f32 %v8499, 0.0
      %v8532 = vmax.f32 %v8500, 0.0
      %v8533 = vmax.f32 %v8501, 0.0
      %v8534 = vmax.f32 %v8502, 0.0
      %v8535 = vmax.f32 %v8503, 0.0
      %v8536 = vmax.f32 %v8504, 0.0
      %v8537 = vmax.f32 %v8505, 0.0
      %8538 = vst [vmem:[%s224] sm:$0xff] %v8506
      %8539 = vst [vmem:[%s224 + $0x8] sm:$0xff] %v8507
      %8540 = vst [vmem:[%s224 + $0x10] sm:$0xff] %v8508
      %8541 = vst [vmem:[%s224 + $0x18] sm:$0xff] %v8509
      %8542 = vst [vmem:[%s224 + $0x20] sm:$0xff] %v8510
      %8543 = vst [vmem:[%s224 + $0x28] sm:$0xff] %v8511
      %8544 = vst [vmem:[%s224 + $0x30] sm:$0xff] %v8512
      %8545 = vst [vmem:[%s224 + $0x38] sm:$0xff] %v8513
      %8546 = vst [vmem:[%s224 + $0x40] sm:$0xff] %v8514
      %8547 = vst [vmem:[%s224 + $0x48] sm:$0xff] %v8515
      %8548 = vst [vmem:[%s224 + $0x50] sm:$0xff] %v8516
      %8549 = vst [vmem:[%s224 + $0x58] sm:$0xff] %v8517
      %8550 = vst [vmem:[%s224 + $0x60] sm:$0xff] %v8518
      %8551 = vst [vmem:[%s224 + $0x68] sm:$0xff] %v8519
      %8552 = vst [vmem:[%s224 + $0x70] sm:$0xff] %v8520
      %8553 = vst [vmem:[%s224 + $0x78] sm:$0xff] %v8521
      %8554 = vst [vmem:[%s224 + $0x80] sm:$0xff] %v8522
      %8555 = vst [vmem:[%s224 + $0x88] sm:$0xff] %v8523
      %8556 = vst [vmem:[%s224 + $0x90] sm:$0xff] %v8524
      %8557 = vst [vmem:[%s224 + $0x98] sm:$0xff] %v8525
      %8558 = vst [vmem:[%s224 + $0xa0] sm:$0xff] %v8526
      %8559 = vst [vmem:[%s224 + $0xa8] sm:$0xff] %v8527
      %8560 = vst [vmem:[%s224 + $0xb0] sm:$0xff] %v8528
      %8561 = vst [vmem:[%s224 + $0xb8] sm:$0xff] %v8529
      %8562 = vst [vmem:[%s224 + $0xc0] sm:$0xff] %v8530
      %8563 = vst [vmem:[%s224 + $0xc8] sm:$0xff] %v8531
      %8564 = vst [vmem:[%s224 + $0xd0] sm:$0xff] %v8532
      %8565 = vst [vmem:[%s224 + $0xd8] sm:$0xff] %v8533
      %8566 = vst [vmem:[%s224 + $0xe0] sm:$0xff] %v8534
      %8567 = vst [vmem:[%s224 + $0xe8] sm:$0xff] %v8535
      %8568 = vst [vmem:[%s224 + $0xf0] sm:$0xff] %v8536
      %8569 = vst [vmem:[%s224 + $0xf8] sm:$0xff] %v8537
      %p8570 = scmp.lt.s32.totalorder %s16, 1
      %s8571 = scalar_select %p8570, %s16, 1
      %s8572 = smul.addr %s8571, 32
      %s8573 = smul.addr %s8572, 8
      %s8574 = scalar_lea.vmem %s5, %s8573
      // Predicated region
      $region41: #{conv_block.1} parent=39 // pred_check
        %p8575 = pneg %p144
      $region42: #{conv_block.1} parent=39 // pred_check_branch
        %8577 = sbr.rel (%p8575) target = $region44
      $region43: #{conv_block.1} parent=39 // pred_region
        _
      $region44: #{conv_block.1} parent=39 // pred_fallthru
        _
    $region40: #{conv_block.1} parent=5 // pred_fallthru
      _
    %p8578 = scmp.le.s32.totalorder 2, %s11
    // Predicated region
    $region45: #{conv_block.1} parent=5 // pred_check
      %p8579 = pneg %p8578
    $region46: #{conv_block.1} parent=5 // pred_check_branch
      %8581 = sbr.rel (%p8579) target = $region48
    $region47: #{conv_block.1} parent=5 // pred_region
      %s8582 = ssub.s32 %s11, 2
      // Predicated region
      $region49: #{conv_block.1} parent=47 // pred_check
        %p8583 = pneg %p150
      $region50: #{conv_block.1} parent=47 // pred_check_branch
        %8585 = sbr.rel (%p8583) target = $region52
      $region51: #{conv_block.1} parent=47 // pred_region
        %p8586 = scmp.lt.s32.totalorder %s17, 1
        %s8587 = scalar_select %p8586, %s17, 1
        %s8588 = smul.addr %s8587, 32
        %s8589 = smul.addr %s8588, 8
        %s8590 = scalar_lea.vmem %s5, %s8589
      $region52: #{conv_block.1} parent=47 // pred_fallthru
        _
    $region48: #{conv_block.1} parent=5 // pred_fallthru
      _
  $region6: #{conv_block.1} parent=0 // loop_footer
    %s15 = sadd.s32 1, %s11
  $region7: #{conv_block.1} parent=0 // loop_footer_branch
    %10 = sbr.rel target = $region3
  $region8: #{conv_block.1} parent=0 // loop_exit
    _

</llo_original>
